<compile_context>
chip_gen: v7x
topology: tpu7x:2x2x1
jax: 0.10.0
libtpu: 0.0.40
codegen_flags: <defaults>
</compile_context>

<pallas_src>
import math
import jax
import jax.numpy as jnp
from jax.experimental import pallas as pl
from jax.experimental.pallas import tpu as pltpu

# ----------------------------- config (small) -------------------------------
B = 2                 # batch
L = 8                 # sequence length
H = 32                # hidden_size
NUM_HEADS = 4
HEAD_DIM = H // NUM_HEADS
FFN = 64              # intermediate size
NUM_LAYERS = 4        # num_hidden_layers
LAYER_START = 2       # config.layer_start
K_LAYERS = NUM_LAYERS + 1 - LAYER_START
VOCAB = 50
TYPE_VOCAB = 2
LN_EPS = 1e-7
ATTN_SCALE = 1.0 / math.sqrt(HEAD_DIM)

# packed H-wide vector table: rows 0,1 = embedding LN gamma/beta, then
# 6 rows per layer: [bo, ln1_g, ln1_b, b2, ln2_g, ln2_b]
VECS_PER_LAYER = 6
N_VEC = 2 + VECS_PER_LAYER * NUM_LAYERS


# ------------------------------ kernel helpers ------------------------------
def _row(ref, i):
    """Static [1, H] row read from a packed [N, H] vector table."""
    return ref[pl.ds(i, 1), :]


def _ln(x, g, b):
    mu = jnp.mean(x, axis=-1, keepdims=True)
    var = jnp.mean(jnp.square(x - mu), axis=-1, keepdims=True)
    return (x - mu) * jax.lax.rsqrt(var + LN_EPS) * g + b


# ------------------- fully fused encoder + pooling kernel -------------------
def deberta_fused_kernel(x_ref, maskk_ref, maskr_ref, lw_ref, vec_ref,
                         bqkv_ref, b1_ref, wqkv_ref, wo_ref, w1_ref, w2_ref,
                         out_ref):
    # ---- embeddings layernorm (hidden_states[0]) ----
    h = _ln(x_ref[...], _row(vec_ref, 0), _row(vec_ref, 1))          # [L, H]

    bias = (1.0 - maskk_ref[...]) * (-1e9)                           # [1, 1, L]

    def encoder_layer(li, x):
        base = 2 + VECS_PER_LAYER * li
        bo = _row(vec_ref, base + 0)
        ln1g = _row(vec_ref, base + 1)
        ln1b = _row(vec_ref, base + 2)
        b2 = _row(vec_ref, base + 3)
        ln2g = _row(vec_ref, base + 4)
        ln2b = _row(vec_ref, base + 5)

        # head-batched projections: weights are pre-laid-out [NH, H, HD] in the
        # wrapper, so no in-kernel lane slicing / reshape / transpose is needed.
        xb = jnp.broadcast_to(x, (NUM_HEADS, L, H))                  # [NH, L, H]
        q = jnp.einsum('hld,hde->hle', xb, wqkv_ref[3 * li + 0],
                       preferred_element_type=jnp.float32) + bqkv_ref[3 * li + 0]
        k = jnp.einsum('hld,hde->hle', xb, wqkv_ref[3 * li + 1],
                       preferred_element_type=jnp.float32) + bqkv_ref[3 * li + 1]
        v = jnp.einsum('hld,hde->hle', xb, wqkv_ref[3 * li + 2],
                       preferred_element_type=jnp.float32) + bqkv_ref[3 * li + 2]

        # scores / softmax / context, head as a leading batch dim throughout
        s = jnp.einsum('hqd,hkd->hqk', q, k,
                       preferred_element_type=jnp.float32) * ATTN_SCALE + bias
        s = s - jnp.max(s, axis=-1, keepdims=True)
        p = jnp.exp(s)
        p = p * pl.reciprocal(jnp.sum(p, axis=-1, keepdims=True), approx=True)
        ctx = jnp.einsum('hqk,hkd->hqd', p, v,
                         preferred_element_type=jnp.float32)          # [NH, L, HD]

        # output projection: head-batched matmul (wo pre-laid-out [NH, HD, H])
        # followed by a cheap VALU sum over the size-NH leading dim.
        attn = jnp.sum(jnp.einsum('hqd,hde->hqe', ctx, wo_ref[li],
                                  preferred_element_type=jnp.float32),
                       axis=0) + bo                                   # [L, H]

        x1 = _ln(x + attn, ln1g, ln1b)
        # TODO(synk): jax.nn.gelu is the tanh approximation (HF DeBERTa uses
        # erf GELU); irrelevant for parity since the weights are synthetic.
        hmid = jax.nn.gelu(
            jnp.dot(x1, w1_ref[li], preferred_element_type=jnp.float32)
            + b1_ref[li])
        ffn = jnp.dot(hmid, w2_ref[li],
                      preferred_element_type=jnp.float32) + b2
        return _ln(x1 + ffn, ln2g, ln2b)

    # ---- encoder stack + WeightedLayerPooling accumulation (in registers) ----
    acc = jnp.zeros((L, H), jnp.float32)
    if LAYER_START <= 0:                 # static check (layer 0 = embeddings)
        acc = acc + lw_ref[0] * h
    for li in range(NUM_LAYERS):         # static layer loop (toy size)
        h = encoder_layer(li, h)
        kidx = li + 1 - LAYER_START
        if kidx >= 0:
            acc = acc + lw_ref[kidx] * h  # SMEM scalar * [L, H]

    lw_sum = lw_ref[0]
    for kidx in range(1, K_LAYERS):
        lw_sum = lw_sum + lw_ref[kidx]
    weighted = acc / lw_sum               # exact divide (parity with torch)

    # ---- masked MeanPooling (exact division, per correctness review) ----
    mrow = maskr_ref[...]                                            # [L, 1]
    msum = jnp.sum(weighted * mrow, axis=0, keepdims=True)           # [1, H]
    denom = jnp.maximum(jnp.sum(mrow, axis=0, keepdims=True), 1e-9)  # [1, 1]
    out_ref[...] = (msum / denom).reshape(1, 1, H)


# ------------------------------ parameter init ------------------------------
def init_params(key):
    keys = jax.random.split(key, 4)

    def nrm(k, shape, s=0.02):
        return jax.random.normal(k, shape, jnp.float32) * s

    lkeys = jax.random.split(keys[3], NUM_LAYERS)
    layers = []
    for i in range(NUM_LAYERS):
        ks = jax.random.split(lkeys[i], 6)
        layers.append(dict(
            wq=nrm(ks[0], (H, H)), wk=nrm(ks[1], (H, H)), wv=nrm(ks[2], (H, H)),
            wo=nrm(ks[3], (H, H)),
            bq=jnp.zeros((H,), jnp.float32), bk=jnp.zeros((H,), jnp.float32),
            bv=jnp.zeros((H,), jnp.float32), bo=jnp.zeros((H,), jnp.float32),
            ln1_g=jnp.ones((H,), jnp.float32), ln1_b=jnp.zeros((H,), jnp.float32),
            w1=nrm(ks[4], (H, FFN)), b1=jnp.zeros((FFN,), jnp.float32),
            w2=nrm(ks[5], (FFN, H)), b2=jnp.zeros((H,), jnp.float32),
            ln2_g=jnp.ones((H,), jnp.float32), ln2_b=jnp.zeros((H,), jnp.float32),
        ))
    return {
        'word_emb': nrm(keys[0], (VOCAB, H)),
        'pos_emb': nrm(keys[1], (L, H)),
        'type_emb': nrm(keys[2], (TYPE_VOCAB, H)),
        'emb_ln_g': jnp.ones((H,), jnp.float32),
        'emb_ln_b': jnp.zeros((H,), jnp.float32),
        # WeightedLayerPooling layer_weights init to ones (as in the module)
        'layer_weights': jnp.ones((K_LAYERS,), jnp.float32),
        'layers': layers,
    }


def pack_params(p):
    """Wrapper-side layout plumbing (free): head-major weight layouts and a
    single packed table of every H-wide per-layer vector."""
    layers = p['layers']

    def head_w(w):                       # [H, H] -> [NH, H, HD]
        return w.reshape(H, NUM_HEADS, HEAD_DIM).transpose(1, 0, 2)

    def head_b(b):                       # [H] -> [NH, 1, HD]
        return b.reshape(NUM_HEADS, 1, HEAD_DIM)

    wqkv = jnp.stack([head_w(l[n]) for l in layers for n in ('wq', 'wk', 'wv')])
    bqkv = jnp.stack([head_b(l[n]) for l in layers for n in ('bq', 'bk', 'bv')])
    wo = jnp.stack([l['wo'].reshape(NUM_HEADS, HEAD_DIM, H) for l in layers])
    vecs = jnp.stack(
        [p['emb_ln_g'], p['emb_ln_b']]
        + [l[n] for l in layers
           for n in ('bo', 'ln1_g', 'ln1_b', 'b2', 'ln2_g', 'ln2_b')])
    b1s = jnp.stack([l['b1'].reshape(1, FFN) for l in layers])
    w1 = jnp.stack([l['w1'] for l in layers])
    w2 = jnp.stack([l['w2'] for l in layers])
    return wqkv, bqkv, wo, vecs, b1s, w1, w2


# --------------------------------- forward ----------------------------------
def deberta_forward(params, input_ids, attention_mask, token_type_ids):
    # embeddings: gathers are plain-JAX glue (no clean Pallas equivalent);
    # everything downstream runs inside the single fused kernel.
    we = params['word_emb'][input_ids]                 # [B, L, H]
    pe = params['pos_emb'][None, :, :]                 # [1, L, H]
    te = params['type_emb'][token_type_ids]            # [B, L, H]
    emb = (we + pe + te).reshape(B * L, H)             # wrapper-side flatten

    mask_f = attention_mask.astype(jnp.float32)
    mask_keys = mask_f.reshape(B, 1, L)                # additive-bias layout
    mask_rows = mask_f.reshape(B * L, 1)               # mean-pool layout

    wqkv, bqkv, wo, vecs, b1s, w1, w2 = pack_params(params)
    lw = params['layer_weights']                       # -> SMEM scalars

    inv = lambda n: (lambda b: (0,) * n)               # grid-invariant blocks
    pooled = pl.pallas_call(
        deberta_fused_kernel,
        out_shape=jax.ShapeDtypeStruct((B, 1, H), jnp.float32),
        grid=(B,),
        in_specs=[
            pl.BlockSpec((L, H), lambda b: (b, 0)),             # emb rows
            pl.BlockSpec((1, 1, L), lambda b: (b, 0, 0)),       # key mask
            pl.BlockSpec((L, 1), lambda b: (b, 0)),             # row mask
            pl.BlockSpec(memory_space=pltpu.MemorySpace.SMEM),  # layer weights
            pl.BlockSpec((N_VEC, H), inv(2)),                   # packed vectors
            pl.BlockSpec((3 * NUM_LAYERS, NUM_HEADS, 1, HEAD_DIM), inv(4)),
            pl.BlockSpec((NUM_LAYERS, 1, FFN), inv(3)),
            pl.BlockSpec((3 * NUM_LAYERS, NUM_HEADS, H, HEAD_DIM), inv(4)),
            pl.BlockSpec((NUM_LAYERS, NUM_HEADS, HEAD_DIM, H), inv(4)),
            pl.BlockSpec((NUM_LAYERS, H, FFN), inv(3)),
            pl.BlockSpec((NUM_LAYERS, FFN, H), inv(3)),
        ],
        out_specs=pl.BlockSpec((1, 1, H), lambda b: (b, 0, 0)),
        compiler_params=pltpu.CompilerParams(
            dimension_semantics=("parallel",)),
    )(emb, mask_keys, mask_rows, lw, vecs, bqkv, b1s, wqkv, wo, w1, w2)
    # NOTE: self.head exists in __init__ but is not used in forward; skipped.
    return pooled.reshape(B, H)


# ----------------------------------- main ------------------------------------
if __name__ == "__main__":
    key = jax.random.PRNGKey(0)
    pkey, ikey = jax.random.split(key)
    params = init_params(pkey)

    input_ids = jax.random.randint(ikey, (B, L), 0, VOCAB, dtype=jnp.int32)
    attention_mask = jnp.array([[1] * L,
                                [1] * (L - 3) + [0] * 3], dtype=jnp.int32)
    token_type_ids = jnp.zeros((B, L), dtype=jnp.int32)

    out = deberta_forward(params, input_ids, attention_mask, token_type_ids)
    jax.block_until_ready(out)
    assert out.shape == (B, H) and out.dtype == jnp.float32
    print("KERNEL_OK")
</pallas_src>

<mosaic_0001>
module attributes {stable_mosaic.version = 11 : i64} {
  func.func @deberta_fused_kernel(%arg0: i32, %arg1: memref<8x32xf32, #tpu.memory_space<vmem>>, %arg2: memref<1x1x8xf32, #tpu.memory_space<vmem>>, %arg3: memref<8x1xf32, #tpu.memory_space<vmem>>, %arg4: memref<3xf32, #tpu.memory_space<smem>>, %arg5: memref<26x32xf32, #tpu.memory_space<vmem>>, %arg6: memref<12x4x1x8xf32, #tpu.memory_space<vmem>>, %arg7: memref<4x1x64xf32, #tpu.memory_space<vmem>>, %arg8: memref<12x4x32x8xf32, #tpu.memory_space<vmem>>, %arg9: memref<4x4x8x32xf32, #tpu.memory_space<vmem>>, %arg10: memref<4x32x64xf32, #tpu.memory_space<vmem>>, %arg11: memref<4x64x32xf32, #tpu.memory_space<vmem>>, %arg12: memref<1x1x32xf32, #tpu.memory_space<vmem>>) attributes {dimension_semantics = [#tpu.dimension_semantics<parallel>], iteration_bounds = array<i64: 2>, scalar_prefetch = 0 : i64, scratch_operands = 0 : i64, tpu.core_type = #tpu.core_type<tc>, window_params = [{transform_indices = @transform_0, window_bounds = array<i64: 8, 32>}, {transform_indices = @transform_1, window_bounds = array<i64: 1, 1, 8>}, {transform_indices = @transform_2, window_bounds = array<i64: 8, 1>}, {transform_indices = @transform_3, window_bounds = array<i64: 3>}, {pipeline_mode = #tpu.pipeline_mode<synchronous>, transform_indices = @transform_4, window_bounds = array<i64: 26, 32>}, {pipeline_mode = #tpu.pipeline_mode<synchronous>, transform_indices = @transform_5, window_bounds = array<i64: 12, 4, 1, 8>}, {pipeline_mode = #tpu.pipeline_mode<synchronous>, transform_indices = @transform_6, window_bounds = array<i64: 4, 1, 64>}, {pipeline_mode = #tpu.pipeline_mode<synchronous>, transform_indices = @transform_7, window_bounds = array<i64: 12, 4, 32, 8>}, {pipeline_mode = #tpu.pipeline_mode<synchronous>, transform_indices = @transform_8, window_bounds = array<i64: 4, 4, 8, 32>}, {pipeline_mode = #tpu.pipeline_mode<synchronous>, transform_indices = @transform_9, window_bounds = array<i64: 4, 32, 64>}, {pipeline_mode = #tpu.pipeline_mode<synchronous>, transform_indices = @transform_10, window_bounds = array<i64: 4, 64, 32>}, {transform_indices = @transform_11, window_bounds = array<i64: 1, 1, 32>}]} {
    %c0 = arith.constant 0 : index
    %c0_0 = arith.constant 0 : index
    %0 = vector.load %arg1[%c0, %c0_0] : memref<8x32xf32, #tpu.memory_space<vmem>>, vector<8x32xf32>
    %c0_1 = arith.constant 0 : index
    %c0_2 = arith.constant 0 : index
    %1 = vector.load %arg5[%c0_1, %c0_2] : memref<26x32xf32, #tpu.memory_space<vmem>>, vector<1x32xf32>
    %c1 = arith.constant 1 : index
    %c0_3 = arith.constant 0 : index
    %2 = vector.load %arg5[%c1, %c0_3] : memref<26x32xf32, #tpu.memory_space<vmem>>, vector<1x32xf32>
    %cst = arith.constant dense<0.000000e+00> : vector<8xf32>
    %3 = vector.multi_reduction <add>, %0, %cst [1] : vector<8x32xf32> to vector<8xf32>
    %4 = vector.shape_cast %3 : vector<8xf32> to vector<8x1xf32>
    %cst_4 = arith.constant 3.200000e+01 : f32
    %5 = vector.broadcast %cst_4 : f32 to vector<8x1xf32>
    %6 = arith.divf %4, %5 : vector<8x1xf32>
    %7 = vector.broadcast %6 : vector<8x1xf32> to vector<8x32xf32>
    %8 = arith.subf %0, %7 : vector<8x32xf32>
    %9 = arith.mulf %8, %8 : vector<8x32xf32>
    %cst_5 = arith.constant dense<0.000000e+00> : vector<8xf32>
    %10 = vector.multi_reduction <add>, %9, %cst_5 [1] : vector<8x32xf32> to vector<8xf32>
    %11 = vector.shape_cast %10 : vector<8xf32> to vector<8x1xf32>
    %cst_6 = arith.constant 3.200000e+01 : f32
    %12 = vector.broadcast %cst_6 : f32 to vector<8x1xf32>
    %13 = arith.divf %11, %12 : vector<8x1xf32>
    %14 = vector.broadcast %6 : vector<8x1xf32> to vector<8x32xf32>
    %15 = arith.subf %0, %14 : vector<8x32xf32>
    %cst_7 = arith.constant 1.000000e-07 : f32
    %16 = vector.broadcast %cst_7 : f32 to vector<8x1xf32>
    %17 = arith.addf %13, %16 : vector<8x1xf32>
    %18 = math.rsqrt %17 : vector<8x1xf32>
    %19 = vector.broadcast %18 : vector<8x1xf32> to vector<8x32xf32>
    %20 = arith.mulf %15, %19 : vector<8x32xf32>
    %21 = vector.broadcast %1 : vector<1x32xf32> to vector<8x32xf32>
    %22 = arith.mulf %20, %21 : vector<8x32xf32>
    %23 = vector.broadcast %2 : vector<1x32xf32> to vector<8x32xf32>
    %24 = arith.addf %22, %23 : vector<8x32xf32>
    %c0_8 = arith.constant 0 : index
    %c0_9 = arith.constant 0 : index
    %c0_10 = arith.constant 0 : index
    %25 = vector.load %arg2[%c0_8, %c0_9, %c0_10] : memref<1x1x8xf32, #tpu.memory_space<vmem>>, vector<1x1x8xf32>
    %cst_11 = arith.constant 1.000000e+00 : f32
    %26 = vector.broadcast %cst_11 : f32 to vector<1x1x8xf32>
    %27 = arith.subf %26, %25 : vector<1x1x8xf32>
    %cst_12 = arith.constant -1.000000e+09 : f32
    %28 = vector.broadcast %cst_12 : f32 to vector<1x1x8xf32>
    %29 = arith.mulf %27, %28 : vector<1x1x8xf32>
    %cst_13 = arith.constant 0.000000e+00 : f32
    %30 = vector.broadcast %cst_13 : f32 to vector<8x32xf32>
    %c2 = arith.constant 2 : index
    %c0_14 = arith.constant 0 : index
    %31 = vector.load %arg5[%c2, %c0_14] : memref<26x32xf32, #tpu.memory_space<vmem>>, vector<1x32xf32>
    %c3 = arith.constant 3 : index
    %c0_15 = arith.constant 0 : index
    %32 = vector.load %arg5[%c3, %c0_15] : memref<26x32xf32, #tpu.memory_space<vmem>>, vector<1x32xf32>
    %c4 = arith.constant 4 : index
    %c0_16 = arith.constant 0 : index
    %33 = vector.load %arg5[%c4, %c0_16] : memref<26x32xf32, #tpu.memory_space<vmem>>, vector<1x32xf32>
    %c5 = arith.constant 5 : index
    %c0_17 = arith.constant 0 : index
    %34 = vector.load %arg5[%c5, %c0_17] : memref<26x32xf32, #tpu.memory_space<vmem>>, vector<1x32xf32>
    %c6 = arith.constant 6 : index
    %c0_18 = arith.constant 0 : index
    %35 = vector.load %arg5[%c6, %c0_18] : memref<26x32xf32, #tpu.memory_space<vmem>>, vector<1x32xf32>
    %c7 = arith.constant 7 : index
    %c0_19 = arith.constant 0 : index
    %36 = vector.load %arg5[%c7, %c0_19] : memref<26x32xf32, #tpu.memory_space<vmem>>, vector<1x32xf32>
    %37 = vector.shape_cast %24 : vector<8x32xf32> to vector<1x8x32xf32>
    %38 = vector.broadcast %37 : vector<1x8x32xf32> to vector<4x8x32xf32>
    %c0_20 = arith.constant 0 : index
    %c0_21 = arith.constant 0 : index
    %c0_22 = arith.constant 0 : index
    %c0_23 = arith.constant 0 : index
    %39 = vector.load %arg8[%c0_20, %c0_21, %c0_22, %c0_23] : memref<12x4x32x8xf32, #tpu.memory_space<vmem>>, vector<1x4x32x8xf32>
    %40 = vector.shape_cast %39 : vector<1x4x32x8xf32> to vector<4x32x8xf32>
    "tpu.trace_start"() <{level = 10 : i32, message = "hld,hde->hle"}> : () -> ()
    %cst_24 = arith.constant dense<0.000000e+00> : vector<4x8x8xf32>
    %41 = tpu.matmul %38, %40, %cst_24 {dimension_numbers = #tpu.dot_dimension_numbers<[2], [1], [1], [2], [0, 0, 0, 1, 1, 2], [0], [0]>} : vector<4x8x32xf32>, vector<4x32x8xf32>, vector<4x8x8xf32> -> vector<4x8x8xf32>
    "tpu.trace_stop"() : () -> ()
    %c0_25 = arith.constant 0 : index
    %c0_26 = arith.constant 0 : index
    %c0_27 = arith.constant 0 : index
    %c0_28 = arith.constant 0 : index
    %42 = vector.load %arg6[%c0_25, %c0_26, %c0_27, %c0_28] : memref<12x4x1x8xf32, #tpu.memory_space<vmem>>, vector<1x4x1x8xf32>
    %43 = vector.shape_cast %42 : vector<1x4x1x8xf32> to vector<4x1x8xf32>
    %44 = vector.broadcast %43 : vector<4x1x8xf32> to vector<4x8x8xf32>
    %45 = arith.addf %41, %44 : vector<4x8x8xf32>
    %c1_29 = arith.constant 1 : index
    %c0_30 = arith.constant 0 : index
    %c0_31 = arith.constant 0 : index
    %c0_32 = arith.constant 0 : index
    %46 = vector.load %arg8[%c1_29, %c0_30, %c0_31, %c0_32] : memref<12x4x32x8xf32, #tpu.memory_space<vmem>>, vector<1x4x32x8xf32>
    %47 = vector.shape_cast %46 : vector<1x4x32x8xf32> to vector<4x32x8xf32>
    "tpu.trace_start"() <{level = 10 : i32, message = "hld,hde->hle"}> : () -> ()
    %cst_33 = arith.constant dense<0.000000e+00> : vector<4x8x8xf32>
    %48 = tpu.matmul %38, %47, %cst_33 {dimension_numbers = #tpu.dot_dimension_numbers<[2], [1], [1], [2], [0, 0, 0, 1, 1, 2], [0], [0]>} : vector<4x8x32xf32>, vector<4x32x8xf32>, vector<4x8x8xf32> -> vector<4x8x8xf32>
    "tpu.trace_stop"() : () -> ()
    %c1_34 = arith.constant 1 : index
    %c0_35 = arith.constant 0 : index
    %c0_36 = arith.constant 0 : index
    %c0_37 = arith.constant 0 : index
    %49 = vector.load %arg6[%c1_34, %c0_35, %c0_36, %c0_37] : memref<12x4x1x8xf32, #tpu.memory_space<vmem>>, vector<1x4x1x8xf32>
    %50 = vector.shape_cast %49 : vector<1x4x1x8xf32> to vector<4x1x8xf32>
    %51 = vector.broadcast %50 : vector<4x1x8xf32> to vector<4x8x8xf32>
    %52 = arith.addf %48, %51 : vector<4x8x8xf32>
    %c2_38 = arith.constant 2 : index
    %c0_39 = arith.constant 0 : index
    %c0_40 = arith.constant 0 : index
    %c0_41 = arith.constant 0 : index
    %53 = vector.load %arg8[%c2_38, %c0_39, %c0_40, %c0_41] : memref<12x4x32x8xf32, #tpu.memory_space<vmem>>, vector<1x4x32x8xf32>
    %54 = vector.shape_cast %53 : vector<1x4x32x8xf32> to vector<4x32x8xf32>
    "tpu.trace_start"() <{level = 10 : i32, message = "hld,hde->hle"}> : () -> ()
    %cst_42 = arith.constant dense<0.000000e+00> : vector<4x8x8xf32>
    %55 = tpu.matmul %38, %54, %cst_42 {dimension_numbers = #tpu.dot_dimension_numbers<[2], [1], [1], [2], [0, 0, 0, 1, 1, 2], [0], [0]>} : vector<4x8x32xf32>, vector<4x32x8xf32>, vector<4x8x8xf32> -> vector<4x8x8xf32>
    "tpu.trace_stop"() : () -> ()
    %c2_43 = arith.constant 2 : index
    %c0_44 = arith.constant 0 : index
    %c0_45 = arith.constant 0 : index
    %c0_46 = arith.constant 0 : index
    %56 = vector.load %arg6[%c2_43, %c0_44, %c0_45, %c0_46] : memref<12x4x1x8xf32, #tpu.memory_space<vmem>>, vector<1x4x1x8xf32>
    %57 = vector.shape_cast %56 : vector<1x4x1x8xf32> to vector<4x1x8xf32>
    %58 = vector.broadcast %57 : vector<4x1x8xf32> to vector<4x8x8xf32>
    %59 = arith.addf %55, %58 : vector<4x8x8xf32>
    "tpu.trace_start"() <{level = 10 : i32, message = "hqd,hkd->hqk"}> : () -> ()
    %cst_47 = arith.constant dense<0.000000e+00> : vector<4x8x8xf32>
    %60 = tpu.matmul %45, %52, %cst_47 {dimension_numbers = #tpu.dot_dimension_numbers<[2], [2], [1], [1], [0, 0, 0, 1, 1, 1], [0], [0]>} : vector<4x8x8xf32>, vector<4x8x8xf32>, vector<4x8x8xf32> -> vector<4x8x8xf32>
    "tpu.trace_stop"() : () -> ()
    %cst_48 = arith.constant 0.353553385 : f32
    %61 = vector.broadcast %cst_48 : f32 to vector<4x8x8xf32>
    %62 = arith.mulf %60, %61 : vector<4x8x8xf32>
    %63 = vector.broadcast %29 : vector<1x1x8xf32> to vector<4x8x8xf32>
    %64 = arith.addf %62, %63 : vector<4x8x8xf32>
    %cst_49 = arith.constant dense<0xFF800000> : vector<4x8xf32>
    %65 = vector.multi_reduction <maximumf>, %64, %cst_49 [2] : vector<4x8x8xf32> to vector<4x8xf32>
    %66 = vector.shape_cast %65 : vector<4x8xf32> to vector<4x8x1xf32>
    %67 = vector.broadcast %66 : vector<4x8x1xf32> to vector<4x8x8xf32>
    %68 = arith.subf %64, %67 : vector<4x8x8xf32>
    %69 = math.exp %68 : vector<4x8x8xf32>
    %cst_50 = arith.constant dense<0.000000e+00> : vector<4x8xf32>
    %70 = vector.multi_reduction <add>, %69, %cst_50 [2] : vector<4x8x8xf32> to vector<4x8xf32>
    %71 = vector.shape_cast %70 : vector<4x8xf32> to vector<4x8x1xf32>
    %72 = tpu.reciprocal %71 {approx = true} : vector<4x8x1xf32> -> vector<4x8x1xf32>
    %73 = vector.broadcast %72 : vector<4x8x1xf32> to vector<4x8x8xf32>
    %74 = arith.mulf %69, %73 : vector<4x8x8xf32>
    "tpu.trace_start"() <{level = 10 : i32, message = "hqk,hkd->hqd"}> : () -> ()
    %cst_51 = arith.constant dense<0.000000e+00> : vector<4x8x8xf32>
    %75 = tpu.matmul %74, %59, %cst_51 {dimension_numbers = #tpu.dot_dimension_numbers<[2], [1], [1], [2], [0, 0, 0, 1, 1, 2], [0], [0]>} : vector<4x8x8xf32>, vector<4x8x8xf32>, vector<4x8x8xf32> -> vector<4x8x8xf32>
    "tpu.trace_stop"() : () -> ()
    %c0_52 = arith.constant 0 : index
    %c0_53 = arith.constant 0 : index
    %c0_54 = arith.constant 0 : index
    %c0_55 = arith.constant 0 : index
    %76 = vector.load %arg9[%c0_52, %c0_53, %c0_54, %c0_55] : memref<4x4x8x32xf32, #tpu.memory_space<vmem>>, vector<1x4x8x32xf32>
    %77 = vector.shape_cast %76 : vector<1x4x8x32xf32> to vector<4x8x32xf32>
    "tpu.trace_start"() <{level = 10 : i32, message = "hqd,hde->hqe"}> : () -> ()
    %cst_56 = arith.constant dense<0.000000e+00> : vector<4x8x32xf32>
    %78 = tpu.matmul %75, %77, %cst_56 {dimension_numbers = #tpu.dot_dimension_numbers<[2], [1], [1], [2], [0, 0, 0, 1, 1, 2], [0], [0]>} : vector<4x8x8xf32>, vector<4x8x32xf32>, vector<4x8x32xf32> -> vector<4x8x32xf32>
    "tpu.trace_stop"() : () -> ()
    %cst_57 = arith.constant dense<0.000000e+00> : vector<8x32xf32>
    %79 = vector.multi_reduction <add>, %78, %cst_57 [0] : vector<4x8x32xf32> to vector<8x32xf32>
    %80 = vector.broadcast %31 : vector<1x32xf32> to vector<8x32xf32>
    %81 = arith.addf %79, %80 : vector<8x32xf32>
    %82 = arith.addf %24, %81 : vector<8x32xf32>
    %cst_58 = arith.constant dense<0.000000e+00> : vector<8xf32>
    %83 = vector.multi_reduction <add>, %82, %cst_58 [1] : vector<8x32xf32> to vector<8xf32>
    %84 = vector.shape_cast %83 : vector<8xf32> to vector<8x1xf32>
    %cst_59 = arith.constant 3.200000e+01 : f32
    %85 = vector.broadcast %cst_59 : f32 to vector<8x1xf32>
    %86 = arith.divf %84, %85 : vector<8x1xf32>
    %87 = vector.broadcast %86 : vector<8x1xf32> to vector<8x32xf32>
    %88 = arith.subf %82, %87 : vector<8x32xf32>
    %89 = arith.mulf %88, %88 : vector<8x32xf32>
    %cst_60 = arith.constant dense<0.000000e+00> : vector<8xf32>
    %90 = vector.multi_reduction <add>, %89, %cst_60 [1] : vector<8x32xf32> to vector<8xf32>
    %91 = vector.shape_cast %90 : vector<8xf32> to vector<8x1xf32>
    %cst_61 = arith.constant 3.200000e+01 : f32
    %92 = vector.broadcast %cst_61 : f32 to vector<8x1xf32>
    %93 = arith.divf %91, %92 : vector<8x1xf32>
    %94 = vector.broadcast %86 : vector<8x1xf32> to vector<8x32xf32>
    %95 = arith.subf %82, %94 : vector<8x32xf32>
    %cst_62 = arith.constant 1.000000e-07 : f32
    %96 = vector.broadcast %cst_62 : f32 to vector<8x1xf32>
    %97 = arith.addf %93, %96 : vector<8x1xf32>
    %98 = math.rsqrt %97 : vector<8x1xf32>
    %99 = vector.broadcast %98 : vector<8x1xf32> to vector<8x32xf32>
    %100 = arith.mulf %95, %99 : vector<8x32xf32>
    %101 = vector.broadcast %32 : vector<1x32xf32> to vector<8x32xf32>
    %102 = arith.mulf %100, %101 : vector<8x32xf32>
    %103 = vector.broadcast %33 : vector<1x32xf32> to vector<8x32xf32>
    %104 = arith.addf %102, %103 : vector<8x32xf32>
    %c0_63 = arith.constant 0 : index
    %c0_64 = arith.constant 0 : index
    %c0_65 = arith.constant 0 : index
    %105 = vector.load %arg10[%c0_63, %c0_64, %c0_65] : memref<4x32x64xf32, #tpu.memory_space<vmem>>, vector<1x32x64xf32>
    %106 = vector.shape_cast %105 : vector<1x32x64xf32> to vector<32x64xf32>
    %cst_66 = arith.constant dense<0.000000e+00> : vector<8x64xf32>
    %107 = tpu.matmul %104, %106, %cst_66 {dimension_numbers = #tpu.dot_dimension_numbers<[1], [0], [0], [1], [0, 0, 1, 1], [], []>} : vector<8x32xf32>, vector<32x64xf32>, vector<8x64xf32> -> vector<8x64xf32>
    %c0_67 = arith.constant 0 : index
    %c0_68 = arith.constant 0 : index
    %c0_69 = arith.constant 0 : index
    %108 = vector.load %arg7[%c0_67, %c0_68, %c0_69] : memref<4x1x64xf32, #tpu.memory_space<vmem>>, vector<1x1x64xf32>
    %109 = vector.shape_cast %108 : vector<1x1x64xf32> to vector<1x64xf32>
    %110 = vector.broadcast %109 : vector<1x64xf32> to vector<8x64xf32>
    %111 = arith.addf %107, %110 : vector<8x64xf32>
    %112 = arith.mulf %111, %111 : vector<8x64xf32>
    %113 = arith.mulf %111, %112 : vector<8x64xf32>
    %cst_70 = arith.constant 4.471500e-02 : f32
    %114 = vector.broadcast %cst_70 : f32 to vector<8x64xf32>
    %115 = arith.mulf %114, %113 : vector<8x64xf32>
    %116 = arith.addf %111, %115 : vector<8x64xf32>
    %cst_71 = arith.constant 0.797884583 : f32
    %117 = vector.broadcast %cst_71 : f32 to vector<8x64xf32>
    %118 = arith.mulf %117, %116 : vector<8x64xf32>
    %119 = math.tanh %118 : vector<8x64xf32>
    %cst_72 = arith.constant 1.000000e+00 : f32
    %120 = vector.broadcast %cst_72 : f32 to vector<8x64xf32>
    %121 = arith.addf %120, %119 : vector<8x64xf32>
    %cst_73 = arith.constant 5.000000e-01 : f32
    %122 = vector.broadcast %cst_73 : f32 to vector<8x64xf32>
    %123 = arith.mulf %122, %121 : vector<8x64xf32>
    %124 = arith.mulf %111, %123 : vector<8x64xf32>
    %c0_74 = arith.constant 0 : index
    %c0_75 = arith.constant 0 : index
    %c0_76 = arith.constant 0 : index
    %125 = vector.load %arg11[%c0_74, %c0_75, %c0_76] : memref<4x64x32xf32, #tpu.memory_space<vmem>>, vector<1x64x32xf32>
    %126 = vector.shape_cast %125 : vector<1x64x32xf32> to vector<64x32xf32>
    %cst_77 = arith.constant dense<0.000000e+00> : vector<8x32xf32>
    %127 = tpu.matmul %124, %126, %cst_77 {dimension_numbers = #tpu.dot_dimension_numbers<[1], [0], [0], [1], [0, 0, 1, 1], [], []>} : vector<8x64xf32>, vector<64x32xf32>, vector<8x32xf32> -> vector<8x32xf32>
    %128 = vector.broadcast %34 : vector<1x32xf32> to vector<8x32xf32>
    %129 = arith.addf %127, %128 : vector<8x32xf32>
    %130 = arith.addf %104, %129 : vector<8x32xf32>
    %cst_78 = arith.constant dense<0.000000e+00> : vector<8xf32>
    %131 = vector.multi_reduction <add>, %130, %cst_78 [1] : vector<8x32xf32> to vector<8xf32>
    %132 = vector.shape_cast %131 : vector<8xf32> to vector<8x1xf32>
    %cst_79 = arith.constant 3.200000e+01 : f32
    %133 = vector.broadcast %cst_79 : f32 to vector<8x1xf32>
    %134 = arith.divf %132, %133 : vector<8x1xf32>
    %135 = vector.broadcast %134 : vector<8x1xf32> to vector<8x32xf32>
    %136 = arith.subf %130, %135 : vector<8x32xf32>
    %137 = arith.mulf %136, %136 : vector<8x32xf32>
    %cst_80 = arith.constant dense<0.000000e+00> : vector<8xf32>
    %138 = vector.multi_reduction <add>, %137, %cst_80 [1] : vector<8x32xf32> to vector<8xf32>
    %139 = vector.shape_cast %138 : vector<8xf32> to vector<8x1xf32>
    %cst_81 = arith.constant 3.200000e+01 : f32
    %140 = vector.broadcast %cst_81 : f32 to vector<8x1xf32>
    %141 = arith.divf %139, %140 : vector<8x1xf32>
    %142 = vector.broadcast %134 : vector<8x1xf32> to vector<8x32xf32>
    %143 = arith.subf %130, %142 : vector<8x32xf32>
    %cst_82 = arith.constant 1.000000e-07 : f32
    %144 = vector.broadcast %cst_82 : f32 to vector<8x1xf32>
    %145 = arith.addf %141, %144 : vector<8x1xf32>
    %146 = math.rsqrt %145 : vector<8x1xf32>
    %147 = vector.broadcast %146 : vector<8x1xf32> to vector<8x32xf32>
    %148 = arith.mulf %143, %147 : vector<8x32xf32>
    %149 = vector.broadcast %35 : vector<1x32xf32> to vector<8x32xf32>
    %150 = arith.mulf %148, %149 : vector<8x32xf32>
    %151 = vector.broadcast %36 : vector<1x32xf32> to vector<8x32xf32>
    %152 = arith.addf %150, %151 : vector<8x32xf32>
    %c8 = arith.constant 8 : index
    %c0_83 = arith.constant 0 : index
    %153 = vector.load %arg5[%c8, %c0_83] : memref<26x32xf32, #tpu.memory_space<vmem>>, vector<1x32xf32>
    %c9 = arith.constant 9 : index
    %c0_84 = arith.constant 0 : index
    %154 = vector.load %arg5[%c9, %c0_84] : memref<26x32xf32, #tpu.memory_space<vmem>>, vector<1x32xf32>
    %c10 = arith.constant 10 : index
    %c0_85 = arith.constant 0 : index
    %155 = vector.load %arg5[%c10, %c0_85] : memref<26x32xf32, #tpu.memory_space<vmem>>, vector<1x32xf32>
    %c11 = arith.constant 11 : index
    %c0_86 = arith.constant 0 : index
    %156 = vector.load %arg5[%c11, %c0_86] : memref<26x32xf32, #tpu.memory_space<vmem>>, vector<1x32xf32>
    %c12 = arith.constant 12 : index
    %c0_87 = arith.constant 0 : index
    %157 = vector.load %arg5[%c12, %c0_87] : memref<26x32xf32, #tpu.memory_space<vmem>>, vector<1x32xf32>
    %c13 = arith.constant 13 : index
    %c0_88 = arith.constant 0 : index
    %158 = vector.load %arg5[%c13, %c0_88] : memref<26x32xf32, #tpu.memory_space<vmem>>, vector<1x32xf32>
    %159 = vector.shape_cast %152 : vector<8x32xf32> to vector<1x8x32xf32>
    %160 = vector.broadcast %159 : vector<1x8x32xf32> to vector<4x8x32xf32>
    %c3_89 = arith.constant 3 : index
    %c0_90 = arith.constant 0 : index
    %c0_91 = arith.constant 0 : index
    %c0_92 = arith.constant 0 : index
    %161 = vector.load %arg8[%c3_89, %c0_90, %c0_91, %c0_92] : memref<12x4x32x8xf32, #tpu.memory_space<vmem>>, vector<1x4x32x8xf32>
    %162 = vector.shape_cast %161 : vector<1x4x32x8xf32> to vector<4x32x8xf32>
    "tpu.trace_start"() <{level = 10 : i32, message = "hld,hde->hle"}> : () -> ()
    %cst_93 = arith.constant dense<0.000000e+00> : vector<4x8x8xf32>
    %163 = tpu.matmul %160, %162, %cst_93 {dimension_numbers = #tpu.dot_dimension_numbers<[2], [1], [1], [2], [0, 0, 0, 1, 1, 2], [0], [0]>} : vector<4x8x32xf32>, vector<4x32x8xf32>, vector<4x8x8xf32> -> vector<4x8x8xf32>
    "tpu.trace_stop"() : () -> ()
    %c3_94 = arith.constant 3 : index
    %c0_95 = arith.constant 0 : index
    %c0_96 = arith.constant 0 : index
    %c0_97 = arith.constant 0 : index
    %164 = vector.load %arg6[%c3_94, %c0_95, %c0_96, %c0_97] : memref<12x4x1x8xf32, #tpu.memory_space<vmem>>, vector<1x4x1x8xf32>
    %165 = vector.shape_cast %164 : vector<1x4x1x8xf32> to vector<4x1x8xf32>
    %166 = vector.broadcast %165 : vector<4x1x8xf32> to vector<4x8x8xf32>
    %167 = arith.addf %163, %166 : vector<4x8x8xf32>
    %c4_98 = arith.constant 4 : index
    %c0_99 = arith.constant 0 : index
    %c0_100 = arith.constant 0 : index
    %c0_101 = arith.constant 0 : index
    %168 = vector.load %arg8[%c4_98, %c0_99, %c0_100, %c0_101] : memref<12x4x32x8xf32, #tpu.memory_space<vmem>>, vector<1x4x32x8xf32>
    %169 = vector.shape_cast %168 : vector<1x4x32x8xf32> to vector<4x32x8xf32>
    "tpu.trace_start"() <{level = 10 : i32, message = "hld,hde->hle"}> : () -> ()
    %cst_102 = arith.constant dense<0.000000e+00> : vector<4x8x8xf32>
    %170 = tpu.matmul %160, %169, %cst_102 {dimension_numbers = #tpu.dot_dimension_numbers<[2], [1], [1], [2], [0, 0, 0, 1, 1, 2], [0], [0]>} : vector<4x8x32xf32>, vector<4x32x8xf32>, vector<4x8x8xf32> -> vector<4x8x8xf32>
    "tpu.trace_stop"() : () -> ()
    %c4_103 = arith.constant 4 : index
    %c0_104 = arith.constant 0 : index
    %c0_105 = arith.constant 0 : index
    %c0_106 = arith.constant 0 : index
    %171 = vector.load %arg6[%c4_103, %c0_104, %c0_105, %c0_106] : memref<12x4x1x8xf32, #tpu.memory_space<vmem>>, vector<1x4x1x8xf32>
    %172 = vector.shape_cast %171 : vector<1x4x1x8xf32> to vector<4x1x8xf32>
    %173 = vector.broadcast %172 : vector<4x1x8xf32> to vector<4x8x8xf32>
    %174 = arith.addf %170, %173 : vector<4x8x8xf32>
    %c5_107 = arith.constant 5 : index
    %c0_108 = arith.constant 0 : index
    %c0_109 = arith.constant 0 : index
    %c0_110 = arith.constant 0 : index
    %175 = vector.load %arg8[%c5_107, %c0_108, %c0_109, %c0_110] : memref<12x4x32x8xf32, #tpu.memory_space<vmem>>, vector<1x4x32x8xf32>
    %176 = vector.shape_cast %175 : vector<1x4x32x8xf32> to vector<4x32x8xf32>
    "tpu.trace_start"() <{level = 10 : i32, message = "hld,hde->hle"}> : () -> ()
    %cst_111 = arith.constant dense<0.000000e+00> : vector<4x8x8xf32>
    %177 = tpu.matmul %160, %176, %cst_111 {dimension_numbers = #tpu.dot_dimension_numbers<[2], [1], [1], [2], [0, 0, 0, 1, 1, 2], [0], [0]>} : vector<4x8x32xf32>, vector<4x32x8xf32>, vector<4x8x8xf32> -> vector<4x8x8xf32>
    "tpu.trace_stop"() : () -> ()
    %c5_112 = arith.constant 5 : index
    %c0_113 = arith.constant 0 : index
    %c0_114 = arith.constant 0 : index
    %c0_115 = arith.constant 0 : index
    %178 = vector.load %arg6[%c5_112, %c0_113, %c0_114, %c0_115] : memref<12x4x1x8xf32, #tpu.memory_space<vmem>>, vector<1x4x1x8xf32>
    %179 = vector.shape_cast %178 : vector<1x4x1x8xf32> to vector<4x1x8xf32>
    %180 = vector.broadcast %179 : vector<4x1x8xf32> to vector<4x8x8xf32>
    %181 = arith.addf %177, %180 : vector<4x8x8xf32>
    "tpu.trace_start"() <{level = 10 : i32, message = "hqd,hkd->hqk"}> : () -> ()
    %cst_116 = arith.constant dense<0.000000e+00> : vector<4x8x8xf32>
    %182 = tpu.matmul %167, %174, %cst_116 {dimension_numbers = #tpu.dot_dimension_numbers<[2], [2], [1], [1], [0, 0, 0, 1, 1, 1], [0], [0]>} : vector<4x8x8xf32>, vector<4x8x8xf32>, vector<4x8x8xf32> -> vector<4x8x8xf32>
    "tpu.trace_stop"() : () -> ()
    %cst_117 = arith.constant 0.353553385 : f32
    %183 = vector.broadcast %cst_117 : f32 to vector<4x8x8xf32>
    %184 = arith.mulf %182, %183 : vector<4x8x8xf32>
    %185 = vector.broadcast %29 : vector<1x1x8xf32> to vector<4x8x8xf32>
    %186 = arith.addf %184, %185 : vector<4x8x8xf32>
    %cst_118 = arith.constant dense<0xFF800000> : vector<4x8xf32>
    %187 = vector.multi_reduction <maximumf>, %186, %cst_118 [2] : vector<4x8x8xf32> to vector<4x8xf32>
    %188 = vector.shape_cast %187 : vector<4x8xf32> to vector<4x8x1xf32>
    %189 = vector.broadcast %188 : vector<4x8x1xf32> to vector<4x8x8xf32>
    %190 = arith.subf %186, %189 : vector<4x8x8xf32>
    %191 = math.exp %190 : vector<4x8x8xf32>
    %cst_119 = arith.constant dense<0.000000e+00> : vector<4x8xf32>
    %192 = vector.multi_reduction <add>, %191, %cst_119 [2] : vector<4x8x8xf32> to vector<4x8xf32>
    %193 = vector.shape_cast %192 : vector<4x8xf32> to vector<4x8x1xf32>
    %194 = tpu.reciprocal %193 {approx = true} : vector<4x8x1xf32> -> vector<4x8x1xf32>
    %195 = vector.broadcast %194 : vector<4x8x1xf32> to vector<4x8x8xf32>
    %196 = arith.mulf %191, %195 : vector<4x8x8xf32>
    "tpu.trace_start"() <{level = 10 : i32, message = "hqk,hkd->hqd"}> : () -> ()
    %cst_120 = arith.constant dense<0.000000e+00> : vector<4x8x8xf32>
    %197 = tpu.matmul %196, %181, %cst_120 {dimension_numbers = #tpu.dot_dimension_numbers<[2], [1], [1], [2], [0, 0, 0, 1, 1, 2], [0], [0]>} : vector<4x8x8xf32>, vector<4x8x8xf32>, vector<4x8x8xf32> -> vector<4x8x8xf32>
    "tpu.trace_stop"() : () -> ()
    %c1_121 = arith.constant 1 : index
    %c0_122 = arith.constant 0 : index
    %c0_123 = arith.constant 0 : index
    %c0_124 = arith.constant 0 : index
    %198 = vector.load %arg9[%c1_121, %c0_122, %c0_123, %c0_124] : memref<4x4x8x32xf32, #tpu.memory_space<vmem>>, vector<1x4x8x32xf32>
    %199 = vector.shape_cast %198 : vector<1x4x8x32xf32> to vector<4x8x32xf32>
    "tpu.trace_start"() <{level = 10 : i32, message = "hqd,hde->hqe"}> : () -> ()
    %cst_125 = arith.constant dense<0.000000e+00> : vector<4x8x32xf32>
    %200 = tpu.matmul %197, %199, %cst_125 {dimension_numbers = #tpu.dot_dimension_numbers<[2], [1], [1], [2], [0, 0, 0, 1, 1, 2], [0], [0]>} : vector<4x8x8xf32>, vector<4x8x32xf32>, vector<4x8x32xf32> -> vector<4x8x32xf32>
    "tpu.trace_stop"() : () -> ()
    %cst_126 = arith.constant dense<0.000000e+00> : vector<8x32xf32>
    %201 = vector.multi_reduction <add>, %200, %cst_126 [0] : vector<4x8x32xf32> to vector<8x32xf32>
    %202 = vector.broadcast %153 : vector<1x32xf32> to vector<8x32xf32>
    %203 = arith.addf %201, %202 : vector<8x32xf32>
    %204 = arith.addf %152, %203 : vector<8x32xf32>
    %cst_127 = arith.constant dense<0.000000e+00> : vector<8xf32>
    %205 = vector.multi_reduction <add>, %204, %cst_127 [1] : vector<8x32xf32> to vector<8xf32>
    %206 = vector.shape_cast %205 : vector<8xf32> to vector<8x1xf32>
    %cst_128 = arith.constant 3.200000e+01 : f32
    %207 = vector.broadcast %cst_128 : f32 to vector<8x1xf32>
    %208 = arith.divf %206, %207 : vector<8x1xf32>
    %209 = vector.broadcast %208 : vector<8x1xf32> to vector<8x32xf32>
    %210 = arith.subf %204, %209 : vector<8x32xf32>
    %211 = arith.mulf %210, %210 : vector<8x32xf32>
    %cst_129 = arith.constant dense<0.000000e+00> : vector<8xf32>
    %212 = vector.multi_reduction <add>, %211, %cst_129 [1] : vector<8x32xf32> to vector<8xf32>
    %213 = vector.shape_cast %212 : vector<8xf32> to vector<8x1xf32>
    %cst_130 = arith.constant 3.200000e+01 : f32
    %214 = vector.broadcast %cst_130 : f32 to vector<8x1xf32>
    %215 = arith.divf %213, %214 : vector<8x1xf32>
    %216 = vector.broadcast %208 : vector<8x1xf32> to vector<8x32xf32>
    %217 = arith.subf %204, %216 : vector<8x32xf32>
    %cst_131 = arith.constant 1.000000e-07 : f32
    %218 = vector.broadcast %cst_131 : f32 to vector<8x1xf32>
    %219 = arith.addf %215, %218 : vector<8x1xf32>
    %220 = math.rsqrt %219 : vector<8x1xf32>
    %221 = vector.broadcast %220 : vector<8x1xf32> to vector<8x32xf32>
    %222 = arith.mulf %217, %221 : vector<8x32xf32>
    %223 = vector.broadcast %154 : vector<1x32xf32> to vector<8x32xf32>
    %224 = arith.mulf %222, %223 : vector<8x32xf32>
    %225 = vector.broadcast %155 : vector<1x32xf32> to vector<8x32xf32>
    %226 = arith.addf %224, %225 : vector<8x32xf32>
    %c1_132 = arith.constant 1 : index
    %c0_133 = arith.constant 0 : index
    %c0_134 = arith.constant 0 : index
    %227 = vector.load %arg10[%c1_132, %c0_133, %c0_134] : memref<4x32x64xf32, #tpu.memory_space<vmem>>, vector<1x32x64xf32>
    %228 = vector.shape_cast %227 : vector<1x32x64xf32> to vector<32x64xf32>
    %cst_135 = arith.constant dense<0.000000e+00> : vector<8x64xf32>
    %229 = tpu.matmul %226, %228, %cst_135 {dimension_numbers = #tpu.dot_dimension_numbers<[1], [0], [0], [1], [0, 0, 1, 1], [], []>} : vector<8x32xf32>, vector<32x64xf32>, vector<8x64xf32> -> vector<8x64xf32>
    %c1_136 = arith.constant 1 : index
    %c0_137 = arith.constant 0 : index
    %c0_138 = arith.constant 0 : index
    %230 = vector.load %arg7[%c1_136, %c0_137, %c0_138] : memref<4x1x64xf32, #tpu.memory_space<vmem>>, vector<1x1x64xf32>
    %231 = vector.shape_cast %230 : vector<1x1x64xf32> to vector<1x64xf32>
    %232 = vector.broadcast %231 : vector<1x64xf32> to vector<8x64xf32>
    %233 = arith.addf %229, %232 : vector<8x64xf32>
    %234 = arith.mulf %233, %233 : vector<8x64xf32>
    %235 = arith.mulf %233, %234 : vector<8x64xf32>
    %cst_139 = arith.constant 4.471500e-02 : f32
    %236 = vector.broadcast %cst_139 : f32 to vector<8x64xf32>
    %237 = arith.mulf %236, %235 : vector<8x64xf32>
    %238 = arith.addf %233, %237 : vector<8x64xf32>
    %cst_140 = arith.constant 0.797884583 : f32
    %239 = vector.broadcast %cst_140 : f32 to vector<8x64xf32>
    %240 = arith.mulf %239, %238 : vector<8x64xf32>
    %241 = math.tanh %240 : vector<8x64xf32>
    %cst_141 = arith.constant 1.000000e+00 : f32
    %242 = vector.broadcast %cst_141 : f32 to vector<8x64xf32>
    %243 = arith.addf %242, %241 : vector<8x64xf32>
    %cst_142 = arith.constant 5.000000e-01 : f32
    %244 = vector.broadcast %cst_142 : f32 to vector<8x64xf32>
    %245 = arith.mulf %244, %243 : vector<8x64xf32>
    %246 = arith.mulf %233, %245 : vector<8x64xf32>
    %c1_143 = arith.constant 1 : index
    %c0_144 = arith.constant 0 : index
    %c0_145 = arith.constant 0 : index
    %247 = vector.load %arg11[%c1_143, %c0_144, %c0_145] : memref<4x64x32xf32, #tpu.memory_space<vmem>>, vector<1x64x32xf32>
    %248 = vector.shape_cast %247 : vector<1x64x32xf32> to vector<64x32xf32>
    %cst_146 = arith.constant dense<0.000000e+00> : vector<8x32xf32>
    %249 = tpu.matmul %246, %248, %cst_146 {dimension_numbers = #tpu.dot_dimension_numbers<[1], [0], [0], [1], [0, 0, 1, 1], [], []>} : vector<8x64xf32>, vector<64x32xf32>, vector<8x32xf32> -> vector<8x32xf32>
    %250 = vector.broadcast %156 : vector<1x32xf32> to vector<8x32xf32>
    %251 = arith.addf %249, %250 : vector<8x32xf32>
    %252 = arith.addf %226, %251 : vector<8x32xf32>
    %cst_147 = arith.constant dense<0.000000e+00> : vector<8xf32>
    %253 = vector.multi_reduction <add>, %252, %cst_147 [1] : vector<8x32xf32> to vector<8xf32>
    %254 = vector.shape_cast %253 : vector<8xf32> to vector<8x1xf32>
    %cst_148 = arith.constant 3.200000e+01 : f32
    %255 = vector.broadcast %cst_148 : f32 to vector<8x1xf32>
    %256 = arith.divf %254, %255 : vector<8x1xf32>
    %257 = vector.broadcast %256 : vector<8x1xf32> to vector<8x32xf32>
    %258 = arith.subf %252, %257 : vector<8x32xf32>
    %259 = arith.mulf %258, %258 : vector<8x32xf32>
    %cst_149 = arith.constant dense<0.000000e+00> : vector<8xf32>
    %260 = vector.multi_reduction <add>, %259, %cst_149 [1] : vector<8x32xf32> to vector<8xf32>
    %261 = vector.shape_cast %260 : vector<8xf32> to vector<8x1xf32>
    %cst_150 = arith.constant 3.200000e+01 : f32
    %262 = vector.broadcast %cst_150 : f32 to vector<8x1xf32>
    %263 = arith.divf %261, %262 : vector<8x1xf32>
    %264 = vector.broadcast %256 : vector<8x1xf32> to vector<8x32xf32>
    %265 = arith.subf %252, %264 : vector<8x32xf32>
    %cst_151 = arith.constant 1.000000e-07 : f32
    %266 = vector.broadcast %cst_151 : f32 to vector<8x1xf32>
    %267 = arith.addf %263, %266 : vector<8x1xf32>
    %268 = math.rsqrt %267 : vector<8x1xf32>
    %269 = vector.broadcast %268 : vector<8x1xf32> to vector<8x32xf32>
    %270 = arith.mulf %265, %269 : vector<8x32xf32>
    %271 = vector.broadcast %157 : vector<1x32xf32> to vector<8x32xf32>
    %272 = arith.mulf %270, %271 : vector<8x32xf32>
    %273 = vector.broadcast %158 : vector<1x32xf32> to vector<8x32xf32>
    %274 = arith.addf %272, %273 : vector<8x32xf32>
    %c0_152 = arith.constant 0 : index
    %275 = memref.load %arg4[%c0_152] : memref<3xf32, #tpu.memory_space<smem>>
    %276 = vector.broadcast %275 : f32 to vector<8x32xf32>
    %277 = arith.mulf %276, %274 : vector<8x32xf32>
    %278 = arith.addf %30, %277 : vector<8x32xf32>
    %c14 = arith.constant 14 : index
    %c0_153 = arith.constant 0 : index
    %279 = vector.load %arg5[%c14, %c0_153] : memref<26x32xf32, #tpu.memory_space<vmem>>, vector<1x32xf32>
    %c15 = arith.constant 15 : index
    %c0_154 = arith.constant 0 : index
    %280 = vector.load %arg5[%c15, %c0_154] : memref<26x32xf32, #tpu.memory_space<vmem>>, vector<1x32xf32>
    %c16 = arith.constant 16 : index
    %c0_155 = arith.constant 0 : index
    %281 = vector.load %arg5[%c16, %c0_155] : memref<26x32xf32, #tpu.memory_space<vmem>>, vector<1x32xf32>
    %c17 = arith.constant 17 : index
    %c0_156 = arith.constant 0 : index
    %282 = vector.load %arg5[%c17, %c0_156] : memref<26x32xf32, #tpu.memory_space<vmem>>, vector<1x32xf32>
    %c18 = arith.constant 18 : index
    %c0_157 = arith.constant 0 : index
    %283 = vector.load %arg5[%c18, %c0_157] : memref<26x32xf32, #tpu.memory_space<vmem>>, vector<1x32xf32>
    %c19 = arith.constant 19 : index
    %c0_158 = arith.constant 0 : index
    %284 = vector.load %arg5[%c19, %c0_158] : memref<26x32xf32, #tpu.memory_space<vmem>>, vector<1x32xf32>
    %285 = vector.shape_cast %274 : vector<8x32xf32> to vector<1x8x32xf32>
    %286 = vector.broadcast %285 : vector<1x8x32xf32> to vector<4x8x32xf32>
    %c6_159 = arith.constant 6 : index
    %c0_160 = arith.constant 0 : index
    %c0_161 = arith.constant 0 : index
    %c0_162 = arith.constant 0 : index
    %287 = vector.load %arg8[%c6_159, %c0_160, %c0_161, %c0_162] : memref<12x4x32x8xf32, #tpu.memory_space<vmem>>, vector<1x4x32x8xf32>
    %288 = vector.shape_cast %287 : vector<1x4x32x8xf32> to vector<4x32x8xf32>
    "tpu.trace_start"() <{level = 10 : i32, message = "hld,hde->hle"}> : () -> ()
    %cst_163 = arith.constant dense<0.000000e+00> : vector<4x8x8xf32>
    %289 = tpu.matmul %286, %288, %cst_163 {dimension_numbers = #tpu.dot_dimension_numbers<[2], [1], [1], [2], [0, 0, 0, 1, 1, 2], [0], [0]>} : vector<4x8x32xf32>, vector<4x32x8xf32>, vector<4x8x8xf32> -> vector<4x8x8xf32>
    "tpu.trace_stop"() : () -> ()
    %c6_164 = arith.constant 6 : index
    %c0_165 = arith.constant 0 : index
    %c0_166 = arith.constant 0 : index
    %c0_167 = arith.constant 0 : index
    %290 = vector.load %arg6[%c6_164, %c0_165, %c0_166, %c0_167] : memref<12x4x1x8xf32, #tpu.memory_space<vmem>>, vector<1x4x1x8xf32>
    %291 = vector.shape_cast %290 : vector<1x4x1x8xf32> to vector<4x1x8xf32>
    %292 = vector.broadcast %291 : vector<4x1x8xf32> to vector<4x8x8xf32>
    %293 = arith.addf %289, %292 : vector<4x8x8xf32>
    %c7_168 = arith.constant 7 : index
    %c0_169 = arith.constant 0 : index
    %c0_170 = arith.constant 0 : index
    %c0_171 = arith.constant 0 : index
    %294 = vector.load %arg8[%c7_168, %c0_169, %c0_170, %c0_171] : memref<12x4x32x8xf32, #tpu.memory_space<vmem>>, vector<1x4x32x8xf32>
    %295 = vector.shape_cast %294 : vector<1x4x32x8xf32> to vector<4x32x8xf32>
    "tpu.trace_start"() <{level = 10 : i32, message = "hld,hde->hle"}> : () -> ()
    %cst_172 = arith.constant dense<0.000000e+00> : vector<4x8x8xf32>
    %296 = tpu.matmul %286, %295, %cst_172 {dimension_numbers = #tpu.dot_dimension_numbers<[2], [1], [1], [2], [0, 0, 0, 1, 1, 2], [0], [0]>} : vector<4x8x32xf32>, vector<4x32x8xf32>, vector<4x8x8xf32> -> vector<4x8x8xf32>
    "tpu.trace_stop"() : () -> ()
    %c7_173 = arith.constant 7 : index
    %c0_174 = arith.constant 0 : index
    %c0_175 = arith.constant 0 : index
    %c0_176 = arith.constant 0 : index
    %297 = vector.load %arg6[%c7_173, %c0_174, %c0_175, %c0_176] : memref<12x4x1x8xf32, #tpu.memory_space<vmem>>, vector<1x4x1x8xf32>
    %298 = vector.shape_cast %297 : vector<1x4x1x8xf32> to vector<4x1x8xf32>
    %299 = vector.broadcast %298 : vector<4x1x8xf32> to vector<4x8x8xf32>
    %300 = arith.addf %296, %299 : vector<4x8x8xf32>
    %c8_177 = arith.constant 8 : index
    %c0_178 = arith.constant 0 : index
    %c0_179 = arith.constant 0 : index
    %c0_180 = arith.constant 0 : index
    %301 = vector.load %arg8[%c8_177, %c0_178, %c0_179, %c0_180] : memref<12x4x32x8xf32, #tpu.memory_space<vmem>>, vector<1x4x32x8xf32>
    %302 = vector.shape_cast %301 : vector<1x4x32x8xf32> to vector<4x32x8xf32>
    "tpu.trace_start"() <{level = 10 : i32, message = "hld,hde->hle"}> : () -> ()
    %cst_181 = arith.constant dense<0.000000e+00> : vector<4x8x8xf32>
    %303 = tpu.matmul %286, %302, %cst_181 {dimension_numbers = #tpu.dot_dimension_numbers<[2], [1], [1], [2], [0, 0, 0, 1, 1, 2], [0], [0]>} : vector<4x8x32xf32>, vector<4x32x8xf32>, vector<4x8x8xf32> -> vector<4x8x8xf32>
    "tpu.trace_stop"() : () -> ()
    %c8_182 = arith.constant 8 : index
    %c0_183 = arith.constant 0 : index
    %c0_184 = arith.constant 0 : index
    %c0_185 = arith.constant 0 : index
    %304 = vector.load %arg6[%c8_182, %c0_183, %c0_184, %c0_185] : memref<12x4x1x8xf32, #tpu.memory_space<vmem>>, vector<1x4x1x8xf32>
    %305 = vector.shape_cast %304 : vector<1x4x1x8xf32> to vector<4x1x8xf32>
    %306 = vector.broadcast %305 : vector<4x1x8xf32> to vector<4x8x8xf32>
    %307 = arith.addf %303, %306 : vector<4x8x8xf32>
    "tpu.trace_start"() <{level = 10 : i32, message = "hqd,hkd->hqk"}> : () -> ()
    %cst_186 = arith.constant dense<0.000000e+00> : vector<4x8x8xf32>
    %308 = tpu.matmul %293, %300, %cst_186 {dimension_numbers = #tpu.dot_dimension_numbers<[2], [2], [1], [1], [0, 0, 0, 1, 1, 1], [0], [0]>} : vector<4x8x8xf32>, vector<4x8x8xf32>, vector<4x8x8xf32> -> vector<4x8x8xf32>
    "tpu.trace_stop"() : () -> ()
    %cst_187 = arith.constant 0.353553385 : f32
    %309 = vector.broadcast %cst_187 : f32 to vector<4x8x8xf32>
    %310 = arith.mulf %308, %309 : vector<4x8x8xf32>
    %311 = vector.broadcast %29 : vector<1x1x8xf32> to vector<4x8x8xf32>
    %312 = arith.addf %310, %311 : vector<4x8x8xf32>
    %cst_188 = arith.constant dense<0xFF800000> : vector<4x8xf32>
    %313 = vector.multi_reduction <maximumf>, %312, %cst_188 [2] : vector<4x8x8xf32> to vector<4x8xf32>
    %314 = vector.shape_cast %313 : vector<4x8xf32> to vector<4x8x1xf32>
    %315 = vector.broadcast %314 : vector<4x8x1xf32> to vector<4x8x8xf32>
    %316 = arith.subf %312, %315 : vector<4x8x8xf32>
    %317 = math.exp %316 : vector<4x8x8xf32>
    %cst_189 = arith.constant dense<0.000000e+00> : vector<4x8xf32>
    %318 = vector.multi_reduction <add>, %317, %cst_189 [2] : vector<4x8x8xf32> to vector<4x8xf32>
    %319 = vector.shape_cast %318 : vector<4x8xf32> to vector<4x8x1xf32>
    %320 = tpu.reciprocal %319 {approx = true} : vector<4x8x1xf32> -> vector<4x8x1xf32>
    %321 = vector.broadcast %320 : vector<4x8x1xf32> to vector<4x8x8xf32>
    %322 = arith.mulf %317, %321 : vector<4x8x8xf32>
    "tpu.trace_start"() <{level = 10 : i32, message = "hqk,hkd->hqd"}> : () -> ()
    %cst_190 = arith.constant dense<0.000000e+00> : vector<4x8x8xf32>
    %323 = tpu.matmul %322, %307, %cst_190 {dimension_numbers = #tpu.dot_dimension_numbers<[2], [1], [1], [2], [0, 0, 0, 1, 1, 2], [0], [0]>} : vector<4x8x8xf32>, vector<4x8x8xf32>, vector<4x8x8xf32> -> vector<4x8x8xf32>
    "tpu.trace_stop"() : () -> ()
    %c2_191 = arith.constant 2 : index
    %c0_192 = arith.constant 0 : index
    %c0_193 = arith.constant 0 : index
    %c0_194 = arith.constant 0 : index
    %324 = vector.load %arg9[%c2_191, %c0_192, %c0_193, %c0_194] : memref<4x4x8x32xf32, #tpu.memory_space<vmem>>, vector<1x4x8x32xf32>
    %325 = vector.shape_cast %324 : vector<1x4x8x32xf32> to vector<4x8x32xf32>
    "tpu.trace_start"() <{level = 10 : i32, message = "hqd,hde->hqe"}> : () -> ()
    %cst_195 = arith.constant dense<0.000000e+00> : vector<4x8x32xf32>
    %326 = tpu.matmul %323, %325, %cst_195 {dimension_numbers = #tpu.dot_dimension_numbers<[2], [1], [1], [2], [0, 0, 0, 1, 1, 2], [0], [0]>} : vector<4x8x8xf32>, vector<4x8x32xf32>, vector<4x8x32xf32> -> vector<4x8x32xf32>
    "tpu.trace_stop"() : () -> ()
    %cst_196 = arith.constant dense<0.000000e+00> : vector<8x32xf32>
    %327 = vector.multi_reduction <add>, %326, %cst_196 [0] : vector<4x8x32xf32> to vector<8x32xf32>
    %328 = vector.broadcast %279 : vector<1x32xf32> to vector<8x32xf32>
    %329 = arith.addf %327, %328 : vector<8x32xf32>
    %330 = arith.addf %274, %329 : vector<8x32xf32>
    %cst_197 = arith.constant dense<0.000000e+00> : vector<8xf32>
    %331 = vector.multi_reduction <add>, %330, %cst_197 [1] : vector<8x32xf32> to vector<8xf32>
    %332 = vector.shape_cast %331 : vector<8xf32> to vector<8x1xf32>
    %cst_198 = arith.constant 3.200000e+01 : f32
    %333 = vector.broadcast %cst_198 : f32 to vector<8x1xf32>
    %334 = arith.divf %332, %333 : vector<8x1xf32>
    %335 = vector.broadcast %334 : vector<8x1xf32> to vector<8x32xf32>
    %336 = arith.subf %330, %335 : vector<8x32xf32>
    %337 = arith.mulf %336, %336 : vector<8x32xf32>
    %cst_199 = arith.constant dense<0.000000e+00> : vector<8xf32>
    %338 = vector.multi_reduction <add>, %337, %cst_199 [1] : vector<8x32xf32> to vector<8xf32>
    %339 = vector.shape_cast %338 : vector<8xf32> to vector<8x1xf32>
    %cst_200 = arith.constant 3.200000e+01 : f32
    %340 = vector.broadcast %cst_200 : f32 to vector<8x1xf32>
    %341 = arith.divf %339, %340 : vector<8x1xf32>
    %342 = vector.broadcast %334 : vector<8x1xf32> to vector<8x32xf32>
    %343 = arith.subf %330, %342 : vector<8x32xf32>
    %cst_201 = arith.constant 1.000000e-07 : f32
    %344 = vector.broadcast %cst_201 : f32 to vector<8x1xf32>
    %345 = arith.addf %341, %344 : vector<8x1xf32>
    %346 = math.rsqrt %345 : vector<8x1xf32>
    %347 = vector.broadcast %346 : vector<8x1xf32> to vector<8x32xf32>
    %348 = arith.mulf %343, %347 : vector<8x32xf32>
    %349 = vector.broadcast %280 : vector<1x32xf32> to vector<8x32xf32>
    %350 = arith.mulf %348, %349 : vector<8x32xf32>
    %351 = vector.broadcast %281 : vector<1x32xf32> to vector<8x32xf32>
    %352 = arith.addf %350, %351 : vector<8x32xf32>
    %c2_202 = arith.constant 2 : index
    %c0_203 = arith.constant 0 : index
    %c0_204 = arith.constant 0 : index
    %353 = vector.load %arg10[%c2_202, %c0_203, %c0_204] : memref<4x32x64xf32, #tpu.memory_space<vmem>>, vector<1x32x64xf32>
    %354 = vector.shape_cast %353 : vector<1x32x64xf32> to vector<32x64xf32>
    %cst_205 = arith.constant dense<0.000000e+00> : vector<8x64xf32>
    %355 = tpu.matmul %352, %354, %cst_205 {dimension_numbers = #tpu.dot_dimension_numbers<[1], [0], [0], [1], [0, 0, 1, 1], [], []>} : vector<8x32xf32>, vector<32x64xf32>, vector<8x64xf32> -> vector<8x64xf32>
    %c2_206 = arith.constant 2 : index
    %c0_207 = arith.constant 0 : index
    %c0_208 = arith.constant 0 : index
    %356 = vector.load %arg7[%c2_206, %c0_207, %c0_208] : memref<4x1x64xf32, #tpu.memory_space<vmem>>, vector<1x1x64xf32>
    %357 = vector.shape_cast %356 : vector<1x1x64xf32> to vector<1x64xf32>
    %358 = vector.broadcast %357 : vector<1x64xf32> to vector<8x64xf32>
    %359 = arith.addf %355, %358 : vector<8x64xf32>
    %360 = arith.mulf %359, %359 : vector<8x64xf32>
    %361 = arith.mulf %359, %360 : vector<8x64xf32>
    %cst_209 = arith.constant 4.471500e-02 : f32
    %362 = vector.broadcast %cst_209 : f32 to vector<8x64xf32>
    %363 = arith.mulf %362, %361 : vector<8x64xf32>
    %364 = arith.addf %359, %363 : vector<8x64xf32>
    %cst_210 = arith.constant 0.797884583 : f32
    %365 = vector.broadcast %cst_210 : f32 to vector<8x64xf32>
    %366 = arith.mulf %365, %364 : vector<8x64xf32>
    %367 = math.tanh %366 : vector<8x64xf32>
    %cst_211 = arith.constant 1.000000e+00 : f32
    %368 = vector.broadcast %cst_211 : f32 to vector<8x64xf32>
    %369 = arith.addf %368, %367 : vector<8x64xf32>
    %cst_212 = arith.constant 5.000000e-01 : f32
    %370 = vector.broadcast %cst_212 : f32 to vector<8x64xf32>
    %371 = arith.mulf %370, %369 : vector<8x64xf32>
    %372 = arith.mulf %359, %371 : vector<8x64xf32>
    %c2_213 = arith.constant 2 : index
    %c0_214 = arith.constant 0 : index
    %c0_215 = arith.constant 0 : index
    %373 = vector.load %arg11[%c2_213, %c0_214, %c0_215] : memref<4x64x32xf32, #tpu.memory_space<vmem>>, vector<1x64x32xf32>
    %374 = vector.shape_cast %373 : vector<1x64x32xf32> to vector<64x32xf32>
    %cst_216 = arith.constant dense<0.000000e+00> : vector<8x32xf32>
    %375 = tpu.matmul %372, %374, %cst_216 {dimension_numbers = #tpu.dot_dimension_numbers<[1], [0], [0], [1], [0, 0, 1, 1], [], []>} : vector<8x64xf32>, vector<64x32xf32>, vector<8x32xf32> -> vector<8x32xf32>
    %376 = vector.broadcast %282 : vector<1x32xf32> to vector<8x32xf32>
    %377 = arith.addf %375, %376 : vector<8x32xf32>
    %378 = arith.addf %352, %377 : vector<8x32xf32>
    %cst_217 = arith.constant dense<0.000000e+00> : vector<8xf32>
    %379 = vector.multi_reduction <add>, %378, %cst_217 [1] : vector<8x32xf32> to vector<8xf32>
    %380 = vector.shape_cast %379 : vector<8xf32> to vector<8x1xf32>
    %cst_218 = arith.constant 3.200000e+01 : f32
    %381 = vector.broadcast %cst_218 : f32 to vector<8x1xf32>
    %382 = arith.divf %380, %381 : vector<8x1xf32>
    %383 = vector.broadcast %382 : vector<8x1xf32> to vector<8x32xf32>
    %384 = arith.subf %378, %383 : vector<8x32xf32>
    %385 = arith.mulf %384, %384 : vector<8x32xf32>
    %cst_219 = arith.constant dense<0.000000e+00> : vector<8xf32>
    %386 = vector.multi_reduction <add>, %385, %cst_219 [1] : vector<8x32xf32> to vector<8xf32>
    %387 = vector.shape_cast %386 : vector<8xf32> to vector<8x1xf32>
    %cst_220 = arith.constant 3.200000e+01 : f32
    %388 = vector.broadcast %cst_220 : f32 to vector<8x1xf32>
    %389 = arith.divf %387, %388 : vector<8x1xf32>
    %390 = vector.broadcast %382 : vector<8x1xf32> to vector<8x32xf32>
    %391 = arith.subf %378, %390 : vector<8x32xf32>
    %cst_221 = arith.constant 1.000000e-07 : f32
    %392 = vector.broadcast %cst_221 : f32 to vector<8x1xf32>
    %393 = arith.addf %389, %392 : vector<8x1xf32>
    %394 = math.rsqrt %393 : vector<8x1xf32>
    %395 = vector.broadcast %394 : vector<8x1xf32> to vector<8x32xf32>
    %396 = arith.mulf %391, %395 : vector<8x32xf32>
    %397 = vector.broadcast %283 : vector<1x32xf32> to vector<8x32xf32>
    %398 = arith.mulf %396, %397 : vector<8x32xf32>
    %399 = vector.broadcast %284 : vector<1x32xf32> to vector<8x32xf32>
    %400 = arith.addf %398, %399 : vector<8x32xf32>
    %c1_222 = arith.constant 1 : index
    %401 = memref.load %arg4[%c1_222] : memref<3xf32, #tpu.memory_space<smem>>
    %402 = vector.broadcast %401 : f32 to vector<8x32xf32>
    %403 = arith.mulf %402, %400 : vector<8x32xf32>
    %404 = arith.addf %278, %403 : vector<8x32xf32>
    %c20 = arith.constant 20 : index
    %c0_223 = arith.constant 0 : index
    %405 = vector.load %arg5[%c20, %c0_223] : memref<26x32xf32, #tpu.memory_space<vmem>>, vector<1x32xf32>
    %c21 = arith.constant 21 : index
    %c0_224 = arith.constant 0 : index
    %406 = vector.load %arg5[%c21, %c0_224] : memref<26x32xf32, #tpu.memory_space<vmem>>, vector<1x32xf32>
    %c22 = arith.constant 22 : index
    %c0_225 = arith.constant 0 : index
    %407 = vector.load %arg5[%c22, %c0_225] : memref<26x32xf32, #tpu.memory_space<vmem>>, vector<1x32xf32>
    %c23 = arith.constant 23 : index
    %c0_226 = arith.constant 0 : index
    %408 = vector.load %arg5[%c23, %c0_226] : memref<26x32xf32, #tpu.memory_space<vmem>>, vector<1x32xf32>
    %c24 = arith.constant 24 : index
    %c0_227 = arith.constant 0 : index
    %409 = vector.load %arg5[%c24, %c0_227] : memref<26x32xf32, #tpu.memory_space<vmem>>, vector<1x32xf32>
    %c25 = arith.constant 25 : index
    %c0_228 = arith.constant 0 : index
    %410 = vector.load %arg5[%c25, %c0_228] : memref<26x32xf32, #tpu.memory_space<vmem>>, vector<1x32xf32>
    %411 = vector.shape_cast %400 : vector<8x32xf32> to vector<1x8x32xf32>
    %412 = vector.broadcast %411 : vector<1x8x32xf32> to vector<4x8x32xf32>
    %c9_229 = arith.constant 9 : index
    %c0_230 = arith.constant 0 : index
    %c0_231 = arith.constant 0 : index
    %c0_232 = arith.constant 0 : index
    %413 = vector.load %arg8[%c9_229, %c0_230, %c0_231, %c0_232] : memref<12x4x32x8xf32, #tpu.memory_space<vmem>>, vector<1x4x32x8xf32>
    %414 = vector.shape_cast %413 : vector<1x4x32x8xf32> to vector<4x32x8xf32>
    "tpu.trace_start"() <{level = 10 : i32, message = "hld,hde->hle"}> : () -> ()
    %cst_233 = arith.constant dense<0.000000e+00> : vector<4x8x8xf32>
    %415 = tpu.matmul %412, %414, %cst_233 {dimension_numbers = #tpu.dot_dimension_numbers<[2], [1], [1], [2], [0, 0, 0, 1, 1, 2], [0], [0]>} : vector<4x8x32xf32>, vector<4x32x8xf32>, vector<4x8x8xf32> -> vector<4x8x8xf32>
    "tpu.trace_stop"() : () -> ()
    %c9_234 = arith.constant 9 : index
    %c0_235 = arith.constant 0 : index
    %c0_236 = arith.constant 0 : index
    %c0_237 = arith.constant 0 : index
    %416 = vector.load %arg6[%c9_234, %c0_235, %c0_236, %c0_237] : memref<12x4x1x8xf32, #tpu.memory_space<vmem>>, vector<1x4x1x8xf32>
    %417 = vector.shape_cast %416 : vector<1x4x1x8xf32> to vector<4x1x8xf32>
    %418 = vector.broadcast %417 : vector<4x1x8xf32> to vector<4x8x8xf32>
    %419 = arith.addf %415, %418 : vector<4x8x8xf32>
    %c10_238 = arith.constant 10 : index
    %c0_239 = arith.constant 0 : index
    %c0_240 = arith.constant 0 : index
    %c0_241 = arith.constant 0 : index
    %420 = vector.load %arg8[%c10_238, %c0_239, %c0_240, %c0_241] : memref<12x4x32x8xf32, #tpu.memory_space<vmem>>, vector<1x4x32x8xf32>
    %421 = vector.shape_cast %420 : vector<1x4x32x8xf32> to vector<4x32x8xf32>
    "tpu.trace_start"() <{level = 10 : i32, message = "hld,hde->hle"}> : () -> ()
    %cst_242 = arith.constant dense<0.000000e+00> : vector<4x8x8xf32>
    %422 = tpu.matmul %412, %421, %cst_242 {dimension_numbers = #tpu.dot_dimension_numbers<[2], [1], [1], [2], [0, 0, 0, 1, 1, 2], [0], [0]>} : vector<4x8x32xf32>, vector<4x32x8xf32>, vector<4x8x8xf32> -> vector<4x8x8xf32>
    "tpu.trace_stop"() : () -> ()
    %c10_243 = arith.constant 10 : index
    %c0_244 = arith.constant 0 : index
    %c0_245 = arith.constant 0 : index
    %c0_246 = arith.constant 0 : index
    %423 = vector.load %arg6[%c10_243, %c0_244, %c0_245, %c0_246] : memref<12x4x1x8xf32, #tpu.memory_space<vmem>>, vector<1x4x1x8xf32>
    %424 = vector.shape_cast %423 : vector<1x4x1x8xf32> to vector<4x1x8xf32>
    %425 = vector.broadcast %424 : vector<4x1x8xf32> to vector<4x8x8xf32>
    %426 = arith.addf %422, %425 : vector<4x8x8xf32>
    %c11_247 = arith.constant 11 : index
    %c0_248 = arith.constant 0 : index
    %c0_249 = arith.constant 0 : index
    %c0_250 = arith.constant 0 : index
    %427 = vector.load %arg8[%c11_247, %c0_248, %c0_249, %c0_250] : memref<12x4x32x8xf32, #tpu.memory_space<vmem>>, vector<1x4x32x8xf32>
    %428 = vector.shape_cast %427 : vector<1x4x32x8xf32> to vector<4x32x8xf32>
    "tpu.trace_start"() <{level = 10 : i32, message = "hld,hde->hle"}> : () -> ()
    %cst_251 = arith.constant dense<0.000000e+00> : vector<4x8x8xf32>
    %429 = tpu.matmul %412, %428, %cst_251 {dimension_numbers = #tpu.dot_dimension_numbers<[2], [1], [1], [2], [0, 0, 0, 1, 1, 2], [0], [0]>} : vector<4x8x32xf32>, vector<4x32x8xf32>, vector<4x8x8xf32> -> vector<4x8x8xf32>
    "tpu.trace_stop"() : () -> ()
    %c11_252 = arith.constant 11 : index
    %c0_253 = arith.constant 0 : index
    %c0_254 = arith.constant 0 : index
    %c0_255 = arith.constant 0 : index
    %430 = vector.load %arg6[%c11_252, %c0_253, %c0_254, %c0_255] : memref<12x4x1x8xf32, #tpu.memory_space<vmem>>, vector<1x4x1x8xf32>
    %431 = vector.shape_cast %430 : vector<1x4x1x8xf32> to vector<4x1x8xf32>
    %432 = vector.broadcast %431 : vector<4x1x8xf32> to vector<4x8x8xf32>
    %433 = arith.addf %429, %432 : vector<4x8x8xf32>
    "tpu.trace_start"() <{level = 10 : i32, message = "hqd,hkd->hqk"}> : () -> ()
    %cst_256 = arith.constant dense<0.000000e+00> : vector<4x8x8xf32>
    %434 = tpu.matmul %419, %426, %cst_256 {dimension_numbers = #tpu.dot_dimension_numbers<[2], [2], [1], [1], [0, 0, 0, 1, 1, 1], [0], [0]>} : vector<4x8x8xf32>, vector<4x8x8xf32>, vector<4x8x8xf32> -> vector<4x8x8xf32>
    "tpu.trace_stop"() : () -> ()
    %cst_257 = arith.constant 0.353553385 : f32
    %435 = vector.broadcast %cst_257 : f32 to vector<4x8x8xf32>
    %436 = arith.mulf %434, %435 : vector<4x8x8xf32>
    %437 = vector.broadcast %29 : vector<1x1x8xf32> to vector<4x8x8xf32>
    %438 = arith.addf %436, %437 : vector<4x8x8xf32>
    %cst_258 = arith.constant dense<0xFF800000> : vector<4x8xf32>
    %439 = vector.multi_reduction <maximumf>, %438, %cst_258 [2] : vector<4x8x8xf32> to vector<4x8xf32>
    %440 = vector.shape_cast %439 : vector<4x8xf32> to vector<4x8x1xf32>
    %441 = vector.broadcast %440 : vector<4x8x1xf32> to vector<4x8x8xf32>
    %442 = arith.subf %438, %441 : vector<4x8x8xf32>
    %443 = math.exp %442 : vector<4x8x8xf32>
    %cst_259 = arith.constant dense<0.000000e+00> : vector<4x8xf32>
    %444 = vector.multi_reduction <add>, %443, %cst_259 [2] : vector<4x8x8xf32> to vector<4x8xf32>
    %445 = vector.shape_cast %444 : vector<4x8xf32> to vector<4x8x1xf32>
    %446 = tpu.reciprocal %445 {approx = true} : vector<4x8x1xf32> -> vector<4x8x1xf32>
    %447 = vector.broadcast %446 : vector<4x8x1xf32> to vector<4x8x8xf32>
    %448 = arith.mulf %443, %447 : vector<4x8x8xf32>
    "tpu.trace_start"() <{level = 10 : i32, message = "hqk,hkd->hqd"}> : () -> ()
    %cst_260 = arith.constant dense<0.000000e+00> : vector<4x8x8xf32>
    %449 = tpu.matmul %448, %433, %cst_260 {dimension_numbers = #tpu.dot_dimension_numbers<[2], [1], [1], [2], [0, 0, 0, 1, 1, 2], [0], [0]>} : vector<4x8x8xf32>, vector<4x8x8xf32>, vector<4x8x8xf32> -> vector<4x8x8xf32>
    "tpu.trace_stop"() : () -> ()
    %c3_261 = arith.constant 3 : index
    %c0_262 = arith.constant 0 : index
    %c0_263 = arith.constant 0 : index
    %c0_264 = arith.constant 0 : index
    %450 = vector.load %arg9[%c3_261, %c0_262, %c0_263, %c0_264] : memref<4x4x8x32xf32, #tpu.memory_space<vmem>>, vector<1x4x8x32xf32>
    %451 = vector.shape_cast %450 : vector<1x4x8x32xf32> to vector<4x8x32xf32>
    "tpu.trace_start"() <{level = 10 : i32, message = "hqd,hde->hqe"}> : () -> ()
    %cst_265 = arith.constant dense<0.000000e+00> : vector<4x8x32xf32>
    %452 = tpu.matmul %449, %451, %cst_265 {dimension_numbers = #tpu.dot_dimension_numbers<[2], [1], [1], [2], [0, 0, 0, 1, 1, 2], [0], [0]>} : vector<4x8x8xf32>, vector<4x8x32xf32>, vector<4x8x32xf32> -> vector<4x8x32xf32>
    "tpu.trace_stop"() : () -> ()
    %cst_266 = arith.constant dense<0.000000e+00> : vector<8x32xf32>
    %453 = vector.multi_reduction <add>, %452, %cst_266 [0] : vector<4x8x32xf32> to vector<8x32xf32>
    %454 = vector.broadcast %405 : vector<1x32xf32> to vector<8x32xf32>
    %455 = arith.addf %453, %454 : vector<8x32xf32>
    %456 = arith.addf %400, %455 : vector<8x32xf32>
    %cst_267 = arith.constant dense<0.000000e+00> : vector<8xf32>
    %457 = vector.multi_reduction <add>, %456, %cst_267 [1] : vector<8x32xf32> to vector<8xf32>
    %458 = vector.shape_cast %457 : vector<8xf32> to vector<8x1xf32>
    %cst_268 = arith.constant 3.200000e+01 : f32
    %459 = vector.broadcast %cst_268 : f32 to vector<8x1xf32>
    %460 = arith.divf %458, %459 : vector<8x1xf32>
    %461 = vector.broadcast %460 : vector<8x1xf32> to vector<8x32xf32>
    %462 = arith.subf %456, %461 : vector<8x32xf32>
    %463 = arith.mulf %462, %462 : vector<8x32xf32>
    %cst_269 = arith.constant dense<0.000000e+00> : vector<8xf32>
    %464 = vector.multi_reduction <add>, %463, %cst_269 [1] : vector<8x32xf32> to vector<8xf32>
    %465 = vector.shape_cast %464 : vector<8xf32> to vector<8x1xf32>
    %cst_270 = arith.constant 3.200000e+01 : f32
    %466 = vector.broadcast %cst_270 : f32 to vector<8x1xf32>
    %467 = arith.divf %465, %466 : vector<8x1xf32>
    %468 = vector.broadcast %460 : vector<8x1xf32> to vector<8x32xf32>
    %469 = arith.subf %456, %468 : vector<8x32xf32>
    %cst_271 = arith.constant 1.000000e-07 : f32
    %470 = vector.broadcast %cst_271 : f32 to vector<8x1xf32>
    %471 = arith.addf %467, %470 : vector<8x1xf32>
    %472 = math.rsqrt %471 : vector<8x1xf32>
    %473 = vector.broadcast %472 : vector<8x1xf32> to vector<8x32xf32>
    %474 = arith.mulf %469, %473 : vector<8x32xf32>
    %475 = vector.broadcast %406 : vector<1x32xf32> to vector<8x32xf32>
    %476 = arith.mulf %474, %475 : vector<8x32xf32>
    %477 = vector.broadcast %407 : vector<1x32xf32> to vector<8x32xf32>
    %478 = arith.addf %476, %477 : vector<8x32xf32>
    %c3_272 = arith.constant 3 : index
    %c0_273 = arith.constant 0 : index
    %c0_274 = arith.constant 0 : index
    %479 = vector.load %arg10[%c3_272, %c0_273, %c0_274] : memref<4x32x64xf32, #tpu.memory_space<vmem>>, vector<1x32x64xf32>
    %480 = vector.shape_cast %479 : vector<1x32x64xf32> to vector<32x64xf32>
    %cst_275 = arith.constant dense<0.000000e+00> : vector<8x64xf32>
    %481 = tpu.matmul %478, %480, %cst_275 {dimension_numbers = #tpu.dot_dimension_numbers<[1], [0], [0], [1], [0, 0, 1, 1], [], []>} : vector<8x32xf32>, vector<32x64xf32>, vector<8x64xf32> -> vector<8x64xf32>
    %c3_276 = arith.constant 3 : index
    %c0_277 = arith.constant 0 : index
    %c0_278 = arith.constant 0 : index
    %482 = vector.load %arg7[%c3_276, %c0_277, %c0_278] : memref<4x1x64xf32, #tpu.memory_space<vmem>>, vector<1x1x64xf32>
    %483 = vector.shape_cast %482 : vector<1x1x64xf32> to vector<1x64xf32>
    %484 = vector.broadcast %483 : vector<1x64xf32> to vector<8x64xf32>
    %485 = arith.addf %481, %484 : vector<8x64xf32>
    %486 = arith.mulf %485, %485 : vector<8x64xf32>
    %487 = arith.mulf %485, %486 : vector<8x64xf32>
    %cst_279 = arith.constant 4.471500e-02 : f32
    %488 = vector.broadcast %cst_279 : f32 to vector<8x64xf32>
    %489 = arith.mulf %488, %487 : vector<8x64xf32>
    %490 = arith.addf %485, %489 : vector<8x64xf32>
    %cst_280 = arith.constant 0.797884583 : f32
    %491 = vector.broadcast %cst_280 : f32 to vector<8x64xf32>
    %492 = arith.mulf %491, %490 : vector<8x64xf32>
    %493 = math.tanh %492 : vector<8x64xf32>
    %cst_281 = arith.constant 1.000000e+00 : f32
    %494 = vector.broadcast %cst_281 : f32 to vector<8x64xf32>
    %495 = arith.addf %494, %493 : vector<8x64xf32>
    %cst_282 = arith.constant 5.000000e-01 : f32
    %496 = vector.broadcast %cst_282 : f32 to vector<8x64xf32>
    %497 = arith.mulf %496, %495 : vector<8x64xf32>
    %498 = arith.mulf %485, %497 : vector<8x64xf32>
    %c3_283 = arith.constant 3 : index
    %c0_284 = arith.constant 0 : index
    %c0_285 = arith.constant 0 : index
    %499 = vector.load %arg11[%c3_283, %c0_284, %c0_285] : memref<4x64x32xf32, #tpu.memory_space<vmem>>, vector<1x64x32xf32>
    %500 = vector.shape_cast %499 : vector<1x64x32xf32> to vector<64x32xf32>
    %cst_286 = arith.constant dense<0.000000e+00> : vector<8x32xf32>
    %501 = tpu.matmul %498, %500, %cst_286 {dimension_numbers = #tpu.dot_dimension_numbers<[1], [0], [0], [1], [0, 0, 1, 1], [], []>} : vector<8x64xf32>, vector<64x32xf32>, vector<8x32xf32> -> vector<8x32xf32>
    %502 = vector.broadcast %408 : vector<1x32xf32> to vector<8x32xf32>
    %503 = arith.addf %501, %502 : vector<8x32xf32>
    %504 = arith.addf %478, %503 : vector<8x32xf32>
    %cst_287 = arith.constant dense<0.000000e+00> : vector<8xf32>
    %505 = vector.multi_reduction <add>, %504, %cst_287 [1] : vector<8x32xf32> to vector<8xf32>
    %506 = vector.shape_cast %505 : vector<8xf32> to vector<8x1xf32>
    %cst_288 = arith.constant 3.200000e+01 : f32
    %507 = vector.broadcast %cst_288 : f32 to vector<8x1xf32>
    %508 = arith.divf %506, %507 : vector<8x1xf32>
    %509 = vector.broadcast %508 : vector<8x1xf32> to vector<8x32xf32>
    %510 = arith.subf %504, %509 : vector<8x32xf32>
    %511 = arith.mulf %510, %510 : vector<8x32xf32>
    %cst_289 = arith.constant dense<0.000000e+00> : vector<8xf32>
    %512 = vector.multi_reduction <add>, %511, %cst_289 [1] : vector<8x32xf32> to vector<8xf32>
    %513 = vector.shape_cast %512 : vector<8xf32> to vector<8x1xf32>
    %cst_290 = arith.constant 3.200000e+01 : f32
    %514 = vector.broadcast %cst_290 : f32 to vector<8x1xf32>
    %515 = arith.divf %513, %514 : vector<8x1xf32>
    %516 = vector.broadcast %508 : vector<8x1xf32> to vector<8x32xf32>
    %517 = arith.subf %504, %516 : vector<8x32xf32>
    %cst_291 = arith.constant 1.000000e-07 : f32
    %518 = vector.broadcast %cst_291 : f32 to vector<8x1xf32>
    %519 = arith.addf %515, %518 : vector<8x1xf32>
    %520 = math.rsqrt %519 : vector<8x1xf32>
    %521 = vector.broadcast %520 : vector<8x1xf32> to vector<8x32xf32>
    %522 = arith.mulf %517, %521 : vector<8x32xf32>
    %523 = vector.broadcast %409 : vector<1x32xf32> to vector<8x32xf32>
    %524 = arith.mulf %522, %523 : vector<8x32xf32>
    %525 = vector.broadcast %410 : vector<1x32xf32> to vector<8x32xf32>
    %526 = arith.addf %524, %525 : vector<8x32xf32>
    %c2_292 = arith.constant 2 : index
    %527 = memref.load %arg4[%c2_292] : memref<3xf32, #tpu.memory_space<smem>>
    %528 = vector.broadcast %527 : f32 to vector<8x32xf32>
    %529 = arith.mulf %528, %526 : vector<8x32xf32>
    %530 = arith.addf %404, %529 : vector<8x32xf32>
    %c0_293 = arith.constant 0 : index
    %531 = memref.load %arg4[%c0_293] : memref<3xf32, #tpu.memory_space<smem>>
    %c1_294 = arith.constant 1 : index
    %532 = memref.load %arg4[%c1_294] : memref<3xf32, #tpu.memory_space<smem>>
    %533 = arith.addf %531, %532 : f32
    %c2_295 = arith.constant 2 : index
    %534 = memref.load %arg4[%c2_295] : memref<3xf32, #tpu.memory_space<smem>>
    %535 = arith.addf %533, %534 : f32
    %536 = vector.broadcast %535 : f32 to vector<8x32xf32>
    %537 = arith.divf %530, %536 : vector<8x32xf32>
    %c0_296 = arith.constant 0 : index
    %c0_297 = arith.constant 0 : index
    %538 = vector.load %arg3[%c0_296, %c0_297] : memref<8x1xf32, #tpu.memory_space<vmem>>, vector<8x1xf32>
    %539 = vector.broadcast %538 : vector<8x1xf32> to vector<8x32xf32>
    %540 = arith.mulf %537, %539 : vector<8x32xf32>
    %cst_298 = arith.constant dense<0.000000e+00> : vector<32xf32>
    %541 = vector.multi_reduction <add>, %540, %cst_298 [0] : vector<8x32xf32> to vector<32xf32>
    %542 = vector.shape_cast %541 : vector<32xf32> to vector<1x32xf32>
    %cst_299 = arith.constant dense<0.000000e+00> : vector<1xf32>
    %543 = vector.multi_reduction <add>, %538, %cst_299 [0] : vector<8x1xf32> to vector<1xf32>
    %544 = vector.shape_cast %543 : vector<1xf32> to vector<1x1xf32>
    %cst_300 = arith.constant 9.99999971E-10 : f32
    %545 = vector.broadcast %cst_300 : f32 to vector<1x1xf32>
    %546 = arith.maximumf %544, %545 : vector<1x1xf32>
    %547 = vector.broadcast %546 : vector<1x1xf32> to vector<1x32xf32>
    %548 = arith.divf %542, %547 : vector<1x32xf32>
    %549 = vector.shape_cast %548 : vector<1x32xf32> to vector<1x1x32xf32>
    %c0_301 = arith.constant 0 : index
    %c0_302 = arith.constant 0 : index
    %c0_303 = arith.constant 0 : index
    %550 = vector.load %arg12[%c0_301, %c0_302, %c0_303] : memref<1x1x32xf32, #tpu.memory_space<vmem>>, vector<1x1x32xf32>
    tpu.vector_store %arg12[%c0_301, %c0_302, %c0_303], %549 {strides = array<i32>} : memref<1x1x32xf32, #tpu.memory_space<vmem>>, vector<1x1x32xf32>,
    return
  }
  func.func @transform_0(%arg0: i32) -> (i32, i32) {
    %c0_i32 = arith.constant 0 : i32
    %c0_i32_0 = arith.constant 0 : i32
    return %arg0, %c0_i32 : i32, i32
  }
  func.func @transform_1(%arg0: i32) -> (i32, i32, i32) {
    %c0_i32 = arith.constant 0 : i32
    %c0_i32_0 = arith.constant 0 : i32
    %c0_i32_1 = arith.constant 0 : i32
    return %arg0, %c0_i32, %c0_i32_0 : i32, i32, i32
  }
  func.func @transform_2(%arg0: i32) -> (i32, i32) {
    %c0_i32 = arith.constant 0 : i32
    %c0_i32_0 = arith.constant 0 : i32
    return %arg0, %c0_i32 : i32, i32
  }
  func.func @transform_3(%arg0: i32) -> i32 {
    %c0_i32 = arith.constant 0 : i32
    %c0_i32_0 = arith.constant 0 : i32
    return %c0_i32 : i32
  }
  func.func @transform_4(%arg0: i32) -> (i32, i32) {
    %c0_i32 = arith.constant 0 : i32
    %c0_i32_0 = arith.constant 0 : i32
    %c0_i32_1 = arith.constant 0 : i32
    return %c0_i32, %c0_i32_0 : i32, i32
  }
  func.func @transform_5(%arg0: i32) -> (i32, i32, i32, i32) {
    %c0_i32 = arith.constant 0 : i32
    %c0_i32_0 = arith.constant 0 : i32
    %c0_i32_1 = arith.constant 0 : i32
    %c0_i32_2 = arith.constant 0 : i32
    %c0_i32_3 = arith.constant 0 : i32
    return %c0_i32, %c0_i32_0, %c0_i32_1, %c0_i32_2 : i32, i32, i32, i32
  }
  func.func @transform_6(%arg0: i32) -> (i32, i32, i32) {
    %c0_i32 = arith.constant 0 : i32
    %c0_i32_0 = arith.constant 0 : i32
    %c0_i32_1 = arith.constant 0 : i32
    %c0_i32_2 = arith.constant 0 : i32
    return %c0_i32, %c0_i32_0, %c0_i32_1 : i32, i32, i32
  }
  func.func @transform_7(%arg0: i32) -> (i32, i32, i32, i32) {
    %c0_i32 = arith.constant 0 : i32
    %c0_i32_0 = arith.constant 0 : i32
    %c0_i32_1 = arith.constant 0 : i32
    %c0_i32_2 = arith.constant 0 : i32
    %c0_i32_3 = arith.constant 0 : i32
    return %c0_i32, %c0_i32_0, %c0_i32_1, %c0_i32_2 : i32, i32, i32, i32
  }
  func.func @transform_8(%arg0: i32) -> (i32, i32, i32, i32) {
    %c0_i32 = arith.constant 0 : i32
    %c0_i32_0 = arith.constant 0 : i32
    %c0_i32_1 = arith.constant 0 : i32
    %c0_i32_2 = arith.constant 0 : i32
    %c0_i32_3 = arith.constant 0 : i32
    return %c0_i32, %c0_i32_0, %c0_i32_1, %c0_i32_2 : i32, i32, i32, i32
  }
  func.func @transform_9(%arg0: i32) -> (i32, i32, i32) {
    %c0_i32 = arith.constant 0 : i32
    %c0_i32_0 = arith.constant 0 : i32
    %c0_i32_1 = arith.constant 0 : i32
    %c0_i32_2 = arith.constant 0 : i32
    return %c0_i32, %c0_i32_0, %c0_i32_1 : i32, i32, i32
  }
  func.func @transform_10(%arg0: i32) -> (i32, i32, i32) {
    %c0_i32 = arith.constant 0 : i32
    %c0_i32_0 = arith.constant 0 : i32
    %c0_i32_1 = arith.constant 0 : i32
    %c0_i32_2 = arith.constant 0 : i32
    return %c0_i32, %c0_i32_0, %c0_i32_1 : i32, i32, i32
  }
  func.func @transform_11(%arg0: i32) -> (i32, i32, i32) {
    %c0_i32 = arith.constant 0 : i32
    %c0_i32_0 = arith.constant 0 : i32
    %c0_i32_1 = arith.constant 0 : i32
    return %arg0, %c0_i32, %c0_i32_0 : i32, i32, i32
  }
}

</mosaic_0001>

<llo_original>
// kernel: tpu_custom_call.1
$region0: #{tpu_custom_call.1}
  #allocation0 [shape = 'u32[]', space=smem, size = 0x4, offset = 0x4, fixed_abs, tag = 'smem constant byte address 0x4 - core index']
  #allocation1 [shape = 'u32[144,128]{1,0:T(1,128)}', space=vmem, size = 0x12000, scoped, tag = 'internal scratch']
  %s0 = inlined_call_operand.vmem [shape: f32[16,32], index: 0, kind: input, shape index: {}]
  %s1 = inlined_call_operand.vmem [shape: f32[2,1,8], index: 1, kind: input, shape index: {}]
  %s2 = inlined_call_operand.vmem [shape: f32[16,1], index: 2, kind: input, shape index: {}]
  %s3 = inlined_call_operand.vmem [shape: f32[3], index: 3, kind: input, shape index: {}]
  %s4 = inlined_call_operand.vmem [shape: f32[26,32], index: 4, kind: input, shape index: {}]
  %s5 = inlined_call_operand.vmem [shape: f32[12,4,1,8], index: 5, kind: input, shape index: {}]
  %s6 = inlined_call_operand.vmem [shape: f32[4,1,64], index: 6, kind: input, shape index: {}]
  %s7 = inlined_call_operand.vmem [shape: f32[12,4,32,8], index: 7, kind: input, shape index: {}]
  %s8 = inlined_call_operand.vmem [shape: f32[4,4,8,32], index: 8, kind: input, shape index: {}]
  %s9 = inlined_call_operand.vmem [shape: f32[4,32,64], index: 9, kind: input, shape index: {}]
  %s10 = inlined_call_operand.vmem [shape: f32[4,64,32], index: 10, kind: input, shape index: {}]
  %s11 = inlined_call_operand.hbm [shape: f32[2,1,32], index: 11, kind: output, shape index: {}]
  %s12 = sld [smem:[#allocation0]]
  $region81: #{tpu_custom_call.1} parent=0
    _
  %s14 = ssub.s32 1, %s12
  %s15 = scalar_select 0, %s14, %s12
  $region1: #{tpu_custom_call.1} parent=0
    #allocation2 [shape = 'u8[512]{0}', space=smem, size = 0x200, scoped, tag = 'input window, operand 3, single buffered']
    #allocation3 [shape = 's32[2]{0}', space=sflag, size = 0x8, scoped, tag = 'scoped memory for tpu_custom_call.1']
    #allocation4 [shape = 's32[2]{0}', space=sflag, size = 0x8, scoped, tag = 'scoped memory for tpu_custom_call.1']
    #allocation5 [shape = 'u8[1024]{0}', space=vmem, size = 0x400, scoped, tag = 'output window, operand 0']
    %16 = vsyncpa [#allocation4], 0
    %17 = vsyncpa [#allocation3], 0
    %s18 = scalar_lea.sflag [#allocation3], 1
    %19 = vsyncpa %s18, 0
    loop: start=0, step=1, limit=4
    $region2: #{tpu_custom_call.1} parent=1 // loop_pre_header
      _
    $region3: #{tpu_custom_call.1} parent=1 // loop_header
      %s21 = sphi 0, %s25
      %p22 = scmp.ge.s32.totalorder %s21, 4
      %s31 = sphi 0, %s33
      %s34 = sphi 0, %s31
      %s35 = sphi 0, %s34
      %s51 = sphi 0, %s35
      %s57 = sphi 0, %s59
      %s60 = sphi 0, %s57
      %s61 = sphi 0, %s60
      %s77 = sphi 0, %s61
      %s83 = sphi 0, %s85
      %s86 = sphi 0, %s83
      %s87 = sphi 0, %s86
      %s103 = sphi 0, %s87
      %s107 = sphi 0, %s107
      %s109 = sphi 0, %s107
      %s110 = sphi 0, %s109
      %s124 = sphi 0, %s110
      %s128 = sphi 0, %s128
      %s130 = sphi 0, %s128
      %s131 = sphi 0, %s130
      %s145 = sphi 0, %s131
      %s149 = sphi 0, %s149
      %s151 = sphi 0, %s149
      %s152 = sphi 0, %s151
      %s166 = sphi 0, %s152
      %s170 = sphi 0, %s170
      %s172 = sphi 0, %s170
      %s173 = sphi 0, %s172
      %s187 = sphi 0, %s173
      %s191 = sphi 0, %s191
      %s193 = sphi 0, %s191
      %s194 = sphi 0, %s193
      %s208 = sphi 0, %s194
      %s212 = sphi 0, %s212
      %s214 = sphi 0, %s212
      %s215 = sphi 0, %s214
      %s229 = sphi 0, %s215
      %s233 = sphi 0, %s233
      %s235 = sphi 0, %s233
      %s236 = sphi 0, %s235
      %s250 = sphi 0, %s236
      %s254 = sphi 0, %s254
      %s256 = sphi 0, %s254
      %s257 = sphi 0, %s256
      %s271 = sphi 0, %s257
      %s277 = sphi 0, %s279
      %s280 = sphi 0, %s277
      %s281 = sphi 0, %s280
      %s297 = sphi 0, %s281
    $region4: #{tpu_custom_call.1} parent=1 // loop_header_branch
      %24 = sbr.rel (%p22) target = $region8
    $region5: #{tpu_custom_call.1} parent=1 // loop_body
      %s26 = ssub.s32 %s21, 1
      %s27 = ssub.s32 %s21, 2
      %s28 = sadd.s32 %s21, 1
      %s29 = ssub.s32 %s21, %s28
      %p30 = scmp.eq.s32.totalorder %s29, 0
      %s32 = sadd.s32 %s31, 1
      %s33 = scalar_select %p30, %s31, %s32
      %p36 = pneg %p30
      %p37 = scmp.eq.s32.totalorder %s21, 1
      %p38 = por %p36, %p37
      %p39 = scmp.ne.s32.totalorder %s31, %s34
      %p40 = scmp.eq.s32.totalorder %s21, 0
      %p41 = por %p39, %p40
      %p42 = scmp.ne.s32.totalorder %s31, %s34
      %p43 = scmp.eq.s32.totalorder %s26, 1
      %p44 = por %p42, %p43
      %p45 = scmp.ne.s32.totalorder %s34, %s35
      %p46 = scmp.eq.s32.totalorder %s26, 0
      %p47 = por %p45, %p46
      %p48 = scmp.ne.s32.totalorder %s34, %s35
      %p49 = scmp.eq.s32.totalorder %s27, 1
      %p50 = por %p48, %p49
      %p52 = scmp.ne.s32.totalorder %s35, %s51
      %p53 = scmp.eq.s32.totalorder %s27, 0
      %p54 = por %p52, %p53
      %s55 = ssub.s32 %s21, %s28
      %p56 = scmp.eq.s32.totalorder %s55, 0
      %s58 = sadd.s32 %s57, 1
      %s59 = scalar_select %p56, %s57, %s58
      %p62 = pneg %p56
      %p63 = scmp.eq.s32.totalorder %s21, 1
      %p64 = por %p62, %p63
      %p65 = scmp.ne.s32.totalorder %s57, %s60
      %p66 = scmp.eq.s32.totalorder %s21, 0
      %p67 = por %p65, %p66
      %p68 = scmp.ne.s32.totalorder %s57, %s60
      %p69 = scmp.eq.s32.totalorder %s26, 1
      %p70 = por %p68, %p69
      %p71 = scmp.ne.s32.totalorder %s60, %s61
      %p72 = scmp.eq.s32.totalorder %s26, 0
      %p73 = por %p71, %p72
      %p74 = scmp.ne.s32.totalorder %s60, %s61
      %p75 = scmp.eq.s32.totalorder %s27, 1
      %p76 = por %p74, %p75
      %p78 = scmp.ne.s32.totalorder %s61, %s77
      %p79 = scmp.eq.s32.totalorder %s27, 0
      %p80 = por %p78, %p79
      %s81 = ssub.s32 %s21, %s28
      %p82 = scmp.eq.s32.totalorder %s81, 0
      %s84 = sadd.s32 %s83, 1
      %s85 = scalar_select %p82, %s83, %s84
      %p88 = pneg %p82
      %p89 = scmp.eq.s32.totalorder %s21, 1
      %p90 = por %p88, %p89
      %p91 = scmp.ne.s32.totalorder %s83, %s86
      %p92 = scmp.eq.s32.totalorder %s21, 0
      %p93 = por %p91, %p92
      %p94 = scmp.ne.s32.totalorder %s83, %s86
      %p95 = scmp.eq.s32.totalorder %s26, 1
      %p96 = por %p94, %p95
      %p97 = scmp.ne.s32.totalorder %s86, %s87
      %p98 = scmp.eq.s32.totalorder %s26, 0
      %p99 = por %p97, %p98
      %p100 = scmp.ne.s32.totalorder %s86, %s87
      %p101 = scmp.eq.s32.totalorder %s27, 1
      %p102 = por %p100, %p101
      %p104 = scmp.ne.s32.totalorder %s87, %s103
      %p105 = scmp.eq.s32.totalorder %s27, 0
      %p106 = por %p104, %p105
      %s108 = sadd.s32 %s107, 1
      %p111 = scmp.eq.s32.totalorder %s21, 1
      %p112 = scmp.ne.s32.totalorder %s107, %s109
      %p113 = scmp.eq.s32.totalorder %s21, 0
      %p114 = por %p112, %p113
      %p115 = scmp.ne.s32.totalorder %s107, %s109
      %p116 = scmp.eq.s32.totalorder %s26, 1
      %p117 = por %p115, %p116
      %p118 = scmp.ne.s32.totalorder %s109, %s110
      %p119 = scmp.eq.s32.totalorder %s26, 0
      %p120 = por %p118, %p119
      %p121 = scmp.ne.s32.totalorder %s109, %s110
      %p122 = scmp.eq.s32.totalorder %s27, 1
      %p123 = por %p121, %p122
      %p125 = scmp.ne.s32.totalorder %s110, %s124
      %p126 = scmp.eq.s32.totalorder %s27, 0
      %p127 = por %p125, %p126
      %s129 = sadd.s32 %s128, 1
      %p132 = scmp.eq.s32.totalorder %s21, 1
      %p133 = scmp.ne.s32.totalorder %s128, %s130
      %p134 = scmp.eq.s32.totalorder %s21, 0
      %p135 = por %p133, %p134
      %p136 = scmp.ne.s32.totalorder %s128, %s130
      %p137 = scmp.eq.s32.totalorder %s26, 1
      %p138 = por %p136, %p137
      %p139 = scmp.ne.s32.totalorder %s130, %s131
      %p140 = scmp.eq.s32.totalorder %s26, 0
      %p141 = por %p139, %p140
      %p142 = scmp.ne.s32.totalorder %s130, %s131
      %p143 = scmp.eq.s32.totalorder %s27, 1
      %p144 = por %p142, %p143
      %p146 = scmp.ne.s32.totalorder %s131, %s145
      %p147 = scmp.eq.s32.totalorder %s27, 0
      %p148 = por %p146, %p147
      %s150 = sadd.s32 %s149, 1
      %p153 = scmp.eq.s32.totalorder %s21, 1
      %p154 = scmp.ne.s32.totalorder %s149, %s151
      %p155 = scmp.eq.s32.totalorder %s21, 0
      %p156 = por %p154, %p155
      %p157 = scmp.ne.s32.totalorder %s149, %s151
      %p158 = scmp.eq.s32.totalorder %s26, 1
      %p159 = por %p157, %p158
      %p160 = scmp.ne.s32.totalorder %s151, %s152
      %p161 = scmp.eq.s32.totalorder %s26, 0
      %p162 = por %p160, %p161
      %p163 = scmp.ne.s32.totalorder %s151, %s152
      %p164 = scmp.eq.s32.totalorder %s27, 1
      %p165 = por %p163, %p164
      %p167 = scmp.ne.s32.totalorder %s152, %s166
      %p168 = scmp.eq.s32.totalorder %s27, 0
      %p169 = por %p167, %p168
      %s171 = sadd.s32 %s170, 1
      %p174 = scmp.eq.s32.totalorder %s21, 1
      %p175 = scmp.ne.s32.totalorder %s170, %s172
      %p176 = scmp.eq.s32.totalorder %s21, 0
      %p177 = por %p175, %p176
      %p178 = scmp.ne.s32.totalorder %s170, %s172
      %p179 = scmp.eq.s32.totalorder %s26, 1
      %p180 = por %p178, %p179
      %p181 = scmp.ne.s32.totalorder %s172, %s173
      %p182 = scmp.eq.s32.totalorder %s26, 0
      %p183 = por %p181, %p182
      %p184 = scmp.ne.s32.totalorder %s172, %s173
      %p185 = scmp.eq.s32.totalorder %s27, 1
      %p186 = por %p184, %p185
      %p188 = scmp.ne.s32.totalorder %s173, %s187
      %p189 = scmp.eq.s32.totalorder %s27, 0
      %p190 = por %p188, %p189
      %s192 = sadd.s32 %s191, 1
      %p195 = scmp.eq.s32.totalorder %s21, 1
      %p196 = scmp.ne.s32.totalorder %s191, %s193
      %p197 = scmp.eq.s32.totalorder %s21, 0
      %p198 = por %p196, %p197
      %p199 = scmp.ne.s32.totalorder %s191, %s193
      %p200 = scmp.eq.s32.totalorder %s26, 1
      %p201 = por %p199, %p200
      %p202 = scmp.ne.s32.totalorder %s193, %s194
      %p203 = scmp.eq.s32.totalorder %s26, 0
      %p204 = por %p202, %p203
      %p205 = scmp.ne.s32.totalorder %s193, %s194
      %p206 = scmp.eq.s32.totalorder %s27, 1
      %p207 = por %p205, %p206
      %p209 = scmp.ne.s32.totalorder %s194, %s208
      %p210 = scmp.eq.s32.totalorder %s27, 0
      %p211 = por %p209, %p210
      %s213 = sadd.s32 %s212, 1
      %p216 = scmp.eq.s32.totalorder %s21, 1
      %p217 = scmp.ne.s32.totalorder %s212, %s214
      %p218 = scmp.eq.s32.totalorder %s21, 0
      %p219 = por %p217, %p218
      %p220 = scmp.ne.s32.totalorder %s212, %s214
      %p221 = scmp.eq.s32.totalorder %s26, 1
      %p222 = por %p220, %p221
      %p223 = scmp.ne.s32.totalorder %s214, %s215
      %p224 = scmp.eq.s32.totalorder %s26, 0
      %p225 = por %p223, %p224
      %p226 = scmp.ne.s32.totalorder %s214, %s215
      %p227 = scmp.eq.s32.totalorder %s27, 1
      %p228 = por %p226, %p227
      %p230 = scmp.ne.s32.totalorder %s215, %s229
      %p231 = scmp.eq.s32.totalorder %s27, 0
      %p232 = por %p230, %p231
      %s234 = sadd.s32 %s233, 1
      %p237 = scmp.eq.s32.totalorder %s21, 1
      %p238 = scmp.ne.s32.totalorder %s233, %s235
      %p239 = scmp.eq.s32.totalorder %s21, 0
      %p240 = por %p238, %p239
      %p241 = scmp.ne.s32.totalorder %s233, %s235
      %p242 = scmp.eq.s32.totalorder %s26, 1
      %p243 = por %p241, %p242
      %p244 = scmp.ne.s32.totalorder %s235, %s236
      %p245 = scmp.eq.s32.totalorder %s26, 0
      %p246 = por %p244, %p245
      %p247 = scmp.ne.s32.totalorder %s235, %s236
      %p248 = scmp.eq.s32.totalorder %s27, 1
      %p249 = por %p247, %p248
      %p251 = scmp.ne.s32.totalorder %s236, %s250
      %p252 = scmp.eq.s32.totalorder %s27, 0
      %p253 = por %p251, %p252
      %s255 = sadd.s32 %s254, 1
      %p258 = scmp.eq.s32.totalorder %s21, 1
      %p259 = scmp.ne.s32.totalorder %s254, %s256
      %p260 = scmp.eq.s32.totalorder %s21, 0
      %p261 = por %p259, %p260
      %p262 = scmp.ne.s32.totalorder %s254, %s256
      %p263 = scmp.eq.s32.totalorder %s26, 1
      %p264 = por %p262, %p263
      %p265 = scmp.ne.s32.totalorder %s256, %s257
      %p266 = scmp.eq.s32.totalorder %s26, 0
      %p267 = por %p265, %p266
      %p268 = scmp.ne.s32.totalorder %s256, %s257
      %p269 = scmp.eq.s32.totalorder %s27, 1
      %p270 = por %p268, %p269
      %p272 = scmp.ne.s32.totalorder %s257, %s271
      %p273 = scmp.eq.s32.totalorder %s27, 0
      %p274 = por %p272, %p273
      %s275 = ssub.s32 %s21, %s28
      %p276 = scmp.eq.s32.totalorder %s275, 0
      %s278 = sadd.s32 %s277, 1
      %s279 = scalar_select %p276, %s277, %s278
      %p282 = pneg %p276
      %p283 = scmp.eq.s32.totalorder %s21, 1
      %p284 = por %p282, %p283
      %p285 = scmp.ne.s32.totalorder %s277, %s280
      %p286 = scmp.eq.s32.totalorder %s21, 0
      %p287 = por %p285, %p286
      %p288 = scmp.ne.s32.totalorder %s277, %s280
      %p289 = scmp.eq.s32.totalorder %s26, 1
      %p290 = por %p288, %p289
      %p291 = scmp.ne.s32.totalorder %s280, %s281
      %p292 = scmp.eq.s32.totalorder %s26, 0
      %p293 = por %p291, %p292
      %p294 = scmp.ne.s32.totalorder %s280, %s281
      %p295 = scmp.eq.s32.totalorder %s27, 1
      %p296 = por %p294, %p295
      %p298 = scmp.ne.s32.totalorder %s281, %s297
      %p299 = scmp.eq.s32.totalorder %s27, 0
      %p300 = por %p298, %p299
      %p301 = scmp.le.s32.totalorder 1, %s21
      %p302 = scmp.lt.s32.totalorder %s21, 3
      %p303 = pnand %p301, %p302
      %p304 = pneg %p303
      // Predicated region
      $region9: #{tpu_custom_call.1} parent=5 // pred_check
        _
      $region10: #{tpu_custom_call.1} parent=5 // pred_check_branch
        %306 = sbr.rel (%p303) target = $region12
      $region11: #{tpu_custom_call.1} parent=5 // pred_region
        %s307 = ssub.s32 %s21, 1
        // Predicated region
        $region13: #{tpu_custom_call.1} parent=11 // pred_check
          %p308 = pneg %p120
        $region14: #{tpu_custom_call.1} parent=11 // pred_check_branch
          %310 = sbr.rel (%p308) target = $region16
        $region15: #{tpu_custom_call.1} parent=11 // pred_region
          %s312 = ssub.s32 16, 16
          %313 = vsyncadd [#allocation4], %s312
          %s315 = sshll.u32 %s3, 4
          %s316 = int_to_ptr.vmem [resolvable:$true] %s315
          %318 = dma.vmem_to_smem %s316, 16, [#allocation2], [#allocation4]
        $region16: #{tpu_custom_call.1} parent=11 // pred_fallthru
          _
        // Predicated region
        $region17: #{tpu_custom_call.1} parent=11 // pred_check
          %p319 = pneg %p141
        $region18: #{tpu_custom_call.1} parent=11 // pred_check_branch
          %321 = sbr.rel (%p319) target = $region20
        $region19: #{tpu_custom_call.1} parent=11 // pred_region
          _
        $region20: #{tpu_custom_call.1} parent=11 // pred_fallthru
          _
        // Predicated region
        $region21: #{tpu_custom_call.1} parent=11 // pred_check
          %p322 = pneg %p162
        $region22: #{tpu_custom_call.1} parent=11 // pred_check_branch
          %324 = sbr.rel (%p322) target = $region24
        $region23: #{tpu_custom_call.1} parent=11 // pred_region
          _
        $region24: #{tpu_custom_call.1} parent=11 // pred_fallthru
          _
        // Predicated region
        $region25: #{tpu_custom_call.1} parent=11 // pred_check
          %p325 = pneg %p183
        $region26: #{tpu_custom_call.1} parent=11 // pred_check_branch
          %327 = sbr.rel (%p325) target = $region28
        $region27: #{tpu_custom_call.1} parent=11 // pred_region
          _
        $region28: #{tpu_custom_call.1} parent=11 // pred_fallthru
          _
        // Predicated region
        $region29: #{tpu_custom_call.1} parent=11 // pred_check
          %p328 = pneg %p204
        $region30: #{tpu_custom_call.1} parent=11 // pred_check_branch
          %330 = sbr.rel (%p328) target = $region32
        $region31: #{tpu_custom_call.1} parent=11 // pred_region
          _
        $region32: #{tpu_custom_call.1} parent=11 // pred_fallthru
          _
        // Predicated region
        $region33: #{tpu_custom_call.1} parent=11 // pred_check
          %p331 = pneg %p225
        $region34: #{tpu_custom_call.1} parent=11 // pred_check_branch
          %333 = sbr.rel (%p331) target = $region36
        $region35: #{tpu_custom_call.1} parent=11 // pred_region
          _
        $region36: #{tpu_custom_call.1} parent=11 // pred_fallthru
          _
        // Predicated region
        $region37: #{tpu_custom_call.1} parent=11 // pred_check
          %p334 = pneg %p246
        $region38: #{tpu_custom_call.1} parent=11 // pred_check_branch
          %336 = sbr.rel (%p334) target = $region40
        $region39: #{tpu_custom_call.1} parent=11 // pred_region
          _
        $region40: #{tpu_custom_call.1} parent=11 // pred_fallthru
          _
        // Predicated region
        $region41: #{tpu_custom_call.1} parent=11 // pred_check
          %p337 = pneg %p267
        $region42: #{tpu_custom_call.1} parent=11 // pred_check_branch
          %339 = sbr.rel (%p337) target = $region44
        $region43: #{tpu_custom_call.1} parent=11 // pred_region
          _
        $region44: #{tpu_custom_call.1} parent=11 // pred_fallthru
          _
      $region12: #{tpu_custom_call.1} parent=5 // pred_fallthru
        _
      %p340 = scmp.lt.s32.totalorder %s21, 2
      // Predicated region
      $region45: #{tpu_custom_call.1} parent=5 // pred_check
        %p341 = pneg %p340
      $region46: #{tpu_custom_call.1} parent=5 // pred_check_branch
        %343 = sbr.rel (%p341) target = $region48
      $region47: #{tpu_custom_call.1} parent=5 // pred_region
        // Predicated region
        $region49: #{tpu_custom_call.1} parent=47 // pred_check
          %p344 = pneg %p41
        $region50: #{tpu_custom_call.1} parent=47 // pred_check_branch
          %346 = sbr.rel (%p344) target = $region52
        $region51: #{tpu_custom_call.1} parent=47 // pred_region
          %p347 = scmp.lt.s32.totalorder %s21, 1
          %s348 = scalar_select %p347, %s21, 1
          %s349 = smul.addr %s348, 8
          %s350 = scalar_lea.vmem %s0, %s349
        $region52: #{tpu_custom_call.1} parent=47 // pred_fallthru
          _
        // Predicated region
        $region53: #{tpu_custom_call.1} parent=47 // pred_check
          %p351 = pneg %p67
        $region54: #{tpu_custom_call.1} parent=47 // pred_check_branch
          %353 = sbr.rel (%p351) target = $region56
        $region55: #{tpu_custom_call.1} parent=47 // pred_region
          %p354 = scmp.lt.s32.totalorder %s21, 1
          %s355 = scalar_select %p354, %s21, 1
          %s356 = scalar_lea.vmem %s1, %s355
        $region56: #{tpu_custom_call.1} parent=47 // pred_fallthru
          _
        // Predicated region
        $region57: #{tpu_custom_call.1} parent=47 // pred_check
          %p357 = pneg %p93
        $region58: #{tpu_custom_call.1} parent=47 // pred_check_branch
          %359 = sbr.rel (%p357) target = $region60
        $region59: #{tpu_custom_call.1} parent=47 // pred_region
          %p360 = scmp.lt.s32.totalorder %s21, 1
          %s361 = scalar_select %p360, %s21, 1
          %s362 = smul.addr %s361, 8
          %s363 = scalar_lea.vmem %s2, %s362
        $region60: #{tpu_custom_call.1} parent=47 // pred_fallthru
          _
      $region48: #{tpu_custom_call.1} parent=5 // pred_fallthru
        _
      %p364 = scmp.le.s32.totalorder 1, %s21
      %p365 = scmp.lt.s32.totalorder %s21, 3
      %p366 = pnand %p364, %p365
      %p367 = pneg %p366
      // Predicated region
      $region61: #{tpu_custom_call.1} parent=5 // pred_check
        _
      $region62: #{tpu_custom_call.1} parent=5 // pred_check_branch
        %369 = sbr.rel (%p366) target = $region64
      $region63: #{tpu_custom_call.1} parent=5 // pred_region
        %s370 = ssub.s32 %s21, 1
        // Predicated region
        $region65: #{tpu_custom_call.1} parent=63 // pred_check
          %p371 = pneg %p120
        $region66: #{tpu_custom_call.1} parent=63 // pred_check_branch
          %373 = sbr.rel (%p371) target = $region68
        $region67: #{tpu_custom_call.1} parent=63 // pred_region
          %374 = dma.done [#allocation4], 16
        $region68: #{tpu_custom_call.1} parent=63 // pred_fallthru
          _
        %375 = sfence
        %p376 = scmp.lt.s32.totalorder %s26, 1
        %s377 = scalar_select %p376, %s26, 1
        %s378 = smul.addr %s377, 8
        %s379 = scalar_lea.vmem %s0, %s378
        %p380 = pneg %p47
        %p381 = pneg %p44
        %p382 = scmp.lt.s32.totalorder %s26, 1
        %s383 = scalar_select %p382, %s26, 1
        %s384 = scalar_lea.vmem %s1, %s383
        %p385 = pneg %p73
        %p386 = pneg %p70
        %p387 = scmp.lt.s32.totalorder %s26, 1
        %s388 = scalar_select %p387, %s26, 1
        %s389 = smul.addr %s388, 8
        %s390 = scalar_lea.vmem %s2, %s389
        %p391 = pneg %p99
        %p392 = pneg %p96
        %p393 = pneg %p120
        %p394 = pneg %p117
        %p395 = pneg %p141
        %p396 = pneg %p138
        %p397 = pneg %p162
        %p398 = pneg %p159
        %p399 = pneg %p183
        %p400 = pneg %p180
        %p401 = pneg %p204
        %p402 = pneg %p201
        %p403 = pneg %p225
        %p404 = pneg %p222
        %p405 = pneg %p246
        %p406 = pneg %p243
        %p407 = pneg %p267
        %p408 = pneg %p264
        %p409 = pneg %p293
        %p410 = pneg %p290
        %s411 = sand.u32 %s280, 1
        %s412 = scalar_lea.sflag [#allocation3], %s411
        %s413 = sand.u32 %s280, 1
        %s414 = scalar_lea.vmem [#allocation5], %s413
        %p415 = scmp.lt.s32.totalorder %s26, 1
        %s416 = scalar_select %p415, %s26, 1
        %s417 = smul.addr %s416, 8
        %s418 = scalar_lea.vmem %s0, %s417
        %p419 = scmp.lt.s32.totalorder %s26, 1
        %s420 = scalar_select %p419, %s26, 1
        %s421 = scalar_lea.vmem %s1, %s420
        %p422 = scmp.lt.s32.totalorder %s26, 1
        %s423 = scalar_select %p422, %s26, 1
        %s424 = smul.addr %s423, 8
        %s425 = scalar_lea.vmem %s2, %s424
        %v426 = vld [vmem:[%s418] sm:$0xff]
        %v427 = vld [vmem:[%s4] sm:$0x1]
        %v428 = vld [vmem:[%s4 + $0x1] sm:$0x1]
        %vm429 = vcmask 261120
        %v430 = vsel %vm429, %v426, 0.0
        %431 = vadd.xlane.f32.xlu0 %v430
        %v432 = vpop.xlane.xlu0 %431
        %v433 = vrcp.pop 32.0
        %v434 = vmul.f32 %v432, %v433
        %v435 = vsub.f32 %v426, %v434
        %v436 = vmul.f32 %v435, %v435
        %v437 = vsel %vm429, %v436, 0.0
        %438 = vadd.xlane.f32.xlu0 %v437
        %v439 = vpop.xlane.xlu0 %438
        %v440 = vmul.f32 %v439, %v433
        %v441 = vadd.f32 %v440, 1e-07
        %v442 = vrsqrt.pop %v441
        %v443 = vmul.f32 %v435, %v442
        %v444 = vlaneseq
        %v445 = vshrl.u32 %v444, 7
        %v446 = vsub.s32 0, %v445
        %v447 = vrot.slane %v427, %v446
        %v448 = vmul.f32 %v443, %v447
        %v449 = vlaneseq
        %v450 = vshrl.u32 %v449, 7
        %v451 = vsub.s32 0, %v450
        %v452 = vrot.slane %v428, %v451
        %v453 = vadd.f32 %v448, %v452
        %v454 = vld [vmem:[%s421] sm:$0x1]
        %v455 = vsub.f32 1.0, %v454
        %v456 = vmul.f32 %v455, -1e+09
        %v457 = vld [vmem:[%s4 + $0x2] sm:$0x1]
        %v458 = vld [vmem:[%s4 + $0x3] sm:$0x1]
        %v459 = vld [vmem:[%s4 + $0x4] sm:$0x1]
        %v460 = vld [vmem:[%s4 + $0x5] sm:$0x1]
        %v461 = vld [vmem:[%s4 + $0x6] sm:$0x1]
        %v462 = vld [vmem:[%s4 + $0x7] sm:$0x1]
        %v463 = vld [vmem:[%s7] sm:$0xff]
        %v464 = vld [vmem:[%s7 + $0x8] sm:$0xff]
        %v465 = vld [vmem:[%s7 + $0x10] sm:$0xff]
        %v466 = vld [vmem:[%s7 + $0x18] sm:$0xff]
        %v467 = vld [vmem:[%s7 + $0x20] sm:$0xff]
        %v468 = vld [vmem:[%s7 + $0x28] sm:$0xff]
        %v469 = vld [vmem:[%s7 + $0x30] sm:$0xff]
        %v470 = vld [vmem:[%s7 + $0x38] sm:$0xff]
        %v471 = vld [vmem:[%s7 + $0x40] sm:$0xff]
        %v472 = vld [vmem:[%s7 + $0x48] sm:$0xff]
        %v473 = vld [vmem:[%s7 + $0x50] sm:$0xff]
        %v474 = vld [vmem:[%s7 + $0x58] sm:$0xff]
        %v475 = vld [vmem:[%s7 + $0x60] sm:$0xff]
        %v476 = vld [vmem:[%s7 + $0x68] sm:$0xff]
        %v477 = vld [vmem:[%s7 + $0x70] sm:$0xff]
        %v478 = vld [vmem:[%s7 + $0x78] sm:$0xff]
        %v479 = vld [vmem:[%s5] sm:$0x1]
        %v480 = vld [vmem:[%s5 + $0x1] sm:$0x1]
        %v481 = vld [vmem:[%s5 + $0x2] sm:$0x1]
        %v482 = vld [vmem:[%s5 + $0x3] sm:$0x1]
        %v487 = vlaneseq
        %v488 = vshrl.u32 %v487, 7
        %v489 = vsub.s32 0, %v488
        %v490 = vrot.slane %v479, %v489
        %v491 = vlaneseq
        %v492 = vshrl.u32 %v491, 7
        %v493 = vsub.s32 0, %v492
        %v494 = vrot.slane %v480, %v493
        %v495 = vlaneseq
        %v496 = vshrl.u32 %v495, 7
        %v497 = vsub.s32 0, %v496
        %v498 = vrot.slane %v481, %v497
        %v499 = vlaneseq
        %v500 = vshrl.u32 %v499, 7
        %v501 = vsub.s32 0, %v500
        %v502 = vrot.slane %v482, %v501
        %v508 = vsel %vm429, %v453, 0
        %510 = vmatprep.subr.mxu0 0.0
        %511 = vmatpush1.msra.mxu0 %v463
        %512 = vmatprep.subr.mxu0 0.0
        %513 = vmatpush1.msra.mxu0 %v464
        %514 = vmatprep.subr.mxu0 0.0
        %515 = vmatpush1.msra.mxu0 %v465
        %516 = vmatprep.subr.mxu0 0.0
        %517 = vmatpush1.msra.mxu0 %v466
        %518 = vmatprep.subr.mxu0 0.0
        %519 = vmatpush1.msra.mxu0 0.0
        %520 = vmatprep.subr.mxu0 0.0
        %521 = vmatpush1.msra.mxu0 0.0
        %522 = vmatprep.subr.mxu0 0.0
        %523 = vmatpush1.msra.mxu0 0.0
        %524 = vmatprep.subr.mxu0 0.0
        %525 = vmatpush1.msra.mxu0 0.0
        %526 = vmatprep.subr.mxu0 0.0
        %527 = vmatpush1.msra.mxu0 0.0
        %528 = vmatprep.subr.mxu0 0.0
        %529 = vmatpush1.msra.mxu0 0.0
        %530 = vmatprep.subr.mxu0 0.0
        %531 = vmatpush1.msra.mxu0 0.0
        %532 = vmatprep.subr.mxu0 0.0
        %533 = vmatpush1.msra.mxu0 0.0
        %534 = vmatprep.subr.mxu0 0.0
        %535 = vmatpush1.msra.mxu0 0.0
        %536 = vmatprep.subr.mxu0 0.0
        %537 = vmatpush1.msra.mxu0 0.0
        %538 = vmatprep.subr.mxu0 0.0
        %539 = vmatpush1.msra.mxu0 0.0
        %540 = vmatprep.subr.mxu0 0.0
        %541 = vmatpush1.msra.mxu0 0.0
        %542 = vmatprep.subr.mxu0 0.0
        %543 = vmatpush1.msra.mxu0 0.0
        %544 = vmatprep.subr.mxu0 0.0
        %545 = vmatpush1.msra.mxu0 0.0
        %546 = vmatprep.subr.mxu0 0.0
        %547 = vmatpush1.msra.mxu0 0.0
        %548 = vmatprep.subr.mxu0 0.0
        %549 = vmatpush1.msra.mxu0 0.0
        %550 = vmatprep.subr.mxu0 0.0
        %551 = vmatpush1.msra.mxu0 0.0
        %552 = vmatprep.subr.mxu0 0.0
        %553 = vmatpush1.msra.mxu0 0.0
        %554 = vmatprep.subr.mxu0 0.0
        %555 = vmatpush1.msra.mxu0 0.0
        %556 = vmatprep.subr.mxu0 0.0
        %557 = vmatpush1.msra.mxu0 0.0
        %558 = vmatprep.subr.mxu0 0.0
        %559 = vmatpush1.msra.mxu0 0.0
        %560 = vmatprep.subr.mxu0 0.0
        %561 = vmatpush1.msra.mxu0 0.0
        %562 = vmatprep.subr.mxu0 0.0
        %563 = vmatpush1.msra.mxu0 0.0
        %564 = vmatprep.subr.mxu0 0.0
        %565 = vmatpush1.msra.mxu0 0.0
        %566 = vmatprep.subr.mxu0 0.0
        %567 = vmatpush1.msra.mxu0 0.0
        %568 = vmatprep.subr.mxu0 0.0
        %569 = vmatpush1.msra.mxu0 0.0
        %570 = vmatprep.subr.mxu0 0.0
        %571 = vmatpush1.msra.mxu0 0.0
        %572 = vmatprep.subr.mxu0 0.0
        %573 = vmatpush1.msra.mxu0 0.0
        %574 = vmatprep.mubr.f32.mxu0 0.0
        %575 = vmatmul.mubr.f32.gmra.mrb[0].mxu0 %v508
        %v576 = vpop.f32.mrb[0].mxu0
        %v577 = vadd.f32 %v490, %v576
        %v578 = vpop.f32.mrb[0].mxu0
        %579 = vdwg.mxu0
        %580 = vmatprep.subr.mxu0 0.0
        %581 = vmatpush1.msra.mxu0 %v467
        %582 = vmatprep.subr.mxu0 0.0
        %583 = vmatpush1.msra.mxu0 %v468
        %584 = vmatprep.subr.mxu0 0.0
        %585 = vmatpush1.msra.mxu0 %v469
        %586 = vmatprep.subr.mxu0 0.0
        %587 = vmatpush1.msra.mxu0 %v470
        %588 = vmatprep.subr.mxu0 0.0
        %589 = vmatpush1.msra.mxu0 0.0
        %590 = vmatprep.subr.mxu0 0.0
        %591 = vmatpush1.msra.mxu0 0.0
        %592 = vmatprep.subr.mxu0 0.0
        %593 = vmatpush1.msra.mxu0 0.0
        %594 = vmatprep.subr.mxu0 0.0
        %595 = vmatpush1.msra.mxu0 0.0
        %596 = vmatprep.subr.mxu0 0.0
        %597 = vmatpush1.msra.mxu0 0.0
        %598 = vmatprep.subr.mxu0 0.0
        %599 = vmatpush1.msra.mxu0 0.0
        %600 = vmatprep.subr.mxu0 0.0
        %601 = vmatpush1.msra.mxu0 0.0
        %602 = vmatprep.subr.mxu0 0.0
        %603 = vmatpush1.msra.mxu0 0.0
        %604 = vmatprep.subr.mxu0 0.0
        %605 = vmatpush1.msra.mxu0 0.0
        %606 = vmatprep.subr.mxu0 0.0
        %607 = vmatpush1.msra.mxu0 0.0
        %608 = vmatprep.subr.mxu0 0.0
        %609 = vmatpush1.msra.mxu0 0.0
        %610 = vmatprep.subr.mxu0 0.0
        %611 = vmatpush1.msra.mxu0 0.0
        %612 = vmatprep.subr.mxu0 0.0
        %613 = vmatpush1.msra.mxu0 0.0
        %614 = vmatprep.subr.mxu0 0.0
        %615 = vmatpush1.msra.mxu0 0.0
        %616 = vmatprep.subr.mxu0 0.0
        %617 = vmatpush1.msra.mxu0 0.0
        %618 = vmatprep.subr.mxu0 0.0
        %619 = vmatpush1.msra.mxu0 0.0
        %620 = vmatprep.subr.mxu0 0.0
        %621 = vmatpush1.msra.mxu0 0.0
        %622 = vmatprep.subr.mxu0 0.0
        %623 = vmatpush1.msra.mxu0 0.0
        %624 = vmatprep.subr.mxu0 0.0
        %625 = vmatpush1.msra.mxu0 0.0
        %626 = vmatprep.subr.mxu0 0.0
        %627 = vmatpush1.msra.mxu0 0.0
        %628 = vmatprep.subr.mxu0 0.0
        %629 = vmatpush1.msra.mxu0 0.0
        %630 = vmatprep.subr.mxu0 0.0
        %631 = vmatpush1.msra.mxu0 0.0
        %632 = vmatprep.subr.mxu0 0.0
        %633 = vmatpush1.msra.mxu0 0.0
        %634 = vmatprep.subr.mxu0 0.0
        %635 = vmatpush1.msra.mxu0 0.0
        %636 = vmatprep.subr.mxu0 0.0
        %637 = vmatpush1.msra.mxu0 0.0
        %638 = vmatprep.subr.mxu0 0.0
        %639 = vmatpush1.msra.mxu0 0.0
        %640 = vmatprep.subr.mxu0 0.0
        %641 = vmatpush1.msra.mxu0 0.0
        %642 = vmatprep.subr.mxu0 0.0
        %643 = vmatpush1.msra.mxu0 0.0
        %644 = vmatprep.mubr.f32.mxu0 0.0
        %645 = vmatmul.mubr.f32.gmra.mrb[0].mxu0 %v508
        %v646 = vpop.f32.mrb[0].mxu0
        %v647 = vadd.f32 %v494, %v646
        %v648 = vpop.f32.mrb[0].mxu0
        %649 = vdwg.mxu0
        %650 = vmatprep.subr.mxu0 0.0
        %651 = vmatpush1.msra.mxu0 %v471
        %652 = vmatprep.subr.mxu0 0.0
        %653 = vmatpush1.msra.mxu0 %v472
        %654 = vmatprep.subr.mxu0 0.0
        %655 = vmatpush1.msra.mxu0 %v473
        %656 = vmatprep.subr.mxu0 0.0
        %657 = vmatpush1.msra.mxu0 %v474
        %658 = vmatprep.subr.mxu0 0.0
        %659 = vmatpush1.msra.mxu0 0.0
        %660 = vmatprep.subr.mxu0 0.0
        %661 = vmatpush1.msra.mxu0 0.0
        %662 = vmatprep.subr.mxu0 0.0
        %663 = vmatpush1.msra.mxu0 0.0
        %664 = vmatprep.subr.mxu0 0.0
        %665 = vmatpush1.msra.mxu0 0.0
        %666 = vmatprep.subr.mxu0 0.0
        %667 = vmatpush1.msra.mxu0 0.0
        %668 = vmatprep.subr.mxu0 0.0
        %669 = vmatpush1.msra.mxu0 0.0
        %670 = vmatprep.subr.mxu0 0.0
        %671 = vmatpush1.msra.mxu0 0.0
        %672 = vmatprep.subr.mxu0 0.0
        %673 = vmatpush1.msra.mxu0 0.0
        %674 = vmatprep.subr.mxu0 0.0
        %675 = vmatpush1.msra.mxu0 0.0
        %676 = vmatprep.subr.mxu0 0.0
        %677 = vmatpush1.msra.mxu0 0.0
        %678 = vmatprep.subr.mxu0 0.0
        %679 = vmatpush1.msra.mxu0 0.0
        %680 = vmatprep.subr.mxu0 0.0
        %681 = vmatpush1.msra.mxu0 0.0
        %682 = vmatprep.subr.mxu0 0.0
        %683 = vmatpush1.msra.mxu0 0.0
        %684 = vmatprep.subr.mxu0 0.0
        %685 = vmatpush1.msra.mxu0 0.0
        %686 = vmatprep.subr.mxu0 0.0
        %687 = vmatpush1.msra.mxu0 0.0
        %688 = vmatprep.subr.mxu0 0.0
        %689 = vmatpush1.msra.mxu0 0.0
        %690 = vmatprep.subr.mxu0 0.0
        %691 = vmatpush1.msra.mxu0 0.0
        %692 = vmatprep.subr.mxu0 0.0
        %693 = vmatpush1.msra.mxu0 0.0
        %694 = vmatprep.subr.mxu0 0.0
        %695 = vmatpush1.msra.mxu0 0.0
        %696 = vmatprep.subr.mxu0 0.0
        %697 = vmatpush1.msra.mxu0 0.0
        %698 = vmatprep.subr.mxu0 0.0
        %699 = vmatpush1.msra.mxu0 0.0
        %700 = vmatprep.subr.mxu0 0.0
        %701 = vmatpush1.msra.mxu0 0.0
        %702 = vmatprep.subr.mxu0 0.0
        %703 = vmatpush1.msra.mxu0 0.0
        %704 = vmatprep.subr.mxu0 0.0
        %705 = vmatpush1.msra.mxu0 0.0
        %706 = vmatprep.subr.mxu0 0.0
        %707 = vmatpush1.msra.mxu0 0.0
        %708 = vmatprep.subr.mxu0 0.0
        %709 = vmatpush1.msra.mxu0 0.0
        %710 = vmatprep.subr.mxu0 0.0
        %711 = vmatpush1.msra.mxu0 0.0
        %712 = vmatprep.subr.mxu0 0.0
        %713 = vmatpush1.msra.mxu0 0.0
        %714 = vmatprep.mubr.f32.mxu0 0.0
        %715 = vmatmul.mubr.f32.gmra.mrb[0].mxu0 %v508
        %v716 = vpop.f32.mrb[0].mxu0
        %v717 = vadd.f32 %v498, %v716
        %v718 = vpop.f32.mrb[0].mxu0
        %719 = vdwg.mxu0
        %720 = vmatprep.subr.mxu0 0.0
        %721 = vmatpush1.msra.mxu0 %v475
        %722 = vmatprep.subr.mxu0 0.0
        %723 = vmatpush1.msra.mxu0 %v476
        %724 = vmatprep.subr.mxu0 0.0
        %725 = vmatpush1.msra.mxu0 %v477
        %726 = vmatprep.subr.mxu0 0.0
        %727 = vmatpush1.msra.mxu0 %v478
        %728 = vmatprep.subr.mxu0 0.0
        %729 = vmatpush1.msra.mxu0 0.0
        %730 = vmatprep.subr.mxu0 0.0
        %731 = vmatpush1.msra.mxu0 0.0
        %732 = vmatprep.subr.mxu0 0.0
        %733 = vmatpush1.msra.mxu0 0.0
        %734 = vmatprep.subr.mxu0 0.0
        %735 = vmatpush1.msra.mxu0 0.0
        %736 = vmatprep.subr.mxu0 0.0
        %737 = vmatpush1.msra.mxu0 0.0
        %738 = vmatprep.subr.mxu0 0.0
        %739 = vmatpush1.msra.mxu0 0.0
        %740 = vmatprep.subr.mxu0 0.0
        %741 = vmatpush1.msra.mxu0 0.0
        %742 = vmatprep.subr.mxu0 0.0
        %743 = vmatpush1.msra.mxu0 0.0
        %744 = vmatprep.subr.mxu0 0.0
        %745 = vmatpush1.msra.mxu0 0.0
        %746 = vmatprep.subr.mxu0 0.0
        %747 = vmatpush1.msra.mxu0 0.0
        %748 = vmatprep.subr.mxu0 0.0
        %749 = vmatpush1.msra.mxu0 0.0
        %750 = vmatprep.subr.mxu0 0.0
        %751 = vmatpush1.msra.mxu0 0.0
        %752 = vmatprep.subr.mxu0 0.0
        %753 = vmatpush1.msra.mxu0 0.0
        %754 = vmatprep.subr.mxu0 0.0
        %755 = vmatpush1.msra.mxu0 0.0
        %756 = vmatprep.subr.mxu0 0.0
        %757 = vmatpush1.msra.mxu0 0.0
        %758 = vmatprep.subr.mxu0 0.0
        %759 = vmatpush1.msra.mxu0 0.0
        %760 = vmatprep.subr.mxu0 0.0
        %761 = vmatpush1.msra.mxu0 0.0
        %762 = vmatprep.subr.mxu0 0.0
        %763 = vmatpush1.msra.mxu0 0.0
        %764 = vmatprep.subr.mxu0 0.0
        %765 = vmatpush1.msra.mxu0 0.0
        %766 = vmatprep.subr.mxu0 0.0
        %767 = vmatpush1.msra.mxu0 0.0
        %768 = vmatprep.subr.mxu0 0.0
        %769 = vmatpush1.msra.mxu0 0.0
        %770 = vmatprep.subr.mxu0 0.0
        %771 = vmatpush1.msra.mxu0 0.0
        %772 = vmatprep.subr.mxu0 0.0
        %773 = vmatpush1.msra.mxu0 0.0
        %774 = vmatprep.subr.mxu0 0.0
        %775 = vmatpush1.msra.mxu0 0.0
        %776 = vmatprep.subr.mxu0 0.0
        %777 = vmatpush1.msra.mxu0 0.0
        %778 = vmatprep.subr.mxu0 0.0
        %779 = vmatpush1.msra.mxu0 0.0
        %780 = vmatprep.subr.mxu0 0.0
        %781 = vmatpush1.msra.mxu0 0.0
        %782 = vmatprep.subr.mxu0 0.0
        %783 = vmatpush1.msra.mxu0 0.0
        %784 = vmatprep.mubr.f32.mxu0 0.0
        %785 = vmatmul.mubr.f32.gmra.mrb[0].mxu0 %v508
        %v786 = vpop.f32.mrb[0].mxu0
        %v787 = vadd.f32 %v502, %v786
        %v788 = vpop.f32.mrb[0].mxu0
        %789 = vdwg.mxu0
        %s790 = scalar_lea.vmem %s7, 128
        %v791 = vld [vmem:[%s790] sm:$0xff]
        %v792 = vld [vmem:[%s790 + $0x8] sm:$0xff]
        %v793 = vld [vmem:[%s790 + $0x10] sm:$0xff]
        %v794 = vld [vmem:[%s790 + $0x18] sm:$0xff]
        %v795 = vld [vmem:[%s790 + $0x20] sm:$0xff]
        %v796 = vld [vmem:[%s790 + $0x28] sm:$0xff]
        %v797 = vld [vmem:[%s790 + $0x30] sm:$0xff]
        %v798 = vld [vmem:[%s790 + $0x38] sm:$0xff]
        %v799 = vld [vmem:[%s790 + $0x40] sm:$0xff]
        %v800 = vld [vmem:[%s790 + $0x48] sm:$0xff]
        %v801 = vld [vmem:[%s790 + $0x50] sm:$0xff]
        %v802 = vld [vmem:[%s790 + $0x58] sm:$0xff]
        %v803 = vld [vmem:[%s790 + $0x60] sm:$0xff]
        %v804 = vld [vmem:[%s790 + $0x68] sm:$0xff]
        %v805 = vld [vmem:[%s790 + $0x70] sm:$0xff]
        %v806 = vld [vmem:[%s790 + $0x78] sm:$0xff]
        %s807 = scalar_lea.vmem %s5, 4
        %v808 = vld [vmem:[%s807] sm:$0x1]
        %v809 = vld [vmem:[%s807 + $0x1] sm:$0x1]
        %v810 = vld [vmem:[%s807 + $0x2] sm:$0x1]
        %v811 = vld [vmem:[%s807 + $0x3] sm:$0x1]
        %v816 = vlaneseq
        %v817 = vshrl.u32 %v816, 7
        %v818 = vsub.s32 0, %v817
        %v819 = vrot.slane %v808, %v818
        %v820 = vlaneseq
        %v821 = vshrl.u32 %v820, 7
        %v822 = vsub.s32 0, %v821
        %v823 = vrot.slane %v809, %v822
        %v824 = vlaneseq
        %v825 = vshrl.u32 %v824, 7
        %v826 = vsub.s32 0, %v825
        %v827 = vrot.slane %v810, %v826
        %v828 = vlaneseq
        %v829 = vshrl.u32 %v828, 7
        %v830 = vsub.s32 0, %v829
        %v831 = vrot.slane %v811, %v830
        %836 = vmatprep.subr.mxu0 0.0
        %837 = vmatpush1.msra.mxu0 %v791
        %838 = vmatprep.subr.mxu0 0.0
        %839 = vmatpush1.msra.mxu0 %v792
        %840 = vmatprep.subr.mxu0 0.0
        %841 = vmatpush1.msra.mxu0 %v793
        %842 = vmatprep.subr.mxu0 0.0
        %843 = vmatpush1.msra.mxu0 %v794
        %844 = vmatprep.subr.mxu0 0.0
        %845 = vmatpush1.msra.mxu0 0.0
        %846 = vmatprep.subr.mxu0 0.0
        %847 = vmatpush1.msra.mxu0 0.0
        %848 = vmatprep.subr.mxu0 0.0
        %849 = vmatpush1.msra.mxu0 0.0
        %850 = vmatprep.subr.mxu0 0.0
        %851 = vmatpush1.msra.mxu0 0.0
        %852 = vmatprep.subr.mxu0 0.0
        %853 = vmatpush1.msra.mxu0 0.0
        %854 = vmatprep.subr.mxu0 0.0
        %855 = vmatpush1.msra.mxu0 0.0
        %856 = vmatprep.subr.mxu0 0.0
        %857 = vmatpush1.msra.mxu0 0.0
        %858 = vmatprep.subr.mxu0 0.0
        %859 = vmatpush1.msra.mxu0 0.0
        %860 = vmatprep.subr.mxu0 0.0
        %861 = vmatpush1.msra.mxu0 0.0
        %862 = vmatprep.subr.mxu0 0.0
        %863 = vmatpush1.msra.mxu0 0.0
        %864 = vmatprep.subr.mxu0 0.0
        %865 = vmatpush1.msra.mxu0 0.0
        %866 = vmatprep.subr.mxu0 0.0
        %867 = vmatpush1.msra.mxu0 0.0
        %868 = vmatprep.subr.mxu0 0.0
        %869 = vmatpush1.msra.mxu0 0.0
        %870 = vmatprep.subr.mxu0 0.0
        %871 = vmatpush1.msra.mxu0 0.0
        %872 = vmatprep.subr.mxu0 0.0
        %873 = vmatpush1.msra.mxu0 0.0
        %874 = vmatprep.subr.mxu0 0.0
        %875 = vmatpush1.msra.mxu0 0.0
        %876 = vmatprep.subr.mxu0 0.0
        %877 = vmatpush1.msra.mxu0 0.0
        %878 = vmatprep.subr.mxu0 0.0
        %879 = vmatpush1.msra.mxu0 0.0
        %880 = vmatprep.subr.mxu0 0.0
        %881 = vmatpush1.msra.mxu0 0.0
        %882 = vmatprep.subr.mxu0 0.0
        %883 = vmatpush1.msra.mxu0 0.0
        %884 = vmatprep.subr.mxu0 0.0
        %885 = vmatpush1.msra.mxu0 0.0
        %886 = vmatprep.subr.mxu0 0.0
        %887 = vmatpush1.msra.mxu0 0.0
        %888 = vmatprep.subr.mxu0 0.0
        %889 = vmatpush1.msra.mxu0 0.0
        %890 = vmatprep.subr.mxu0 0.0
        %891 = vmatpush1.msra.mxu0 0.0
        %892 = vmatprep.subr.mxu0 0.0
        %893 = vmatpush1.msra.mxu0 0.0
        %894 = vmatprep.subr.mxu0 0.0
        %895 = vmatpush1.msra.mxu0 0.0
        %896 = vmatprep.subr.mxu0 0.0
        %897 = vmatpush1.msra.mxu0 0.0
        %898 = vmatprep.subr.mxu0 0.0
        %899 = vmatpush1.msra.mxu0 0.0
        %900 = vmatprep.mubr.f32.mxu0 0.0
        %901 = vmatmul.mubr.f32.gmra.mrb[0].mxu0 %v508
        %v902 = vpop.f32.mrb[0].mxu0
        %v903 = vadd.f32 %v819, %v902
        %v904 = vpop.f32.mrb[0].mxu0
        %905 = vdwg.mxu0
        %906 = vmatprep.subr.mxu0 0.0
        %907 = vmatpush1.msra.mxu0 %v795
        %908 = vmatprep.subr.mxu0 0.0
        %909 = vmatpush1.msra.mxu0 %v796
        %910 = vmatprep.subr.mxu0 0.0
        %911 = vmatpush1.msra.mxu0 %v797
        %912 = vmatprep.subr.mxu0 0.0
        %913 = vmatpush1.msra.mxu0 %v798
        %914 = vmatprep.subr.mxu0 0.0
        %915 = vmatpush1.msra.mxu0 0.0
        %916 = vmatprep.subr.mxu0 0.0
        %917 = vmatpush1.msra.mxu0 0.0
        %918 = vmatprep.subr.mxu0 0.0
        %919 = vmatpush1.msra.mxu0 0.0
        %920 = vmatprep.subr.mxu0 0.0
        %921 = vmatpush1.msra.mxu0 0.0
        %922 = vmatprep.subr.mxu0 0.0
        %923 = vmatpush1.msra.mxu0 0.0
        %924 = vmatprep.subr.mxu0 0.0
        %925 = vmatpush1.msra.mxu0 0.0
        %926 = vmatprep.subr.mxu0 0.0
        %927 = vmatpush1.msra.mxu0 0.0
        %928 = vmatprep.subr.mxu0 0.0
        %929 = vmatpush1.msra.mxu0 0.0
        %930 = vmatprep.subr.mxu0 0.0
        %931 = vmatpush1.msra.mxu0 0.0
        %932 = vmatprep.subr.mxu0 0.0
        %933 = vmatpush1.msra.mxu0 0.0
        %934 = vmatprep.subr.mxu0 0.0
        %935 = vmatpush1.msra.mxu0 0.0
        %936 = vmatprep.subr.mxu0 0.0
        %937 = vmatpush1.msra.mxu0 0.0
        %938 = vmatprep.subr.mxu0 0.0
        %939 = vmatpush1.msra.mxu0 0.0
        %940 = vmatprep.subr.mxu0 0.0
        %941 = vmatpush1.msra.mxu0 0.0
        %942 = vmatprep.subr.mxu0 0.0
        %943 = vmatpush1.msra.mxu0 0.0
        %944 = vmatprep.subr.mxu0 0.0
        %945 = vmatpush1.msra.mxu0 0.0
        %946 = vmatprep.subr.mxu0 0.0
        %947 = vmatpush1.msra.mxu0 0.0
        %948 = vmatprep.subr.mxu0 0.0
        %949 = vmatpush1.msra.mxu0 0.0
        %950 = vmatprep.subr.mxu0 0.0
        %951 = vmatpush1.msra.mxu0 0.0
        %952 = vmatprep.subr.mxu0 0.0
        %953 = vmatpush1.msra.mxu0 0.0
        %954 = vmatprep.subr.mxu0 0.0
        %955 = vmatpush1.msra.mxu0 0.0
        %956 = vmatprep.subr.mxu0 0.0
        %957 = vmatpush1.msra.mxu0 0.0
        %958 = vmatprep.subr.mxu0 0.0
        %959 = vmatpush1.msra.mxu0 0.0
        %960 = vmatprep.subr.mxu0 0.0
        %961 = vmatpush1.msra.mxu0 0.0
        %962 = vmatprep.subr.mxu0 0.0
        %963 = vmatpush1.msra.mxu0 0.0
        %964 = vmatprep.subr.mxu0 0.0
        %965 = vmatpush1.msra.mxu0 0.0
        %966 = vmatprep.subr.mxu0 0.0
        %967 = vmatpush1.msra.mxu0 0.0
        %968 = vmatprep.subr.mxu0 0.0
        %969 = vmatpush1.msra.mxu0 0.0
        %970 = vmatprep.mubr.f32.mxu0 0.0
        %971 = vmatmul.mubr.f32.gmra.mrb[0].mxu0 %v508
        %v972 = vpop.f32.mrb[0].mxu0
        %v973 = vadd.f32 %v823, %v972
        %v974 = vpop.f32.mrb[0].mxu0
        %975 = vdwg.mxu0
        %976 = vmatprep.subr.mxu0 0.0
        %977 = vmatpush1.msra.mxu0 %v799
        %978 = vmatprep.subr.mxu0 0.0
        %979 = vmatpush1.msra.mxu0 %v800
        %980 = vmatprep.subr.mxu0 0.0
        %981 = vmatpush1.msra.mxu0 %v801
        %982 = vmatprep.subr.mxu0 0.0
        %983 = vmatpush1.msra.mxu0 %v802
        %984 = vmatprep.subr.mxu0 0.0
        %985 = vmatpush1.msra.mxu0 0.0
        %986 = vmatprep.subr.mxu0 0.0
        %987 = vmatpush1.msra.mxu0 0.0
        %988 = vmatprep.subr.mxu0 0.0
        %989 = vmatpush1.msra.mxu0 0.0
        %990 = vmatprep.subr.mxu0 0.0
        %991 = vmatpush1.msra.mxu0 0.0
        %992 = vmatprep.subr.mxu0 0.0
        %993 = vmatpush1.msra.mxu0 0.0
        %994 = vmatprep.subr.mxu0 0.0
        %995 = vmatpush1.msra.mxu0 0.0
        %996 = vmatprep.subr.mxu0 0.0
        %997 = vmatpush1.msra.mxu0 0.0
        %998 = vmatprep.subr.mxu0 0.0
        %999 = vmatpush1.msra.mxu0 0.0
        %1000 = vmatprep.subr.mxu0 0.0
        %1001 = vmatpush1.msra.mxu0 0.0
        %1002 = vmatprep.subr.mxu0 0.0
        %1003 = vmatpush1.msra.mxu0 0.0
        %1004 = vmatprep.subr.mxu0 0.0
        %1005 = vmatpush1.msra.mxu0 0.0
        %1006 = vmatprep.subr.mxu0 0.0
        %1007 = vmatpush1.msra.mxu0 0.0
        %1008 = vmatprep.subr.mxu0 0.0
        %1009 = vmatpush1.msra.mxu0 0.0
        %1010 = vmatprep.subr.mxu0 0.0
        %1011 = vmatpush1.msra.mxu0 0.0
        %1012 = vmatprep.subr.mxu0 0.0
        %1013 = vmatpush1.msra.mxu0 0.0
        %1014 = vmatprep.subr.mxu0 0.0
        %1015 = vmatpush1.msra.mxu0 0.0
        %1016 = vmatprep.subr.mxu0 0.0
        %1017 = vmatpush1.msra.mxu0 0.0
        %1018 = vmatprep.subr.mxu0 0.0
        %1019 = vmatpush1.msra.mxu0 0.0
        %1020 = vmatprep.subr.mxu0 0.0
        %1021 = vmatpush1.msra.mxu0 0.0
        %1022 = vmatprep.subr.mxu0 0.0
        %1023 = vmatpush1.msra.mxu0 0.0
        %1024 = vmatprep.subr.mxu0 0.0
        %1025 = vmatpush1.msra.mxu0 0.0
        %1026 = vmatprep.subr.mxu0 0.0
        %1027 = vmatpush1.msra.mxu0 0.0
        %1028 = vmatprep.subr.mxu0 0.0
        %1029 = vmatpush1.msra.mxu0 0.0
        %1030 = vmatprep.subr.mxu0 0.0
        %1031 = vmatpush1.msra.mxu0 0.0
        %1032 = vmatprep.subr.mxu0 0.0
        %1033 = vmatpush1.msra.mxu0 0.0
        %1034 = vmatprep.subr.mxu0 0.0
        %1035 = vmatpush1.msra.mxu0 0.0
        %1036 = vmatprep.subr.mxu0 0.0
        %1037 = vmatpush1.msra.mxu0 0.0
        %1038 = vmatprep.subr.mxu0 0.0
        %1039 = vmatpush1.msra.mxu0 0.0
        %1040 = vmatprep.mubr.f32.mxu0 0.0
        %1041 = vmatmul.mubr.f32.gmra.mrb[0].mxu0 %v508
        %v1042 = vpop.f32.mrb[0].mxu0
        %v1043 = vadd.f32 %v827, %v1042
        %v1044 = vpop.f32.mrb[0].mxu0
        %1045 = vdwg.mxu0
        %1046 = vmatprep.subr.mxu0 0.0
        %1047 = vmatpush1.msra.mxu0 %v803
        %1048 = vmatprep.subr.mxu0 0.0
        %1049 = vmatpush1.msra.mxu0 %v804
        %1050 = vmatprep.subr.mxu0 0.0
        %1051 = vmatpush1.msra.mxu0 %v805
        %1052 = vmatprep.subr.mxu0 0.0
        %1053 = vmatpush1.msra.mxu0 %v806
        %1054 = vmatprep.subr.mxu0 0.0
        %1055 = vmatpush1.msra.mxu0 0.0
        %1056 = vmatprep.subr.mxu0 0.0
        %1057 = vmatpush1.msra.mxu0 0.0
        %1058 = vmatprep.subr.mxu0 0.0
        %1059 = vmatpush1.msra.mxu0 0.0
        %1060 = vmatprep.subr.mxu0 0.0
        %1061 = vmatpush1.msra.mxu0 0.0
        %1062 = vmatprep.subr.mxu0 0.0
        %1063 = vmatpush1.msra.mxu0 0.0
        %1064 = vmatprep.subr.mxu0 0.0
        %1065 = vmatpush1.msra.mxu0 0.0
        %1066 = vmatprep.subr.mxu0 0.0
        %1067 = vmatpush1.msra.mxu0 0.0
        %1068 = vmatprep.subr.mxu0 0.0
        %1069 = vmatpush1.msra.mxu0 0.0
        %1070 = vmatprep.subr.mxu0 0.0
        %1071 = vmatpush1.msra.mxu0 0.0
        %1072 = vmatprep.subr.mxu0 0.0
        %1073 = vmatpush1.msra.mxu0 0.0
        %1074 = vmatprep.subr.mxu0 0.0
        %1075 = vmatpush1.msra.mxu0 0.0
        %1076 = vmatprep.subr.mxu0 0.0
        %1077 = vmatpush1.msra.mxu0 0.0
        %1078 = vmatprep.subr.mxu0 0.0
        %1079 = vmatpush1.msra.mxu0 0.0
        %1080 = vmatprep.subr.mxu0 0.0
        %1081 = vmatpush1.msra.mxu0 0.0
        %1082 = vmatprep.subr.mxu0 0.0
        %1083 = vmatpush1.msra.mxu0 0.0
        %1084 = vmatprep.subr.mxu0 0.0
        %1085 = vmatpush1.msra.mxu0 0.0
        %1086 = vmatprep.subr.mxu0 0.0
        %1087 = vmatpush1.msra.mxu0 0.0
        %1088 = vmatprep.subr.mxu0 0.0
        %1089 = vmatpush1.msra.mxu0 0.0
        %1090 = vmatprep.subr.mxu0 0.0
        %1091 = vmatpush1.msra.mxu0 0.0
        %1092 = vmatprep.subr.mxu0 0.0
        %1093 = vmatpush1.msra.mxu0 0.0
        %1094 = vmatprep.subr.mxu0 0.0
        %1095 = vmatpush1.msra.mxu0 0.0
        %1096 = vmatprep.subr.mxu0 0.0
        %1097 = vmatpush1.msra.mxu0 0.0
        %1098 = vmatprep.subr.mxu0 0.0
        %1099 = vmatpush1.msra.mxu0 0.0
        %1100 = vmatprep.subr.mxu0 0.0
        %1101 = vmatpush1.msra.mxu0 0.0
        %1102 = vmatprep.subr.mxu0 0.0
        %1103 = vmatpush1.msra.mxu0 0.0
        %1104 = vmatprep.subr.mxu0 0.0
        %1105 = vmatpush1.msra.mxu0 0.0
        %1106 = vmatprep.subr.mxu0 0.0
        %1107 = vmatpush1.msra.mxu0 0.0
        %1108 = vmatprep.subr.mxu0 0.0
        %1109 = vmatpush1.msra.mxu0 0.0
        %1110 = vmatprep.mubr.f32.mxu0 0.0
        %1111 = vmatmul.mubr.f32.gmra.mrb[0].mxu0 %v508
        %v1112 = vpop.f32.mrb[0].mxu0
        %v1113 = vadd.f32 %v831, %v1112
        %v1114 = vpop.f32.mrb[0].mxu0
        %1115 = vdwg.mxu0
        %s1116 = scalar_lea.vmem %s7, 256
        %v1117 = vld [vmem:[%s1116] sm:$0xff]
        %v1118 = vld [vmem:[%s1116 + $0x8] sm:$0xff]
        %v1119 = vld [vmem:[%s1116 + $0x10] sm:$0xff]
        %v1120 = vld [vmem:[%s1116 + $0x18] sm:$0xff]
        %v1121 = vld [vmem:[%s1116 + $0x20] sm:$0xff]
        %v1122 = vld [vmem:[%s1116 + $0x28] sm:$0xff]
        %v1123 = vld [vmem:[%s1116 + $0x30] sm:$0xff]
        %v1124 = vld [vmem:[%s1116 + $0x38] sm:$0xff]
        %v1125 = vld [vmem:[%s1116 + $0x40] sm:$0xff]
        %v1126 = vld [vmem:[%s1116 + $0x48] sm:$0xff]
        %v1127 = vld [vmem:[%s1116 + $0x50] sm:$0xff]
        %v1128 = vld [vmem:[%s1116 + $0x58] sm:$0xff]
        %v1129 = vld [vmem:[%s1116 + $0x60] sm:$0xff]
        %v1130 = vld [vmem:[%s1116 + $0x68] sm:$0xff]
        %v1131 = vld [vmem:[%s1116 + $0x70] sm:$0xff]
        %v1132 = vld [vmem:[%s1116 + $0x78] sm:$0xff]
        %s1133 = scalar_lea.vmem %s5, 8
        %v1134 = vld [vmem:[%s1133] sm:$0x1]
        %v1135 = vld [vmem:[%s1133 + $0x1] sm:$0x1]
        %v1136 = vld [vmem:[%s1133 + $0x2] sm:$0x1]
        %v1137 = vld [vmem:[%s1133 + $0x3] sm:$0x1]
        %v1142 = vlaneseq
        %v1143 = vshrl.u32 %v1142, 7
        %v1144 = vsub.s32 0, %v1143
        %v1145 = vrot.slane %v1134, %v1144
        %v1146 = vlaneseq
        %v1147 = vshrl.u32 %v1146, 7
        %v1148 = vsub.s32 0, %v1147
        %v1149 = vrot.slane %v1135, %v1148
        %v1150 = vlaneseq
        %v1151 = vshrl.u32 %v1150, 7
        %v1152 = vsub.s32 0, %v1151
        %v1153 = vrot.slane %v1136, %v1152
        %v1154 = vlaneseq
        %v1155 = vshrl.u32 %v1154, 7
        %v1156 = vsub.s32 0, %v1155
        %v1157 = vrot.slane %v1137, %v1156
        %1162 = vmatprep.subr.mxu0 0.0
        %1163 = vmatpush1.msra.mxu0 %v1117
        %1164 = vmatprep.subr.mxu0 0.0
        %1165 = vmatpush1.msra.mxu0 %v1118
        %1166 = vmatprep.subr.mxu0 0.0
        %1167 = vmatpush1.msra.mxu0 %v1119
        %1168 = vmatprep.subr.mxu0 0.0
        %1169 = vmatpush1.msra.mxu0 %v1120
        %1170 = vmatprep.subr.mxu0 0.0
        %1171 = vmatpush1.msra.mxu0 0.0
        %1172 = vmatprep.subr.mxu0 0.0
        %1173 = vmatpush1.msra.mxu0 0.0
        %1174 = vmatprep.subr.mxu0 0.0
        %1175 = vmatpush1.msra.mxu0 0.0
        %1176 = vmatprep.subr.mxu0 0.0
        %1177 = vmatpush1.msra.mxu0 0.0
        %1178 = vmatprep.subr.mxu0 0.0
        %1179 = vmatpush1.msra.mxu0 0.0
        %1180 = vmatprep.subr.mxu0 0.0
        %1181 = vmatpush1.msra.mxu0 0.0
        %1182 = vmatprep.subr.mxu0 0.0
        %1183 = vmatpush1.msra.mxu0 0.0
        %1184 = vmatprep.subr.mxu0 0.0
        %1185 = vmatpush1.msra.mxu0 0.0
        %1186 = vmatprep.subr.mxu0 0.0
        %1187 = vmatpush1.msra.mxu0 0.0
        %1188 = vmatprep.subr.mxu0 0.0
        %1189 = vmatpush1.msra.mxu0 0.0
        %1190 = vmatprep.subr.mxu0 0.0
        %1191 = vmatpush1.msra.mxu0 0.0
        %1192 = vmatprep.subr.mxu0 0.0
        %1193 = vmatpush1.msra.mxu0 0.0
        %1194 = vmatprep.subr.mxu0 0.0
        %1195 = vmatpush1.msra.mxu0 0.0
        %1196 = vmatprep.subr.mxu0 0.0
        %1197 = vmatpush1.msra.mxu0 0.0
        %1198 = vmatprep.subr.mxu0 0.0
        %1199 = vmatpush1.msra.mxu0 0.0
        %1200 = vmatprep.subr.mxu0 0.0
        %1201 = vmatpush1.msra.mxu0 0.0
        %1202 = vmatprep.subr.mxu0 0.0
        %1203 = vmatpush1.msra.mxu0 0.0
        %1204 = vmatprep.subr.mxu0 0.0
        %1205 = vmatpush1.msra.mxu0 0.0
        %1206 = vmatprep.subr.mxu0 0.0
        %1207 = vmatpush1.msra.mxu0 0.0
        %1208 = vmatprep.subr.mxu0 0.0
        %1209 = vmatpush1.msra.mxu0 0.0
        %1210 = vmatprep.subr.mxu0 0.0
        %1211 = vmatpush1.msra.mxu0 0.0
        %1212 = vmatprep.subr.mxu0 0.0
        %1213 = vmatpush1.msra.mxu0 0.0
        %1214 = vmatprep.subr.mxu0 0.0
        %1215 = vmatpush1.msra.mxu0 0.0
        %1216 = vmatprep.subr.mxu0 0.0
        %1217 = vmatpush1.msra.mxu0 0.0
        %1218 = vmatprep.subr.mxu0 0.0
        %1219 = vmatpush1.msra.mxu0 0.0
        %1220 = vmatprep.subr.mxu0 0.0
        %1221 = vmatpush1.msra.mxu0 0.0
        %1222 = vmatprep.subr.mxu0 0.0
        %1223 = vmatpush1.msra.mxu0 0.0
        %1224 = vmatprep.subr.mxu0 0.0
        %1225 = vmatpush1.msra.mxu0 0.0
        %1226 = vmatprep.mubr.f32.mxu0 0.0
        %1227 = vmatmul.mubr.f32.gmra.mrb[0].mxu0 %v508
        %v1228 = vpop.f32.mrb[0].mxu0
        %v1229 = vadd.f32 %v1145, %v1228
        %v1230 = vpop.f32.mrb[0].mxu0
        %1231 = vdwg.mxu0
        %1232 = vmatprep.subr.mxu0 0.0
        %1233 = vmatpush1.msra.mxu0 %v1121
        %1234 = vmatprep.subr.mxu0 0.0
        %1235 = vmatpush1.msra.mxu0 %v1122
        %1236 = vmatprep.subr.mxu0 0.0
        %1237 = vmatpush1.msra.mxu0 %v1123
        %1238 = vmatprep.subr.mxu0 0.0
        %1239 = vmatpush1.msra.mxu0 %v1124
        %1240 = vmatprep.subr.mxu0 0.0
        %1241 = vmatpush1.msra.mxu0 0.0
        %1242 = vmatprep.subr.mxu0 0.0
        %1243 = vmatpush1.msra.mxu0 0.0
        %1244 = vmatprep.subr.mxu0 0.0
        %1245 = vmatpush1.msra.mxu0 0.0
        %1246 = vmatprep.subr.mxu0 0.0
        %1247 = vmatpush1.msra.mxu0 0.0
        %1248 = vmatprep.subr.mxu0 0.0
        %1249 = vmatpush1.msra.mxu0 0.0
        %1250 = vmatprep.subr.mxu0 0.0
        %1251 = vmatpush1.msra.mxu0 0.0
        %1252 = vmatprep.subr.mxu0 0.0
        %1253 = vmatpush1.msra.mxu0 0.0
        %1254 = vmatprep.subr.mxu0 0.0
        %1255 = vmatpush1.msra.mxu0 0.0
        %1256 = vmatprep.subr.mxu0 0.0
        %1257 = vmatpush1.msra.mxu0 0.0
        %1258 = vmatprep.subr.mxu0 0.0
        %1259 = vmatpush1.msra.mxu0 0.0
        %1260 = vmatprep.subr.mxu0 0.0
        %1261 = vmatpush1.msra.mxu0 0.0
        %1262 = vmatprep.subr.mxu0 0.0
        %1263 = vmatpush1.msra.mxu0 0.0
        %1264 = vmatprep.subr.mxu0 0.0
        %1265 = vmatpush1.msra.mxu0 0.0
        %1266 = vmatprep.subr.mxu0 0.0
        %1267 = vmatpush1.msra.mxu0 0.0
        %1268 = vmatprep.subr.mxu0 0.0
        %1269 = vmatpush1.msra.mxu0 0.0
        %1270 = vmatprep.subr.mxu0 0.0
        %1271 = vmatpush1.msra.mxu0 0.0
        %1272 = vmatprep.subr.mxu0 0.0
        %1273 = vmatpush1.msra.mxu0 0.0
        %1274 = vmatprep.subr.mxu0 0.0
        %1275 = vmatpush1.msra.mxu0 0.0
        %1276 = vmatprep.subr.mxu0 0.0
        %1277 = vmatpush1.msra.mxu0 0.0
        %1278 = vmatprep.subr.mxu0 0.0
        %1279 = vmatpush1.msra.mxu0 0.0
        %1280 = vmatprep.subr.mxu0 0.0
        %1281 = vmatpush1.msra.mxu0 0.0
        %1282 = vmatprep.subr.mxu0 0.0
        %1283 = vmatpush1.msra.mxu0 0.0
        %1284 = vmatprep.subr.mxu0 0.0
        %1285 = vmatpush1.msra.mxu0 0.0
        %1286 = vmatprep.subr.mxu0 0.0
        %1287 = vmatpush1.msra.mxu0 0.0
        %1288 = vmatprep.subr.mxu0 0.0
        %1289 = vmatpush1.msra.mxu0 0.0
        %1290 = vmatprep.subr.mxu0 0.0
        %1291 = vmatpush1.msra.mxu0 0.0
        %1292 = vmatprep.subr.mxu0 0.0
        %1293 = vmatpush1.msra.mxu0 0.0
        %1294 = vmatprep.subr.mxu0 0.0
        %1295 = vmatpush1.msra.mxu0 0.0
        %1296 = vmatprep.mubr.f32.mxu0 0.0
        %1297 = vmatmul.mubr.f32.gmra.mrb[0].mxu0 %v508
        %v1298 = vpop.f32.mrb[0].mxu0
        %v1299 = vadd.f32 %v1149, %v1298
        %v1300 = vpop.f32.mrb[0].mxu0
        %1301 = vdwg.mxu0
        %1302 = vmatprep.subr.mxu0 0.0
        %1303 = vmatpush1.msra.mxu0 %v1125
        %1304 = vmatprep.subr.mxu0 0.0
        %1305 = vmatpush1.msra.mxu0 %v1126
        %1306 = vmatprep.subr.mxu0 0.0
        %1307 = vmatpush1.msra.mxu0 %v1127
        %1308 = vmatprep.subr.mxu0 0.0
        %1309 = vmatpush1.msra.mxu0 %v1128
        %1310 = vmatprep.subr.mxu0 0.0
        %1311 = vmatpush1.msra.mxu0 0.0
        %1312 = vmatprep.subr.mxu0 0.0
        %1313 = vmatpush1.msra.mxu0 0.0
        %1314 = vmatprep.subr.mxu0 0.0
        %1315 = vmatpush1.msra.mxu0 0.0
        %1316 = vmatprep.subr.mxu0 0.0
        %1317 = vmatpush1.msra.mxu0 0.0
        %1318 = vmatprep.subr.mxu0 0.0
        %1319 = vmatpush1.msra.mxu0 0.0
        %1320 = vmatprep.subr.mxu0 0.0
        %1321 = vmatpush1.msra.mxu0 0.0
        %1322 = vmatprep.subr.mxu0 0.0
        %1323 = vmatpush1.msra.mxu0 0.0
        %1324 = vmatprep.subr.mxu0 0.0
        %1325 = vmatpush1.msra.mxu0 0.0
        %1326 = vmatprep.subr.mxu0 0.0
        %1327 = vmatpush1.msra.mxu0 0.0
        %1328 = vmatprep.subr.mxu0 0.0
        %1329 = vmatpush1.msra.mxu0 0.0
        %1330 = vmatprep.subr.mxu0 0.0
        %1331 = vmatpush1.msra.mxu0 0.0
        %1332 = vmatprep.subr.mxu0 0.0
        %1333 = vmatpush1.msra.mxu0 0.0
        %1334 = vmatprep.subr.mxu0 0.0
        %1335 = vmatpush1.msra.mxu0 0.0
        %1336 = vmatprep.subr.mxu0 0.0
        %1337 = vmatpush1.msra.mxu0 0.0
        %1338 = vmatprep.subr.mxu0 0.0
        %1339 = vmatpush1.msra.mxu0 0.0
        %1340 = vmatprep.subr.mxu0 0.0
        %1341 = vmatpush1.msra.mxu0 0.0
        %1342 = vmatprep.subr.mxu0 0.0
        %1343 = vmatpush1.msra.mxu0 0.0
        %1344 = vmatprep.subr.mxu0 0.0
        %1345 = vmatpush1.msra.mxu0 0.0
        %1346 = vmatprep.subr.mxu0 0.0
        %1347 = vmatpush1.msra.mxu0 0.0
        %1348 = vmatprep.subr.mxu0 0.0
        %1349 = vmatpush1.msra.mxu0 0.0
        %1350 = vmatprep.subr.mxu0 0.0
        %1351 = vmatpush1.msra.mxu0 0.0
        %1352 = vmatprep.subr.mxu0 0.0
        %1353 = vmatpush1.msra.mxu0 0.0
        %1354 = vmatprep.subr.mxu0 0.0
        %1355 = vmatpush1.msra.mxu0 0.0
        %1356 = vmatprep.subr.mxu0 0.0
        %1357 = vmatpush1.msra.mxu0 0.0
        %1358 = vmatprep.subr.mxu0 0.0
        %1359 = vmatpush1.msra.mxu0 0.0
        %1360 = vmatprep.subr.mxu0 0.0
        %1361 = vmatpush1.msra.mxu0 0.0
        %1362 = vmatprep.subr.mxu0 0.0
        %1363 = vmatpush1.msra.mxu0 0.0
        %1364 = vmatprep.subr.mxu0 0.0
        %1365 = vmatpush1.msra.mxu0 0.0
        %1366 = vmatprep.mubr.f32.mxu0 0.0
        %1367 = vmatmul.mubr.f32.gmra.mrb[0].mxu0 %v508
        %v1368 = vpop.f32.mrb[0].mxu0
        %v1369 = vadd.f32 %v1153, %v1368
        %v1370 = vpop.f32.mrb[0].mxu0
        %1371 = vdwg.mxu0
        %1372 = vmatprep.subr.mxu0 0.0
        %1373 = vmatpush1.msra.mxu0 %v1129
        %1374 = vmatprep.subr.mxu0 0.0
        %1375 = vmatpush1.msra.mxu0 %v1130
        %1376 = vmatprep.subr.mxu0 0.0
        %1377 = vmatpush1.msra.mxu0 %v1131
        %1378 = vmatprep.subr.mxu0 0.0
        %1379 = vmatpush1.msra.mxu0 %v1132
        %1380 = vmatprep.subr.mxu0 0.0
        %1381 = vmatpush1.msra.mxu0 0.0
        %1382 = vmatprep.subr.mxu0 0.0
        %1383 = vmatpush1.msra.mxu0 0.0
        %1384 = vmatprep.subr.mxu0 0.0
        %1385 = vmatpush1.msra.mxu0 0.0
        %1386 = vmatprep.subr.mxu0 0.0
        %1387 = vmatpush1.msra.mxu0 0.0
        %1388 = vmatprep.subr.mxu0 0.0
        %1389 = vmatpush1.msra.mxu0 0.0
        %1390 = vmatprep.subr.mxu0 0.0
        %1391 = vmatpush1.msra.mxu0 0.0
        %1392 = vmatprep.subr.mxu0 0.0
        %1393 = vmatpush1.msra.mxu0 0.0
        %1394 = vmatprep.subr.mxu0 0.0
        %1395 = vmatpush1.msra.mxu0 0.0
        %1396 = vmatprep.subr.mxu0 0.0
        %1397 = vmatpush1.msra.mxu0 0.0
        %1398 = vmatprep.subr.mxu0 0.0
        %1399 = vmatpush1.msra.mxu0 0.0
        %1400 = vmatprep.subr.mxu0 0.0
        %1401 = vmatpush1.msra.mxu0 0.0
        %1402 = vmatprep.subr.mxu0 0.0
        %1403 = vmatpush1.msra.mxu0 0.0
        %1404 = vmatprep.subr.mxu0 0.0
        %1405 = vmatpush1.msra.mxu0 0.0
        %1406 = vmatprep.subr.mxu0 0.0
        %1407 = vmatpush1.msra.mxu0 0.0
        %1408 = vmatprep.subr.mxu0 0.0
        %1409 = vmatpush1.msra.mxu0 0.0
        %1410 = vmatprep.subr.mxu0 0.0
        %1411 = vmatpush1.msra.mxu0 0.0
        %1412 = vmatprep.subr.mxu0 0.0
        %1413 = vmatpush1.msra.mxu0 0.0
        %1414 = vmatprep.subr.mxu0 0.0
        %1415 = vmatpush1.msra.mxu0 0.0
        %1416 = vmatprep.subr.mxu0 0.0
        %1417 = vmatpush1.msra.mxu0 0.0
        %1418 = vmatprep.subr.mxu0 0.0
        %1419 = vmatpush1.msra.mxu0 0.0
        %1420 = vmatprep.subr.mxu0 0.0
        %1421 = vmatpush1.msra.mxu0 0.0
        %1422 = vmatprep.subr.mxu0 0.0
        %1423 = vmatpush1.msra.mxu0 0.0
        %1424 = vmatprep.subr.mxu0 0.0
        %1425 = vmatpush1.msra.mxu0 0.0
        %1426 = vmatprep.subr.mxu0 0.0
        %1427 = vmatpush1.msra.mxu0 0.0
        %1428 = vmatprep.subr.mxu0 0.0
        %1429 = vmatpush1.msra.mxu0 0.0
        %1430 = vmatprep.subr.mxu0 0.0
        %1431 = vmatpush1.msra.mxu0 0.0
        %1432 = vmatprep.subr.mxu0 0.0
        %1433 = vmatpush1.msra.mxu0 0.0
        %1434 = vmatprep.subr.mxu0 0.0
        %1435 = vmatpush1.msra.mxu0 0.0
        %1436 = vmatprep.mubr.f32.mxu0 0.0
        %1437 = vmatmul.mubr.f32.gmra.mrb[0].mxu0 %v508
        %v1438 = vpop.f32.mrb[0].mxu0
        %v1439 = vadd.f32 %v1157, %v1438
        %v1440 = vpop.f32.mrb[0].mxu0
        %1441 = vdwg.mxu0
        %vm1442 = vcmask 64512
        %v1444 = vsel %vm1442, %v577, 0
        %v1447 = vsel %vm1442, %v903, 0
        %1449 = vmatprep.subr.mxu0 0.0
        %1450 = vmatpush1.xpose.msra.mxu0 %v1447
        %1451 = vmatprep.subr.mxu0 0.0
        %1452 = vmatpush1.xpose.msra.mxu0 0.0
        %1453 = vmatprep.subr.mxu0 0.0
        %1454 = vmatpush1.xpose.msra.mxu0 0.0
        %1455 = vmatprep.subr.mxu0 0.0
        %1456 = vmatpush1.xpose.msra.mxu0 0.0
        %1457 = vmatprep.subr.mxu0 0.0
        %1458 = vmatpush1.xpose.msra.mxu0 0.0
        %1459 = vmatprep.subr.mxu0 0.0
        %1460 = vmatpush1.xpose.msra.mxu0 0.0
        %1461 = vmatprep.subr.mxu0 0.0
        %1462 = vmatpush1.xpose.msra.mxu0 0.0
        %1463 = vmatprep.subr.mxu0 0.0
        %1464 = vmatpush1.xpose.msra.mxu0 0.0
        %1465 = vmatprep.subr.mxu0 0.0
        %1466 = vmatpush1.xpose.msra.mxu0 0.0
        %1467 = vmatprep.subr.mxu0 0.0
        %1468 = vmatpush1.xpose.msra.mxu0 0.0
        %1469 = vmatprep.subr.mxu0 0.0
        %1470 = vmatpush1.xpose.msra.mxu0 0.0
        %1471 = vmatprep.subr.mxu0 0.0
        %1472 = vmatpush1.xpose.msra.mxu0 0.0
        %1473 = vmatprep.subr.mxu0 0.0
        %1474 = vmatpush1.xpose.msra.mxu0 0.0
        %1475 = vmatprep.subr.mxu0 0.0
        %1476 = vmatpush1.xpose.msra.mxu0 0.0
        %1477 = vmatprep.subr.mxu0 0.0
        %1478 = vmatpush1.xpose.msra.mxu0 0.0
        %1479 = vmatprep.subr.mxu0 0.0
        %1480 = vmatpush1.xpose.msra.mxu0 0.0
        %1481 = vmatprep.subr.mxu0 0.0
        %1482 = vmatpush1.xpose.msra.mxu0 0.0
        %1483 = vmatprep.subr.mxu0 0.0
        %1484 = vmatpush1.xpose.msra.mxu0 0.0
        %1485 = vmatprep.subr.mxu0 0.0
        %1486 = vmatpush1.xpose.msra.mxu0 0.0
        %1487 = vmatprep.subr.mxu0 0.0
        %1488 = vmatpush1.xpose.msra.mxu0 0.0
        %1489 = vmatprep.subr.mxu0 0.0
        %1490 = vmatpush1.xpose.msra.mxu0 0.0
        %1491 = vmatprep.subr.mxu0 0.0
        %1492 = vmatpush1.xpose.msra.mxu0 0.0
        %1493 = vmatprep.subr.mxu0 0.0
        %1494 = vmatpush1.xpose.msra.mxu0 0.0
        %1495 = vmatprep.subr.mxu0 0.0
        %1496 = vmatpush1.xpose.msra.mxu0 0.0
        %1497 = vmatprep.subr.mxu0 0.0
        %1498 = vmatpush1.xpose.msra.mxu0 0.0
        %1499 = vmatprep.subr.mxu0 0.0
        %1500 = vmatpush1.xpose.msra.mxu0 0.0
        %1501 = vmatprep.subr.mxu0 0.0
        %1502 = vmatpush1.xpose.msra.mxu0 0.0
        %1503 = vmatprep.subr.mxu0 0.0
        %1504 = vmatpush1.xpose.msra.mxu0 0.0
        %1505 = vmatprep.subr.mxu0 0.0
        %1506 = vmatpush1.xpose.msra.mxu0 0.0
        %1507 = vmatprep.subr.mxu0 0.0
        %1508 = vmatpush1.xpose.msra.mxu0 0.0
        %1509 = vmatprep.subr.mxu0 0.0
        %1510 = vmatpush1.xpose.msra.mxu0 0.0
        %1511 = vmatprep.subr.mxu0 0.0
        %1512 = vmatpush1.xpose.msra.mxu0 0.0
        %1513 = vmatprep.mubr.f32.mxu0 0.0
        %1514 = vmatmul.mubr.f32.gmra.mrb[0].mxu0 %v1444
        %v1515 = vpop.f32.mrb[0].mxu0
        %v1516 = vadd.f32 0.0, %v1515
        %v1517 = vpop.f32.mrb[0].mxu0
        %1518 = vdwg.mxu0
        %v1520 = vsel %vm1442, %v647, 0
        %v1523 = vsel %vm1442, %v973, 0
        %1525 = vmatprep.subr.mxu0 0.0
        %1526 = vmatpush1.xpose.msra.mxu0 %v1523
        %1527 = vmatprep.subr.mxu0 0.0
        %1528 = vmatpush1.xpose.msra.mxu0 0.0
        %1529 = vmatprep.subr.mxu0 0.0
        %1530 = vmatpush1.xpose.msra.mxu0 0.0
        %1531 = vmatprep.subr.mxu0 0.0
        %1532 = vmatpush1.xpose.msra.mxu0 0.0
        %1533 = vmatprep.subr.mxu0 0.0
        %1534 = vmatpush1.xpose.msra.mxu0 0.0
        %1535 = vmatprep.subr.mxu0 0.0
        %1536 = vmatpush1.xpose.msra.mxu0 0.0
        %1537 = vmatprep.subr.mxu0 0.0
        %1538 = vmatpush1.xpose.msra.mxu0 0.0
        %1539 = vmatprep.subr.mxu0 0.0
        %1540 = vmatpush1.xpose.msra.mxu0 0.0
        %1541 = vmatprep.subr.mxu0 0.0
        %1542 = vmatpush1.xpose.msra.mxu0 0.0
        %1543 = vmatprep.subr.mxu0 0.0
        %1544 = vmatpush1.xpose.msra.mxu0 0.0
        %1545 = vmatprep.subr.mxu0 0.0
        %1546 = vmatpush1.xpose.msra.mxu0 0.0
        %1547 = vmatprep.subr.mxu0 0.0
        %1548 = vmatpush1.xpose.msra.mxu0 0.0
        %1549 = vmatprep.subr.mxu0 0.0
        %1550 = vmatpush1.xpose.msra.mxu0 0.0
        %1551 = vmatprep.subr.mxu0 0.0
        %1552 = vmatpush1.xpose.msra.mxu0 0.0
        %1553 = vmatprep.subr.mxu0 0.0
        %1554 = vmatpush1.xpose.msra.mxu0 0.0
        %1555 = vmatprep.subr.mxu0 0.0
        %1556 = vmatpush1.xpose.msra.mxu0 0.0
        %1557 = vmatprep.subr.mxu0 0.0
        %1558 = vmatpush1.xpose.msra.mxu0 0.0
        %1559 = vmatprep.subr.mxu0 0.0
        %1560 = vmatpush1.xpose.msra.mxu0 0.0
        %1561 = vmatprep.subr.mxu0 0.0
        %1562 = vmatpush1.xpose.msra.mxu0 0.0
        %1563 = vmatprep.subr.mxu0 0.0
        %1564 = vmatpush1.xpose.msra.mxu0 0.0
        %1565 = vmatprep.subr.mxu0 0.0
        %1566 = vmatpush1.xpose.msra.mxu0 0.0
        %1567 = vmatprep.subr.mxu0 0.0
        %1568 = vmatpush1.xpose.msra.mxu0 0.0
        %1569 = vmatprep.subr.mxu0 0.0
        %1570 = vmatpush1.xpose.msra.mxu0 0.0
        %1571 = vmatprep.subr.mxu0 0.0
        %1572 = vmatpush1.xpose.msra.mxu0 0.0
        %1573 = vmatprep.subr.mxu0 0.0
        %1574 = vmatpush1.xpose.msra.mxu0 0.0
        %1575 = vmatprep.subr.mxu0 0.0
        %1576 = vmatpush1.xpose.msra.mxu0 0.0
        %1577 = vmatprep.subr.mxu0 0.0
        %1578 = vmatpush1.xpose.msra.mxu0 0.0
        %1579 = vmatprep.subr.mxu0 0.0
        %1580 = vmatpush1.xpose.msra.mxu0 0.0
        %1581 = vmatprep.subr.mxu0 0.0
        %1582 = vmatpush1.xpose.msra.mxu0 0.0
        %1583 = vmatprep.subr.mxu0 0.0
        %1584 = vmatpush1.xpose.msra.mxu0 0.0
        %1585 = vmatprep.subr.mxu0 0.0
        %1586 = vmatpush1.xpose.msra.mxu0 0.0
        %1587 = vmatprep.subr.mxu0 0.0
        %1588 = vmatpush1.xpose.msra.mxu0 0.0
        %1589 = vmatprep.mubr.f32.mxu0 0.0
        %1590 = vmatmul.mubr.f32.gmra.mrb[0].mxu0 %v1520
        %v1591 = vpop.f32.mrb[0].mxu0
        %v1592 = vadd.f32 0.0, %v1591
        %v1593 = vpop.f32.mrb[0].mxu0
        %1594 = vdwg.mxu0
        %v1596 = vsel %vm1442, %v717, 0
        %v1599 = vsel %vm1442, %v1043, 0
        %1601 = vmatprep.subr.mxu0 0.0
        %1602 = vmatpush1.xpose.msra.mxu0 %v1599
        %1603 = vmatprep.subr.mxu0 0.0
        %1604 = vmatpush1.xpose.msra.mxu0 0.0
        %1605 = vmatprep.subr.mxu0 0.0
        %1606 = vmatpush1.xpose.msra.mxu0 0.0
        %1607 = vmatprep.subr.mxu0 0.0
        %1608 = vmatpush1.xpose.msra.mxu0 0.0
        %1609 = vmatprep.subr.mxu0 0.0
        %1610 = vmatpush1.xpose.msra.mxu0 0.0
        %1611 = vmatprep.subr.mxu0 0.0
        %1612 = vmatpush1.xpose.msra.mxu0 0.0
        %1613 = vmatprep.subr.mxu0 0.0
        %1614 = vmatpush1.xpose.msra.mxu0 0.0
        %1615 = vmatprep.subr.mxu0 0.0
        %1616 = vmatpush1.xpose.msra.mxu0 0.0
        %1617 = vmatprep.subr.mxu0 0.0
        %1618 = vmatpush1.xpose.msra.mxu0 0.0
        %1619 = vmatprep.subr.mxu0 0.0
        %1620 = vmatpush1.xpose.msra.mxu0 0.0
        %1621 = vmatprep.subr.mxu0 0.0
        %1622 = vmatpush1.xpose.msra.mxu0 0.0
        %1623 = vmatprep.subr.mxu0 0.0
        %1624 = vmatpush1.xpose.msra.mxu0 0.0
        %1625 = vmatprep.subr.mxu0 0.0
        %1626 = vmatpush1.xpose.msra.mxu0 0.0
        %1627 = vmatprep.subr.mxu0 0.0
        %1628 = vmatpush1.xpose.msra.mxu0 0.0
        %1629 = vmatprep.subr.mxu0 0.0
        %1630 = vmatpush1.xpose.msra.mxu0 0.0
        %1631 = vmatprep.subr.mxu0 0.0
        %1632 = vmatpush1.xpose.msra.mxu0 0.0
        %1633 = vmatprep.subr.mxu0 0.0
        %1634 = vmatpush1.xpose.msra.mxu0 0.0
        %1635 = vmatprep.subr.mxu0 0.0
        %1636 = vmatpush1.xpose.msra.mxu0 0.0
        %1637 = vmatprep.subr.mxu0 0.0
        %1638 = vmatpush1.xpose.msra.mxu0 0.0
        %1639 = vmatprep.subr.mxu0 0.0
        %1640 = vmatpush1.xpose.msra.mxu0 0.0
        %1641 = vmatprep.subr.mxu0 0.0
        %1642 = vmatpush1.xpose.msra.mxu0 0.0
        %1643 = vmatprep.subr.mxu0 0.0
        %1644 = vmatpush1.xpose.msra.mxu0 0.0
        %1645 = vmatprep.subr.mxu0 0.0
        %1646 = vmatpush1.xpose.msra.mxu0 0.0
        %1647 = vmatprep.subr.mxu0 0.0
        %1648 = vmatpush1.xpose.msra.mxu0 0.0
        %1649 = vmatprep.subr.mxu0 0.0
        %1650 = vmatpush1.xpose.msra.mxu0 0.0
        %1651 = vmatprep.subr.mxu0 0.0
        %1652 = vmatpush1.xpose.msra.mxu0 0.0
        %1653 = vmatprep.subr.mxu0 0.0
        %1654 = vmatpush1.xpose.msra.mxu0 0.0
        %1655 = vmatprep.subr.mxu0 0.0
        %1656 = vmatpush1.xpose.msra.mxu0 0.0
        %1657 = vmatprep.subr.mxu0 0.0
        %1658 = vmatpush1.xpose.msra.mxu0 0.0
        %1659 = vmatprep.subr.mxu0 0.0
        %1660 = vmatpush1.xpose.msra.mxu0 0.0
        %1661 = vmatprep.subr.mxu0 0.0
        %1662 = vmatpush1.xpose.msra.mxu0 0.0
        %1663 = vmatprep.subr.mxu0 0.0
        %1664 = vmatpush1.xpose.msra.mxu0 0.0
        %1665 = vmatprep.mubr.f32.mxu0 0.0
        %1666 = vmatmul.mubr.f32.gmra.mrb[0].mxu0 %v1596
        %v1667 = vpop.f32.mrb[0].mxu0
        %v1668 = vadd.f32 0.0, %v1667
        %v1669 = vpop.f32.mrb[0].mxu0
        %1670 = vdwg.mxu0
        %v1672 = vsel %vm1442, %v787, 0
        %v1675 = vsel %vm1442, %v1113, 0
        %1677 = vmatprep.subr.mxu0 0.0
        %1678 = vmatpush1.xpose.msra.mxu0 %v1675
        %1679 = vmatprep.subr.mxu0 0.0
        %1680 = vmatpush1.xpose.msra.mxu0 0.0
        %1681 = vmatprep.subr.mxu0 0.0
        %1682 = vmatpush1.xpose.msra.mxu0 0.0
        %1683 = vmatprep.subr.mxu0 0.0
        %1684 = vmatpush1.xpose.msra.mxu0 0.0
        %1685 = vmatprep.subr.mxu0 0.0
        %1686 = vmatpush1.xpose.msra.mxu0 0.0
        %1687 = vmatprep.subr.mxu0 0.0
        %1688 = vmatpush1.xpose.msra.mxu0 0.0
        %1689 = vmatprep.subr.mxu0 0.0
        %1690 = vmatpush1.xpose.msra.mxu0 0.0
        %1691 = vmatprep.subr.mxu0 0.0
        %1692 = vmatpush1.xpose.msra.mxu0 0.0
        %1693 = vmatprep.subr.mxu0 0.0
        %1694 = vmatpush1.xpose.msra.mxu0 0.0
        %1695 = vmatprep.subr.mxu0 0.0
        %1696 = vmatpush1.xpose.msra.mxu0 0.0
        %1697 = vmatprep.subr.mxu0 0.0
        %1698 = vmatpush1.xpose.msra.mxu0 0.0
        %1699 = vmatprep.subr.mxu0 0.0
        %1700 = vmatpush1.xpose.msra.mxu0 0.0
        %1701 = vmatprep.subr.mxu0 0.0
        %1702 = vmatpush1.xpose.msra.mxu0 0.0
        %1703 = vmatprep.subr.mxu0 0.0
        %1704 = vmatpush1.xpose.msra.mxu0 0.0
        %1705 = vmatprep.subr.mxu0 0.0
        %1706 = vmatpush1.xpose.msra.mxu0 0.0
        %1707 = vmatprep.subr.mxu0 0.0
        %1708 = vmatpush1.xpose.msra.mxu0 0.0
        %1709 = vmatprep.subr.mxu0 0.0
        %1710 = vmatpush1.xpose.msra.mxu0 0.0
        %1711 = vmatprep.subr.mxu0 0.0
        %1712 = vmatpush1.xpose.msra.mxu0 0.0
        %1713 = vmatprep.subr.mxu0 0.0
        %1714 = vmatpush1.xpose.msra.mxu0 0.0
        %1715 = vmatprep.subr.mxu0 0.0
        %1716 = vmatpush1.xpose.msra.mxu0 0.0
        %1717 = vmatprep.subr.mxu0 0.0
        %1718 = vmatpush1.xpose.msra.mxu0 0.0
        %1719 = vmatprep.subr.mxu0 0.0
        %1720 = vmatpush1.xpose.msra.mxu0 0.0
        %1721 = vmatprep.subr.mxu0 0.0
        %1722 = vmatpush1.xpose.msra.mxu0 0.0
        %1723 = vmatprep.subr.mxu0 0.0
        %1724 = vmatpush1.xpose.msra.mxu0 0.0
        %1725 = vmatprep.subr.mxu0 0.0
        %1726 = vmatpush1.xpose.msra.mxu0 0.0
        %1727 = vmatprep.subr.mxu0 0.0
        %1728 = vmatpush1.xpose.msra.mxu0 0.0
        %1729 = vmatprep.subr.mxu0 0.0
        %1730 = vmatpush1.xpose.msra.mxu0 0.0
        %1731 = vmatprep.subr.mxu0 0.0
        %1732 = vmatpush1.xpose.msra.mxu0 0.0
        %1733 = vmatprep.subr.mxu0 0.0
        %1734 = vmatpush1.xpose.msra.mxu0 0.0
        %1735 = vmatprep.subr.mxu0 0.0
        %1736 = vmatpush1.xpose.msra.mxu0 0.0
        %1737 = vmatprep.subr.mxu0 0.0
        %1738 = vmatpush1.xpose.msra.mxu0 0.0
        %1739 = vmatprep.subr.mxu0 0.0
        %1740 = vmatpush1.xpose.msra.mxu0 0.0
        %1741 = vmatprep.mubr.f32.mxu0 0.0
        %1742 = vmatmul.mubr.f32.gmra.mrb[0].mxu0 %v1672
        %v1743 = vpop.f32.mrb[0].mxu0
        %v1744 = vadd.f32 0.0, %v1743
        %v1745 = vpop.f32.mrb[0].mxu0
        %1746 = vdwg.mxu0
        %v1747 = vmul.f32 %v1516, 0.35355338
        %v1748 = vmul.f32 %v1592, 0.35355338
        %v1749 = vmul.f32 %v1668, 0.35355338
        %v1750 = vmul.f32 %v1744, 0.35355338
        %v1752 = vlaneseq
        %v1753 = vshrl.u32 %v1752, 7
        %v1754 = vsub.s32 0, %v1753
        %v1755 = vrot.slane %v456, %v1754
        %v1757 = vadd.f32 %v1747, %v1755
        %v1758 = vadd.f32 %v1748, %v1755
        %v1759 = vadd.f32 %v1749, %v1755
        %v1760 = vadd.f32 %v1750, %v1755
        %v1761 = vsel %vm1442, %v1757, -inf
        %1762 = vmax.xlane.f32.xlu0 %v1761
        %v1763 = vpop.xlane.xlu0 %1762
        %v1764 = vsel %vm1442, %v1758, -inf
        %1765 = vmax.xlane.f32.xlu0 %v1764
        %v1766 = vpop.xlane.xlu0 %1765
        %v1767 = vsel %vm1442, %v1759, -inf
        %1768 = vmax.xlane.f32.xlu0 %v1767
        %v1769 = vpop.xlane.xlu0 %1768
        %v1770 = vsel %vm1442, %v1760, -inf
        %1771 = vmax.xlane.f32.xlu0 %v1770
        %v1772 = vpop.xlane.xlu0 %1771
        %v1773 = vsub.f32 %v1757, %v1763
        %v1774 = vsub.f32 %v1758, %v1766
        %v1775 = vsub.f32 %v1759, %v1769
        %v1776 = vsub.f32 %v1760, %v1772
        %v1777 = vmul.f32 %v1773, 1.442695
        %v1778 = vpow.pop %v1777
        %v1779 = vmul.f32 %v1774, 1.442695
        %v1780 = vpow.pop %v1779
        %v1781 = vmul.f32 %v1775, 1.442695
        %v1782 = vpow.pop %v1781
        %v1783 = vmul.f32 %v1776, 1.442695
        %v1784 = vpow.pop %v1783
        %v1785 = vsel %vm1442, %v1778, 0.0
        %1786 = vadd.xlane.f32.xlu0 %v1785
        %v1787 = vpop.xlane.xlu0 %1786
        %v1788 = vsel %vm1442, %v1780, 0.0
        %1789 = vadd.xlane.f32.xlu0 %v1788
        %v1790 = vpop.xlane.xlu0 %1789
        %v1791 = vsel %vm1442, %v1782, 0.0
        %1792 = vadd.xlane.f32.xlu0 %v1791
        %v1793 = vpop.xlane.xlu0 %1792
        %v1794 = vsel %vm1442, %v1784, 0.0
        %1795 = vadd.xlane.f32.xlu0 %v1794
        %v1796 = vpop.xlane.xlu0 %1795
        %v1797 = vrcp.pop %v1787
        %v1798 = vrcp.pop %v1790
        %v1799 = vrcp.pop %v1793
        %v1800 = vrcp.pop %v1796
        %v1801 = vmul.f32 %v1778, %v1797
        %v1802 = vmul.f32 %v1780, %v1798
        %v1803 = vmul.f32 %v1782, %v1799
        %v1804 = vmul.f32 %v1784, %v1800
        %v1806 = vsel %vm1442, %v1801, 0
        %1808 = vmatprep.subr.mxu0 0.0
        %1809 = vmatpush1.msra.mxu0 %v1229
        %1810 = vmatprep.subr.mxu0 0.0
        %1811 = vmatpush1.msra.mxu0 0.0
        %1812 = vmatprep.subr.mxu0 0.0
        %1813 = vmatpush1.msra.mxu0 0.0
        %1814 = vmatprep.subr.mxu0 0.0
        %1815 = vmatpush1.msra.mxu0 0.0
        %1816 = vmatprep.subr.mxu0 0.0
        %1817 = vmatpush1.msra.mxu0 0.0
        %1818 = vmatprep.subr.mxu0 0.0
        %1819 = vmatpush1.msra.mxu0 0.0
        %1820 = vmatprep.subr.mxu0 0.0
        %1821 = vmatpush1.msra.mxu0 0.0
        %1822 = vmatprep.subr.mxu0 0.0
        %1823 = vmatpush1.msra.mxu0 0.0
        %1824 = vmatprep.subr.mxu0 0.0
        %1825 = vmatpush1.msra.mxu0 0.0
        %1826 = vmatprep.subr.mxu0 0.0
        %1827 = vmatpush1.msra.mxu0 0.0
        %1828 = vmatprep.subr.mxu0 0.0
        %1829 = vmatpush1.msra.mxu0 0.0
        %1830 = vmatprep.subr.mxu0 0.0
        %1831 = vmatpush1.msra.mxu0 0.0
        %1832 = vmatprep.subr.mxu0 0.0
        %1833 = vmatpush1.msra.mxu0 0.0
        %1834 = vmatprep.subr.mxu0 0.0
        %1835 = vmatpush1.msra.mxu0 0.0
        %1836 = vmatprep.subr.mxu0 0.0
        %1837 = vmatpush1.msra.mxu0 0.0
        %1838 = vmatprep.subr.mxu0 0.0
        %1839 = vmatpush1.msra.mxu0 0.0
        %1840 = vmatprep.subr.mxu0 0.0
        %1841 = vmatpush1.msra.mxu0 0.0
        %1842 = vmatprep.subr.mxu0 0.0
        %1843 = vmatpush1.msra.mxu0 0.0
        %1844 = vmatprep.subr.mxu0 0.0
        %1845 = vmatpush1.msra.mxu0 0.0
        %1846 = vmatprep.subr.mxu0 0.0
        %1847 = vmatpush1.msra.mxu0 0.0
        %1848 = vmatprep.subr.mxu0 0.0
        %1849 = vmatpush1.msra.mxu0 0.0
        %1850 = vmatprep.subr.mxu0 0.0
        %1851 = vmatpush1.msra.mxu0 0.0
        %1852 = vmatprep.subr.mxu0 0.0
        %1853 = vmatpush1.msra.mxu0 0.0
        %1854 = vmatprep.subr.mxu0 0.0
        %1855 = vmatpush1.msra.mxu0 0.0
        %1856 = vmatprep.subr.mxu0 0.0
        %1857 = vmatpush1.msra.mxu0 0.0
        %1858 = vmatprep.subr.mxu0 0.0
        %1859 = vmatpush1.msra.mxu0 0.0
        %1860 = vmatprep.subr.mxu0 0.0
        %1861 = vmatpush1.msra.mxu0 0.0
        %1862 = vmatprep.subr.mxu0 0.0
        %1863 = vmatpush1.msra.mxu0 0.0
        %1864 = vmatprep.subr.mxu0 0.0
        %1865 = vmatpush1.msra.mxu0 0.0
        %1866 = vmatprep.subr.mxu0 0.0
        %1867 = vmatpush1.msra.mxu0 0.0
        %1868 = vmatprep.subr.mxu0 0.0
        %1869 = vmatpush1.msra.mxu0 0.0
        %1870 = vmatprep.subr.mxu0 0.0
        %1871 = vmatpush1.msra.mxu0 0.0
        %1872 = vmatprep.mubr.f32.mxu0 0.0
        %1873 = vmatmul.mubr.f32.gmra.mrb[0].mxu0 %v1806
        %v1874 = vpop.f32.mrb[0].mxu0
        %v1875 = vadd.f32 0.0, %v1874
        %v1876 = vpop.f32.mrb[0].mxu0
        %1877 = vdwg.mxu0
        %v1879 = vsel %vm1442, %v1802, 0
        %1881 = vmatprep.subr.mxu0 0.0
        %1882 = vmatpush1.msra.mxu0 %v1299
        %1883 = vmatprep.subr.mxu0 0.0
        %1884 = vmatpush1.msra.mxu0 0.0
        %1885 = vmatprep.subr.mxu0 0.0
        %1886 = vmatpush1.msra.mxu0 0.0
        %1887 = vmatprep.subr.mxu0 0.0
        %1888 = vmatpush1.msra.mxu0 0.0
        %1889 = vmatprep.subr.mxu0 0.0
        %1890 = vmatpush1.msra.mxu0 0.0
        %1891 = vmatprep.subr.mxu0 0.0
        %1892 = vmatpush1.msra.mxu0 0.0
        %1893 = vmatprep.subr.mxu0 0.0
        %1894 = vmatpush1.msra.mxu0 0.0
        %1895 = vmatprep.subr.mxu0 0.0
        %1896 = vmatpush1.msra.mxu0 0.0
        %1897 = vmatprep.subr.mxu0 0.0
        %1898 = vmatpush1.msra.mxu0 0.0
        %1899 = vmatprep.subr.mxu0 0.0
        %1900 = vmatpush1.msra.mxu0 0.0
        %1901 = vmatprep.subr.mxu0 0.0
        %1902 = vmatpush1.msra.mxu0 0.0
        %1903 = vmatprep.subr.mxu0 0.0
        %1904 = vmatpush1.msra.mxu0 0.0
        %1905 = vmatprep.subr.mxu0 0.0
        %1906 = vmatpush1.msra.mxu0 0.0
        %1907 = vmatprep.subr.mxu0 0.0
        %1908 = vmatpush1.msra.mxu0 0.0
        %1909 = vmatprep.subr.mxu0 0.0
        %1910 = vmatpush1.msra.mxu0 0.0
        %1911 = vmatprep.subr.mxu0 0.0
        %1912 = vmatpush1.msra.mxu0 0.0
        %1913 = vmatprep.subr.mxu0 0.0
        %1914 = vmatpush1.msra.mxu0 0.0
        %1915 = vmatprep.subr.mxu0 0.0
        %1916 = vmatpush1.msra.mxu0 0.0
        %1917 = vmatprep.subr.mxu0 0.0
        %1918 = vmatpush1.msra.mxu0 0.0
        %1919 = vmatprep.subr.mxu0 0.0
        %1920 = vmatpush1.msra.mxu0 0.0
        %1921 = vmatprep.subr.mxu0 0.0
        %1922 = vmatpush1.msra.mxu0 0.0
        %1923 = vmatprep.subr.mxu0 0.0
        %1924 = vmatpush1.msra.mxu0 0.0
        %1925 = vmatprep.subr.mxu0 0.0
        %1926 = vmatpush1.msra.mxu0 0.0
        %1927 = vmatprep.subr.mxu0 0.0
        %1928 = vmatpush1.msra.mxu0 0.0
        %1929 = vmatprep.subr.mxu0 0.0
        %1930 = vmatpush1.msra.mxu0 0.0
        %1931 = vmatprep.subr.mxu0 0.0
        %1932 = vmatpush1.msra.mxu0 0.0
        %1933 = vmatprep.subr.mxu0 0.0
        %1934 = vmatpush1.msra.mxu0 0.0
        %1935 = vmatprep.subr.mxu0 0.0
        %1936 = vmatpush1.msra.mxu0 0.0
        %1937 = vmatprep.subr.mxu0 0.0
        %1938 = vmatpush1.msra.mxu0 0.0
        %1939 = vmatprep.subr.mxu0 0.0
        %1940 = vmatpush1.msra.mxu0 0.0
        %1941 = vmatprep.subr.mxu0 0.0
        %1942 = vmatpush1.msra.mxu0 0.0
        %1943 = vmatprep.subr.mxu0 0.0
        %1944 = vmatpush1.msra.mxu0 0.0
        %1945 = vmatprep.mubr.f32.mxu0 0.0
        %1946 = vmatmul.mubr.f32.gmra.mrb[0].mxu0 %v1879
        %v1947 = vpop.f32.mrb[0].mxu0
        %v1948 = vadd.f32 0.0, %v1947
        %v1949 = vpop.f32.mrb[0].mxu0
        %1950 = vdwg.mxu0
        %v1952 = vsel %vm1442, %v1803, 0
        %1954 = vmatprep.subr.mxu0 0.0
        %1955 = vmatpush1.msra.mxu0 %v1369
        %1956 = vmatprep.subr.mxu0 0.0
        %1957 = vmatpush1.msra.mxu0 0.0
        %1958 = vmatprep.subr.mxu0 0.0
        %1959 = vmatpush1.msra.mxu0 0.0
        %1960 = vmatprep.subr.mxu0 0.0
        %1961 = vmatpush1.msra.mxu0 0.0
        %1962 = vmatprep.subr.mxu0 0.0
        %1963 = vmatpush1.msra.mxu0 0.0
        %1964 = vmatprep.subr.mxu0 0.0
        %1965 = vmatpush1.msra.mxu0 0.0
        %1966 = vmatprep.subr.mxu0 0.0
        %1967 = vmatpush1.msra.mxu0 0.0
        %1968 = vmatprep.subr.mxu0 0.0
        %1969 = vmatpush1.msra.mxu0 0.0
        %1970 = vmatprep.subr.mxu0 0.0
        %1971 = vmatpush1.msra.mxu0 0.0
        %1972 = vmatprep.subr.mxu0 0.0
        %1973 = vmatpush1.msra.mxu0 0.0
        %1974 = vmatprep.subr.mxu0 0.0
        %1975 = vmatpush1.msra.mxu0 0.0
        %1976 = vmatprep.subr.mxu0 0.0
        %1977 = vmatpush1.msra.mxu0 0.0
        %1978 = vmatprep.subr.mxu0 0.0
        %1979 = vmatpush1.msra.mxu0 0.0
        %1980 = vmatprep.subr.mxu0 0.0
        %1981 = vmatpush1.msra.mxu0 0.0
        %1982 = vmatprep.subr.mxu0 0.0
        %1983 = vmatpush1.msra.mxu0 0.0
        %1984 = vmatprep.subr.mxu0 0.0
        %1985 = vmatpush1.msra.mxu0 0.0
        %1986 = vmatprep.subr.mxu0 0.0
        %1987 = vmatpush1.msra.mxu0 0.0
        %1988 = vmatprep.subr.mxu0 0.0
        %1989 = vmatpush1.msra.mxu0 0.0
        %1990 = vmatprep.subr.mxu0 0.0
        %1991 = vmatpush1.msra.mxu0 0.0
        %1992 = vmatprep.subr.mxu0 0.0
        %1993 = vmatpush1.msra.mxu0 0.0
        %1994 = vmatprep.subr.mxu0 0.0
        %1995 = vmatpush1.msra.mxu0 0.0
        %1996 = vmatprep.subr.mxu0 0.0
        %1997 = vmatpush1.msra.mxu0 0.0
        %1998 = vmatprep.subr.mxu0 0.0
        %1999 = vmatpush1.msra.mxu0 0.0
        %2000 = vmatprep.subr.mxu0 0.0
        %2001 = vmatpush1.msra.mxu0 0.0
        %2002 = vmatprep.subr.mxu0 0.0
        %2003 = vmatpush1.msra.mxu0 0.0
        %2004 = vmatprep.subr.mxu0 0.0
        %2005 = vmatpush1.msra.mxu0 0.0
        %2006 = vmatprep.subr.mxu0 0.0
        %2007 = vmatpush1.msra.mxu0 0.0
        %2008 = vmatprep.subr.mxu0 0.0
        %2009 = vmatpush1.msra.mxu0 0.0
        %2010 = vmatprep.subr.mxu0 0.0
        %2011 = vmatpush1.msra.mxu0 0.0
        %2012 = vmatprep.subr.mxu0 0.0
        %2013 = vmatpush1.msra.mxu0 0.0
        %2014 = vmatprep.subr.mxu0 0.0
        %2015 = vmatpush1.msra.mxu0 0.0
        %2016 = vmatprep.subr.mxu0 0.0
        %2017 = vmatpush1.msra.mxu0 0.0
        %2018 = vmatprep.mubr.f32.mxu0 0.0
        %2019 = vmatmul.mubr.f32.gmra.mrb[0].mxu0 %v1952
        %v2020 = vpop.f32.mrb[0].mxu0
        %v2021 = vadd.f32 0.0, %v2020
        %v2022 = vpop.f32.mrb[0].mxu0
        %2023 = vdwg.mxu0
        %v2025 = vsel %vm1442, %v1804, 0
        %2027 = vmatprep.subr.mxu0 0.0
        %2028 = vmatpush1.msra.mxu0 %v1439
        %2029 = vmatprep.subr.mxu0 0.0
        %2030 = vmatpush1.msra.mxu0 0.0
        %2031 = vmatprep.subr.mxu0 0.0
        %2032 = vmatpush1.msra.mxu0 0.0
        %2033 = vmatprep.subr.mxu0 0.0
        %2034 = vmatpush1.msra.mxu0 0.0
        %2035 = vmatprep.subr.mxu0 0.0
        %2036 = vmatpush1.msra.mxu0 0.0
        %2037 = vmatprep.subr.mxu0 0.0
        %2038 = vmatpush1.msra.mxu0 0.0
        %2039 = vmatprep.subr.mxu0 0.0
        %2040 = vmatpush1.msra.mxu0 0.0
        %2041 = vmatprep.subr.mxu0 0.0
        %2042 = vmatpush1.msra.mxu0 0.0
        %2043 = vmatprep.subr.mxu0 0.0
        %2044 = vmatpush1.msra.mxu0 0.0
        %2045 = vmatprep.subr.mxu0 0.0
        %2046 = vmatpush1.msra.mxu0 0.0
        %2047 = vmatprep.subr.mxu0 0.0
        %2048 = vmatpush1.msra.mxu0 0.0
        %2049 = vmatprep.subr.mxu0 0.0
        %2050 = vmatpush1.msra.mxu0 0.0
        %2051 = vmatprep.subr.mxu0 0.0
        %2052 = vmatpush1.msra.mxu0 0.0
        %2053 = vmatprep.subr.mxu0 0.0
        %2054 = vmatpush1.msra.mxu0 0.0
        %2055 = vmatprep.subr.mxu0 0.0
        %2056 = vmatpush1.msra.mxu0 0.0
        %2057 = vmatprep.subr.mxu0 0.0
        %2058 = vmatpush1.msra.mxu0 0.0
        %2059 = vmatprep.subr.mxu0 0.0
        %2060 = vmatpush1.msra.mxu0 0.0
        %2061 = vmatprep.subr.mxu0 0.0
        %2062 = vmatpush1.msra.mxu0 0.0
        %2063 = vmatprep.subr.mxu0 0.0
        %2064 = vmatpush1.msra.mxu0 0.0
        %2065 = vmatprep.subr.mxu0 0.0
        %2066 = vmatpush1.msra.mxu0 0.0
        %2067 = vmatprep.subr.mxu0 0.0
        %2068 = vmatpush1.msra.mxu0 0.0
        %2069 = vmatprep.subr.mxu0 0.0
        %2070 = vmatpush1.msra.mxu0 0.0
        %2071 = vmatprep.subr.mxu0 0.0
        %2072 = vmatpush1.msra.mxu0 0.0
        %2073 = vmatprep.subr.mxu0 0.0
        %2074 = vmatpush1.msra.mxu0 0.0
        %2075 = vmatprep.subr.mxu0 0.0
        %2076 = vmatpush1.msra.mxu0 0.0
        %2077 = vmatprep.subr.mxu0 0.0
        %2078 = vmatpush1.msra.mxu0 0.0
        %2079 = vmatprep.subr.mxu0 0.0
        %2080 = vmatpush1.msra.mxu0 0.0
        %2081 = vmatprep.subr.mxu0 0.0
        %2082 = vmatpush1.msra.mxu0 0.0
        %2083 = vmatprep.subr.mxu0 0.0
        %2084 = vmatpush1.msra.mxu0 0.0
        %2085 = vmatprep.subr.mxu0 0.0
        %2086 = vmatpush1.msra.mxu0 0.0
        %2087 = vmatprep.subr.mxu0 0.0
        %2088 = vmatpush1.msra.mxu0 0.0
        %2089 = vmatprep.subr.mxu0 0.0
        %2090 = vmatpush1.msra.mxu0 0.0
        %2091 = vmatprep.mubr.f32.mxu0 0.0
        %2092 = vmatmul.mubr.f32.gmra.mrb[0].mxu0 %v2025
        %v2093 = vpop.f32.mrb[0].mxu0
        %v2094 = vadd.f32 0.0, %v2093
        %v2095 = vpop.f32.mrb[0].mxu0
        %2096 = vdwg.mxu0
        %v2097 = vld [vmem:[%s8] sm:$0xff]
        %v2098 = vld [vmem:[%s8 + $0x8] sm:$0xff]
        %v2099 = vld [vmem:[%s8 + $0x10] sm:$0xff]
        %v2100 = vld [vmem:[%s8 + $0x18] sm:$0xff]
        %v2102 = vsel %vm1442, %v1875, 0
        %2104 = vmatprep.subr.mxu0 0.0
        %2105 = vmatpush1.msra.mxu0 %v2097
        %2106 = vmatprep.subr.mxu0 0.0
        %2107 = vmatpush1.msra.mxu0 0.0
        %2108 = vmatprep.subr.mxu0 0.0
        %2109 = vmatpush1.msra.mxu0 0.0
        %2110 = vmatprep.subr.mxu0 0.0
        %2111 = vmatpush1.msra.mxu0 0.0
        %2112 = vmatprep.subr.mxu0 0.0
        %2113 = vmatpush1.msra.mxu0 0.0
        %2114 = vmatprep.subr.mxu0 0.0
        %2115 = vmatpush1.msra.mxu0 0.0
        %2116 = vmatprep.subr.mxu0 0.0
        %2117 = vmatpush1.msra.mxu0 0.0
        %2118 = vmatprep.subr.mxu0 0.0
        %2119 = vmatpush1.msra.mxu0 0.0
        %2120 = vmatprep.subr.mxu0 0.0
        %2121 = vmatpush1.msra.mxu0 0.0
        %2122 = vmatprep.subr.mxu0 0.0
        %2123 = vmatpush1.msra.mxu0 0.0
        %2124 = vmatprep.subr.mxu0 0.0
        %2125 = vmatpush1.msra.mxu0 0.0
        %2126 = vmatprep.subr.mxu0 0.0
        %2127 = vmatpush1.msra.mxu0 0.0
        %2128 = vmatprep.subr.mxu0 0.0
        %2129 = vmatpush1.msra.mxu0 0.0
        %2130 = vmatprep.subr.mxu0 0.0
        %2131 = vmatpush1.msra.mxu0 0.0
        %2132 = vmatprep.subr.mxu0 0.0
        %2133 = vmatpush1.msra.mxu0 0.0
        %2134 = vmatprep.subr.mxu0 0.0
        %2135 = vmatpush1.msra.mxu0 0.0
        %2136 = vmatprep.subr.mxu0 0.0
        %2137 = vmatpush1.msra.mxu0 0.0
        %2138 = vmatprep.subr.mxu0 0.0
        %2139 = vmatpush1.msra.mxu0 0.0
        %2140 = vmatprep.subr.mxu0 0.0
        %2141 = vmatpush1.msra.mxu0 0.0
        %2142 = vmatprep.subr.mxu0 0.0
        %2143 = vmatpush1.msra.mxu0 0.0
        %2144 = vmatprep.subr.mxu0 0.0
        %2145 = vmatpush1.msra.mxu0 0.0
        %2146 = vmatprep.subr.mxu0 0.0
        %2147 = vmatpush1.msra.mxu0 0.0
        %2148 = vmatprep.subr.mxu0 0.0
        %2149 = vmatpush1.msra.mxu0 0.0
        %2150 = vmatprep.subr.mxu0 0.0
        %2151 = vmatpush1.msra.mxu0 0.0
        %2152 = vmatprep.subr.mxu0 0.0
        %2153 = vmatpush1.msra.mxu0 0.0
        %2154 = vmatprep.subr.mxu0 0.0
        %2155 = vmatpush1.msra.mxu0 0.0
        %2156 = vmatprep.subr.mxu0 0.0
        %2157 = vmatpush1.msra.mxu0 0.0
        %2158 = vmatprep.subr.mxu0 0.0
        %2159 = vmatpush1.msra.mxu0 0.0
        %2160 = vmatprep.subr.mxu0 0.0
        %2161 = vmatpush1.msra.mxu0 0.0
        %2162 = vmatprep.subr.mxu0 0.0
        %2163 = vmatpush1.msra.mxu0 0.0
        %2164 = vmatprep.subr.mxu0 0.0
        %2165 = vmatpush1.msra.mxu0 0.0
        %2166 = vmatprep.subr.mxu0 0.0
        %2167 = vmatpush1.msra.mxu0 0.0
        %2168 = vmatprep.mubr.f32.mxu0 0.0
        %2169 = vmatmul.mubr.f32.gmra.mrb[0].mxu0 %v2102
        %v2170 = vpop.f32.mrb[0].mxu0
        %v2171 = vadd.f32 0.0, %v2170
        %v2172 = vpop.f32.mrb[0].mxu0
        %2173 = vdwg.mxu0
        %v2175 = vsel %vm1442, %v1948, 0
        %2177 = vmatprep.subr.mxu0 0.0
        %2178 = vmatpush1.msra.mxu0 %v2098
        %2179 = vmatprep.subr.mxu0 0.0
        %2180 = vmatpush1.msra.mxu0 0.0
        %2181 = vmatprep.subr.mxu0 0.0
        %2182 = vmatpush1.msra.mxu0 0.0
        %2183 = vmatprep.subr.mxu0 0.0
        %2184 = vmatpush1.msra.mxu0 0.0
        %2185 = vmatprep.subr.mxu0 0.0
        %2186 = vmatpush1.msra.mxu0 0.0
        %2187 = vmatprep.subr.mxu0 0.0
        %2188 = vmatpush1.msra.mxu0 0.0
        %2189 = vmatprep.subr.mxu0 0.0
        %2190 = vmatpush1.msra.mxu0 0.0
        %2191 = vmatprep.subr.mxu0 0.0
        %2192 = vmatpush1.msra.mxu0 0.0
        %2193 = vmatprep.subr.mxu0 0.0
        %2194 = vmatpush1.msra.mxu0 0.0
        %2195 = vmatprep.subr.mxu0 0.0
        %2196 = vmatpush1.msra.mxu0 0.0
        %2197 = vmatprep.subr.mxu0 0.0
        %2198 = vmatpush1.msra.mxu0 0.0
        %2199 = vmatprep.subr.mxu0 0.0
        %2200 = vmatpush1.msra.mxu0 0.0
        %2201 = vmatprep.subr.mxu0 0.0
        %2202 = vmatpush1.msra.mxu0 0.0
        %2203 = vmatprep.subr.mxu0 0.0
        %2204 = vmatpush1.msra.mxu0 0.0
        %2205 = vmatprep.subr.mxu0 0.0
        %2206 = vmatpush1.msra.mxu0 0.0
        %2207 = vmatprep.subr.mxu0 0.0
        %2208 = vmatpush1.msra.mxu0 0.0
        %2209 = vmatprep.subr.mxu0 0.0
        %2210 = vmatpush1.msra.mxu0 0.0
        %2211 = vmatprep.subr.mxu0 0.0
        %2212 = vmatpush1.msra.mxu0 0.0
        %2213 = vmatprep.subr.mxu0 0.0
        %2214 = vmatpush1.msra.mxu0 0.0
        %2215 = vmatprep.subr.mxu0 0.0
        %2216 = vmatpush1.msra.mxu0 0.0
        %2217 = vmatprep.subr.mxu0 0.0
        %2218 = vmatpush1.msra.mxu0 0.0
        %2219 = vmatprep.subr.mxu0 0.0
        %2220 = vmatpush1.msra.mxu0 0.0
        %2221 = vmatprep.subr.mxu0 0.0
        %2222 = vmatpush1.msra.mxu0 0.0
        %2223 = vmatprep.subr.mxu0 0.0
        %2224 = vmatpush1.msra.mxu0 0.0
        %2225 = vmatprep.subr.mxu0 0.0
        %2226 = vmatpush1.msra.mxu0 0.0
        %2227 = vmatprep.subr.mxu0 0.0
        %2228 = vmatpush1.msra.mxu0 0.0
        %2229 = vmatprep.subr.mxu0 0.0
        %2230 = vmatpush1.msra.mxu0 0.0
        %2231 = vmatprep.subr.mxu0 0.0
        %2232 = vmatpush1.msra.mxu0 0.0
        %2233 = vmatprep.subr.mxu0 0.0
        %2234 = vmatpush1.msra.mxu0 0.0
        %2235 = vmatprep.subr.mxu0 0.0
        %2236 = vmatpush1.msra.mxu0 0.0
        %2237 = vmatprep.subr.mxu0 0.0
        %2238 = vmatpush1.msra.mxu0 0.0
        %2239 = vmatprep.subr.mxu0 0.0
        %2240 = vmatpush1.msra.mxu0 0.0
        %2241 = vmatprep.mubr.f32.mxu0 0.0
        %2242 = vmatmul.mubr.f32.gmra.mrb[0].mxu0 %v2175
        %v2243 = vpop.f32.mrb[0].mxu0
        %v2244 = vadd.f32 0.0, %v2243
        %v2245 = vpop.f32.mrb[0].mxu0
        %2246 = vdwg.mxu0
        %v2248 = vsel %vm1442, %v2021, 0
        %2250 = vmatprep.subr.mxu0 0.0
        %2251 = vmatpush1.msra.mxu0 %v2099
        %2252 = vmatprep.subr.mxu0 0.0
        %2253 = vmatpush1.msra.mxu0 0.0
        %2254 = vmatprep.subr.mxu0 0.0
        %2255 = vmatpush1.msra.mxu0 0.0
        %2256 = vmatprep.subr.mxu0 0.0
        %2257 = vmatpush1.msra.mxu0 0.0
        %2258 = vmatprep.subr.mxu0 0.0
        %2259 = vmatpush1.msra.mxu0 0.0
        %2260 = vmatprep.subr.mxu0 0.0
        %2261 = vmatpush1.msra.mxu0 0.0
        %2262 = vmatprep.subr.mxu0 0.0
        %2263 = vmatpush1.msra.mxu0 0.0
        %2264 = vmatprep.subr.mxu0 0.0
        %2265 = vmatpush1.msra.mxu0 0.0
        %2266 = vmatprep.subr.mxu0 0.0
        %2267 = vmatpush1.msra.mxu0 0.0
        %2268 = vmatprep.subr.mxu0 0.0
        %2269 = vmatpush1.msra.mxu0 0.0
        %2270 = vmatprep.subr.mxu0 0.0
        %2271 = vmatpush1.msra.mxu0 0.0
        %2272 = vmatprep.subr.mxu0 0.0
        %2273 = vmatpush1.msra.mxu0 0.0
        %2274 = vmatprep.subr.mxu0 0.0
        %2275 = vmatpush1.msra.mxu0 0.0
        %2276 = vmatprep.subr.mxu0 0.0
        %2277 = vmatpush1.msra.mxu0 0.0
        %2278 = vmatprep.subr.mxu0 0.0
        %2279 = vmatpush1.msra.mxu0 0.0
        %2280 = vmatprep.subr.mxu0 0.0
        %2281 = vmatpush1.msra.mxu0 0.0
        %2282 = vmatprep.subr.mxu0 0.0
        %2283 = vmatpush1.msra.mxu0 0.0
        %2284 = vmatprep.subr.mxu0 0.0
        %2285 = vmatpush1.msra.mxu0 0.0
        %2286 = vmatprep.subr.mxu0 0.0
        %2287 = vmatpush1.msra.mxu0 0.0
        %2288 = vmatprep.subr.mxu0 0.0
        %2289 = vmatpush1.msra.mxu0 0.0
        %2290 = vmatprep.subr.mxu0 0.0
        %2291 = vmatpush1.msra.mxu0 0.0
        %2292 = vmatprep.subr.mxu0 0.0
        %2293 = vmatpush1.msra.mxu0 0.0
        %2294 = vmatprep.subr.mxu0 0.0
        %2295 = vmatpush1.msra.mxu0 0.0
        %2296 = vmatprep.subr.mxu0 0.0
        %2297 = vmatpush1.msra.mxu0 0.0
        %2298 = vmatprep.subr.mxu0 0.0
        %2299 = vmatpush1.msra.mxu0 0.0
        %2300 = vmatprep.subr.mxu0 0.0
        %2301 = vmatpush1.msra.mxu0 0.0
        %2302 = vmatprep.subr.mxu0 0.0
        %2303 = vmatpush1.msra.mxu0 0.0
        %2304 = vmatprep.subr.mxu0 0.0
        %2305 = vmatpush1.msra.mxu0 0.0
        %2306 = vmatprep.subr.mxu0 0.0
        %2307 = vmatpush1.msra.mxu0 0.0
        %2308 = vmatprep.subr.mxu0 0.0
        %2309 = vmatpush1.msra.mxu0 0.0
        %2310 = vmatprep.subr.mxu0 0.0
        %2311 = vmatpush1.msra.mxu0 0.0
        %2312 = vmatprep.subr.mxu0 0.0
        %2313 = vmatpush1.msra.mxu0 0.0
        %2314 = vmatprep.mubr.f32.mxu0 0.0
        %2315 = vmatmul.mubr.f32.gmra.mrb[0].mxu0 %v2248
        %v2316 = vpop.f32.mrb[0].mxu0
        %v2317 = vadd.f32 0.0, %v2316
        %v2318 = vpop.f32.mrb[0].mxu0
        %2319 = vdwg.mxu0
        %v2321 = vsel %vm1442, %v2094, 0
        %2323 = vmatprep.subr.mxu0 0.0
        %2324 = vmatpush1.msra.mxu0 %v2100
        %2325 = vmatprep.subr.mxu0 0.0
        %2326 = vmatpush1.msra.mxu0 0.0
        %2327 = vmatprep.subr.mxu0 0.0
        %2328 = vmatpush1.msra.mxu0 0.0
        %2329 = vmatprep.subr.mxu0 0.0
        %2330 = vmatpush1.msra.mxu0 0.0
        %2331 = vmatprep.subr.mxu0 0.0
        %2332 = vmatpush1.msra.mxu0 0.0
        %2333 = vmatprep.subr.mxu0 0.0
        %2334 = vmatpush1.msra.mxu0 0.0
        %2335 = vmatprep.subr.mxu0 0.0
        %2336 = vmatpush1.msra.mxu0 0.0
        %2337 = vmatprep.subr.mxu0 0.0
        %2338 = vmatpush1.msra.mxu0 0.0
        %2339 = vmatprep.subr.mxu0 0.0
        %2340 = vmatpush1.msra.mxu0 0.0
        %2341 = vmatprep.subr.mxu0 0.0
        %2342 = vmatpush1.msra.mxu0 0.0
        %2343 = vmatprep.subr.mxu0 0.0
        %2344 = vmatpush1.msra.mxu0 0.0
        %2345 = vmatprep.subr.mxu0 0.0
        %2346 = vmatpush1.msra.mxu0 0.0
        %2347 = vmatprep.subr.mxu0 0.0
        %2348 = vmatpush1.msra.mxu0 0.0
        %2349 = vmatprep.subr.mxu0 0.0
        %2350 = vmatpush1.msra.mxu0 0.0
        %2351 = vmatprep.subr.mxu0 0.0
        %2352 = vmatpush1.msra.mxu0 0.0
        %2353 = vmatprep.subr.mxu0 0.0
        %2354 = vmatpush1.msra.mxu0 0.0
        %2355 = vmatprep.subr.mxu0 0.0
        %2356 = vmatpush1.msra.mxu0 0.0
        %2357 = vmatprep.subr.mxu0 0.0
        %2358 = vmatpush1.msra.mxu0 0.0
        %2359 = vmatprep.subr.mxu0 0.0
        %2360 = vmatpush1.msra.mxu0 0.0
        %2361 = vmatprep.subr.mxu0 0.0
        %2362 = vmatpush1.msra.mxu0 0.0
        %2363 = vmatprep.subr.mxu0 0.0
        %2364 = vmatpush1.msra.mxu0 0.0
        %2365 = vmatprep.subr.mxu0 0.0
        %2366 = vmatpush1.msra.mxu0 0.0
        %2367 = vmatprep.subr.mxu0 0.0
        %2368 = vmatpush1.msra.mxu0 0.0
        %2369 = vmatprep.subr.mxu0 0.0
        %2370 = vmatpush1.msra.mxu0 0.0
        %2371 = vmatprep.subr.mxu0 0.0
        %2372 = vmatpush1.msra.mxu0 0.0
        %2373 = vmatprep.subr.mxu0 0.0
        %2374 = vmatpush1.msra.mxu0 0.0
        %2375 = vmatprep.subr.mxu0 0.0
        %2376 = vmatpush1.msra.mxu0 0.0
        %2377 = vmatprep.subr.mxu0 0.0
        %2378 = vmatpush1.msra.mxu0 0.0
        %2379 = vmatprep.subr.mxu0 0.0
        %2380 = vmatpush1.msra.mxu0 0.0
        %2381 = vmatprep.subr.mxu0 0.0
        %2382 = vmatpush1.msra.mxu0 0.0
        %2383 = vmatprep.subr.mxu0 0.0
        %2384 = vmatpush1.msra.mxu0 0.0
        %2385 = vmatprep.subr.mxu0 0.0
        %2386 = vmatpush1.msra.mxu0 0.0
        %2387 = vmatprep.mubr.f32.mxu0 0.0
        %2388 = vmatmul.mubr.f32.gmra.mrb[0].mxu0 %v2321
        %v2389 = vpop.f32.mrb[0].mxu0
        %v2390 = vadd.f32 0.0, %v2389
        %v2391 = vpop.f32.mrb[0].mxu0
        %2392 = vdwg.mxu0
        %v2393 = vsel %vm429, %v2171, 0.0
        %v2394 = vsel %vm429, %v2244, 0.0
        %v2395 = vadd.f32 %v2393, %v2394
        %v2396 = vsel %vm429, %v2317, 0.0
        %v2397 = vadd.f32 %v2395, %v2396
        %v2398 = vsel %vm429, %v2390, 0.0
        %v2399 = vadd.f32 %v2397, %v2398
        %v2400 = vlaneseq
        %v2401 = vshrl.u32 %v2400, 7
        %v2402 = vsub.s32 0, %v2401
        %v2403 = vrot.slane %v457, %v2402
        %v2404 = vadd.f32 %v2399, %v2403
        %v2405 = vadd.f32 %v453, %v2404
        %v2406 = vsel %vm429, %v2405, 0.0
        %2407 = vadd.xlane.f32.xlu0 %v2406
        %v2408 = vpop.xlane.xlu0 %2407
        %v2409 = vmul.f32 %v2408, %v433
        %v2410 = vsub.f32 %v2405, %v2409
        %v2411 = vmul.f32 %v2410, %v2410
        %v2412 = vsel %vm429, %v2411, 0.0
        %2413 = vadd.xlane.f32.xlu0 %v2412
        %v2414 = vpop.xlane.xlu0 %2413
        %v2415 = vmul.f32 %v2414, %v433
        %v2416 = vadd.f32 %v2415, 1e-07
        %v2417 = vrsqrt.pop %v2416
        %v2418 = vmul.f32 %v2410, %v2417
        %v2419 = vlaneseq
        %v2420 = vshrl.u32 %v2419, 7
        %v2421 = vsub.s32 0, %v2420
        %v2422 = vrot.slane %v458, %v2421
        %v2423 = vmul.f32 %v2418, %v2422
        %v2424 = vlaneseq
        %v2425 = vshrl.u32 %v2424, 7
        %v2426 = vsub.s32 0, %v2425
        %v2427 = vrot.slane %v459, %v2426
        %v2428 = vadd.f32 %v2423, %v2427
        %v2429 = vld [vmem:[%s9] sm:$0xff]
        %v2430 = vld [vmem:[%s9 + $0x8] sm:$0xff]
        %v2431 = vld [vmem:[%s9 + $0x10] sm:$0xff]
        %v2432 = vld [vmem:[%s9 + $0x18] sm:$0xff]
        %v2433 = vld [vmem:[%s6] sm:$0x1]
        %v2435 = vlaneseq
        %v2436 = vshrl.u32 %v2435, 7
        %v2437 = vsub.s32 0, %v2436
        %v2438 = vrot.slane %v2433, %v2437
        %v2441 = vsel %vm429, %v2428, 0
        %2443 = vmatprep.subr.mxu0 0.0
        %2444 = vmatpush1.msra.mxu0 %v2429
        %2445 = vmatprep.subr.mxu0 0.0
        %2446 = vmatpush1.msra.mxu0 %v2430
        %2447 = vmatprep.subr.mxu0 0.0
        %2448 = vmatpush1.msra.mxu0 %v2431
        %2449 = vmatprep.subr.mxu0 0.0
        %2450 = vmatpush1.msra.mxu0 %v2432
        %2451 = vmatprep.subr.mxu0 0.0
        %2452 = vmatpush1.msra.mxu0 0.0
        %2453 = vmatprep.subr.mxu0 0.0
        %2454 = vmatpush1.msra.mxu0 0.0
        %2455 = vmatprep.subr.mxu0 0.0
        %2456 = vmatpush1.msra.mxu0 0.0
        %2457 = vmatprep.subr.mxu0 0.0
        %2458 = vmatpush1.msra.mxu0 0.0
        %2459 = vmatprep.subr.mxu0 0.0
        %2460 = vmatpush1.msra.mxu0 0.0
        %2461 = vmatprep.subr.mxu0 0.0
        %2462 = vmatpush1.msra.mxu0 0.0
        %2463 = vmatprep.subr.mxu0 0.0
        %2464 = vmatpush1.msra.mxu0 0.0
        %2465 = vmatprep.subr.mxu0 0.0
        %2466 = vmatpush1.msra.mxu0 0.0
        %2467 = vmatprep.subr.mxu0 0.0
        %2468 = vmatpush1.msra.mxu0 0.0
        %2469 = vmatprep.subr.mxu0 0.0
        %2470 = vmatpush1.msra.mxu0 0.0
        %2471 = vmatprep.subr.mxu0 0.0
        %2472 = vmatpush1.msra.mxu0 0.0
        %2473 = vmatprep.subr.mxu0 0.0
        %2474 = vmatpush1.msra.mxu0 0.0
        %2475 = vmatprep.subr.mxu0 0.0
        %2476 = vmatpush1.msra.mxu0 0.0
        %2477 = vmatprep.subr.mxu0 0.0
        %2478 = vmatpush1.msra.mxu0 0.0
        %2479 = vmatprep.subr.mxu0 0.0
        %2480 = vmatpush1.msra.mxu0 0.0
        %2481 = vmatprep.subr.mxu0 0.0
        %2482 = vmatpush1.msra.mxu0 0.0
        %2483 = vmatprep.subr.mxu0 0.0
        %2484 = vmatpush1.msra.mxu0 0.0
        %2485 = vmatprep.subr.mxu0 0.0
        %2486 = vmatpush1.msra.mxu0 0.0
        %2487 = vmatprep.subr.mxu0 0.0
        %2488 = vmatpush1.msra.mxu0 0.0
        %2489 = vmatprep.subr.mxu0 0.0
        %2490 = vmatpush1.msra.mxu0 0.0
        %2491 = vmatprep.subr.mxu0 0.0
        %2492 = vmatpush1.msra.mxu0 0.0
        %2493 = vmatprep.subr.mxu0 0.0
        %2494 = vmatpush1.msra.mxu0 0.0
        %2495 = vmatprep.subr.mxu0 0.0
        %2496 = vmatpush1.msra.mxu0 0.0
        %2497 = vmatprep.subr.mxu0 0.0
        %2498 = vmatpush1.msra.mxu0 0.0
        %2499 = vmatprep.subr.mxu0 0.0
        %2500 = vmatpush1.msra.mxu0 0.0
        %2501 = vmatprep.subr.mxu0 0.0
        %2502 = vmatpush1.msra.mxu0 0.0
        %2503 = vmatprep.subr.mxu0 0.0
        %2504 = vmatpush1.msra.mxu0 0.0
        %2505 = vmatprep.subr.mxu0 0.0
        %2506 = vmatpush1.msra.mxu0 0.0
        %2507 = vmatprep.mubr.f32.mxu0 0.0
        %2508 = vmatmul.mubr.f32.gmra.mrb[0].mxu0 %v2441
        %v2509 = vpop.f32.mrb[0].mxu0
        %v2510 = vadd.f32 %v2438, %v2509
        %v2511 = vpop.f32.mrb[0].mxu0
        %2512 = vdwg.mxu0
        %v2513 = vmul.f32 %v2510, %v2510
        %v2514 = vmul.f32 %v2510, %v2513
        %v2515 = vmul.f32 %v2514, 0.044715
        %v2516 = vadd.f32 %v2510, %v2515
        %v2517 = vmul.f32 %v2516, 0.7978846
        %v2518 = vtanh.pop %v2517
        %v2519 = vadd.f32 %v2518, 1.0
        %v2520 = vmul.f32 %v2519, 0.5
        %v2521 = vmul.f32 %v2510, %v2520
        %v2522 = vld [vmem:[%s10] sm:$0xff]
        %v2523 = vld [vmem:[%s10 + $0x8] sm:$0xff]
        %v2524 = vld [vmem:[%s10 + $0x10] sm:$0xff]
        %v2525 = vld [vmem:[%s10 + $0x18] sm:$0xff]
        %v2526 = vld [vmem:[%s10 + $0x20] sm:$0xff]
        %v2527 = vld [vmem:[%s10 + $0x28] sm:$0xff]
        %v2528 = vld [vmem:[%s10 + $0x30] sm:$0xff]
        %v2529 = vld [vmem:[%s10 + $0x38] sm:$0xff]
        %v2530 = vlaneseq
        %v2531 = vshrl.u32 %v2530, 7
        %v2532 = vsub.s32 0, %v2531
        %v2533 = vrot.slane %v460, %v2532
        %vm2534 = vcmask 523264
        %v2536 = vsel %vm2534, %v2521, 0
        %2538 = vmatprep.subr.mxu0 0.0
        %2539 = vmatpush1.msra.mxu0 %v2522
        %2540 = vmatprep.subr.mxu0 0.0
        %2541 = vmatpush1.msra.mxu0 %v2523
        %2542 = vmatprep.subr.mxu0 0.0
        %2543 = vmatpush1.msra.mxu0 %v2524
        %2544 = vmatprep.subr.mxu0 0.0
        %2545 = vmatpush1.msra.mxu0 %v2525
        %2546 = vmatprep.subr.mxu0 0.0
        %2547 = vmatpush1.msra.mxu0 %v2526
        %2548 = vmatprep.subr.mxu0 0.0
        %2549 = vmatpush1.msra.mxu0 %v2527
        %2550 = vmatprep.subr.mxu0 0.0
        %2551 = vmatpush1.msra.mxu0 %v2528
        %2552 = vmatprep.subr.mxu0 0.0
        %2553 = vmatpush1.msra.mxu0 %v2529
        %2554 = vmatprep.subr.mxu0 0.0
        %2555 = vmatpush1.msra.mxu0 0.0
        %2556 = vmatprep.subr.mxu0 0.0
        %2557 = vmatpush1.msra.mxu0 0.0
        %2558 = vmatprep.subr.mxu0 0.0
        %2559 = vmatpush1.msra.mxu0 0.0
        %2560 = vmatprep.subr.mxu0 0.0
        %2561 = vmatpush1.msra.mxu0 0.0
        %2562 = vmatprep.subr.mxu0 0.0
        %2563 = vmatpush1.msra.mxu0 0.0
        %2564 = vmatprep.subr.mxu0 0.0
        %2565 = vmatpush1.msra.mxu0 0.0
        %2566 = vmatprep.subr.mxu0 0.0
        %2567 = vmatpush1.msra.mxu0 0.0
        %2568 = vmatprep.subr.mxu0 0.0
        %2569 = vmatpush1.msra.mxu0 0.0
        %2570 = vmatprep.subr.mxu0 0.0
        %2571 = vmatpush1.msra.mxu0 0.0
        %2572 = vmatprep.subr.mxu0 0.0
        %2573 = vmatpush1.msra.mxu0 0.0
        %2574 = vmatprep.subr.mxu0 0.0
        %2575 = vmatpush1.msra.mxu0 0.0
        %2576 = vmatprep.subr.mxu0 0.0
        %2577 = vmatpush1.msra.mxu0 0.0
        %2578 = vmatprep.subr.mxu0 0.0
        %2579 = vmatpush1.msra.mxu0 0.0
        %2580 = vmatprep.subr.mxu0 0.0
        %2581 = vmatpush1.msra.mxu0 0.0
        %2582 = vmatprep.subr.mxu0 0.0
        %2583 = vmatpush1.msra.mxu0 0.0
        %2584 = vmatprep.subr.mxu0 0.0
        %2585 = vmatpush1.msra.mxu0 0.0
        %2586 = vmatprep.subr.mxu0 0.0
        %2587 = vmatpush1.msra.mxu0 0.0
        %2588 = vmatprep.subr.mxu0 0.0
        %2589 = vmatpush1.msra.mxu0 0.0
        %2590 = vmatprep.subr.mxu0 0.0
        %2591 = vmatpush1.msra.mxu0 0.0
        %2592 = vmatprep.subr.mxu0 0.0
        %2593 = vmatpush1.msra.mxu0 0.0
        %2594 = vmatprep.subr.mxu0 0.0
        %2595 = vmatpush1.msra.mxu0 0.0
        %2596 = vmatprep.subr.mxu0 0.0
        %2597 = vmatpush1.msra.mxu0 0.0
        %2598 = vmatprep.subr.mxu0 0.0
        %2599 = vmatpush1.msra.mxu0 0.0
        %2600 = vmatprep.subr.mxu0 0.0
        %2601 = vmatpush1.msra.mxu0 0.0
        %2602 = vmatprep.mubr.f32.mxu0 0.0
        %2603 = vmatmul.mubr.f32.gmra.mrb[0].mxu0 %v2536
        %v2604 = vpop.f32.mrb[0].mxu0
        %v2605 = vadd.f32 %v2533, %v2604
        %v2606 = vpop.f32.mrb[0].mxu0
        %2607 = vdwg.mxu0
        %v2608 = vadd.f32 %v2428, %v2605
        %v2609 = vsel %vm429, %v2608, 0.0
        %2610 = vadd.xlane.f32.xlu0 %v2609
        %v2611 = vpop.xlane.xlu0 %2610
        %v2612 = vmul.f32 %v2611, %v433
        %v2613 = vsub.f32 %v2608, %v2612
        %v2614 = vmul.f32 %v2613, %v2613
        %v2615 = vsel %vm429, %v2614, 0.0
        %2616 = vadd.xlane.f32.xlu0 %v2615
        %v2617 = vpop.xlane.xlu0 %2616
        %v2618 = vmul.f32 %v2617, %v433
        %v2619 = vadd.f32 %v2618, 1e-07
        %v2620 = vrsqrt.pop %v2619
        %v2621 = vmul.f32 %v2613, %v2620
        %v2622 = vlaneseq
        %v2623 = vshrl.u32 %v2622, 7
        %v2624 = vsub.s32 0, %v2623
        %v2625 = vrot.slane %v461, %v2624
        %v2626 = vmul.f32 %v2621, %v2625
        %v2627 = vlaneseq
        %v2628 = vshrl.u32 %v2627, 7
        %v2629 = vsub.s32 0, %v2628
        %v2630 = vrot.slane %v462, %v2629
        %v2631 = vadd.f32 %v2626, %v2630
        %v2632 = vld [vmem:[%s4 + $0x8] sm:$0x1]
        %v2633 = vld [vmem:[%s4 + $0x9] sm:$0x1]
        %v2634 = vld [vmem:[%s4 + $0xa] sm:$0x1]
        %v2635 = vld [vmem:[%s4 + $0xb] sm:$0x1]
        %v2636 = vld [vmem:[%s4 + $0xc] sm:$0x1]
        %v2637 = vld [vmem:[%s4 + $0xd] sm:$0x1]
        %s2638 = scalar_lea.vmem %s7, 384
        %v2639 = vld [vmem:[%s2638] sm:$0xff]
        %v2640 = vld [vmem:[%s2638 + $0x8] sm:$0xff]
        %v2641 = vld [vmem:[%s2638 + $0x10] sm:$0xff]
        %v2642 = vld [vmem:[%s2638 + $0x18] sm:$0xff]
        %v2643 = vld [vmem:[%s2638 + $0x20] sm:$0xff]
        %v2644 = vld [vmem:[%s2638 + $0x28] sm:$0xff]
        %v2645 = vld [vmem:[%s2638 + $0x30] sm:$0xff]
        %v2646 = vld [vmem:[%s2638 + $0x38] sm:$0xff]
        %v2647 = vld [vmem:[%s2638 + $0x40] sm:$0xff]
        %v2648 = vld [vmem:[%s2638 + $0x48] sm:$0xff]
        %v2649 = vld [vmem:[%s2638 + $0x50] sm:$0xff]
        %v2650 = vld [vmem:[%s2638 + $0x58] sm:$0xff]
        %v2651 = vld [vmem:[%s2638 + $0x60] sm:$0xff]
        %v2652 = vld [vmem:[%s2638 + $0x68] sm:$0xff]
        %v2653 = vld [vmem:[%s2638 + $0x70] sm:$0xff]
        %v2654 = vld [vmem:[%s2638 + $0x78] sm:$0xff]
        %s2655 = scalar_lea.vmem %s5, 12
        %v2656 = vld [vmem:[%s2655] sm:$0x1]
        %v2657 = vld [vmem:[%s2655 + $0x1] sm:$0x1]
        %v2658 = vld [vmem:[%s2655 + $0x2] sm:$0x1]
        %v2659 = vld [vmem:[%s2655 + $0x3] sm:$0x1]
        %v2664 = vlaneseq
        %v2665 = vshrl.u32 %v2664, 7
        %v2666 = vsub.s32 0, %v2665
        %v2667 = vrot.slane %v2656, %v2666
        %v2668 = vlaneseq
        %v2669 = vshrl.u32 %v2668, 7
        %v2670 = vsub.s32 0, %v2669
        %v2671 = vrot.slane %v2657, %v2670
        %v2672 = vlaneseq
        %v2673 = vshrl.u32 %v2672, 7
        %v2674 = vsub.s32 0, %v2673
        %v2675 = vrot.slane %v2658, %v2674
        %v2676 = vlaneseq
        %v2677 = vshrl.u32 %v2676, 7
        %v2678 = vsub.s32 0, %v2677
        %v2679 = vrot.slane %v2659, %v2678
        %v2685 = vsel %vm429, %v2631, 0
        %2687 = vmatprep.subr.mxu0 0.0
        %2688 = vmatpush1.msra.mxu0 %v2639
        %2689 = vmatprep.subr.mxu0 0.0
        %2690 = vmatpush1.msra.mxu0 %v2640
        %2691 = vmatprep.subr.mxu0 0.0
        %2692 = vmatpush1.msra.mxu0 %v2641
        %2693 = vmatprep.subr.mxu0 0.0
        %2694 = vmatpush1.msra.mxu0 %v2642
        %2695 = vmatprep.subr.mxu0 0.0
        %2696 = vmatpush1.msra.mxu0 0.0
        %2697 = vmatprep.subr.mxu0 0.0
        %2698 = vmatpush1.msra.mxu0 0.0
        %2699 = vmatprep.subr.mxu0 0.0
        %2700 = vmatpush1.msra.mxu0 0.0
        %2701 = vmatprep.subr.mxu0 0.0
        %2702 = vmatpush1.msra.mxu0 0.0
        %2703 = vmatprep.subr.mxu0 0.0
        %2704 = vmatpush1.msra.mxu0 0.0
        %2705 = vmatprep.subr.mxu0 0.0
        %2706 = vmatpush1.msra.mxu0 0.0
        %2707 = vmatprep.subr.mxu0 0.0
        %2708 = vmatpush1.msra.mxu0 0.0
        %2709 = vmatprep.subr.mxu0 0.0
        %2710 = vmatpush1.msra.mxu0 0.0
        %2711 = vmatprep.subr.mxu0 0.0
        %2712 = vmatpush1.msra.mxu0 0.0
        %2713 = vmatprep.subr.mxu0 0.0
        %2714 = vmatpush1.msra.mxu0 0.0
        %2715 = vmatprep.subr.mxu0 0.0
        %2716 = vmatpush1.msra.mxu0 0.0
        %2717 = vmatprep.subr.mxu0 0.0
        %2718 = vmatpush1.msra.mxu0 0.0
        %2719 = vmatprep.subr.mxu0 0.0
        %2720 = vmatpush1.msra.mxu0 0.0
        %2721 = vmatprep.subr.mxu0 0.0
        %2722 = vmatpush1.msra.mxu0 0.0
        %2723 = vmatprep.subr.mxu0 0.0
        %2724 = vmatpush1.msra.mxu0 0.0
        %2725 = vmatprep.subr.mxu0 0.0
        %2726 = vmatpush1.msra.mxu0 0.0
        %2727 = vmatprep.subr.mxu0 0.0
        %2728 = vmatpush1.msra.mxu0 0.0
        %2729 = vmatprep.subr.mxu0 0.0
        %2730 = vmatpush1.msra.mxu0 0.0
        %2731 = vmatprep.subr.mxu0 0.0
        %2732 = vmatpush1.msra.mxu0 0.0
        %2733 = vmatprep.subr.mxu0 0.0
        %2734 = vmatpush1.msra.mxu0 0.0
        %2735 = vmatprep.subr.mxu0 0.0
        %2736 = vmatpush1.msra.mxu0 0.0
        %2737 = vmatprep.subr.mxu0 0.0
        %2738 = vmatpush1.msra.mxu0 0.0
        %2739 = vmatprep.subr.mxu0 0.0
        %2740 = vmatpush1.msra.mxu0 0.0
        %2741 = vmatprep.subr.mxu0 0.0
        %2742 = vmatpush1.msra.mxu0 0.0
        %2743 = vmatprep.subr.mxu0 0.0
        %2744 = vmatpush1.msra.mxu0 0.0
        %2745 = vmatprep.subr.mxu0 0.0
        %2746 = vmatpush1.msra.mxu0 0.0
        %2747 = vmatprep.subr.mxu0 0.0
        %2748 = vmatpush1.msra.mxu0 0.0
        %2749 = vmatprep.subr.mxu0 0.0
        %2750 = vmatpush1.msra.mxu0 0.0
        %2751 = vmatprep.mubr.f32.mxu0 0.0
        %2752 = vmatmul.mubr.f32.gmra.mrb[0].mxu0 %v2685
        %v2753 = vpop.f32.mrb[0].mxu0
        %v2754 = vadd.f32 %v2667, %v2753
        %v2755 = vpop.f32.mrb[0].mxu0
        %2756 = vdwg.mxu0
        %2757 = vmatprep.subr.mxu0 0.0
        %2758 = vmatpush1.msra.mxu0 %v2643
        %2759 = vmatprep.subr.mxu0 0.0
        %2760 = vmatpush1.msra.mxu0 %v2644
        %2761 = vmatprep.subr.mxu0 0.0
        %2762 = vmatpush1.msra.mxu0 %v2645
        %2763 = vmatprep.subr.mxu0 0.0
        %2764 = vmatpush1.msra.mxu0 %v2646
        %2765 = vmatprep.subr.mxu0 0.0
        %2766 = vmatpush1.msra.mxu0 0.0
        %2767 = vmatprep.subr.mxu0 0.0
        %2768 = vmatpush1.msra.mxu0 0.0
        %2769 = vmatprep.subr.mxu0 0.0
        %2770 = vmatpush1.msra.mxu0 0.0
        %2771 = vmatprep.subr.mxu0 0.0
        %2772 = vmatpush1.msra.mxu0 0.0
        %2773 = vmatprep.subr.mxu0 0.0
        %2774 = vmatpush1.msra.mxu0 0.0
        %2775 = vmatprep.subr.mxu0 0.0
        %2776 = vmatpush1.msra.mxu0 0.0
        %2777 = vmatprep.subr.mxu0 0.0
        %2778 = vmatpush1.msra.mxu0 0.0
        %2779 = vmatprep.subr.mxu0 0.0
        %2780 = vmatpush1.msra.mxu0 0.0
        %2781 = vmatprep.subr.mxu0 0.0
        %2782 = vmatpush1.msra.mxu0 0.0
        %2783 = vmatprep.subr.mxu0 0.0
        %2784 = vmatpush1.msra.mxu0 0.0
        %2785 = vmatprep.subr.mxu0 0.0
        %2786 = vmatpush1.msra.mxu0 0.0
        %2787 = vmatprep.subr.mxu0 0.0
        %2788 = vmatpush1.msra.mxu0 0.0
        %2789 = vmatprep.subr.mxu0 0.0
        %2790 = vmatpush1.msra.mxu0 0.0
        %2791 = vmatprep.subr.mxu0 0.0
        %2792 = vmatpush1.msra.mxu0 0.0
        %2793 = vmatprep.subr.mxu0 0.0
        %2794 = vmatpush1.msra.mxu0 0.0
        %2795 = vmatprep.subr.mxu0 0.0
        %2796 = vmatpush1.msra.mxu0 0.0
        %2797 = vmatprep.subr.mxu0 0.0
        %2798 = vmatpush1.msra.mxu0 0.0
        %2799 = vmatprep.subr.mxu0 0.0
        %2800 = vmatpush1.msra.mxu0 0.0
        %2801 = vmatprep.subr.mxu0 0.0
        %2802 = vmatpush1.msra.mxu0 0.0
        %2803 = vmatprep.subr.mxu0 0.0
        %2804 = vmatpush1.msra.mxu0 0.0
        %2805 = vmatprep.subr.mxu0 0.0
        %2806 = vmatpush1.msra.mxu0 0.0
        %2807 = vmatprep.subr.mxu0 0.0
        %2808 = vmatpush1.msra.mxu0 0.0
        %2809 = vmatprep.subr.mxu0 0.0
        %2810 = vmatpush1.msra.mxu0 0.0
        %2811 = vmatprep.subr.mxu0 0.0
        %2812 = vmatpush1.msra.mxu0 0.0
        %2813 = vmatprep.subr.mxu0 0.0
        %2814 = vmatpush1.msra.mxu0 0.0
        %2815 = vmatprep.subr.mxu0 0.0
        %2816 = vmatpush1.msra.mxu0 0.0
        %2817 = vmatprep.subr.mxu0 0.0
        %2818 = vmatpush1.msra.mxu0 0.0
        %2819 = vmatprep.subr.mxu0 0.0
        %2820 = vmatpush1.msra.mxu0 0.0
        %2821 = vmatprep.mubr.f32.mxu0 0.0
        %2822 = vmatmul.mubr.f32.gmra.mrb[0].mxu0 %v2685
        %v2823 = vpop.f32.mrb[0].mxu0
        %v2824 = vadd.f32 %v2671, %v2823
        %v2825 = vpop.f32.mrb[0].mxu0
        %2826 = vdwg.mxu0
        %2827 = vmatprep.subr.mxu0 0.0
        %2828 = vmatpush1.msra.mxu0 %v2647
        %2829 = vmatprep.subr.mxu0 0.0
        %2830 = vmatpush1.msra.mxu0 %v2648
        %2831 = vmatprep.subr.mxu0 0.0
        %2832 = vmatpush1.msra.mxu0 %v2649
        %2833 = vmatprep.subr.mxu0 0.0
        %2834 = vmatpush1.msra.mxu0 %v2650
        %2835 = vmatprep.subr.mxu0 0.0
        %2836 = vmatpush1.msra.mxu0 0.0
        %2837 = vmatprep.subr.mxu0 0.0
        %2838 = vmatpush1.msra.mxu0 0.0
        %2839 = vmatprep.subr.mxu0 0.0
        %2840 = vmatpush1.msra.mxu0 0.0
        %2841 = vmatprep.subr.mxu0 0.0
        %2842 = vmatpush1.msra.mxu0 0.0
        %2843 = vmatprep.subr.mxu0 0.0
        %2844 = vmatpush1.msra.mxu0 0.0
        %2845 = vmatprep.subr.mxu0 0.0
        %2846 = vmatpush1.msra.mxu0 0.0
        %2847 = vmatprep.subr.mxu0 0.0
        %2848 = vmatpush1.msra.mxu0 0.0
        %2849 = vmatprep.subr.mxu0 0.0
        %2850 = vmatpush1.msra.mxu0 0.0
        %2851 = vmatprep.subr.mxu0 0.0
        %2852 = vmatpush1.msra.mxu0 0.0
        %2853 = vmatprep.subr.mxu0 0.0
        %2854 = vmatpush1.msra.mxu0 0.0
        %2855 = vmatprep.subr.mxu0 0.0
        %2856 = vmatpush1.msra.mxu0 0.0
        %2857 = vmatprep.subr.mxu0 0.0
        %2858 = vmatpush1.msra.mxu0 0.0
        %2859 = vmatprep.subr.mxu0 0.0
        %2860 = vmatpush1.msra.mxu0 0.0
        %2861 = vmatprep.subr.mxu0 0.0
        %2862 = vmatpush1.msra.mxu0 0.0
        %2863 = vmatprep.subr.mxu0 0.0
        %2864 = vmatpush1.msra.mxu0 0.0
        %2865 = vmatprep.subr.mxu0 0.0
        %2866 = vmatpush1.msra.mxu0 0.0
        %2867 = vmatprep.subr.mxu0 0.0
        %2868 = vmatpush1.msra.mxu0 0.0
        %2869 = vmatprep.subr.mxu0 0.0
        %2870 = vmatpush1.msra.mxu0 0.0
        %2871 = vmatprep.subr.mxu0 0.0
        %2872 = vmatpush1.msra.mxu0 0.0
        %2873 = vmatprep.subr.mxu0 0.0
        %2874 = vmatpush1.msra.mxu0 0.0
        %2875 = vmatprep.subr.mxu0 0.0
        %2876 = vmatpush1.msra.mxu0 0.0
        %2877 = vmatprep.subr.mxu0 0.0
        %2878 = vmatpush1.msra.mxu0 0.0
        %2879 = vmatprep.subr.mxu0 0.0
        %2880 = vmatpush1.msra.mxu0 0.0
        %2881 = vmatprep.subr.mxu0 0.0
        %2882 = vmatpush1.msra.mxu0 0.0
        %2883 = vmatprep.subr.mxu0 0.0
        %2884 = vmatpush1.msra.mxu0 0.0
        %2885 = vmatprep.subr.mxu0 0.0
        %2886 = vmatpush1.msra.mxu0 0.0
        %2887 = vmatprep.subr.mxu0 0.0
        %2888 = vmatpush1.msra.mxu0 0.0
        %2889 = vmatprep.subr.mxu0 0.0
        %2890 = vmatpush1.msra.mxu0 0.0
        %2891 = vmatprep.mubr.f32.mxu0 0.0
        %2892 = vmatmul.mubr.f32.gmra.mrb[0].mxu0 %v2685
        %v2893 = vpop.f32.mrb[0].mxu0
        %v2894 = vadd.f32 %v2675, %v2893
        %v2895 = vpop.f32.mrb[0].mxu0
        %2896 = vdwg.mxu0
        %2897 = vmatprep.subr.mxu0 0.0
        %2898 = vmatpush1.msra.mxu0 %v2651
        %2899 = vmatprep.subr.mxu0 0.0
        %2900 = vmatpush1.msra.mxu0 %v2652
        %2901 = vmatprep.subr.mxu0 0.0
        %2902 = vmatpush1.msra.mxu0 %v2653
        %2903 = vmatprep.subr.mxu0 0.0
        %2904 = vmatpush1.msra.mxu0 %v2654
        %2905 = vmatprep.subr.mxu0 0.0
        %2906 = vmatpush1.msra.mxu0 0.0
        %2907 = vmatprep.subr.mxu0 0.0
        %2908 = vmatpush1.msra.mxu0 0.0
        %2909 = vmatprep.subr.mxu0 0.0
        %2910 = vmatpush1.msra.mxu0 0.0
        %2911 = vmatprep.subr.mxu0 0.0
        %2912 = vmatpush1.msra.mxu0 0.0
        %2913 = vmatprep.subr.mxu0 0.0
        %2914 = vmatpush1.msra.mxu0 0.0
        %2915 = vmatprep.subr.mxu0 0.0
        %2916 = vmatpush1.msra.mxu0 0.0
        %2917 = vmatprep.subr.mxu0 0.0
        %2918 = vmatpush1.msra.mxu0 0.0
        %2919 = vmatprep.subr.mxu0 0.0
        %2920 = vmatpush1.msra.mxu0 0.0
        %2921 = vmatprep.subr.mxu0 0.0
        %2922 = vmatpush1.msra.mxu0 0.0
        %2923 = vmatprep.subr.mxu0 0.0
        %2924 = vmatpush1.msra.mxu0 0.0
        %2925 = vmatprep.subr.mxu0 0.0
        %2926 = vmatpush1.msra.mxu0 0.0
        %2927 = vmatprep.subr.mxu0 0.0
        %2928 = vmatpush1.msra.mxu0 0.0
        %2929 = vmatprep.subr.mxu0 0.0
        %2930 = vmatpush1.msra.mxu0 0.0
        %2931 = vmatprep.subr.mxu0 0.0
        %2932 = vmatpush1.msra.mxu0 0.0
        %2933 = vmatprep.subr.mxu0 0.0
        %2934 = vmatpush1.msra.mxu0 0.0
        %2935 = vmatprep.subr.mxu0 0.0
        %2936 = vmatpush1.msra.mxu0 0.0
        %2937 = vmatprep.subr.mxu0 0.0
        %2938 = vmatpush1.msra.mxu0 0.0
        %2939 = vmatprep.subr.mxu0 0.0
        %2940 = vmatpush1.msra.mxu0 0.0
        %2941 = vmatprep.subr.mxu0 0.0
        %2942 = vmatpush1.msra.mxu0 0.0
        %2943 = vmatprep.subr.mxu0 0.0
        %2944 = vmatpush1.msra.mxu0 0.0
        %2945 = vmatprep.subr.mxu0 0.0
        %2946 = vmatpush1.msra.mxu0 0.0
        %2947 = vmatprep.subr.mxu0 0.0
        %2948 = vmatpush1.msra.mxu0 0.0
        %2949 = vmatprep.subr.mxu0 0.0
        %2950 = vmatpush1.msra.mxu0 0.0
        %2951 = vmatprep.subr.mxu0 0.0
        %2952 = vmatpush1.msra.mxu0 0.0
        %2953 = vmatprep.subr.mxu0 0.0
        %2954 = vmatpush1.msra.mxu0 0.0
        %2955 = vmatprep.subr.mxu0 0.0
        %2956 = vmatpush1.msra.mxu0 0.0
        %2957 = vmatprep.subr.mxu0 0.0
        %2958 = vmatpush1.msra.mxu0 0.0
        %2959 = vmatprep.subr.mxu0 0.0
        %2960 = vmatpush1.msra.mxu0 0.0
        %2961 = vmatprep.mubr.f32.mxu0 0.0
        %2962 = vmatmul.mubr.f32.gmra.mrb[0].mxu0 %v2685
        %v2963 = vpop.f32.mrb[0].mxu0
        %v2964 = vadd.f32 %v2679, %v2963
        %v2965 = vpop.f32.mrb[0].mxu0
        %2966 = vdwg.mxu0
        %s2967 = scalar_lea.vmem %s7, 512
        %v2968 = vld [vmem:[%s2967] sm:$0xff]
        %v2969 = vld [vmem:[%s2967 + $0x8] sm:$0xff]
        %v2970 = vld [vmem:[%s2967 + $0x10] sm:$0xff]
        %v2971 = vld [vmem:[%s2967 + $0x18] sm:$0xff]
        %v2972 = vld [vmem:[%s2967 + $0x20] sm:$0xff]
        %v2973 = vld [vmem:[%s2967 + $0x28] sm:$0xff]
        %v2974 = vld [vmem:[%s2967 + $0x30] sm:$0xff]
        %v2975 = vld [vmem:[%s2967 + $0x38] sm:$0xff]
        %v2976 = vld [vmem:[%s2967 + $0x40] sm:$0xff]
        %v2977 = vld [vmem:[%s2967 + $0x48] sm:$0xff]
        %v2978 = vld [vmem:[%s2967 + $0x50] sm:$0xff]
        %v2979 = vld [vmem:[%s2967 + $0x58] sm:$0xff]
        %v2980 = vld [vmem:[%s2967 + $0x60] sm:$0xff]
        %v2981 = vld [vmem:[%s2967 + $0x68] sm:$0xff]
        %v2982 = vld [vmem:[%s2967 + $0x70] sm:$0xff]
        %v2983 = vld [vmem:[%s2967 + $0x78] sm:$0xff]
        %s2984 = scalar_lea.vmem %s5, 16
        %v2985 = vld [vmem:[%s2984] sm:$0x1]
        %v2986 = vld [vmem:[%s2984 + $0x1] sm:$0x1]
        %v2987 = vld [vmem:[%s2984 + $0x2] sm:$0x1]
        %v2988 = vld [vmem:[%s2984 + $0x3] sm:$0x1]
        %v2993 = vlaneseq
        %v2994 = vshrl.u32 %v2993, 7
        %v2995 = vsub.s32 0, %v2994
        %v2996 = vrot.slane %v2985, %v2995
        %v2997 = vlaneseq
        %v2998 = vshrl.u32 %v2997, 7
        %v2999 = vsub.s32 0, %v2998
        %v3000 = vrot.slane %v2986, %v2999
        %v3001 = vlaneseq
        %v3002 = vshrl.u32 %v3001, 7
        %v3003 = vsub.s32 0, %v3002
        %v3004 = vrot.slane %v2987, %v3003
        %v3005 = vlaneseq
        %v3006 = vshrl.u32 %v3005, 7
        %v3007 = vsub.s32 0, %v3006
        %v3008 = vrot.slane %v2988, %v3007
        %3013 = vmatprep.subr.mxu0 0.0
        %3014 = vmatpush1.msra.mxu0 %v2968
        %3015 = vmatprep.subr.mxu0 0.0
        %3016 = vmatpush1.msra.mxu0 %v2969
        %3017 = vmatprep.subr.mxu0 0.0
        %3018 = vmatpush1.msra.mxu0 %v2970
        %3019 = vmatprep.subr.mxu0 0.0
        %3020 = vmatpush1.msra.mxu0 %v2971
        %3021 = vmatprep.subr.mxu0 0.0
        %3022 = vmatpush1.msra.mxu0 0.0
        %3023 = vmatprep.subr.mxu0 0.0
        %3024 = vmatpush1.msra.mxu0 0.0
        %3025 = vmatprep.subr.mxu0 0.0
        %3026 = vmatpush1.msra.mxu0 0.0
        %3027 = vmatprep.subr.mxu0 0.0
        %3028 = vmatpush1.msra.mxu0 0.0
        %3029 = vmatprep.subr.mxu0 0.0
        %3030 = vmatpush1.msra.mxu0 0.0
        %3031 = vmatprep.subr.mxu0 0.0
        %3032 = vmatpush1.msra.mxu0 0.0
        %3033 = vmatprep.subr.mxu0 0.0
        %3034 = vmatpush1.msra.mxu0 0.0
        %3035 = vmatprep.subr.mxu0 0.0
        %3036 = vmatpush1.msra.mxu0 0.0
        %3037 = vmatprep.subr.mxu0 0.0
        %3038 = vmatpush1.msra.mxu0 0.0
        %3039 = vmatprep.subr.mxu0 0.0
        %3040 = vmatpush1.msra.mxu0 0.0
        %3041 = vmatprep.subr.mxu0 0.0
        %3042 = vmatpush1.msra.mxu0 0.0
        %3043 = vmatprep.subr.mxu0 0.0
        %3044 = vmatpush1.msra.mxu0 0.0
        %3045 = vmatprep.subr.mxu0 0.0
        %3046 = vmatpush1.msra.mxu0 0.0
        %3047 = vmatprep.subr.mxu0 0.0
        %3048 = vmatpush1.msra.mxu0 0.0
        %3049 = vmatprep.subr.mxu0 0.0
        %3050 = vmatpush1.msra.mxu0 0.0
        %3051 = vmatprep.subr.mxu0 0.0
        %3052 = vmatpush1.msra.mxu0 0.0
        %3053 = vmatprep.subr.mxu0 0.0
        %3054 = vmatpush1.msra.mxu0 0.0
        %3055 = vmatprep.subr.mxu0 0.0
        %3056 = vmatpush1.msra.mxu0 0.0
        %3057 = vmatprep.subr.mxu0 0.0
        %3058 = vmatpush1.msra.mxu0 0.0
        %3059 = vmatprep.subr.mxu0 0.0
        %3060 = vmatpush1.msra.mxu0 0.0
        %3061 = vmatprep.subr.mxu0 0.0
        %3062 = vmatpush1.msra.mxu0 0.0
        %3063 = vmatprep.subr.mxu0 0.0
        %3064 = vmatpush1.msra.mxu0 0.0
        %3065 = vmatprep.subr.mxu0 0.0
        %3066 = vmatpush1.msra.mxu0 0.0
        %3067 = vmatprep.subr.mxu0 0.0
        %3068 = vmatpush1.msra.mxu0 0.0
        %3069 = vmatprep.subr.mxu0 0.0
        %3070 = vmatpush1.msra.mxu0 0.0
        %3071 = vmatprep.subr.mxu0 0.0
        %3072 = vmatpush1.msra.mxu0 0.0
        %3073 = vmatprep.subr.mxu0 0.0
        %3074 = vmatpush1.msra.mxu0 0.0
        %3075 = vmatprep.subr.mxu0 0.0
        %3076 = vmatpush1.msra.mxu0 0.0
        %3077 = vmatprep.mubr.f32.mxu0 0.0
        %3078 = vmatmul.mubr.f32.gmra.mrb[0].mxu0 %v2685
        %v3079 = vpop.f32.mrb[0].mxu0
        %v3080 = vadd.f32 %v2996, %v3079
        %v3081 = vpop.f32.mrb[0].mxu0
        %3082 = vdwg.mxu0
        %3083 = vmatprep.subr.mxu0 0.0
        %3084 = vmatpush1.msra.mxu0 %v2972
        %3085 = vmatprep.subr.mxu0 0.0
        %3086 = vmatpush1.msra.mxu0 %v2973
        %3087 = vmatprep.subr.mxu0 0.0
        %3088 = vmatpush1.msra.mxu0 %v2974
        %3089 = vmatprep.subr.mxu0 0.0
        %3090 = vmatpush1.msra.mxu0 %v2975
        %3091 = vmatprep.subr.mxu0 0.0
        %3092 = vmatpush1.msra.mxu0 0.0
        %3093 = vmatprep.subr.mxu0 0.0
        %3094 = vmatpush1.msra.mxu0 0.0
        %3095 = vmatprep.subr.mxu0 0.0
        %3096 = vmatpush1.msra.mxu0 0.0
        %3097 = vmatprep.subr.mxu0 0.0
        %3098 = vmatpush1.msra.mxu0 0.0
        %3099 = vmatprep.subr.mxu0 0.0
        %3100 = vmatpush1.msra.mxu0 0.0
        %3101 = vmatprep.subr.mxu0 0.0
        %3102 = vmatpush1.msra.mxu0 0.0
        %3103 = vmatprep.subr.mxu0 0.0
        %3104 = vmatpush1.msra.mxu0 0.0
        %3105 = vmatprep.subr.mxu0 0.0
        %3106 = vmatpush1.msra.mxu0 0.0
        %3107 = vmatprep.subr.mxu0 0.0
        %3108 = vmatpush1.msra.mxu0 0.0
        %3109 = vmatprep.subr.mxu0 0.0
        %3110 = vmatpush1.msra.mxu0 0.0
        %3111 = vmatprep.subr.mxu0 0.0
        %3112 = vmatpush1.msra.mxu0 0.0
        %3113 = vmatprep.subr.mxu0 0.0
        %3114 = vmatpush1.msra.mxu0 0.0
        %3115 = vmatprep.subr.mxu0 0.0
        %3116 = vmatpush1.msra.mxu0 0.0
        %3117 = vmatprep.subr.mxu0 0.0
        %3118 = vmatpush1.msra.mxu0 0.0
        %3119 = vmatprep.subr.mxu0 0.0
        %3120 = vmatpush1.msra.mxu0 0.0
        %3121 = vmatprep.subr.mxu0 0.0
        %3122 = vmatpush1.msra.mxu0 0.0
        %3123 = vmatprep.subr.mxu0 0.0
        %3124 = vmatpush1.msra.mxu0 0.0
        %3125 = vmatprep.subr.mxu0 0.0
        %3126 = vmatpush1.msra.mxu0 0.0
        %3127 = vmatprep.subr.mxu0 0.0
        %3128 = vmatpush1.msra.mxu0 0.0
        %3129 = vmatprep.subr.mxu0 0.0
        %3130 = vmatpush1.msra.mxu0 0.0
        %3131 = vmatprep.subr.mxu0 0.0
        %3132 = vmatpush1.msra.mxu0 0.0
        %3133 = vmatprep.subr.mxu0 0.0
        %3134 = vmatpush1.msra.mxu0 0.0
        %3135 = vmatprep.subr.mxu0 0.0
        %3136 = vmatpush1.msra.mxu0 0.0
        %3137 = vmatprep.subr.mxu0 0.0
        %3138 = vmatpush1.msra.mxu0 0.0
        %3139 = vmatprep.subr.mxu0 0.0
        %3140 = vmatpush1.msra.mxu0 0.0
        %3141 = vmatprep.subr.mxu0 0.0
        %3142 = vmatpush1.msra.mxu0 0.0
        %3143 = vmatprep.subr.mxu0 0.0
        %3144 = vmatpush1.msra.mxu0 0.0
        %3145 = vmatprep.subr.mxu0 0.0
        %3146 = vmatpush1.msra.mxu0 0.0
        %3147 = vmatprep.mubr.f32.mxu0 0.0
        %3148 = vmatmul.mubr.f32.gmra.mrb[0].mxu0 %v2685
        %v3149 = vpop.f32.mrb[0].mxu0
        %v3150 = vadd.f32 %v3000, %v3149
        %v3151 = vpop.f32.mrb[0].mxu0
        %3152 = vdwg.mxu0
        %3153 = vmatprep.subr.mxu0 0.0
        %3154 = vmatpush1.msra.mxu0 %v2976
        %3155 = vmatprep.subr.mxu0 0.0
        %3156 = vmatpush1.msra.mxu0 %v2977
        %3157 = vmatprep.subr.mxu0 0.0
        %3158 = vmatpush1.msra.mxu0 %v2978
        %3159 = vmatprep.subr.mxu0 0.0
        %3160 = vmatpush1.msra.mxu0 %v2979
        %3161 = vmatprep.subr.mxu0 0.0
        %3162 = vmatpush1.msra.mxu0 0.0
        %3163 = vmatprep.subr.mxu0 0.0
        %3164 = vmatpush1.msra.mxu0 0.0
        %3165 = vmatprep.subr.mxu0 0.0
        %3166 = vmatpush1.msra.mxu0 0.0
        %3167 = vmatprep.subr.mxu0 0.0
        %3168 = vmatpush1.msra.mxu0 0.0
        %3169 = vmatprep.subr.mxu0 0.0
        %3170 = vmatpush1.msra.mxu0 0.0
        %3171 = vmatprep.subr.mxu0 0.0
        %3172 = vmatpush1.msra.mxu0 0.0
        %3173 = vmatprep.subr.mxu0 0.0
        %3174 = vmatpush1.msra.mxu0 0.0
        %3175 = vmatprep.subr.mxu0 0.0
        %3176 = vmatpush1.msra.mxu0 0.0
        %3177 = vmatprep.subr.mxu0 0.0
        %3178 = vmatpush1.msra.mxu0 0.0
        %3179 = vmatprep.subr.mxu0 0.0
        %3180 = vmatpush1.msra.mxu0 0.0
        %3181 = vmatprep.subr.mxu0 0.0
        %3182 = vmatpush1.msra.mxu0 0.0
        %3183 = vmatprep.subr.mxu0 0.0
        %3184 = vmatpush1.msra.mxu0 0.0
        %3185 = vmatprep.subr.mxu0 0.0
        %3186 = vmatpush1.msra.mxu0 0.0
        %3187 = vmatprep.subr.mxu0 0.0
        %3188 = vmatpush1.msra.mxu0 0.0
        %3189 = vmatprep.subr.mxu0 0.0
        %3190 = vmatpush1.msra.mxu0 0.0
        %3191 = vmatprep.subr.mxu0 0.0
        %3192 = vmatpush1.msra.mxu0 0.0
        %3193 = vmatprep.subr.mxu0 0.0
        %3194 = vmatpush1.msra.mxu0 0.0
        %3195 = vmatprep.subr.mxu0 0.0
        %3196 = vmatpush1.msra.mxu0 0.0
        %3197 = vmatprep.subr.mxu0 0.0
        %3198 = vmatpush1.msra.mxu0 0.0
        %3199 = vmatprep.subr.mxu0 0.0
        %3200 = vmatpush1.msra.mxu0 0.0
        %3201 = vmatprep.subr.mxu0 0.0
        %3202 = vmatpush1.msra.mxu0 0.0
        %3203 = vmatprep.subr.mxu0 0.0
        %3204 = vmatpush1.msra.mxu0 0.0
        %3205 = vmatprep.subr.mxu0 0.0
        %3206 = vmatpush1.msra.mxu0 0.0
        %3207 = vmatprep.subr.mxu0 0.0
        %3208 = vmatpush1.msra.mxu0 0.0
        %3209 = vmatprep.subr.mxu0 0.0
        %3210 = vmatpush1.msra.mxu0 0.0
        %3211 = vmatprep.subr.mxu0 0.0
        %3212 = vmatpush1.msra.mxu0 0.0
        %3213 = vmatprep.subr.mxu0 0.0
        %3214 = vmatpush1.msra.mxu0 0.0
        %3215 = vmatprep.subr.mxu0 0.0
        %3216 = vmatpush1.msra.mxu0 0.0
        %3217 = vmatprep.mubr.f32.mxu0 0.0
        %3218 = vmatmul.mubr.f32.gmra.mrb[0].mxu0 %v2685
        %v3219 = vpop.f32.mrb[0].mxu0
        %v3220 = vadd.f32 %v3004, %v3219
        %v3221 = vpop.f32.mrb[0].mxu0
        %3222 = vdwg.mxu0
        %3223 = vmatprep.subr.mxu0 0.0
        %3224 = vmatpush1.msra.mxu0 %v2980
        %3225 = vmatprep.subr.mxu0 0.0
        %3226 = vmatpush1.msra.mxu0 %v2981
        %3227 = vmatprep.subr.mxu0 0.0
        %3228 = vmatpush1.msra.mxu0 %v2982
        %3229 = vmatprep.subr.mxu0 0.0
        %3230 = vmatpush1.msra.mxu0 %v2983
        %3231 = vmatprep.subr.mxu0 0.0
        %3232 = vmatpush1.msra.mxu0 0.0
        %3233 = vmatprep.subr.mxu0 0.0
        %3234 = vmatpush1.msra.mxu0 0.0
        %3235 = vmatprep.subr.mxu0 0.0
        %3236 = vmatpush1.msra.mxu0 0.0
        %3237 = vmatprep.subr.mxu0 0.0
        %3238 = vmatpush1.msra.mxu0 0.0
        %3239 = vmatprep.subr.mxu0 0.0
        %3240 = vmatpush1.msra.mxu0 0.0
        %3241 = vmatprep.subr.mxu0 0.0
        %3242 = vmatpush1.msra.mxu0 0.0
        %3243 = vmatprep.subr.mxu0 0.0
        %3244 = vmatpush1.msra.mxu0 0.0
        %3245 = vmatprep.subr.mxu0 0.0
        %3246 = vmatpush1.msra.mxu0 0.0
        %3247 = vmatprep.subr.mxu0 0.0
        %3248 = vmatpush1.msra.mxu0 0.0
        %3249 = vmatprep.subr.mxu0 0.0
        %3250 = vmatpush1.msra.mxu0 0.0
        %3251 = vmatprep.subr.mxu0 0.0
        %3252 = vmatpush1.msra.mxu0 0.0
        %3253 = vmatprep.subr.mxu0 0.0
        %3254 = vmatpush1.msra.mxu0 0.0
        %3255 = vmatprep.subr.mxu0 0.0
        %3256 = vmatpush1.msra.mxu0 0.0
        %3257 = vmatprep.subr.mxu0 0.0
        %3258 = vmatpush1.msra.mxu0 0.0
        %3259 = vmatprep.subr.mxu0 0.0
        %3260 = vmatpush1.msra.mxu0 0.0
        %3261 = vmatprep.subr.mxu0 0.0
        %3262 = vmatpush1.msra.mxu0 0.0
        %3263 = vmatprep.subr.mxu0 0.0
        %3264 = vmatpush1.msra.mxu0 0.0
        %3265 = vmatprep.subr.mxu0 0.0
        %3266 = vmatpush1.msra.mxu0 0.0
        %3267 = vmatprep.subr.mxu0 0.0
        %3268 = vmatpush1.msra.mxu0 0.0
        %3269 = vmatprep.subr.mxu0 0.0
        %3270 = vmatpush1.msra.mxu0 0.0
        %3271 = vmatprep.subr.mxu0 0.0
        %3272 = vmatpush1.msra.mxu0 0.0
        %3273 = vmatprep.subr.mxu0 0.0
        %3274 = vmatpush1.msra.mxu0 0.0
        %3275 = vmatprep.subr.mxu0 0.0
        %3276 = vmatpush1.msra.mxu0 0.0
        %3277 = vmatprep.subr.mxu0 0.0
        %3278 = vmatpush1.msra.mxu0 0.0
        %3279 = vmatprep.subr.mxu0 0.0
        %3280 = vmatpush1.msra.mxu0 0.0
        %3281 = vmatprep.subr.mxu0 0.0
        %3282 = vmatpush1.msra.mxu0 0.0
        %3283 = vmatprep.subr.mxu0 0.0
        %3284 = vmatpush1.msra.mxu0 0.0
        %3285 = vmatprep.subr.mxu0 0.0
        %3286 = vmatpush1.msra.mxu0 0.0
        %3287 = vmatprep.mubr.f32.mxu0 0.0
        %3288 = vmatmul.mubr.f32.gmra.mrb[0].mxu0 %v2685
        %v3289 = vpop.f32.mrb[0].mxu0
        %v3290 = vadd.f32 %v3008, %v3289
        %v3291 = vpop.f32.mrb[0].mxu0
        %3292 = vdwg.mxu0
        %s3293 = scalar_lea.vmem %s7, 640
        %v3294 = vld [vmem:[%s3293] sm:$0xff]
        %v3295 = vld [vmem:[%s3293 + $0x8] sm:$0xff]
        %v3296 = vld [vmem:[%s3293 + $0x10] sm:$0xff]
        %v3297 = vld [vmem:[%s3293 + $0x18] sm:$0xff]
        %v3298 = vld [vmem:[%s3293 + $0x20] sm:$0xff]
        %v3299 = vld [vmem:[%s3293 + $0x28] sm:$0xff]
        %v3300 = vld [vmem:[%s3293 + $0x30] sm:$0xff]
        %v3301 = vld [vmem:[%s3293 + $0x38] sm:$0xff]
        %v3302 = vld [vmem:[%s3293 + $0x40] sm:$0xff]
        %v3303 = vld [vmem:[%s3293 + $0x48] sm:$0xff]
        %v3304 = vld [vmem:[%s3293 + $0x50] sm:$0xff]
        %v3305 = vld [vmem:[%s3293 + $0x58] sm:$0xff]
        %v3306 = vld [vmem:[%s3293 + $0x60] sm:$0xff]
        %v3307 = vld [vmem:[%s3293 + $0x68] sm:$0xff]
        %v3308 = vld [vmem:[%s3293 + $0x70] sm:$0xff]
        %v3309 = vld [vmem:[%s3293 + $0x78] sm:$0xff]
        %s3310 = scalar_lea.vmem %s5, 20
        %v3311 = vld [vmem:[%s3310] sm:$0x1]
        %v3312 = vld [vmem:[%s3310 + $0x1] sm:$0x1]
        %v3313 = vld [vmem:[%s3310 + $0x2] sm:$0x1]
        %v3314 = vld [vmem:[%s3310 + $0x3] sm:$0x1]
        %v3319 = vlaneseq
        %v3320 = vshrl.u32 %v3319, 7
        %v3321 = vsub.s32 0, %v3320
        %v3322 = vrot.slane %v3311, %v3321
        %v3323 = vlaneseq
        %v3324 = vshrl.u32 %v3323, 7
        %v3325 = vsub.s32 0, %v3324
        %v3326 = vrot.slane %v3312, %v3325
        %v3327 = vlaneseq
        %v3328 = vshrl.u32 %v3327, 7
        %v3329 = vsub.s32 0, %v3328
        %v3330 = vrot.slane %v3313, %v3329
        %v3331 = vlaneseq
        %v3332 = vshrl.u32 %v3331, 7
        %v3333 = vsub.s32 0, %v3332
        %v3334 = vrot.slane %v3314, %v3333
        %3339 = vmatprep.subr.mxu0 0.0
        %3340 = vmatpush1.msra.mxu0 %v3294
        %3341 = vmatprep.subr.mxu0 0.0
        %3342 = vmatpush1.msra.mxu0 %v3295
        %3343 = vmatprep.subr.mxu0 0.0
        %3344 = vmatpush1.msra.mxu0 %v3296
        %3345 = vmatprep.subr.mxu0 0.0
        %3346 = vmatpush1.msra.mxu0 %v3297
        %3347 = vmatprep.subr.mxu0 0.0
        %3348 = vmatpush1.msra.mxu0 0.0
        %3349 = vmatprep.subr.mxu0 0.0
        %3350 = vmatpush1.msra.mxu0 0.0
        %3351 = vmatprep.subr.mxu0 0.0
        %3352 = vmatpush1.msra.mxu0 0.0
        %3353 = vmatprep.subr.mxu0 0.0
        %3354 = vmatpush1.msra.mxu0 0.0
        %3355 = vmatprep.subr.mxu0 0.0
        %3356 = vmatpush1.msra.mxu0 0.0
        %3357 = vmatprep.subr.mxu0 0.0
        %3358 = vmatpush1.msra.mxu0 0.0
        %3359 = vmatprep.subr.mxu0 0.0
        %3360 = vmatpush1.msra.mxu0 0.0
        %3361 = vmatprep.subr.mxu0 0.0
        %3362 = vmatpush1.msra.mxu0 0.0
        %3363 = vmatprep.subr.mxu0 0.0
        %3364 = vmatpush1.msra.mxu0 0.0
        %3365 = vmatprep.subr.mxu0 0.0
        %3366 = vmatpush1.msra.mxu0 0.0
        %3367 = vmatprep.subr.mxu0 0.0
        %3368 = vmatpush1.msra.mxu0 0.0
        %3369 = vmatprep.subr.mxu0 0.0
        %3370 = vmatpush1.msra.mxu0 0.0
        %3371 = vmatprep.subr.mxu0 0.0
        %3372 = vmatpush1.msra.mxu0 0.0
        %3373 = vmatprep.subr.mxu0 0.0
        %3374 = vmatpush1.msra.mxu0 0.0
        %3375 = vmatprep.subr.mxu0 0.0
        %3376 = vmatpush1.msra.mxu0 0.0
        %3377 = vmatprep.subr.mxu0 0.0
        %3378 = vmatpush1.msra.mxu0 0.0
        %3379 = vmatprep.subr.mxu0 0.0
        %3380 = vmatpush1.msra.mxu0 0.0
        %3381 = vmatprep.subr.mxu0 0.0
        %3382 = vmatpush1.msra.mxu0 0.0
        %3383 = vmatprep.subr.mxu0 0.0
        %3384 = vmatpush1.msra.mxu0 0.0
        %3385 = vmatprep.subr.mxu0 0.0
        %3386 = vmatpush1.msra.mxu0 0.0
        %3387 = vmatprep.subr.mxu0 0.0
        %3388 = vmatpush1.msra.mxu0 0.0
        %3389 = vmatprep.subr.mxu0 0.0
        %3390 = vmatpush1.msra.mxu0 0.0
        %3391 = vmatprep.subr.mxu0 0.0
        %3392 = vmatpush1.msra.mxu0 0.0
        %3393 = vmatprep.subr.mxu0 0.0
        %3394 = vmatpush1.msra.mxu0 0.0
        %3395 = vmatprep.subr.mxu0 0.0
        %3396 = vmatpush1.msra.mxu0 0.0
        %3397 = vmatprep.subr.mxu0 0.0
        %3398 = vmatpush1.msra.mxu0 0.0
        %3399 = vmatprep.subr.mxu0 0.0
        %3400 = vmatpush1.msra.mxu0 0.0
        %3401 = vmatprep.subr.mxu0 0.0
        %3402 = vmatpush1.msra.mxu0 0.0
        %3403 = vmatprep.mubr.f32.mxu0 0.0
        %3404 = vmatmul.mubr.f32.gmra.mrb[0].mxu0 %v2685
        %v3405 = vpop.f32.mrb[0].mxu0
        %v3406 = vadd.f32 %v3322, %v3405
        %v3407 = vpop.f32.mrb[0].mxu0
        %3408 = vdwg.mxu0
        %3409 = vmatprep.subr.mxu0 0.0
        %3410 = vmatpush1.msra.mxu0 %v3298
        %3411 = vmatprep.subr.mxu0 0.0
        %3412 = vmatpush1.msra.mxu0 %v3299
        %3413 = vmatprep.subr.mxu0 0.0
        %3414 = vmatpush1.msra.mxu0 %v3300
        %3415 = vmatprep.subr.mxu0 0.0
        %3416 = vmatpush1.msra.mxu0 %v3301
        %3417 = vmatprep.subr.mxu0 0.0
        %3418 = vmatpush1.msra.mxu0 0.0
        %3419 = vmatprep.subr.mxu0 0.0
        %3420 = vmatpush1.msra.mxu0 0.0
        %3421 = vmatprep.subr.mxu0 0.0
        %3422 = vmatpush1.msra.mxu0 0.0
        %3423 = vmatprep.subr.mxu0 0.0
        %3424 = vmatpush1.msra.mxu0 0.0
        %3425 = vmatprep.subr.mxu0 0.0
        %3426 = vmatpush1.msra.mxu0 0.0
        %3427 = vmatprep.subr.mxu0 0.0
        %3428 = vmatpush1.msra.mxu0 0.0
        %3429 = vmatprep.subr.mxu0 0.0
        %3430 = vmatpush1.msra.mxu0 0.0
        %3431 = vmatprep.subr.mxu0 0.0
        %3432 = vmatpush1.msra.mxu0 0.0
        %3433 = vmatprep.subr.mxu0 0.0
        %3434 = vmatpush1.msra.mxu0 0.0
        %3435 = vmatprep.subr.mxu0 0.0
        %3436 = vmatpush1.msra.mxu0 0.0
        %3437 = vmatprep.subr.mxu0 0.0
        %3438 = vmatpush1.msra.mxu0 0.0
        %3439 = vmatprep.subr.mxu0 0.0
        %3440 = vmatpush1.msra.mxu0 0.0
        %3441 = vmatprep.subr.mxu0 0.0
        %3442 = vmatpush1.msra.mxu0 0.0
        %3443 = vmatprep.subr.mxu0 0.0
        %3444 = vmatpush1.msra.mxu0 0.0
        %3445 = vmatprep.subr.mxu0 0.0
        %3446 = vmatpush1.msra.mxu0 0.0
        %3447 = vmatprep.subr.mxu0 0.0
        %3448 = vmatpush1.msra.mxu0 0.0
        %3449 = vmatprep.subr.mxu0 0.0
        %3450 = vmatpush1.msra.mxu0 0.0
        %3451 = vmatprep.subr.mxu0 0.0
        %3452 = vmatpush1.msra.mxu0 0.0
        %3453 = vmatprep.subr.mxu0 0.0
        %3454 = vmatpush1.msra.mxu0 0.0
        %3455 = vmatprep.subr.mxu0 0.0
        %3456 = vmatpush1.msra.mxu0 0.0
        %3457 = vmatprep.subr.mxu0 0.0
        %3458 = vmatpush1.msra.mxu0 0.0
        %3459 = vmatprep.subr.mxu0 0.0
        %3460 = vmatpush1.msra.mxu0 0.0
        %3461 = vmatprep.subr.mxu0 0.0
        %3462 = vmatpush1.msra.mxu0 0.0
        %3463 = vmatprep.subr.mxu0 0.0
        %3464 = vmatpush1.msra.mxu0 0.0
        %3465 = vmatprep.subr.mxu0 0.0
        %3466 = vmatpush1.msra.mxu0 0.0
        %3467 = vmatprep.subr.mxu0 0.0
        %3468 = vmatpush1.msra.mxu0 0.0
        %3469 = vmatprep.subr.mxu0 0.0
        %3470 = vmatpush1.msra.mxu0 0.0
        %3471 = vmatprep.subr.mxu0 0.0
        %3472 = vmatpush1.msra.mxu0 0.0
        %3473 = vmatprep.mubr.f32.mxu0 0.0
        %3474 = vmatmul.mubr.f32.gmra.mrb[0].mxu0 %v2685
        %v3475 = vpop.f32.mrb[0].mxu0
        %v3476 = vadd.f32 %v3326, %v3475
        %v3477 = vpop.f32.mrb[0].mxu0
        %3478 = vdwg.mxu0
        %3479 = vmatprep.subr.mxu0 0.0
        %3480 = vmatpush1.msra.mxu0 %v3302
        %3481 = vmatprep.subr.mxu0 0.0
        %3482 = vmatpush1.msra.mxu0 %v3303
        %3483 = vmatprep.subr.mxu0 0.0
        %3484 = vmatpush1.msra.mxu0 %v3304
        %3485 = vmatprep.subr.mxu0 0.0
        %3486 = vmatpush1.msra.mxu0 %v3305
        %3487 = vmatprep.subr.mxu0 0.0
        %3488 = vmatpush1.msra.mxu0 0.0
        %3489 = vmatprep.subr.mxu0 0.0
        %3490 = vmatpush1.msra.mxu0 0.0
        %3491 = vmatprep.subr.mxu0 0.0
        %3492 = vmatpush1.msra.mxu0 0.0
        %3493 = vmatprep.subr.mxu0 0.0
        %3494 = vmatpush1.msra.mxu0 0.0
        %3495 = vmatprep.subr.mxu0 0.0
        %3496 = vmatpush1.msra.mxu0 0.0
        %3497 = vmatprep.subr.mxu0 0.0
        %3498 = vmatpush1.msra.mxu0 0.0
        %3499 = vmatprep.subr.mxu0 0.0
        %3500 = vmatpush1.msra.mxu0 0.0
        %3501 = vmatprep.subr.mxu0 0.0
        %3502 = vmatpush1.msra.mxu0 0.0
        %3503 = vmatprep.subr.mxu0 0.0
        %3504 = vmatpush1.msra.mxu0 0.0
        %3505 = vmatprep.subr.mxu0 0.0
        %3506 = vmatpush1.msra.mxu0 0.0
        %3507 = vmatprep.subr.mxu0 0.0
        %3508 = vmatpush1.msra.mxu0 0.0
        %3509 = vmatprep.subr.mxu0 0.0
        %3510 = vmatpush1.msra.mxu0 0.0
        %3511 = vmatprep.subr.mxu0 0.0
        %3512 = vmatpush1.msra.mxu0 0.0
        %3513 = vmatprep.subr.mxu0 0.0
        %3514 = vmatpush1.msra.mxu0 0.0
        %3515 = vmatprep.subr.mxu0 0.0
        %3516 = vmatpush1.msra.mxu0 0.0
        %3517 = vmatprep.subr.mxu0 0.0
        %3518 = vmatpush1.msra.mxu0 0.0
        %3519 = vmatprep.subr.mxu0 0.0
        %3520 = vmatpush1.msra.mxu0 0.0
        %3521 = vmatprep.subr.mxu0 0.0
        %3522 = vmatpush1.msra.mxu0 0.0
        %3523 = vmatprep.subr.mxu0 0.0
        %3524 = vmatpush1.msra.mxu0 0.0
        %3525 = vmatprep.subr.mxu0 0.0
        %3526 = vmatpush1.msra.mxu0 0.0
        %3527 = vmatprep.subr.mxu0 0.0
        %3528 = vmatpush1.msra.mxu0 0.0
        %3529 = vmatprep.subr.mxu0 0.0
        %3530 = vmatpush1.msra.mxu0 0.0
        %3531 = vmatprep.subr.mxu0 0.0
        %3532 = vmatpush1.msra.mxu0 0.0
        %3533 = vmatprep.subr.mxu0 0.0
        %3534 = vmatpush1.msra.mxu0 0.0
        %3535 = vmatprep.subr.mxu0 0.0
        %3536 = vmatpush1.msra.mxu0 0.0
        %3537 = vmatprep.subr.mxu0 0.0
        %3538 = vmatpush1.msra.mxu0 0.0
        %3539 = vmatprep.subr.mxu0 0.0
        %3540 = vmatpush1.msra.mxu0 0.0
        %3541 = vmatprep.subr.mxu0 0.0
        %3542 = vmatpush1.msra.mxu0 0.0
        %3543 = vmatprep.mubr.f32.mxu0 0.0
        %3544 = vmatmul.mubr.f32.gmra.mrb[0].mxu0 %v2685
        %v3545 = vpop.f32.mrb[0].mxu0
        %v3546 = vadd.f32 %v3330, %v3545
        %v3547 = vpop.f32.mrb[0].mxu0
        %3548 = vdwg.mxu0
        %3549 = vmatprep.subr.mxu0 0.0
        %3550 = vmatpush1.msra.mxu0 %v3306
        %3551 = vmatprep.subr.mxu0 0.0
        %3552 = vmatpush1.msra.mxu0 %v3307
        %3553 = vmatprep.subr.mxu0 0.0
        %3554 = vmatpush1.msra.mxu0 %v3308
        %3555 = vmatprep.subr.mxu0 0.0
        %3556 = vmatpush1.msra.mxu0 %v3309
        %3557 = vmatprep.subr.mxu0 0.0
        %3558 = vmatpush1.msra.mxu0 0.0
        %3559 = vmatprep.subr.mxu0 0.0
        %3560 = vmatpush1.msra.mxu0 0.0
        %3561 = vmatprep.subr.mxu0 0.0
        %3562 = vmatpush1.msra.mxu0 0.0
        %3563 = vmatprep.subr.mxu0 0.0
        %3564 = vmatpush1.msra.mxu0 0.0
        %3565 = vmatprep.subr.mxu0 0.0
        %3566 = vmatpush1.msra.mxu0 0.0
        %3567 = vmatprep.subr.mxu0 0.0
        %3568 = vmatpush1.msra.mxu0 0.0
        %3569 = vmatprep.subr.mxu0 0.0
        %3570 = vmatpush1.msra.mxu0 0.0
        %3571 = vmatprep.subr.mxu0 0.0
        %3572 = vmatpush1.msra.mxu0 0.0
        %3573 = vmatprep.subr.mxu0 0.0
        %3574 = vmatpush1.msra.mxu0 0.0
        %3575 = vmatprep.subr.mxu0 0.0
        %3576 = vmatpush1.msra.mxu0 0.0
        %3577 = vmatprep.subr.mxu0 0.0
        %3578 = vmatpush1.msra.mxu0 0.0
        %3579 = vmatprep.subr.mxu0 0.0
        %3580 = vmatpush1.msra.mxu0 0.0
        %3581 = vmatprep.subr.mxu0 0.0
        %3582 = vmatpush1.msra.mxu0 0.0
        %3583 = vmatprep.subr.mxu0 0.0
        %3584 = vmatpush1.msra.mxu0 0.0
        %3585 = vmatprep.subr.mxu0 0.0
        %3586 = vmatpush1.msra.mxu0 0.0
        %3587 = vmatprep.subr.mxu0 0.0
        %3588 = vmatpush1.msra.mxu0 0.0
        %3589 = vmatprep.subr.mxu0 0.0
        %3590 = vmatpush1.msra.mxu0 0.0
        %3591 = vmatprep.subr.mxu0 0.0
        %3592 = vmatpush1.msra.mxu0 0.0
        %3593 = vmatprep.subr.mxu0 0.0
        %3594 = vmatpush1.msra.mxu0 0.0
        %3595 = vmatprep.subr.mxu0 0.0
        %3596 = vmatpush1.msra.mxu0 0.0
        %3597 = vmatprep.subr.mxu0 0.0
        %3598 = vmatpush1.msra.mxu0 0.0
        %3599 = vmatprep.subr.mxu0 0.0
        %3600 = vmatpush1.msra.mxu0 0.0
        %3601 = vmatprep.subr.mxu0 0.0
        %3602 = vmatpush1.msra.mxu0 0.0
        %3603 = vmatprep.subr.mxu0 0.0
        %3604 = vmatpush1.msra.mxu0 0.0
        %3605 = vmatprep.subr.mxu0 0.0
        %3606 = vmatpush1.msra.mxu0 0.0
        %3607 = vmatprep.subr.mxu0 0.0
        %3608 = vmatpush1.msra.mxu0 0.0
        %3609 = vmatprep.subr.mxu0 0.0
        %3610 = vmatpush1.msra.mxu0 0.0
        %3611 = vmatprep.subr.mxu0 0.0
        %3612 = vmatpush1.msra.mxu0 0.0
        %3613 = vmatprep.mubr.f32.mxu0 0.0
        %3614 = vmatmul.mubr.f32.gmra.mrb[0].mxu0 %v2685
        %v3615 = vpop.f32.mrb[0].mxu0
        %v3616 = vadd.f32 %v3334, %v3615
        %v3617 = vpop.f32.mrb[0].mxu0
        %3618 = vdwg.mxu0
        %v3620 = vsel %vm1442, %v2754, 0
        %v3623 = vsel %vm1442, %v3080, 0
        %3625 = vmatprep.subr.mxu0 0.0
        %3626 = vmatpush1.xpose.msra.mxu0 %v3623
        %3627 = vmatprep.subr.mxu0 0.0
        %3628 = vmatpush1.xpose.msra.mxu0 0.0
        %3629 = vmatprep.subr.mxu0 0.0
        %3630 = vmatpush1.xpose.msra.mxu0 0.0
        %3631 = vmatprep.subr.mxu0 0.0
        %3632 = vmatpush1.xpose.msra.mxu0 0.0
        %3633 = vmatprep.subr.mxu0 0.0
        %3634 = vmatpush1.xpose.msra.mxu0 0.0
        %3635 = vmatprep.subr.mxu0 0.0
        %3636 = vmatpush1.xpose.msra.mxu0 0.0
        %3637 = vmatprep.subr.mxu0 0.0
        %3638 = vmatpush1.xpose.msra.mxu0 0.0
        %3639 = vmatprep.subr.mxu0 0.0
        %3640 = vmatpush1.xpose.msra.mxu0 0.0
        %3641 = vmatprep.subr.mxu0 0.0
        %3642 = vmatpush1.xpose.msra.mxu0 0.0
        %3643 = vmatprep.subr.mxu0 0.0
        %3644 = vmatpush1.xpose.msra.mxu0 0.0
        %3645 = vmatprep.subr.mxu0 0.0
        %3646 = vmatpush1.xpose.msra.mxu0 0.0
        %3647 = vmatprep.subr.mxu0 0.0
        %3648 = vmatpush1.xpose.msra.mxu0 0.0
        %3649 = vmatprep.subr.mxu0 0.0
        %3650 = vmatpush1.xpose.msra.mxu0 0.0
        %3651 = vmatprep.subr.mxu0 0.0
        %3652 = vmatpush1.xpose.msra.mxu0 0.0
        %3653 = vmatprep.subr.mxu0 0.0
        %3654 = vmatpush1.xpose.msra.mxu0 0.0
        %3655 = vmatprep.subr.mxu0 0.0
        %3656 = vmatpush1.xpose.msra.mxu0 0.0
        %3657 = vmatprep.subr.mxu0 0.0
        %3658 = vmatpush1.xpose.msra.mxu0 0.0
        %3659 = vmatprep.subr.mxu0 0.0
        %3660 = vmatpush1.xpose.msra.mxu0 0.0
        %3661 = vmatprep.subr.mxu0 0.0
        %3662 = vmatpush1.xpose.msra.mxu0 0.0
        %3663 = vmatprep.subr.mxu0 0.0
        %3664 = vmatpush1.xpose.msra.mxu0 0.0
        %3665 = vmatprep.subr.mxu0 0.0
        %3666 = vmatpush1.xpose.msra.mxu0 0.0
        %3667 = vmatprep.subr.mxu0 0.0
        %3668 = vmatpush1.xpose.msra.mxu0 0.0
        %3669 = vmatprep.subr.mxu0 0.0
        %3670 = vmatpush1.xpose.msra.mxu0 0.0
        %3671 = vmatprep.subr.mxu0 0.0
        %3672 = vmatpush1.xpose.msra.mxu0 0.0
        %3673 = vmatprep.subr.mxu0 0.0
        %3674 = vmatpush1.xpose.msra.mxu0 0.0
        %3675 = vmatprep.subr.mxu0 0.0
        %3676 = vmatpush1.xpose.msra.mxu0 0.0
        %3677 = vmatprep.subr.mxu0 0.0
        %3678 = vmatpush1.xpose.msra.mxu0 0.0
        %3679 = vmatprep.subr.mxu0 0.0
        %3680 = vmatpush1.xpose.msra.mxu0 0.0
        %3681 = vmatprep.subr.mxu0 0.0
        %3682 = vmatpush1.xpose.msra.mxu0 0.0
        %3683 = vmatprep.subr.mxu0 0.0
        %3684 = vmatpush1.xpose.msra.mxu0 0.0
        %3685 = vmatprep.subr.mxu0 0.0
        %3686 = vmatpush1.xpose.msra.mxu0 0.0
        %3687 = vmatprep.subr.mxu0 0.0
        %3688 = vmatpush1.xpose.msra.mxu0 0.0
        %3689 = vmatprep.mubr.f32.mxu0 0.0
        %3690 = vmatmul.mubr.f32.gmra.mrb[0].mxu0 %v3620
        %v3691 = vpop.f32.mrb[0].mxu0
        %v3692 = vadd.f32 0.0, %v3691
        %v3693 = vpop.f32.mrb[0].mxu0
        %3694 = vdwg.mxu0
        %v3696 = vsel %vm1442, %v2824, 0
        %v3699 = vsel %vm1442, %v3150, 0
        %3701 = vmatprep.subr.mxu0 0.0
        %3702 = vmatpush1.xpose.msra.mxu0 %v3699
        %3703 = vmatprep.subr.mxu0 0.0
        %3704 = vmatpush1.xpose.msra.mxu0 0.0
        %3705 = vmatprep.subr.mxu0 0.0
        %3706 = vmatpush1.xpose.msra.mxu0 0.0
        %3707 = vmatprep.subr.mxu0 0.0
        %3708 = vmatpush1.xpose.msra.mxu0 0.0
        %3709 = vmatprep.subr.mxu0 0.0
        %3710 = vmatpush1.xpose.msra.mxu0 0.0
        %3711 = vmatprep.subr.mxu0 0.0
        %3712 = vmatpush1.xpose.msra.mxu0 0.0
        %3713 = vmatprep.subr.mxu0 0.0
        %3714 = vmatpush1.xpose.msra.mxu0 0.0
        %3715 = vmatprep.subr.mxu0 0.0
        %3716 = vmatpush1.xpose.msra.mxu0 0.0
        %3717 = vmatprep.subr.mxu0 0.0
        %3718 = vmatpush1.xpose.msra.mxu0 0.0
        %3719 = vmatprep.subr.mxu0 0.0
        %3720 = vmatpush1.xpose.msra.mxu0 0.0
        %3721 = vmatprep.subr.mxu0 0.0
        %3722 = vmatpush1.xpose.msra.mxu0 0.0
        %3723 = vmatprep.subr.mxu0 0.0
        %3724 = vmatpush1.xpose.msra.mxu0 0.0
        %3725 = vmatprep.subr.mxu0 0.0
        %3726 = vmatpush1.xpose.msra.mxu0 0.0
        %3727 = vmatprep.subr.mxu0 0.0
        %3728 = vmatpush1.xpose.msra.mxu0 0.0
        %3729 = vmatprep.subr.mxu0 0.0
        %3730 = vmatpush1.xpose.msra.mxu0 0.0
        %3731 = vmatprep.subr.mxu0 0.0
        %3732 = vmatpush1.xpose.msra.mxu0 0.0
        %3733 = vmatprep.subr.mxu0 0.0
        %3734 = vmatpush1.xpose.msra.mxu0 0.0
        %3735 = vmatprep.subr.mxu0 0.0
        %3736 = vmatpush1.xpose.msra.mxu0 0.0
        %3737 = vmatprep.subr.mxu0 0.0
        %3738 = vmatpush1.xpose.msra.mxu0 0.0
        %3739 = vmatprep.subr.mxu0 0.0
        %3740 = vmatpush1.xpose.msra.mxu0 0.0
        %3741 = vmatprep.subr.mxu0 0.0
        %3742 = vmatpush1.xpose.msra.mxu0 0.0
        %3743 = vmatprep.subr.mxu0 0.0
        %3744 = vmatpush1.xpose.msra.mxu0 0.0
        %3745 = vmatprep.subr.mxu0 0.0
        %3746 = vmatpush1.xpose.msra.mxu0 0.0
        %3747 = vmatprep.subr.mxu0 0.0
        %3748 = vmatpush1.xpose.msra.mxu0 0.0
        %3749 = vmatprep.subr.mxu0 0.0
        %3750 = vmatpush1.xpose.msra.mxu0 0.0
        %3751 = vmatprep.subr.mxu0 0.0
        %3752 = vmatpush1.xpose.msra.mxu0 0.0
        %3753 = vmatprep.subr.mxu0 0.0
        %3754 = vmatpush1.xpose.msra.mxu0 0.0
        %3755 = vmatprep.subr.mxu0 0.0
        %3756 = vmatpush1.xpose.msra.mxu0 0.0
        %3757 = vmatprep.subr.mxu0 0.0
        %3758 = vmatpush1.xpose.msra.mxu0 0.0
        %3759 = vmatprep.subr.mxu0 0.0
        %3760 = vmatpush1.xpose.msra.mxu0 0.0
        %3761 = vmatprep.subr.mxu0 0.0
        %3762 = vmatpush1.xpose.msra.mxu0 0.0
        %3763 = vmatprep.subr.mxu0 0.0
        %3764 = vmatpush1.xpose.msra.mxu0 0.0
        %3765 = vmatprep.mubr.f32.mxu0 0.0
        %3766 = vmatmul.mubr.f32.gmra.mrb[0].mxu0 %v3696
        %v3767 = vpop.f32.mrb[0].mxu0
        %v3768 = vadd.f32 0.0, %v3767
        %v3769 = vpop.f32.mrb[0].mxu0
        %3770 = vdwg.mxu0
        %v3772 = vsel %vm1442, %v2894, 0
        %v3775 = vsel %vm1442, %v3220, 0
        %3777 = vmatprep.subr.mxu0 0.0
        %3778 = vmatpush1.xpose.msra.mxu0 %v3775
        %3779 = vmatprep.subr.mxu0 0.0
        %3780 = vmatpush1.xpose.msra.mxu0 0.0
        %3781 = vmatprep.subr.mxu0 0.0
        %3782 = vmatpush1.xpose.msra.mxu0 0.0
        %3783 = vmatprep.subr.mxu0 0.0
        %3784 = vmatpush1.xpose.msra.mxu0 0.0
        %3785 = vmatprep.subr.mxu0 0.0
        %3786 = vmatpush1.xpose.msra.mxu0 0.0
        %3787 = vmatprep.subr.mxu0 0.0
        %3788 = vmatpush1.xpose.msra.mxu0 0.0
        %3789 = vmatprep.subr.mxu0 0.0
        %3790 = vmatpush1.xpose.msra.mxu0 0.0
        %3791 = vmatprep.subr.mxu0 0.0
        %3792 = vmatpush1.xpose.msra.mxu0 0.0
        %3793 = vmatprep.subr.mxu0 0.0
        %3794 = vmatpush1.xpose.msra.mxu0 0.0
        %3795 = vmatprep.subr.mxu0 0.0
        %3796 = vmatpush1.xpose.msra.mxu0 0.0
        %3797 = vmatprep.subr.mxu0 0.0
        %3798 = vmatpush1.xpose.msra.mxu0 0.0
        %3799 = vmatprep.subr.mxu0 0.0
        %3800 = vmatpush1.xpose.msra.mxu0 0.0
        %3801 = vmatprep.subr.mxu0 0.0
        %3802 = vmatpush1.xpose.msra.mxu0 0.0
        %3803 = vmatprep.subr.mxu0 0.0
        %3804 = vmatpush1.xpose.msra.mxu0 0.0
        %3805 = vmatprep.subr.mxu0 0.0
        %3806 = vmatpush1.xpose.msra.mxu0 0.0
        %3807 = vmatprep.subr.mxu0 0.0
        %3808 = vmatpush1.xpose.msra.mxu0 0.0
        %3809 = vmatprep.subr.mxu0 0.0
        %3810 = vmatpush1.xpose.msra.mxu0 0.0
        %3811 = vmatprep.subr.mxu0 0.0
        %3812 = vmatpush1.xpose.msra.mxu0 0.0
        %3813 = vmatprep.subr.mxu0 0.0
        %3814 = vmatpush1.xpose.msra.mxu0 0.0
        %3815 = vmatprep.subr.mxu0 0.0
        %3816 = vmatpush1.xpose.msra.mxu0 0.0
        %3817 = vmatprep.subr.mxu0 0.0
        %3818 = vmatpush1.xpose.msra.mxu0 0.0
        %3819 = vmatprep.subr.mxu0 0.0
        %3820 = vmatpush1.xpose.msra.mxu0 0.0
        %3821 = vmatprep.subr.mxu0 0.0
        %3822 = vmatpush1.xpose.msra.mxu0 0.0
        %3823 = vmatprep.subr.mxu0 0.0
        %3824 = vmatpush1.xpose.msra.mxu0 0.0
        %3825 = vmatprep.subr.mxu0 0.0
        %3826 = vmatpush1.xpose.msra.mxu0 0.0
        %3827 = vmatprep.subr.mxu0 0.0
        %3828 = vmatpush1.xpose.msra.mxu0 0.0
        %3829 = vmatprep.subr.mxu0 0.0
        %3830 = vmatpush1.xpose.msra.mxu0 0.0
        %3831 = vmatprep.subr.mxu0 0.0
        %3832 = vmatpush1.xpose.msra.mxu0 0.0
        %3833 = vmatprep.subr.mxu0 0.0
        %3834 = vmatpush1.xpose.msra.mxu0 0.0
        %3835 = vmatprep.subr.mxu0 0.0
        %3836 = vmatpush1.xpose.msra.mxu0 0.0
        %3837 = vmatprep.subr.mxu0 0.0
        %3838 = vmatpush1.xpose.msra.mxu0 0.0
        %3839 = vmatprep.subr.mxu0 0.0
        %3840 = vmatpush1.xpose.msra.mxu0 0.0
        %3841 = vmatprep.mubr.f32.mxu0 0.0
        %3842 = vmatmul.mubr.f32.gmra.mrb[0].mxu0 %v3772
        %v3843 = vpop.f32.mrb[0].mxu0
        %v3844 = vadd.f32 0.0, %v3843
        %v3845 = vpop.f32.mrb[0].mxu0
        %3846 = vdwg.mxu0
        %v3848 = vsel %vm1442, %v2964, 0
        %v3851 = vsel %vm1442, %v3290, 0
        %3853 = vmatprep.subr.mxu0 0.0
        %3854 = vmatpush1.xpose.msra.mxu0 %v3851
        %3855 = vmatprep.subr.mxu0 0.0
        %3856 = vmatpush1.xpose.msra.mxu0 0.0
        %3857 = vmatprep.subr.mxu0 0.0
        %3858 = vmatpush1.xpose.msra.mxu0 0.0
        %3859 = vmatprep.subr.mxu0 0.0
        %3860 = vmatpush1.xpose.msra.mxu0 0.0
        %3861 = vmatprep.subr.mxu0 0.0
        %3862 = vmatpush1.xpose.msra.mxu0 0.0
        %3863 = vmatprep.subr.mxu0 0.0
        %3864 = vmatpush1.xpose.msra.mxu0 0.0
        %3865 = vmatprep.subr.mxu0 0.0
        %3866 = vmatpush1.xpose.msra.mxu0 0.0
        %3867 = vmatprep.subr.mxu0 0.0
        %3868 = vmatpush1.xpose.msra.mxu0 0.0
        %3869 = vmatprep.subr.mxu0 0.0
        %3870 = vmatpush1.xpose.msra.mxu0 0.0
        %3871 = vmatprep.subr.mxu0 0.0
        %3872 = vmatpush1.xpose.msra.mxu0 0.0
        %3873 = vmatprep.subr.mxu0 0.0
        %3874 = vmatpush1.xpose.msra.mxu0 0.0
        %3875 = vmatprep.subr.mxu0 0.0
        %3876 = vmatpush1.xpose.msra.mxu0 0.0
        %3877 = vmatprep.subr.mxu0 0.0
        %3878 = vmatpush1.xpose.msra.mxu0 0.0
        %3879 = vmatprep.subr.mxu0 0.0
        %3880 = vmatpush1.xpose.msra.mxu0 0.0
        %3881 = vmatprep.subr.mxu0 0.0
        %3882 = vmatpush1.xpose.msra.mxu0 0.0
        %3883 = vmatprep.subr.mxu0 0.0
        %3884 = vmatpush1.xpose.msra.mxu0 0.0
        %3885 = vmatprep.subr.mxu0 0.0
        %3886 = vmatpush1.xpose.msra.mxu0 0.0
        %3887 = vmatprep.subr.mxu0 0.0
        %3888 = vmatpush1.xpose.msra.mxu0 0.0
        %3889 = vmatprep.subr.mxu0 0.0
        %3890 = vmatpush1.xpose.msra.mxu0 0.0
        %3891 = vmatprep.subr.mxu0 0.0
        %3892 = vmatpush1.xpose.msra.mxu0 0.0
        %3893 = vmatprep.subr.mxu0 0.0
        %3894 = vmatpush1.xpose.msra.mxu0 0.0
        %3895 = vmatprep.subr.mxu0 0.0
        %3896 = vmatpush1.xpose.msra.mxu0 0.0
        %3897 = vmatprep.subr.mxu0 0.0
        %3898 = vmatpush1.xpose.msra.mxu0 0.0
        %3899 = vmatprep.subr.mxu0 0.0
        %3900 = vmatpush1.xpose.msra.mxu0 0.0
        %3901 = vmatprep.subr.mxu0 0.0
        %3902 = vmatpush1.xpose.msra.mxu0 0.0
        %3903 = vmatprep.subr.mxu0 0.0
        %3904 = vmatpush1.xpose.msra.mxu0 0.0
        %3905 = vmatprep.subr.mxu0 0.0
        %3906 = vmatpush1.xpose.msra.mxu0 0.0
        %3907 = vmatprep.subr.mxu0 0.0
        %3908 = vmatpush1.xpose.msra.mxu0 0.0
        %3909 = vmatprep.subr.mxu0 0.0
        %3910 = vmatpush1.xpose.msra.mxu0 0.0
        %3911 = vmatprep.subr.mxu0 0.0
        %3912 = vmatpush1.xpose.msra.mxu0 0.0
        %3913 = vmatprep.subr.mxu0 0.0
        %3914 = vmatpush1.xpose.msra.mxu0 0.0
        %3915 = vmatprep.subr.mxu0 0.0
        %3916 = vmatpush1.xpose.msra.mxu0 0.0
        %3917 = vmatprep.mubr.f32.mxu0 0.0
        %3918 = vmatmul.mubr.f32.gmra.mrb[0].mxu0 %v3848
        %v3919 = vpop.f32.mrb[0].mxu0
        %v3920 = vadd.f32 0.0, %v3919
        %v3921 = vpop.f32.mrb[0].mxu0
        %3922 = vdwg.mxu0
        %v3923 = vmul.f32 %v3692, 0.35355338
        %v3924 = vmul.f32 %v3768, 0.35355338
        %v3925 = vmul.f32 %v3844, 0.35355338
        %v3926 = vmul.f32 %v3920, 0.35355338
        %v3927 = vadd.f32 %v3923, %v1755
        %v3928 = vadd.f32 %v3924, %v1755
        %v3929 = vadd.f32 %v3925, %v1755
        %v3930 = vadd.f32 %v3926, %v1755
        %v3931 = vsel %vm1442, %v3927, -inf
        %3932 = vmax.xlane.f32.xlu0 %v3931
        %v3933 = vpop.xlane.xlu0 %3932
        %v3934 = vsel %vm1442, %v3928, -inf
        %3935 = vmax.xlane.f32.xlu0 %v3934
        %v3936 = vpop.xlane.xlu0 %3935
        %v3937 = vsel %vm1442, %v3929, -inf
        %3938 = vmax.xlane.f32.xlu0 %v3937
        %v3939 = vpop.xlane.xlu0 %3938
        %v3940 = vsel %vm1442, %v3930, -inf
        %3941 = vmax.xlane.f32.xlu0 %v3940
        %v3942 = vpop.xlane.xlu0 %3941
        %v3943 = vsub.f32 %v3927, %v3933
        %v3944 = vsub.f32 %v3928, %v3936
        %v3945 = vsub.f32 %v3929, %v3939
        %v3946 = vsub.f32 %v3930, %v3942
        %v3947 = vmul.f32 %v3943, 1.442695
        %v3948 = vpow.pop %v3947
        %v3949 = vmul.f32 %v3944, 1.442695
        %v3950 = vpow.pop %v3949
        %v3951 = vmul.f32 %v3945, 1.442695
        %v3952 = vpow.pop %v3951
        %v3953 = vmul.f32 %v3946, 1.442695
        %v3954 = vpow.pop %v3953
        %v3955 = vsel %vm1442, %v3948, 0.0
        %3956 = vadd.xlane.f32.xlu0 %v3955
        %v3957 = vpop.xlane.xlu0 %3956
        %v3958 = vsel %vm1442, %v3950, 0.0
        %3959 = vadd.xlane.f32.xlu0 %v3958
        %v3960 = vpop.xlane.xlu0 %3959
        %v3961 = vsel %vm1442, %v3952, 0.0
        %3962 = vadd.xlane.f32.xlu0 %v3961
        %v3963 = vpop.xlane.xlu0 %3962
        %v3964 = vsel %vm1442, %v3954, 0.0
        %3965 = vadd.xlane.f32.xlu0 %v3964
        %v3966 = vpop.xlane.xlu0 %3965
        %v3967 = vrcp.pop %v3957
        %v3968 = vrcp.pop %v3960
        %v3969 = vrcp.pop %v3963
        %v3970 = vrcp.pop %v3966
        %v3971 = vmul.f32 %v3948, %v3967
        %v3972 = vmul.f32 %v3950, %v3968
        %v3973 = vmul.f32 %v3952, %v3969
        %v3974 = vmul.f32 %v3954, %v3970
        %v3976 = vsel %vm1442, %v3971, 0
        %3978 = vmatprep.subr.mxu0 0.0
        %3979 = vmatpush1.msra.mxu0 %v3406
        %3980 = vmatprep.subr.mxu0 0.0
        %3981 = vmatpush1.msra.mxu0 0.0
        %3982 = vmatprep.subr.mxu0 0.0
        %3983 = vmatpush1.msra.mxu0 0.0
        %3984 = vmatprep.subr.mxu0 0.0
        %3985 = vmatpush1.msra.mxu0 0.0
        %3986 = vmatprep.subr.mxu0 0.0
        %3987 = vmatpush1.msra.mxu0 0.0
        %3988 = vmatprep.subr.mxu0 0.0
        %3989 = vmatpush1.msra.mxu0 0.0
        %3990 = vmatprep.subr.mxu0 0.0
        %3991 = vmatpush1.msra.mxu0 0.0
        %3992 = vmatprep.subr.mxu0 0.0
        %3993 = vmatpush1.msra.mxu0 0.0
        %3994 = vmatprep.subr.mxu0 0.0
        %3995 = vmatpush1.msra.mxu0 0.0
        %3996 = vmatprep.subr.mxu0 0.0
        %3997 = vmatpush1.msra.mxu0 0.0
        %3998 = vmatprep.subr.mxu0 0.0
        %3999 = vmatpush1.msra.mxu0 0.0
        %4000 = vmatprep.subr.mxu0 0.0
        %4001 = vmatpush1.msra.mxu0 0.0
        %4002 = vmatprep.subr.mxu0 0.0
        %4003 = vmatpush1.msra.mxu0 0.0
        %4004 = vmatprep.subr.mxu0 0.0
        %4005 = vmatpush1.msra.mxu0 0.0
        %4006 = vmatprep.subr.mxu0 0.0
        %4007 = vmatpush1.msra.mxu0 0.0
        %4008 = vmatprep.subr.mxu0 0.0
        %4009 = vmatpush1.msra.mxu0 0.0
        %4010 = vmatprep.subr.mxu0 0.0
        %4011 = vmatpush1.msra.mxu0 0.0
        %4012 = vmatprep.subr.mxu0 0.0
        %4013 = vmatpush1.msra.mxu0 0.0
        %4014 = vmatprep.subr.mxu0 0.0
        %4015 = vmatpush1.msra.mxu0 0.0
        %4016 = vmatprep.subr.mxu0 0.0
        %4017 = vmatpush1.msra.mxu0 0.0
        %4018 = vmatprep.subr.mxu0 0.0
        %4019 = vmatpush1.msra.mxu0 0.0
        %4020 = vmatprep.subr.mxu0 0.0
        %4021 = vmatpush1.msra.mxu0 0.0
        %4022 = vmatprep.subr.mxu0 0.0
        %4023 = vmatpush1.msra.mxu0 0.0
        %4024 = vmatprep.subr.mxu0 0.0
        %4025 = vmatpush1.msra.mxu0 0.0
        %4026 = vmatprep.subr.mxu0 0.0
        %4027 = vmatpush1.msra.mxu0 0.0
        %4028 = vmatprep.subr.mxu0 0.0
        %4029 = vmatpush1.msra.mxu0 0.0
        %4030 = vmatprep.subr.mxu0 0.0
        %4031 = vmatpush1.msra.mxu0 0.0
        %4032 = vmatprep.subr.mxu0 0.0
        %4033 = vmatpush1.msra.mxu0 0.0
        %4034 = vmatprep.subr.mxu0 0.0
        %4035 = vmatpush1.msra.mxu0 0.0
        %4036 = vmatprep.subr.mxu0 0.0
        %4037 = vmatpush1.msra.mxu0 0.0
        %4038 = vmatprep.subr.mxu0 0.0
        %4039 = vmatpush1.msra.mxu0 0.0
        %4040 = vmatprep.subr.mxu0 0.0
        %4041 = vmatpush1.msra.mxu0 0.0
        %4042 = vmatprep.mubr.f32.mxu0 0.0
        %4043 = vmatmul.mubr.f32.gmra.mrb[0].mxu0 %v3976
        %v4044 = vpop.f32.mrb[0].mxu0
        %v4045 = vadd.f32 0.0, %v4044
        %v4046 = vpop.f32.mrb[0].mxu0
        %4047 = vdwg.mxu0
        %v4049 = vsel %vm1442, %v3972, 0
        %4051 = vmatprep.subr.mxu0 0.0
        %4052 = vmatpush1.msra.mxu0 %v3476
        %4053 = vmatprep.subr.mxu0 0.0
        %4054 = vmatpush1.msra.mxu0 0.0
        %4055 = vmatprep.subr.mxu0 0.0
        %4056 = vmatpush1.msra.mxu0 0.0
        %4057 = vmatprep.subr.mxu0 0.0
        %4058 = vmatpush1.msra.mxu0 0.0
        %4059 = vmatprep.subr.mxu0 0.0
        %4060 = vmatpush1.msra.mxu0 0.0
        %4061 = vmatprep.subr.mxu0 0.0
        %4062 = vmatpush1.msra.mxu0 0.0
        %4063 = vmatprep.subr.mxu0 0.0
        %4064 = vmatpush1.msra.mxu0 0.0
        %4065 = vmatprep.subr.mxu0 0.0
        %4066 = vmatpush1.msra.mxu0 0.0
        %4067 = vmatprep.subr.mxu0 0.0
        %4068 = vmatpush1.msra.mxu0 0.0
        %4069 = vmatprep.subr.mxu0 0.0
        %4070 = vmatpush1.msra.mxu0 0.0
        %4071 = vmatprep.subr.mxu0 0.0
        %4072 = vmatpush1.msra.mxu0 0.0
        %4073 = vmatprep.subr.mxu0 0.0
        %4074 = vmatpush1.msra.mxu0 0.0
        %4075 = vmatprep.subr.mxu0 0.0
        %4076 = vmatpush1.msra.mxu0 0.0
        %4077 = vmatprep.subr.mxu0 0.0
        %4078 = vmatpush1.msra.mxu0 0.0
        %4079 = vmatprep.subr.mxu0 0.0
        %4080 = vmatpush1.msra.mxu0 0.0
        %4081 = vmatprep.subr.mxu0 0.0
        %4082 = vmatpush1.msra.mxu0 0.0
        %4083 = vmatprep.subr.mxu0 0.0
        %4084 = vmatpush1.msra.mxu0 0.0
        %4085 = vmatprep.subr.mxu0 0.0
        %4086 = vmatpush1.msra.mxu0 0.0
        %4087 = vmatprep.subr.mxu0 0.0
        %4088 = vmatpush1.msra.mxu0 0.0
        %4089 = vmatprep.subr.mxu0 0.0
        %4090 = vmatpush1.msra.mxu0 0.0
        %4091 = vmatprep.subr.mxu0 0.0
        %4092 = vmatpush1.msra.mxu0 0.0
        %4093 = vmatprep.subr.mxu0 0.0
        %4094 = vmatpush1.msra.mxu0 0.0
        %4095 = vmatprep.subr.mxu0 0.0
        %4096 = vmatpush1.msra.mxu0 0.0
        %4097 = vmatprep.subr.mxu0 0.0
        %4098 = vmatpush1.msra.mxu0 0.0
        %4099 = vmatprep.subr.mxu0 0.0
        %4100 = vmatpush1.msra.mxu0 0.0
        %4101 = vmatprep.subr.mxu0 0.0
        %4102 = vmatpush1.msra.mxu0 0.0
        %4103 = vmatprep.subr.mxu0 0.0
        %4104 = vmatpush1.msra.mxu0 0.0
        %4105 = vmatprep.subr.mxu0 0.0
        %4106 = vmatpush1.msra.mxu0 0.0
        %4107 = vmatprep.subr.mxu0 0.0
        %4108 = vmatpush1.msra.mxu0 0.0
        %4109 = vmatprep.subr.mxu0 0.0
        %4110 = vmatpush1.msra.mxu0 0.0
        %4111 = vmatprep.subr.mxu0 0.0
        %4112 = vmatpush1.msra.mxu0 0.0
        %4113 = vmatprep.subr.mxu0 0.0
        %4114 = vmatpush1.msra.mxu0 0.0
        %4115 = vmatprep.mubr.f32.mxu0 0.0
        %4116 = vmatmul.mubr.f32.gmra.mrb[0].mxu0 %v4049
        %v4117 = vpop.f32.mrb[0].mxu0
        %v4118 = vadd.f32 0.0, %v4117
        %v4119 = vpop.f32.mrb[0].mxu0
        %4120 = vdwg.mxu0
        %v4122 = vsel %vm1442, %v3973, 0
        %4124 = vmatprep.subr.mxu0 0.0
        %4125 = vmatpush1.msra.mxu0 %v3546
        %4126 = vmatprep.subr.mxu0 0.0
        %4127 = vmatpush1.msra.mxu0 0.0
        %4128 = vmatprep.subr.mxu0 0.0
        %4129 = vmatpush1.msra.mxu0 0.0
        %4130 = vmatprep.subr.mxu0 0.0
        %4131 = vmatpush1.msra.mxu0 0.0
        %4132 = vmatprep.subr.mxu0 0.0
        %4133 = vmatpush1.msra.mxu0 0.0
        %4134 = vmatprep.subr.mxu0 0.0
        %4135 = vmatpush1.msra.mxu0 0.0
        %4136 = vmatprep.subr.mxu0 0.0
        %4137 = vmatpush1.msra.mxu0 0.0
        %4138 = vmatprep.subr.mxu0 0.0
        %4139 = vmatpush1.msra.mxu0 0.0
        %4140 = vmatprep.subr.mxu0 0.0
        %4141 = vmatpush1.msra.mxu0 0.0
        %4142 = vmatprep.subr.mxu0 0.0
        %4143 = vmatpush1.msra.mxu0 0.0
        %4144 = vmatprep.subr.mxu0 0.0
        %4145 = vmatpush1.msra.mxu0 0.0
        %4146 = vmatprep.subr.mxu0 0.0
        %4147 = vmatpush1.msra.mxu0 0.0
        %4148 = vmatprep.subr.mxu0 0.0
        %4149 = vmatpush1.msra.mxu0 0.0
        %4150 = vmatprep.subr.mxu0 0.0
        %4151 = vmatpush1.msra.mxu0 0.0
        %4152 = vmatprep.subr.mxu0 0.0
        %4153 = vmatpush1.msra.mxu0 0.0
        %4154 = vmatprep.subr.mxu0 0.0
        %4155 = vmatpush1.msra.mxu0 0.0
        %4156 = vmatprep.subr.mxu0 0.0
        %4157 = vmatpush1.msra.mxu0 0.0
        %4158 = vmatprep.subr.mxu0 0.0
        %4159 = vmatpush1.msra.mxu0 0.0
        %4160 = vmatprep.subr.mxu0 0.0
        %4161 = vmatpush1.msra.mxu0 0.0
        %4162 = vmatprep.subr.mxu0 0.0
        %4163 = vmatpush1.msra.mxu0 0.0
        %4164 = vmatprep.subr.mxu0 0.0
        %4165 = vmatpush1.msra.mxu0 0.0
        %4166 = vmatprep.subr.mxu0 0.0
        %4167 = vmatpush1.msra.mxu0 0.0
        %4168 = vmatprep.subr.mxu0 0.0
        %4169 = vmatpush1.msra.mxu0 0.0
        %4170 = vmatprep.subr.mxu0 0.0
        %4171 = vmatpush1.msra.mxu0 0.0
        %4172 = vmatprep.subr.mxu0 0.0
        %4173 = vmatpush1.msra.mxu0 0.0
        %4174 = vmatprep.subr.mxu0 0.0
        %4175 = vmatpush1.msra.mxu0 0.0
        %4176 = vmatprep.subr.mxu0 0.0
        %4177 = vmatpush1.msra.mxu0 0.0
        %4178 = vmatprep.subr.mxu0 0.0
        %4179 = vmatpush1.msra.mxu0 0.0
        %4180 = vmatprep.subr.mxu0 0.0
        %4181 = vmatpush1.msra.mxu0 0.0
        %4182 = vmatprep.subr.mxu0 0.0
        %4183 = vmatpush1.msra.mxu0 0.0
        %4184 = vmatprep.subr.mxu0 0.0
        %4185 = vmatpush1.msra.mxu0 0.0
        %4186 = vmatprep.subr.mxu0 0.0
        %4187 = vmatpush1.msra.mxu0 0.0
        %4188 = vmatprep.mubr.f32.mxu0 0.0
        %4189 = vmatmul.mubr.f32.gmra.mrb[0].mxu0 %v4122
        %v4190 = vpop.f32.mrb[0].mxu0
        %v4191 = vadd.f32 0.0, %v4190
        %v4192 = vpop.f32.mrb[0].mxu0
        %4193 = vdwg.mxu0
        %v4195 = vsel %vm1442, %v3974, 0
        %4197 = vmatprep.subr.mxu0 0.0
        %4198 = vmatpush1.msra.mxu0 %v3616
        %4199 = vmatprep.subr.mxu0 0.0
        %4200 = vmatpush1.msra.mxu0 0.0
        %4201 = vmatprep.subr.mxu0 0.0
        %4202 = vmatpush1.msra.mxu0 0.0
        %4203 = vmatprep.subr.mxu0 0.0
        %4204 = vmatpush1.msra.mxu0 0.0
        %4205 = vmatprep.subr.mxu0 0.0
        %4206 = vmatpush1.msra.mxu0 0.0
        %4207 = vmatprep.subr.mxu0 0.0
        %4208 = vmatpush1.msra.mxu0 0.0
        %4209 = vmatprep.subr.mxu0 0.0
        %4210 = vmatpush1.msra.mxu0 0.0
        %4211 = vmatprep.subr.mxu0 0.0
        %4212 = vmatpush1.msra.mxu0 0.0
        %4213 = vmatprep.subr.mxu0 0.0
        %4214 = vmatpush1.msra.mxu0 0.0
        %4215 = vmatprep.subr.mxu0 0.0
        %4216 = vmatpush1.msra.mxu0 0.0
        %4217 = vmatprep.subr.mxu0 0.0
        %4218 = vmatpush1.msra.mxu0 0.0
        %4219 = vmatprep.subr.mxu0 0.0
        %4220 = vmatpush1.msra.mxu0 0.0
        %4221 = vmatprep.subr.mxu0 0.0
        %4222 = vmatpush1.msra.mxu0 0.0
        %4223 = vmatprep.subr.mxu0 0.0
        %4224 = vmatpush1.msra.mxu0 0.0
        %4225 = vmatprep.subr.mxu0 0.0
        %4226 = vmatpush1.msra.mxu0 0.0
        %4227 = vmatprep.subr.mxu0 0.0
        %4228 = vmatpush1.msra.mxu0 0.0
        %4229 = vmatprep.subr.mxu0 0.0
        %4230 = vmatpush1.msra.mxu0 0.0
        %4231 = vmatprep.subr.mxu0 0.0
        %4232 = vmatpush1.msra.mxu0 0.0
        %4233 = vmatprep.subr.mxu0 0.0
        %4234 = vmatpush1.msra.mxu0 0.0
        %4235 = vmatprep.subr.mxu0 0.0
        %4236 = vmatpush1.msra.mxu0 0.0
        %4237 = vmatprep.subr.mxu0 0.0
        %4238 = vmatpush1.msra.mxu0 0.0
        %4239 = vmatprep.subr.mxu0 0.0
        %4240 = vmatpush1.msra.mxu0 0.0
        %4241 = vmatprep.subr.mxu0 0.0
        %4242 = vmatpush1.msra.mxu0 0.0
        %4243 = vmatprep.subr.mxu0 0.0
        %4244 = vmatpush1.msra.mxu0 0.0
        %4245 = vmatprep.subr.mxu0 0.0
        %4246 = vmatpush1.msra.mxu0 0.0
        %4247 = vmatprep.subr.mxu0 0.0
        %4248 = vmatpush1.msra.mxu0 0.0
        %4249 = vmatprep.subr.mxu0 0.0
        %4250 = vmatpush1.msra.mxu0 0.0
        %4251 = vmatprep.subr.mxu0 0.0
        %4252 = vmatpush1.msra.mxu0 0.0
        %4253 = vmatprep.subr.mxu0 0.0
        %4254 = vmatpush1.msra.mxu0 0.0
        %4255 = vmatprep.subr.mxu0 0.0
        %4256 = vmatpush1.msra.mxu0 0.0
        %4257 = vmatprep.subr.mxu0 0.0
        %4258 = vmatpush1.msra.mxu0 0.0
        %4259 = vmatprep.subr.mxu0 0.0
        %4260 = vmatpush1.msra.mxu0 0.0
        %4261 = vmatprep.mubr.f32.mxu0 0.0
        %4262 = vmatmul.mubr.f32.gmra.mrb[0].mxu0 %v4195
        %v4263 = vpop.f32.mrb[0].mxu0
        %v4264 = vadd.f32 0.0, %v4263
        %v4265 = vpop.f32.mrb[0].mxu0
        %4266 = vdwg.mxu0
        %s4267 = scalar_lea.vmem %s8, 32
        %v4268 = vld [vmem:[%s4267] sm:$0xff]
        %v4269 = vld [vmem:[%s4267 + $0x8] sm:$0xff]
        %v4270 = vld [vmem:[%s4267 + $0x10] sm:$0xff]
        %v4271 = vld [vmem:[%s4267 + $0x18] sm:$0xff]
        %v4273 = vsel %vm1442, %v4045, 0
        %4275 = vmatprep.subr.mxu0 0.0
        %4276 = vmatpush1.msra.mxu0 %v4268
        %4277 = vmatprep.subr.mxu0 0.0
        %4278 = vmatpush1.msra.mxu0 0.0
        %4279 = vmatprep.subr.mxu0 0.0
        %4280 = vmatpush1.msra.mxu0 0.0
        %4281 = vmatprep.subr.mxu0 0.0
        %4282 = vmatpush1.msra.mxu0 0.0
        %4283 = vmatprep.subr.mxu0 0.0
        %4284 = vmatpush1.msra.mxu0 0.0
        %4285 = vmatprep.subr.mxu0 0.0
        %4286 = vmatpush1.msra.mxu0 0.0
        %4287 = vmatprep.subr.mxu0 0.0
        %4288 = vmatpush1.msra.mxu0 0.0
        %4289 = vmatprep.subr.mxu0 0.0
        %4290 = vmatpush1.msra.mxu0 0.0
        %4291 = vmatprep.subr.mxu0 0.0
        %4292 = vmatpush1.msra.mxu0 0.0
        %4293 = vmatprep.subr.mxu0 0.0
        %4294 = vmatpush1.msra.mxu0 0.0
        %4295 = vmatprep.subr.mxu0 0.0
        %4296 = vmatpush1.msra.mxu0 0.0
        %4297 = vmatprep.subr.mxu0 0.0
        %4298 = vmatpush1.msra.mxu0 0.0
        %4299 = vmatprep.subr.mxu0 0.0
        %4300 = vmatpush1.msra.mxu0 0.0
        %4301 = vmatprep.subr.mxu0 0.0
        %4302 = vmatpush1.msra.mxu0 0.0
        %4303 = vmatprep.subr.mxu0 0.0
        %4304 = vmatpush1.msra.mxu0 0.0
        %4305 = vmatprep.subr.mxu0 0.0
        %4306 = vmatpush1.msra.mxu0 0.0
        %4307 = vmatprep.subr.mxu0 0.0
        %4308 = vmatpush1.msra.mxu0 0.0
        %4309 = vmatprep.subr.mxu0 0.0
        %4310 = vmatpush1.msra.mxu0 0.0
        %4311 = vmatprep.subr.mxu0 0.0
        %4312 = vmatpush1.msra.mxu0 0.0
        %4313 = vmatprep.subr.mxu0 0.0
        %4314 = vmatpush1.msra.mxu0 0.0
        %4315 = vmatprep.subr.mxu0 0.0
        %4316 = vmatpush1.msra.mxu0 0.0
        %4317 = vmatprep.subr.mxu0 0.0
        %4318 = vmatpush1.msra.mxu0 0.0
        %4319 = vmatprep.subr.mxu0 0.0
        %4320 = vmatpush1.msra.mxu0 0.0
        %4321 = vmatprep.subr.mxu0 0.0
        %4322 = vmatpush1.msra.mxu0 0.0
        %4323 = vmatprep.subr.mxu0 0.0
        %4324 = vmatpush1.msra.mxu0 0.0
        %4325 = vmatprep.subr.mxu0 0.0
        %4326 = vmatpush1.msra.mxu0 0.0
        %4327 = vmatprep.subr.mxu0 0.0
        %4328 = vmatpush1.msra.mxu0 0.0
        %4329 = vmatprep.subr.mxu0 0.0
        %4330 = vmatpush1.msra.mxu0 0.0
        %4331 = vmatprep.subr.mxu0 0.0
        %4332 = vmatpush1.msra.mxu0 0.0
        %4333 = vmatprep.subr.mxu0 0.0
        %4334 = vmatpush1.msra.mxu0 0.0
        %4335 = vmatprep.subr.mxu0 0.0
        %4336 = vmatpush1.msra.mxu0 0.0
        %4337 = vmatprep.subr.mxu0 0.0
        %4338 = vmatpush1.msra.mxu0 0.0
        %4339 = vmatprep.mubr.f32.mxu0 0.0
        %4340 = vmatmul.mubr.f32.gmra.mrb[0].mxu0 %v4273
        %v4341 = vpop.f32.mrb[0].mxu0
        %v4342 = vadd.f32 0.0, %v4341
        %v4343 = vpop.f32.mrb[0].mxu0
        %4344 = vdwg.mxu0
        %v4346 = vsel %vm1442, %v4118, 0
        %4348 = vmatprep.subr.mxu0 0.0
        %4349 = vmatpush1.msra.mxu0 %v4269
        %4350 = vmatprep.subr.mxu0 0.0
        %4351 = vmatpush1.msra.mxu0 0.0
        %4352 = vmatprep.subr.mxu0 0.0
        %4353 = vmatpush1.msra.mxu0 0.0
        %4354 = vmatprep.subr.mxu0 0.0
        %4355 = vmatpush1.msra.mxu0 0.0
        %4356 = vmatprep.subr.mxu0 0.0
        %4357 = vmatpush1.msra.mxu0 0.0
        %4358 = vmatprep.subr.mxu0 0.0
        %4359 = vmatpush1.msra.mxu0 0.0
        %4360 = vmatprep.subr.mxu0 0.0
        %4361 = vmatpush1.msra.mxu0 0.0
        %4362 = vmatprep.subr.mxu0 0.0
        %4363 = vmatpush1.msra.mxu0 0.0
        %4364 = vmatprep.subr.mxu0 0.0
        %4365 = vmatpush1.msra.mxu0 0.0
        %4366 = vmatprep.subr.mxu0 0.0
        %4367 = vmatpush1.msra.mxu0 0.0
        %4368 = vmatprep.subr.mxu0 0.0
        %4369 = vmatpush1.msra.mxu0 0.0
        %4370 = vmatprep.subr.mxu0 0.0
        %4371 = vmatpush1.msra.mxu0 0.0
        %4372 = vmatprep.subr.mxu0 0.0
        %4373 = vmatpush1.msra.mxu0 0.0
        %4374 = vmatprep.subr.mxu0 0.0
        %4375 = vmatpush1.msra.mxu0 0.0
        %4376 = vmatprep.subr.mxu0 0.0
        %4377 = vmatpush1.msra.mxu0 0.0
        %4378 = vmatprep.subr.mxu0 0.0
        %4379 = vmatpush1.msra.mxu0 0.0
        %4380 = vmatprep.subr.mxu0 0.0
        %4381 = vmatpush1.msra.mxu0 0.0
        %4382 = vmatprep.subr.mxu0 0.0
        %4383 = vmatpush1.msra.mxu0 0.0
        %4384 = vmatprep.subr.mxu0 0.0
        %4385 = vmatpush1.msra.mxu0 0.0
        %4386 = vmatprep.subr.mxu0 0.0
        %4387 = vmatpush1.msra.mxu0 0.0
        %4388 = vmatprep.subr.mxu0 0.0
        %4389 = vmatpush1.msra.mxu0 0.0
        %4390 = vmatprep.subr.mxu0 0.0
        %4391 = vmatpush1.msra.mxu0 0.0
        %4392 = vmatprep.subr.mxu0 0.0
        %4393 = vmatpush1.msra.mxu0 0.0
        %4394 = vmatprep.subr.mxu0 0.0
        %4395 = vmatpush1.msra.mxu0 0.0
        %4396 = vmatprep.subr.mxu0 0.0
        %4397 = vmatpush1.msra.mxu0 0.0
        %4398 = vmatprep.subr.mxu0 0.0
        %4399 = vmatpush1.msra.mxu0 0.0
        %4400 = vmatprep.subr.mxu0 0.0
        %4401 = vmatpush1.msra.mxu0 0.0
        %4402 = vmatprep.subr.mxu0 0.0
        %4403 = vmatpush1.msra.mxu0 0.0
        %4404 = vmatprep.subr.mxu0 0.0
        %4405 = vmatpush1.msra.mxu0 0.0
        %4406 = vmatprep.subr.mxu0 0.0
        %4407 = vmatpush1.msra.mxu0 0.0
        %4408 = vmatprep.subr.mxu0 0.0
        %4409 = vmatpush1.msra.mxu0 0.0
        %4410 = vmatprep.subr.mxu0 0.0
        %4411 = vmatpush1.msra.mxu0 0.0
        %4412 = vmatprep.mubr.f32.mxu0 0.0
        %4413 = vmatmul.mubr.f32.gmra.mrb[0].mxu0 %v4346
        %v4414 = vpop.f32.mrb[0].mxu0
        %v4415 = vadd.f32 0.0, %v4414
        %v4416 = vpop.f32.mrb[0].mxu0
        %4417 = vdwg.mxu0
        %v4419 = vsel %vm1442, %v4191, 0
        %4421 = vmatprep.subr.mxu0 0.0
        %4422 = vmatpush1.msra.mxu0 %v4270
        %4423 = vmatprep.subr.mxu0 0.0
        %4424 = vmatpush1.msra.mxu0 0.0
        %4425 = vmatprep.subr.mxu0 0.0
        %4426 = vmatpush1.msra.mxu0 0.0
        %4427 = vmatprep.subr.mxu0 0.0
        %4428 = vmatpush1.msra.mxu0 0.0
        %4429 = vmatprep.subr.mxu0 0.0
        %4430 = vmatpush1.msra.mxu0 0.0
        %4431 = vmatprep.subr.mxu0 0.0
        %4432 = vmatpush1.msra.mxu0 0.0
        %4433 = vmatprep.subr.mxu0 0.0
        %4434 = vmatpush1.msra.mxu0 0.0
        %4435 = vmatprep.subr.mxu0 0.0
        %4436 = vmatpush1.msra.mxu0 0.0
        %4437 = vmatprep.subr.mxu0 0.0
        %4438 = vmatpush1.msra.mxu0 0.0
        %4439 = vmatprep.subr.mxu0 0.0
        %4440 = vmatpush1.msra.mxu0 0.0
        %4441 = vmatprep.subr.mxu0 0.0
        %4442 = vmatpush1.msra.mxu0 0.0
        %4443 = vmatprep.subr.mxu0 0.0
        %4444 = vmatpush1.msra.mxu0 0.0
        %4445 = vmatprep.subr.mxu0 0.0
        %4446 = vmatpush1.msra.mxu0 0.0
        %4447 = vmatprep.subr.mxu0 0.0
        %4448 = vmatpush1.msra.mxu0 0.0
        %4449 = vmatprep.subr.mxu0 0.0
        %4450 = vmatpush1.msra.mxu0 0.0
        %4451 = vmatprep.subr.mxu0 0.0
        %4452 = vmatpush1.msra.mxu0 0.0
        %4453 = vmatprep.subr.mxu0 0.0
        %4454 = vmatpush1.msra.mxu0 0.0
        %4455 = vmatprep.subr.mxu0 0.0
        %4456 = vmatpush1.msra.mxu0 0.0
        %4457 = vmatprep.subr.mxu0 0.0
        %4458 = vmatpush1.msra.mxu0 0.0
        %4459 = vmatprep.subr.mxu0 0.0
        %4460 = vmatpush1.msra.mxu0 0.0
        %4461 = vmatprep.subr.mxu0 0.0
        %4462 = vmatpush1.msra.mxu0 0.0
        %4463 = vmatprep.subr.mxu0 0.0
        %4464 = vmatpush1.msra.mxu0 0.0
        %4465 = vmatprep.subr.mxu0 0.0
        %4466 = vmatpush1.msra.mxu0 0.0
        %4467 = vmatprep.subr.mxu0 0.0
        %4468 = vmatpush1.msra.mxu0 0.0
        %4469 = vmatprep.subr.mxu0 0.0
        %4470 = vmatpush1.msra.mxu0 0.0
        %4471 = vmatprep.subr.mxu0 0.0
        %4472 = vmatpush1.msra.mxu0 0.0
        %4473 = vmatprep.subr.mxu0 0.0
        %4474 = vmatpush1.msra.mxu0 0.0
        %4475 = vmatprep.subr.mxu0 0.0
        %4476 = vmatpush1.msra.mxu0 0.0
        %4477 = vmatprep.subr.mxu0 0.0
        %4478 = vmatpush1.msra.mxu0 0.0
        %4479 = vmatprep.subr.mxu0 0.0
        %4480 = vmatpush1.msra.mxu0 0.0
        %4481 = vmatprep.subr.mxu0 0.0
        %4482 = vmatpush1.msra.mxu0 0.0
        %4483 = vmatprep.subr.mxu0 0.0
        %4484 = vmatpush1.msra.mxu0 0.0
        %4485 = vmatprep.mubr.f32.mxu0 0.0
        %4486 = vmatmul.mubr.f32.gmra.mrb[0].mxu0 %v4419
        %v4487 = vpop.f32.mrb[0].mxu0
        %v4488 = vadd.f32 0.0, %v4487
        %v4489 = vpop.f32.mrb[0].mxu0
        %4490 = vdwg.mxu0
        %v4492 = vsel %vm1442, %v4264, 0
        %4494 = vmatprep.subr.mxu0 0.0
        %4495 = vmatpush1.msra.mxu0 %v4271
        %4496 = vmatprep.subr.mxu0 0.0
        %4497 = vmatpush1.msra.mxu0 0.0
        %4498 = vmatprep.subr.mxu0 0.0
        %4499 = vmatpush1.msra.mxu0 0.0
        %4500 = vmatprep.subr.mxu0 0.0
        %4501 = vmatpush1.msra.mxu0 0.0
        %4502 = vmatprep.subr.mxu0 0.0
        %4503 = vmatpush1.msra.mxu0 0.0
        %4504 = vmatprep.subr.mxu0 0.0
        %4505 = vmatpush1.msra.mxu0 0.0
        %4506 = vmatprep.subr.mxu0 0.0
        %4507 = vmatpush1.msra.mxu0 0.0
        %4508 = vmatprep.subr.mxu0 0.0
        %4509 = vmatpush1.msra.mxu0 0.0
        %4510 = vmatprep.subr.mxu0 0.0
        %4511 = vmatpush1.msra.mxu0 0.0
        %4512 = vmatprep.subr.mxu0 0.0
        %4513 = vmatpush1.msra.mxu0 0.0
        %4514 = vmatprep.subr.mxu0 0.0
        %4515 = vmatpush1.msra.mxu0 0.0
        %4516 = vmatprep.subr.mxu0 0.0
        %4517 = vmatpush1.msra.mxu0 0.0
        %4518 = vmatprep.subr.mxu0 0.0
        %4519 = vmatpush1.msra.mxu0 0.0
        %4520 = vmatprep.subr.mxu0 0.0
        %4521 = vmatpush1.msra.mxu0 0.0
        %4522 = vmatprep.subr.mxu0 0.0
        %4523 = vmatpush1.msra.mxu0 0.0
        %4524 = vmatprep.subr.mxu0 0.0
        %4525 = vmatpush1.msra.mxu0 0.0
        %4526 = vmatprep.subr.mxu0 0.0
        %4527 = vmatpush1.msra.mxu0 0.0
        %4528 = vmatprep.subr.mxu0 0.0
        %4529 = vmatpush1.msra.mxu0 0.0
        %4530 = vmatprep.subr.mxu0 0.0
        %4531 = vmatpush1.msra.mxu0 0.0
        %4532 = vmatprep.subr.mxu0 0.0
        %4533 = vmatpush1.msra.mxu0 0.0
        %4534 = vmatprep.subr.mxu0 0.0
        %4535 = vmatpush1.msra.mxu0 0.0
        %4536 = vmatprep.subr.mxu0 0.0
        %4537 = vmatpush1.msra.mxu0 0.0
        %4538 = vmatprep.subr.mxu0 0.0
        %4539 = vmatpush1.msra.mxu0 0.0
        %4540 = vmatprep.subr.mxu0 0.0
        %4541 = vmatpush1.msra.mxu0 0.0
        %4542 = vmatprep.subr.mxu0 0.0
        %4543 = vmatpush1.msra.mxu0 0.0
        %4544 = vmatprep.subr.mxu0 0.0
        %4545 = vmatpush1.msra.mxu0 0.0
        %4546 = vmatprep.subr.mxu0 0.0
        %4547 = vmatpush1.msra.mxu0 0.0
        %4548 = vmatprep.subr.mxu0 0.0
        %4549 = vmatpush1.msra.mxu0 0.0
        %4550 = vmatprep.subr.mxu0 0.0
        %4551 = vmatpush1.msra.mxu0 0.0
        %4552 = vmatprep.subr.mxu0 0.0
        %4553 = vmatpush1.msra.mxu0 0.0
        %4554 = vmatprep.subr.mxu0 0.0
        %4555 = vmatpush1.msra.mxu0 0.0
        %4556 = vmatprep.subr.mxu0 0.0
        %4557 = vmatpush1.msra.mxu0 0.0
        %4558 = vmatprep.mubr.f32.mxu0 0.0
        %4559 = vmatmul.mubr.f32.gmra.mrb[0].mxu0 %v4492
        %v4560 = vpop.f32.mrb[0].mxu0
        %v4561 = vadd.f32 0.0, %v4560
        %v4562 = vpop.f32.mrb[0].mxu0
        %4563 = vdwg.mxu0
        %v4564 = vsel %vm429, %v4342, 0.0
        %v4565 = vsel %vm429, %v4415, 0.0
        %v4566 = vadd.f32 %v4564, %v4565
        %v4567 = vsel %vm429, %v4488, 0.0
        %v4568 = vadd.f32 %v4566, %v4567
        %v4569 = vsel %vm429, %v4561, 0.0
        %v4570 = vadd.f32 %v4568, %v4569
        %v4571 = vlaneseq
        %v4572 = vshrl.u32 %v4571, 7
        %v4573 = vsub.s32 0, %v4572
        %v4574 = vrot.slane %v2632, %v4573
        %v4575 = vadd.f32 %v4570, %v4574
        %v4576 = vadd.f32 %v2631, %v4575
        %v4577 = vsel %vm429, %v4576, 0.0
        %4578 = vadd.xlane.f32.xlu0 %v4577
        %v4579 = vpop.xlane.xlu0 %4578
        %v4580 = vmul.f32 %v4579, %v433
        %v4581 = vsub.f32 %v4576, %v4580
        %v4582 = vmul.f32 %v4581, %v4581
        %v4583 = vsel %vm429, %v4582, 0.0
        %4584 = vadd.xlane.f32.xlu0 %v4583
        %v4585 = vpop.xlane.xlu0 %4584
        %v4586 = vmul.f32 %v4585, %v433
        %v4587 = vadd.f32 %v4586, 1e-07
        %v4588 = vrsqrt.pop %v4587
        %v4589 = vmul.f32 %v4581, %v4588
        %v4590 = vlaneseq
        %v4591 = vshrl.u32 %v4590, 7
        %v4592 = vsub.s32 0, %v4591
        %v4593 = vrot.slane %v2633, %v4592
        %v4594 = vmul.f32 %v4589, %v4593
        %v4595 = vlaneseq
        %v4596 = vshrl.u32 %v4595, 7
        %v4597 = vsub.s32 0, %v4596
        %v4598 = vrot.slane %v2634, %v4597
        %v4599 = vadd.f32 %v4594, %v4598
        %s4600 = scalar_lea.vmem %s9, 32
        %v4601 = vld [vmem:[%s4600] sm:$0xff]
        %v4602 = vld [vmem:[%s4600 + $0x8] sm:$0xff]
        %v4603 = vld [vmem:[%s4600 + $0x10] sm:$0xff]
        %v4604 = vld [vmem:[%s4600 + $0x18] sm:$0xff]
        %s4605 = scalar_lea.vmem %s6, 1
        %v4606 = vld [vmem:[%s4605] sm:$0x1]
        %v4608 = vlaneseq
        %v4609 = vshrl.u32 %v4608, 7
        %v4610 = vsub.s32 0, %v4609
        %v4611 = vrot.slane %v4606, %v4610
        %v4614 = vsel %vm429, %v4599, 0
        %4616 = vmatprep.subr.mxu0 0.0
        %4617 = vmatpush1.msra.mxu0 %v4601
        %4618 = vmatprep.subr.mxu0 0.0
        %4619 = vmatpush1.msra.mxu0 %v4602
        %4620 = vmatprep.subr.mxu0 0.0
        %4621 = vmatpush1.msra.mxu0 %v4603
        %4622 = vmatprep.subr.mxu0 0.0
        %4623 = vmatpush1.msra.mxu0 %v4604
        %4624 = vmatprep.subr.mxu0 0.0
        %4625 = vmatpush1.msra.mxu0 0.0
        %4626 = vmatprep.subr.mxu0 0.0
        %4627 = vmatpush1.msra.mxu0 0.0
        %4628 = vmatprep.subr.mxu0 0.0
        %4629 = vmatpush1.msra.mxu0 0.0
        %4630 = vmatprep.subr.mxu0 0.0
        %4631 = vmatpush1.msra.mxu0 0.0
        %4632 = vmatprep.subr.mxu0 0.0
        %4633 = vmatpush1.msra.mxu0 0.0
        %4634 = vmatprep.subr.mxu0 0.0
        %4635 = vmatpush1.msra.mxu0 0.0
        %4636 = vmatprep.subr.mxu0 0.0
        %4637 = vmatpush1.msra.mxu0 0.0
        %4638 = vmatprep.subr.mxu0 0.0
        %4639 = vmatpush1.msra.mxu0 0.0
        %4640 = vmatprep.subr.mxu0 0.0
        %4641 = vmatpush1.msra.mxu0 0.0
        %4642 = vmatprep.subr.mxu0 0.0
        %4643 = vmatpush1.msra.mxu0 0.0
        %4644 = vmatprep.subr.mxu0 0.0
        %4645 = vmatpush1.msra.mxu0 0.0
        %4646 = vmatprep.subr.mxu0 0.0
        %4647 = vmatpush1.msra.mxu0 0.0
        %4648 = vmatprep.subr.mxu0 0.0
        %4649 = vmatpush1.msra.mxu0 0.0
        %4650 = vmatprep.subr.mxu0 0.0
        %4651 = vmatpush1.msra.mxu0 0.0
        %4652 = vmatprep.subr.mxu0 0.0
        %4653 = vmatpush1.msra.mxu0 0.0
        %4654 = vmatprep.subr.mxu0 0.0
        %4655 = vmatpush1.msra.mxu0 0.0
        %4656 = vmatprep.subr.mxu0 0.0
        %4657 = vmatpush1.msra.mxu0 0.0
        %4658 = vmatprep.subr.mxu0 0.0
        %4659 = vmatpush1.msra.mxu0 0.0
        %4660 = vmatprep.subr.mxu0 0.0
        %4661 = vmatpush1.msra.mxu0 0.0
        %4662 = vmatprep.subr.mxu0 0.0
        %4663 = vmatpush1.msra.mxu0 0.0
        %4664 = vmatprep.subr.mxu0 0.0
        %4665 = vmatpush1.msra.mxu0 0.0
        %4666 = vmatprep.subr.mxu0 0.0
        %4667 = vmatpush1.msra.mxu0 0.0
        %4668 = vmatprep.subr.mxu0 0.0
        %4669 = vmatpush1.msra.mxu0 0.0
        %4670 = vmatprep.subr.mxu0 0.0
        %4671 = vmatpush1.msra.mxu0 0.0
        %4672 = vmatprep.subr.mxu0 0.0
        %4673 = vmatpush1.msra.mxu0 0.0
        %4674 = vmatprep.subr.mxu0 0.0
        %4675 = vmatpush1.msra.mxu0 0.0
        %4676 = vmatprep.subr.mxu0 0.0
        %4677 = vmatpush1.msra.mxu0 0.0
        %4678 = vmatprep.subr.mxu0 0.0
        %4679 = vmatpush1.msra.mxu0 0.0
        %4680 = vmatprep.mubr.f32.mxu0 0.0
        %4681 = vmatmul.mubr.f32.gmra.mrb[0].mxu0 %v4614
        %v4682 = vpop.f32.mrb[0].mxu0
        %v4683 = vadd.f32 %v4611, %v4682
        %v4684 = vpop.f32.mrb[0].mxu0
        %4685 = vdwg.mxu0
        %v4686 = vmul.f32 %v4683, %v4683
        %v4687 = vmul.f32 %v4683, %v4686
        %v4688 = vmul.f32 %v4687, 0.044715
        %v4689 = vadd.f32 %v4683, %v4688
        %v4690 = vmul.f32 %v4689, 0.7978846
        %v4691 = vtanh.pop %v4690
        %v4692 = vadd.f32 %v4691, 1.0
        %v4693 = vmul.f32 %v4692, 0.5
        %v4694 = vmul.f32 %v4683, %v4693
        %s4695 = scalar_lea.vmem %s10, 64
        %v4696 = vld [vmem:[%s4695] sm:$0xff]
        %v4697 = vld [vmem:[%s4695 + $0x8] sm:$0xff]
        %v4698 = vld [vmem:[%s4695 + $0x10] sm:$0xff]
        %v4699 = vld [vmem:[%s4695 + $0x18] sm:$0xff]
        %v4700 = vld [vmem:[%s4695 + $0x20] sm:$0xff]
        %v4701 = vld [vmem:[%s4695 + $0x28] sm:$0xff]
        %v4702 = vld [vmem:[%s4695 + $0x30] sm:$0xff]
        %v4703 = vld [vmem:[%s4695 + $0x38] sm:$0xff]
        %v4704 = vlaneseq
        %v4705 = vshrl.u32 %v4704, 7
        %v4706 = vsub.s32 0, %v4705
        %v4707 = vrot.slane %v2635, %v4706
        %v4709 = vsel %vm2534, %v4694, 0
        %4711 = vmatprep.subr.mxu0 0.0
        %4712 = vmatpush1.msra.mxu0 %v4696
        %4713 = vmatprep.subr.mxu0 0.0
        %4714 = vmatpush1.msra.mxu0 %v4697
        %4715 = vmatprep.subr.mxu0 0.0
        %4716 = vmatpush1.msra.mxu0 %v4698
        %4717 = vmatprep.subr.mxu0 0.0
        %4718 = vmatpush1.msra.mxu0 %v4699
        %4719 = vmatprep.subr.mxu0 0.0
        %4720 = vmatpush1.msra.mxu0 %v4700
        %4721 = vmatprep.subr.mxu0 0.0
        %4722 = vmatpush1.msra.mxu0 %v4701
        %4723 = vmatprep.subr.mxu0 0.0
        %4724 = vmatpush1.msra.mxu0 %v4702
        %4725 = vmatprep.subr.mxu0 0.0
        %4726 = vmatpush1.msra.mxu0 %v4703
        %4727 = vmatprep.subr.mxu0 0.0
        %4728 = vmatpush1.msra.mxu0 0.0
        %4729 = vmatprep.subr.mxu0 0.0
        %4730 = vmatpush1.msra.mxu0 0.0
        %4731 = vmatprep.subr.mxu0 0.0
        %4732 = vmatpush1.msra.mxu0 0.0
        %4733 = vmatprep.subr.mxu0 0.0
        %4734 = vmatpush1.msra.mxu0 0.0
        %4735 = vmatprep.subr.mxu0 0.0
        %4736 = vmatpush1.msra.mxu0 0.0
        %4737 = vmatprep.subr.mxu0 0.0
        %4738 = vmatpush1.msra.mxu0 0.0
        %4739 = vmatprep.subr.mxu0 0.0
        %4740 = vmatpush1.msra.mxu0 0.0
        %4741 = vmatprep.subr.mxu0 0.0
        %4742 = vmatpush1.msra.mxu0 0.0
        %4743 = vmatprep.subr.mxu0 0.0
        %4744 = vmatpush1.msra.mxu0 0.0
        %4745 = vmatprep.subr.mxu0 0.0
        %4746 = vmatpush1.msra.mxu0 0.0
        %4747 = vmatprep.subr.mxu0 0.0
        %4748 = vmatpush1.msra.mxu0 0.0
        %4749 = vmatprep.subr.mxu0 0.0
        %4750 = vmatpush1.msra.mxu0 0.0
        %4751 = vmatprep.subr.mxu0 0.0
        %4752 = vmatpush1.msra.mxu0 0.0
        %4753 = vmatprep.subr.mxu0 0.0
        %4754 = vmatpush1.msra.mxu0 0.0
        %4755 = vmatprep.subr.mxu0 0.0
        %4756 = vmatpush1.msra.mxu0 0.0
        %4757 = vmatprep.subr.mxu0 0.0
        %4758 = vmatpush1.msra.mxu0 0.0
        %4759 = vmatprep.subr.mxu0 0.0
        %4760 = vmatpush1.msra.mxu0 0.0
        %4761 = vmatprep.subr.mxu0 0.0
        %4762 = vmatpush1.msra.mxu0 0.0
        %4763 = vmatprep.subr.mxu0 0.0
        %4764 = vmatpush1.msra.mxu0 0.0
        %4765 = vmatprep.subr.mxu0 0.0
        %4766 = vmatpush1.msra.mxu0 0.0
        %4767 = vmatprep.subr.mxu0 0.0
        %4768 = vmatpush1.msra.mxu0 0.0
        %4769 = vmatprep.subr.mxu0 0.0
        %4770 = vmatpush1.msra.mxu0 0.0
        %4771 = vmatprep.subr.mxu0 0.0
        %4772 = vmatpush1.msra.mxu0 0.0
        %4773 = vmatprep.subr.mxu0 0.0
        %4774 = vmatpush1.msra.mxu0 0.0
        %4775 = vmatprep.mubr.f32.mxu0 0.0
        %4776 = vmatmul.mubr.f32.gmra.mrb[0].mxu0 %v4709
        %v4777 = vpop.f32.mrb[0].mxu0
        %v4778 = vadd.f32 %v4707, %v4777
        %v4779 = vpop.f32.mrb[0].mxu0
        %4780 = vdwg.mxu0
        %v4781 = vadd.f32 %v4599, %v4778
        %v4782 = vsel %vm429, %v4781, 0.0
        %4783 = vadd.xlane.f32.xlu0 %v4782
        %v4784 = vpop.xlane.xlu0 %4783
        %v4785 = vmul.f32 %v4784, %v433
        %v4786 = vsub.f32 %v4781, %v4785
        %v4787 = vmul.f32 %v4786, %v4786
        %v4788 = vsel %vm429, %v4787, 0.0
        %4789 = vadd.xlane.f32.xlu0 %v4788
        %v4790 = vpop.xlane.xlu0 %4789
        %v4791 = vmul.f32 %v4790, %v433
        %v4792 = vadd.f32 %v4791, 1e-07
        %v4793 = vrsqrt.pop %v4792
        %v4794 = vmul.f32 %v4786, %v4793
        %v4795 = vlaneseq
        %v4796 = vshrl.u32 %v4795, 7
        %v4797 = vsub.s32 0, %v4796
        %v4798 = vrot.slane %v2636, %v4797
        %v4799 = vmul.f32 %v4794, %v4798
        %v4800 = vlaneseq
        %v4801 = vshrl.u32 %v4800, 7
        %v4802 = vsub.s32 0, %v4801
        %v4803 = vrot.slane %v2637, %v4802
        %v4804 = vadd.f32 %v4799, %v4803
        %s4805 = sld [smem:[#allocation2]]
        %v4806 = vstv %s4805
        %v4807 = vmul.f32 %v4806, %v4804
        %v4808 = vadd.f32 %v4807, 0.0
        %v4809 = vld [vmem:[%s4 + $0xe] sm:$0x1]
        %v4810 = vld [vmem:[%s4 + $0xf] sm:$0x1]
        %v4811 = vld [vmem:[%s4 + $0x10] sm:$0x1]
        %v4812 = vld [vmem:[%s4 + $0x11] sm:$0x1]
        %v4813 = vld [vmem:[%s4 + $0x12] sm:$0x1]
        %v4814 = vld [vmem:[%s4 + $0x13] sm:$0x1]
        %s4815 = scalar_lea.vmem %s7, 768
        %v4816 = vld [vmem:[%s4815] sm:$0xff]
        %v4817 = vld [vmem:[%s4815 + $0x8] sm:$0xff]
        %v4818 = vld [vmem:[%s4815 + $0x10] sm:$0xff]
        %v4819 = vld [vmem:[%s4815 + $0x18] sm:$0xff]
        %v4820 = vld [vmem:[%s4815 + $0x20] sm:$0xff]
        %v4821 = vld [vmem:[%s4815 + $0x28] sm:$0xff]
        %v4822 = vld [vmem:[%s4815 + $0x30] sm:$0xff]
        %v4823 = vld [vmem:[%s4815 + $0x38] sm:$0xff]
        %v4824 = vld [vmem:[%s4815 + $0x40] sm:$0xff]
        %v4825 = vld [vmem:[%s4815 + $0x48] sm:$0xff]
        %v4826 = vld [vmem:[%s4815 + $0x50] sm:$0xff]
        %v4827 = vld [vmem:[%s4815 + $0x58] sm:$0xff]
        %v4828 = vld [vmem:[%s4815 + $0x60] sm:$0xff]
        %v4829 = vld [vmem:[%s4815 + $0x68] sm:$0xff]
        %v4830 = vld [vmem:[%s4815 + $0x70] sm:$0xff]
        %v4831 = vld [vmem:[%s4815 + $0x78] sm:$0xff]
        %s4832 = scalar_lea.vmem %s5, 24
        %v4833 = vld [vmem:[%s4832] sm:$0x1]
        %v4834 = vld [vmem:[%s4832 + $0x1] sm:$0x1]
        %v4835 = vld [vmem:[%s4832 + $0x2] sm:$0x1]
        %v4836 = vld [vmem:[%s4832 + $0x3] sm:$0x1]
        %v4841 = vlaneseq
        %v4842 = vshrl.u32 %v4841, 7
        %v4843 = vsub.s32 0, %v4842
        %v4844 = vrot.slane %v4833, %v4843
        %v4845 = vlaneseq
        %v4846 = vshrl.u32 %v4845, 7
        %v4847 = vsub.s32 0, %v4846
        %v4848 = vrot.slane %v4834, %v4847
        %v4849 = vlaneseq
        %v4850 = vshrl.u32 %v4849, 7
        %v4851 = vsub.s32 0, %v4850
        %v4852 = vrot.slane %v4835, %v4851
        %v4853 = vlaneseq
        %v4854 = vshrl.u32 %v4853, 7
        %v4855 = vsub.s32 0, %v4854
        %v4856 = vrot.slane %v4836, %v4855
        %v4862 = vsel %vm429, %v4804, 0
        %4864 = vmatprep.subr.mxu0 0.0
        %4865 = vmatpush1.msra.mxu0 %v4816
        %4866 = vmatprep.subr.mxu0 0.0
        %4867 = vmatpush1.msra.mxu0 %v4817
        %4868 = vmatprep.subr.mxu0 0.0
        %4869 = vmatpush1.msra.mxu0 %v4818
        %4870 = vmatprep.subr.mxu0 0.0
        %4871 = vmatpush1.msra.mxu0 %v4819
        %4872 = vmatprep.subr.mxu0 0.0
        %4873 = vmatpush1.msra.mxu0 0.0
        %4874 = vmatprep.subr.mxu0 0.0
        %4875 = vmatpush1.msra.mxu0 0.0
        %4876 = vmatprep.subr.mxu0 0.0
        %4877 = vmatpush1.msra.mxu0 0.0
        %4878 = vmatprep.subr.mxu0 0.0
        %4879 = vmatpush1.msra.mxu0 0.0
        %4880 = vmatprep.subr.mxu0 0.0
        %4881 = vmatpush1.msra.mxu0 0.0
        %4882 = vmatprep.subr.mxu0 0.0
        %4883 = vmatpush1.msra.mxu0 0.0
        %4884 = vmatprep.subr.mxu0 0.0
        %4885 = vmatpush1.msra.mxu0 0.0
        %4886 = vmatprep.subr.mxu0 0.0
        %4887 = vmatpush1.msra.mxu0 0.0
        %4888 = vmatprep.subr.mxu0 0.0
        %4889 = vmatpush1.msra.mxu0 0.0
        %4890 = vmatprep.subr.mxu0 0.0
        %4891 = vmatpush1.msra.mxu0 0.0
        %4892 = vmatprep.subr.mxu0 0.0
        %4893 = vmatpush1.msra.mxu0 0.0
        %4894 = vmatprep.subr.mxu0 0.0
        %4895 = vmatpush1.msra.mxu0 0.0
        %4896 = vmatprep.subr.mxu0 0.0
        %4897 = vmatpush1.msra.mxu0 0.0
        %4898 = vmatprep.subr.mxu0 0.0
        %4899 = vmatpush1.msra.mxu0 0.0
        %4900 = vmatprep.subr.mxu0 0.0
        %4901 = vmatpush1.msra.mxu0 0.0
        %4902 = vmatprep.subr.mxu0 0.0
        %4903 = vmatpush1.msra.mxu0 0.0
        %4904 = vmatprep.subr.mxu0 0.0
        %4905 = vmatpush1.msra.mxu0 0.0
        %4906 = vmatprep.subr.mxu0 0.0
        %4907 = vmatpush1.msra.mxu0 0.0
        %4908 = vmatprep.subr.mxu0 0.0
        %4909 = vmatpush1.msra.mxu0 0.0
        %4910 = vmatprep.subr.mxu0 0.0
        %4911 = vmatpush1.msra.mxu0 0.0
        %4912 = vmatprep.subr.mxu0 0.0
        %4913 = vmatpush1.msra.mxu0 0.0
        %4914 = vmatprep.subr.mxu0 0.0
        %4915 = vmatpush1.msra.mxu0 0.0
        %4916 = vmatprep.subr.mxu0 0.0
        %4917 = vmatpush1.msra.mxu0 0.0
        %4918 = vmatprep.subr.mxu0 0.0
        %4919 = vmatpush1.msra.mxu0 0.0
        %4920 = vmatprep.subr.mxu0 0.0
        %4921 = vmatpush1.msra.mxu0 0.0
        %4922 = vmatprep.subr.mxu0 0.0
        %4923 = vmatpush1.msra.mxu0 0.0
        %4924 = vmatprep.subr.mxu0 0.0
        %4925 = vmatpush1.msra.mxu0 0.0
        %4926 = vmatprep.subr.mxu0 0.0
        %4927 = vmatpush1.msra.mxu0 0.0
        %4928 = vmatprep.mubr.f32.mxu0 0.0
        %4929 = vmatmul.mubr.f32.gmra.mrb[0].mxu0 %v4862
        %v4930 = vpop.f32.mrb[0].mxu0
        %v4931 = vadd.f32 %v4844, %v4930
        %v4932 = vpop.f32.mrb[0].mxu0
        %4933 = vdwg.mxu0
        %4934 = vmatprep.subr.mxu0 0.0
        %4935 = vmatpush1.msra.mxu0 %v4820
        %4936 = vmatprep.subr.mxu0 0.0
        %4937 = vmatpush1.msra.mxu0 %v4821
        %4938 = vmatprep.subr.mxu0 0.0
        %4939 = vmatpush1.msra.mxu0 %v4822
        %4940 = vmatprep.subr.mxu0 0.0
        %4941 = vmatpush1.msra.mxu0 %v4823
        %4942 = vmatprep.subr.mxu0 0.0
        %4943 = vmatpush1.msra.mxu0 0.0
        %4944 = vmatprep.subr.mxu0 0.0
        %4945 = vmatpush1.msra.mxu0 0.0
        %4946 = vmatprep.subr.mxu0 0.0
        %4947 = vmatpush1.msra.mxu0 0.0
        %4948 = vmatprep.subr.mxu0 0.0
        %4949 = vmatpush1.msra.mxu0 0.0
        %4950 = vmatprep.subr.mxu0 0.0
        %4951 = vmatpush1.msra.mxu0 0.0
        %4952 = vmatprep.subr.mxu0 0.0
        %4953 = vmatpush1.msra.mxu0 0.0
        %4954 = vmatprep.subr.mxu0 0.0
        %4955 = vmatpush1.msra.mxu0 0.0
        %4956 = vmatprep.subr.mxu0 0.0
        %4957 = vmatpush1.msra.mxu0 0.0
        %4958 = vmatprep.subr.mxu0 0.0
        %4959 = vmatpush1.msra.mxu0 0.0
        %4960 = vmatprep.subr.mxu0 0.0
        %4961 = vmatpush1.msra.mxu0 0.0
        %4962 = vmatprep.subr.mxu0 0.0
        %4963 = vmatpush1.msra.mxu0 0.0
        %4964 = vmatprep.subr.mxu0 0.0
        %4965 = vmatpush1.msra.mxu0 0.0
        %4966 = vmatprep.subr.mxu0 0.0
        %4967 = vmatpush1.msra.mxu0 0.0
        %4968 = vmatprep.subr.mxu0 0.0
        %4969 = vmatpush1.msra.mxu0 0.0
        %4970 = vmatprep.subr.mxu0 0.0
        %4971 = vmatpush1.msra.mxu0 0.0
        %4972 = vmatprep.subr.mxu0 0.0
        %4973 = vmatpush1.msra.mxu0 0.0
        %4974 = vmatprep.subr.mxu0 0.0
        %4975 = vmatpush1.msra.mxu0 0.0
        %4976 = vmatprep.subr.mxu0 0.0
        %4977 = vmatpush1.msra.mxu0 0.0
        %4978 = vmatprep.subr.mxu0 0.0
        %4979 = vmatpush1.msra.mxu0 0.0
        %4980 = vmatprep.subr.mxu0 0.0
        %4981 = vmatpush1.msra.mxu0 0.0
        %4982 = vmatprep.subr.mxu0 0.0
        %4983 = vmatpush1.msra.mxu0 0.0
        %4984 = vmatprep.subr.mxu0 0.0
        %4985 = vmatpush1.msra.mxu0 0.0
        %4986 = vmatprep.subr.mxu0 0.0
        %4987 = vmatpush1.msra.mxu0 0.0
        %4988 = vmatprep.subr.mxu0 0.0
        %4989 = vmatpush1.msra.mxu0 0.0
        %4990 = vmatprep.subr.mxu0 0.0
        %4991 = vmatpush1.msra.mxu0 0.0
        %4992 = vmatprep.subr.mxu0 0.0
        %4993 = vmatpush1.msra.mxu0 0.0
        %4994 = vmatprep.subr.mxu0 0.0
        %4995 = vmatpush1.msra.mxu0 0.0
        %4996 = vmatprep.subr.mxu0 0.0
        %4997 = vmatpush1.msra.mxu0 0.0
        %4998 = vmatprep.mubr.f32.mxu0 0.0
        %4999 = vmatmul.mubr.f32.gmra.mrb[0].mxu0 %v4862
        %v5000 = vpop.f32.mrb[0].mxu0
        %v5001 = vadd.f32 %v4848, %v5000
        %v5002 = vpop.f32.mrb[0].mxu0
        %5003 = vdwg.mxu0
        %5004 = vmatprep.subr.mxu0 0.0
        %5005 = vmatpush1.msra.mxu0 %v4824
        %5006 = vmatprep.subr.mxu0 0.0
        %5007 = vmatpush1.msra.mxu0 %v4825
        %5008 = vmatprep.subr.mxu0 0.0
        %5009 = vmatpush1.msra.mxu0 %v4826
        %5010 = vmatprep.subr.mxu0 0.0
        %5011 = vmatpush1.msra.mxu0 %v4827
        %5012 = vmatprep.subr.mxu0 0.0
        %5013 = vmatpush1.msra.mxu0 0.0
        %5014 = vmatprep.subr.mxu0 0.0
        %5015 = vmatpush1.msra.mxu0 0.0
        %5016 = vmatprep.subr.mxu0 0.0
        %5017 = vmatpush1.msra.mxu0 0.0
        %5018 = vmatprep.subr.mxu0 0.0
        %5019 = vmatpush1.msra.mxu0 0.0
        %5020 = vmatprep.subr.mxu0 0.0
        %5021 = vmatpush1.msra.mxu0 0.0
        %5022 = vmatprep.subr.mxu0 0.0
        %5023 = vmatpush1.msra.mxu0 0.0
        %5024 = vmatprep.subr.mxu0 0.0
        %5025 = vmatpush1.msra.mxu0 0.0
        %5026 = vmatprep.subr.mxu0 0.0
        %5027 = vmatpush1.msra.mxu0 0.0
        %5028 = vmatprep.subr.mxu0 0.0
        %5029 = vmatpush1.msra.mxu0 0.0
        %5030 = vmatprep.subr.mxu0 0.0
        %5031 = vmatpush1.msra.mxu0 0.0
        %5032 = vmatprep.subr.mxu0 0.0
        %5033 = vmatpush1.msra.mxu0 0.0
        %5034 = vmatprep.subr.mxu0 0.0
        %5035 = vmatpush1.msra.mxu0 0.0
        %5036 = vmatprep.subr.mxu0 0.0
        %5037 = vmatpush1.msra.mxu0 0.0
        %5038 = vmatprep.subr.mxu0 0.0
        %5039 = vmatpush1.msra.mxu0 0.0
        %5040 = vmatprep.subr.mxu0 0.0
        %5041 = vmatpush1.msra.mxu0 0.0
        %5042 = vmatprep.subr.mxu0 0.0
        %5043 = vmatpush1.msra.mxu0 0.0
        %5044 = vmatprep.subr.mxu0 0.0
        %5045 = vmatpush1.msra.mxu0 0.0
        %5046 = vmatprep.subr.mxu0 0.0
        %5047 = vmatpush1.msra.mxu0 0.0
        %5048 = vmatprep.subr.mxu0 0.0
        %5049 = vmatpush1.msra.mxu0 0.0
        %5050 = vmatprep.subr.mxu0 0.0
        %5051 = vmatpush1.msra.mxu0 0.0
        %5052 = vmatprep.subr.mxu0 0.0
        %5053 = vmatpush1.msra.mxu0 0.0
        %5054 = vmatprep.subr.mxu0 0.0
        %5055 = vmatpush1.msra.mxu0 0.0
        %5056 = vmatprep.subr.mxu0 0.0
        %5057 = vmatpush1.msra.mxu0 0.0
        %5058 = vmatprep.subr.mxu0 0.0
        %5059 = vmatpush1.msra.mxu0 0.0
        %5060 = vmatprep.subr.mxu0 0.0
        %5061 = vmatpush1.msra.mxu0 0.0
        %5062 = vmatprep.subr.mxu0 0.0
        %5063 = vmatpush1.msra.mxu0 0.0
        %5064 = vmatprep.subr.mxu0 0.0
        %5065 = vmatpush1.msra.mxu0 0.0
        %5066 = vmatprep.subr.mxu0 0.0
        %5067 = vmatpush1.msra.mxu0 0.0
        %5068 = vmatprep.mubr.f32.mxu0 0.0
        %5069 = vmatmul.mubr.f32.gmra.mrb[0].mxu0 %v4862
        %v5070 = vpop.f32.mrb[0].mxu0
        %v5071 = vadd.f32 %v4852, %v5070
        %v5072 = vpop.f32.mrb[0].mxu0
        %5073 = vdwg.mxu0
        %5074 = vmatprep.subr.mxu0 0.0
        %5075 = vmatpush1.msra.mxu0 %v4828
        %5076 = vmatprep.subr.mxu0 0.0
        %5077 = vmatpush1.msra.mxu0 %v4829
        %5078 = vmatprep.subr.mxu0 0.0
        %5079 = vmatpush1.msra.mxu0 %v4830
        %5080 = vmatprep.subr.mxu0 0.0
        %5081 = vmatpush1.msra.mxu0 %v4831
        %5082 = vmatprep.subr.mxu0 0.0
        %5083 = vmatpush1.msra.mxu0 0.0
        %5084 = vmatprep.subr.mxu0 0.0
        %5085 = vmatpush1.msra.mxu0 0.0
        %5086 = vmatprep.subr.mxu0 0.0
        %5087 = vmatpush1.msra.mxu0 0.0
        %5088 = vmatprep.subr.mxu0 0.0
        %5089 = vmatpush1.msra.mxu0 0.0
        %5090 = vmatprep.subr.mxu0 0.0
        %5091 = vmatpush1.msra.mxu0 0.0
        %5092 = vmatprep.subr.mxu0 0.0
        %5093 = vmatpush1.msra.mxu0 0.0
        %5094 = vmatprep.subr.mxu0 0.0
        %5095 = vmatpush1.msra.mxu0 0.0
        %5096 = vmatprep.subr.mxu0 0.0
        %5097 = vmatpush1.msra.mxu0 0.0
        %5098 = vmatprep.subr.mxu0 0.0
        %5099 = vmatpush1.msra.mxu0 0.0
        %5100 = vmatprep.subr.mxu0 0.0
        %5101 = vmatpush1.msra.mxu0 0.0
        %5102 = vmatprep.subr.mxu0 0.0
        %5103 = vmatpush1.msra.mxu0 0.0
        %5104 = vmatprep.subr.mxu0 0.0
        %5105 = vmatpush1.msra.mxu0 0.0
        %5106 = vmatprep.subr.mxu0 0.0
        %5107 = vmatpush1.msra.mxu0 0.0
        %5108 = vmatprep.subr.mxu0 0.0
        %5109 = vmatpush1.msra.mxu0 0.0
        %5110 = vmatprep.subr.mxu0 0.0
        %5111 = vmatpush1.msra.mxu0 0.0
        %5112 = vmatprep.subr.mxu0 0.0
        %5113 = vmatpush1.msra.mxu0 0.0
        %5114 = vmatprep.subr.mxu0 0.0
        %5115 = vmatpush1.msra.mxu0 0.0
        %5116 = vmatprep.subr.mxu0 0.0
        %5117 = vmatpush1.msra.mxu0 0.0
        %5118 = vmatprep.subr.mxu0 0.0
        %5119 = vmatpush1.msra.mxu0 0.0
        %5120 = vmatprep.subr.mxu0 0.0
        %5121 = vmatpush1.msra.mxu0 0.0
        %5122 = vmatprep.subr.mxu0 0.0
        %5123 = vmatpush1.msra.mxu0 0.0
        %5124 = vmatprep.subr.mxu0 0.0
        %5125 = vmatpush1.msra.mxu0 0.0
        %5126 = vmatprep.subr.mxu0 0.0
        %5127 = vmatpush1.msra.mxu0 0.0
        %5128 = vmatprep.subr.mxu0 0.0
        %5129 = vmatpush1.msra.mxu0 0.0
        %5130 = vmatprep.subr.mxu0 0.0
        %5131 = vmatpush1.msra.mxu0 0.0
        %5132 = vmatprep.subr.mxu0 0.0
        %5133 = vmatpush1.msra.mxu0 0.0
        %5134 = vmatprep.subr.mxu0 0.0
        %5135 = vmatpush1.msra.mxu0 0.0
        %5136 = vmatprep.subr.mxu0 0.0
        %5137 = vmatpush1.msra.mxu0 0.0
        %5138 = vmatprep.mubr.f32.mxu0 0.0
        %5139 = vmatmul.mubr.f32.gmra.mrb[0].mxu0 %v4862
        %v5140 = vpop.f32.mrb[0].mxu0
        %v5141 = vadd.f32 %v4856, %v5140
        %v5142 = vpop.f32.mrb[0].mxu0
        %5143 = vdwg.mxu0
        %s5144 = scalar_lea.vmem %s7, 896
        %v5145 = vld [vmem:[%s5144] sm:$0xff]
        %v5146 = vld [vmem:[%s5144 + $0x8] sm:$0xff]
        %v5147 = vld [vmem:[%s5144 + $0x10] sm:$0xff]
        %v5148 = vld [vmem:[%s5144 + $0x18] sm:$0xff]
        %v5149 = vld [vmem:[%s5144 + $0x20] sm:$0xff]
        %v5150 = vld [vmem:[%s5144 + $0x28] sm:$0xff]
        %v5151 = vld [vmem:[%s5144 + $0x30] sm:$0xff]
        %v5152 = vld [vmem:[%s5144 + $0x38] sm:$0xff]
        %v5153 = vld [vmem:[%s5144 + $0x40] sm:$0xff]
        %v5154 = vld [vmem:[%s5144 + $0x48] sm:$0xff]
        %v5155 = vld [vmem:[%s5144 + $0x50] sm:$0xff]
        %v5156 = vld [vmem:[%s5144 + $0x58] sm:$0xff]
        %v5157 = vld [vmem:[%s5144 + $0x60] sm:$0xff]
        %v5158 = vld [vmem:[%s5144 + $0x68] sm:$0xff]
        %v5159 = vld [vmem:[%s5144 + $0x70] sm:$0xff]
        %v5160 = vld [vmem:[%s5144 + $0x78] sm:$0xff]
        %s5161 = scalar_lea.vmem %s5, 28
        %v5162 = vld [vmem:[%s5161] sm:$0x1]
        %v5163 = vld [vmem:[%s5161 + $0x1] sm:$0x1]
        %v5164 = vld [vmem:[%s5161 + $0x2] sm:$0x1]
        %v5165 = vld [vmem:[%s5161 + $0x3] sm:$0x1]
        %v5170 = vlaneseq
        %v5171 = vshrl.u32 %v5170, 7
        %v5172 = vsub.s32 0, %v5171
        %v5173 = vrot.slane %v5162, %v5172
        %v5174 = vlaneseq
        %v5175 = vshrl.u32 %v5174, 7
        %v5176 = vsub.s32 0, %v5175
        %v5177 = vrot.slane %v5163, %v5176
        %v5178 = vlaneseq
        %v5179 = vshrl.u32 %v5178, 7
        %v5180 = vsub.s32 0, %v5179
        %v5181 = vrot.slane %v5164, %v5180
        %v5182 = vlaneseq
        %v5183 = vshrl.u32 %v5182, 7
        %v5184 = vsub.s32 0, %v5183
        %v5185 = vrot.slane %v5165, %v5184
        %5190 = vmatprep.subr.mxu0 0.0
        %5191 = vmatpush1.msra.mxu0 %v5145
        %5192 = vmatprep.subr.mxu0 0.0
        %5193 = vmatpush1.msra.mxu0 %v5146
        %5194 = vmatprep.subr.mxu0 0.0
        %5195 = vmatpush1.msra.mxu0 %v5147
        %5196 = vmatprep.subr.mxu0 0.0
        %5197 = vmatpush1.msra.mxu0 %v5148
        %5198 = vmatprep.subr.mxu0 0.0
        %5199 = vmatpush1.msra.mxu0 0.0
        %5200 = vmatprep.subr.mxu0 0.0
        %5201 = vmatpush1.msra.mxu0 0.0
        %5202 = vmatprep.subr.mxu0 0.0
        %5203 = vmatpush1.msra.mxu0 0.0
        %5204 = vmatprep.subr.mxu0 0.0
        %5205 = vmatpush1.msra.mxu0 0.0
        %5206 = vmatprep.subr.mxu0 0.0
        %5207 = vmatpush1.msra.mxu0 0.0
        %5208 = vmatprep.subr.mxu0 0.0
        %5209 = vmatpush1.msra.mxu0 0.0
        %5210 = vmatprep.subr.mxu0 0.0
        %5211 = vmatpush1.msra.mxu0 0.0
        %5212 = vmatprep.subr.mxu0 0.0
        %5213 = vmatpush1.msra.mxu0 0.0
        %5214 = vmatprep.subr.mxu0 0.0
        %5215 = vmatpush1.msra.mxu0 0.0
        %5216 = vmatprep.subr.mxu0 0.0
        %5217 = vmatpush1.msra.mxu0 0.0
        %5218 = vmatprep.subr.mxu0 0.0
        %5219 = vmatpush1.msra.mxu0 0.0
        %5220 = vmatprep.subr.mxu0 0.0
        %5221 = vmatpush1.msra.mxu0 0.0
        %5222 = vmatprep.subr.mxu0 0.0
        %5223 = vmatpush1.msra.mxu0 0.0
        %5224 = vmatprep.subr.mxu0 0.0
        %5225 = vmatpush1.msra.mxu0 0.0
        %5226 = vmatprep.subr.mxu0 0.0
        %5227 = vmatpush1.msra.mxu0 0.0
        %5228 = vmatprep.subr.mxu0 0.0
        %5229 = vmatpush1.msra.mxu0 0.0
        %5230 = vmatprep.subr.mxu0 0.0
        %5231 = vmatpush1.msra.mxu0 0.0
        %5232 = vmatprep.subr.mxu0 0.0
        %5233 = vmatpush1.msra.mxu0 0.0
        %5234 = vmatprep.subr.mxu0 0.0
        %5235 = vmatpush1.msra.mxu0 0.0
        %5236 = vmatprep.subr.mxu0 0.0
        %5237 = vmatpush1.msra.mxu0 0.0
        %5238 = vmatprep.subr.mxu0 0.0
        %5239 = vmatpush1.msra.mxu0 0.0
        %5240 = vmatprep.subr.mxu0 0.0
        %5241 = vmatpush1.msra.mxu0 0.0
        %5242 = vmatprep.subr.mxu0 0.0
        %5243 = vmatpush1.msra.mxu0 0.0
        %5244 = vmatprep.subr.mxu0 0.0
        %5245 = vmatpush1.msra.mxu0 0.0
        %5246 = vmatprep.subr.mxu0 0.0
        %5247 = vmatpush1.msra.mxu0 0.0
        %5248 = vmatprep.subr.mxu0 0.0
        %5249 = vmatpush1.msra.mxu0 0.0
        %5250 = vmatprep.subr.mxu0 0.0
        %5251 = vmatpush1.msra.mxu0 0.0
        %5252 = vmatprep.subr.mxu0 0.0
        %5253 = vmatpush1.msra.mxu0 0.0
        %5254 = vmatprep.mubr.f32.mxu0 0.0
        %5255 = vmatmul.mubr.f32.gmra.mrb[0].mxu0 %v4862
        %v5256 = vpop.f32.mrb[0].mxu0
        %v5257 = vadd.f32 %v5173, %v5256
        %v5258 = vpop.f32.mrb[0].mxu0
        %5259 = vdwg.mxu0
        %5260 = vmatprep.subr.mxu0 0.0
        %5261 = vmatpush1.msra.mxu0 %v5149
        %5262 = vmatprep.subr.mxu0 0.0
        %5263 = vmatpush1.msra.mxu0 %v5150
        %5264 = vmatprep.subr.mxu0 0.0
        %5265 = vmatpush1.msra.mxu0 %v5151
        %5266 = vmatprep.subr.mxu0 0.0
        %5267 = vmatpush1.msra.mxu0 %v5152
        %5268 = vmatprep.subr.mxu0 0.0
        %5269 = vmatpush1.msra.mxu0 0.0
        %5270 = vmatprep.subr.mxu0 0.0
        %5271 = vmatpush1.msra.mxu0 0.0
        %5272 = vmatprep.subr.mxu0 0.0
        %5273 = vmatpush1.msra.mxu0 0.0
        %5274 = vmatprep.subr.mxu0 0.0
        %5275 = vmatpush1.msra.mxu0 0.0
        %5276 = vmatprep.subr.mxu0 0.0
        %5277 = vmatpush1.msra.mxu0 0.0
        %5278 = vmatprep.subr.mxu0 0.0
        %5279 = vmatpush1.msra.mxu0 0.0
        %5280 = vmatprep.subr.mxu0 0.0
        %5281 = vmatpush1.msra.mxu0 0.0
        %5282 = vmatprep.subr.mxu0 0.0
        %5283 = vmatpush1.msra.mxu0 0.0
        %5284 = vmatprep.subr.mxu0 0.0
        %5285 = vmatpush1.msra.mxu0 0.0
        %5286 = vmatprep.subr.mxu0 0.0
        %5287 = vmatpush1.msra.mxu0 0.0
        %5288 = vmatprep.subr.mxu0 0.0
        %5289 = vmatpush1.msra.mxu0 0.0
        %5290 = vmatprep.subr.mxu0 0.0
        %5291 = vmatpush1.msra.mxu0 0.0
        %5292 = vmatprep.subr.mxu0 0.0
        %5293 = vmatpush1.msra.mxu0 0.0
        %5294 = vmatprep.subr.mxu0 0.0
        %5295 = vmatpush1.msra.mxu0 0.0
        %5296 = vmatprep.subr.mxu0 0.0
        %5297 = vmatpush1.msra.mxu0 0.0
        %5298 = vmatprep.subr.mxu0 0.0
        %5299 = vmatpush1.msra.mxu0 0.0
        %5300 = vmatprep.subr.mxu0 0.0
        %5301 = vmatpush1.msra.mxu0 0.0
        %5302 = vmatprep.subr.mxu0 0.0
        %5303 = vmatpush1.msra.mxu0 0.0
        %5304 = vmatprep.subr.mxu0 0.0
        %5305 = vmatpush1.msra.mxu0 0.0
        %5306 = vmatprep.subr.mxu0 0.0
        %5307 = vmatpush1.msra.mxu0 0.0
        %5308 = vmatprep.subr.mxu0 0.0
        %5309 = vmatpush1.msra.mxu0 0.0
        %5310 = vmatprep.subr.mxu0 0.0
        %5311 = vmatpush1.msra.mxu0 0.0
        %5312 = vmatprep.subr.mxu0 0.0
        %5313 = vmatpush1.msra.mxu0 0.0
        %5314 = vmatprep.subr.mxu0 0.0
        %5315 = vmatpush1.msra.mxu0 0.0
        %5316 = vmatprep.subr.mxu0 0.0
        %5317 = vmatpush1.msra.mxu0 0.0
        %5318 = vmatprep.subr.mxu0 0.0
        %5319 = vmatpush1.msra.mxu0 0.0
        %5320 = vmatprep.subr.mxu0 0.0
        %5321 = vmatpush1.msra.mxu0 0.0
        %5322 = vmatprep.subr.mxu0 0.0
        %5323 = vmatpush1.msra.mxu0 0.0
        %5324 = vmatprep.mubr.f32.mxu0 0.0
        %5325 = vmatmul.mubr.f32.gmra.mrb[0].mxu0 %v4862
        %v5326 = vpop.f32.mrb[0].mxu0
        %v5327 = vadd.f32 %v5177, %v5326
        %v5328 = vpop.f32.mrb[0].mxu0
        %5329 = vdwg.mxu0
        %5330 = vmatprep.subr.mxu0 0.0
        %5331 = vmatpush1.msra.mxu0 %v5153
        %5332 = vmatprep.subr.mxu0 0.0
        %5333 = vmatpush1.msra.mxu0 %v5154
        %5334 = vmatprep.subr.mxu0 0.0
        %5335 = vmatpush1.msra.mxu0 %v5155
        %5336 = vmatprep.subr.mxu0 0.0
        %5337 = vmatpush1.msra.mxu0 %v5156
        %5338 = vmatprep.subr.mxu0 0.0
        %5339 = vmatpush1.msra.mxu0 0.0
        %5340 = vmatprep.subr.mxu0 0.0
        %5341 = vmatpush1.msra.mxu0 0.0
        %5342 = vmatprep.subr.mxu0 0.0
        %5343 = vmatpush1.msra.mxu0 0.0
        %5344 = vmatprep.subr.mxu0 0.0
        %5345 = vmatpush1.msra.mxu0 0.0
        %5346 = vmatprep.subr.mxu0 0.0
        %5347 = vmatpush1.msra.mxu0 0.0
        %5348 = vmatprep.subr.mxu0 0.0
        %5349 = vmatpush1.msra.mxu0 0.0
        %5350 = vmatprep.subr.mxu0 0.0
        %5351 = vmatpush1.msra.mxu0 0.0
        %5352 = vmatprep.subr.mxu0 0.0
        %5353 = vmatpush1.msra.mxu0 0.0
        %5354 = vmatprep.subr.mxu0 0.0
        %5355 = vmatpush1.msra.mxu0 0.0
        %5356 = vmatprep.subr.mxu0 0.0
        %5357 = vmatpush1.msra.mxu0 0.0
        %5358 = vmatprep.subr.mxu0 0.0
        %5359 = vmatpush1.msra.mxu0 0.0
        %5360 = vmatprep.subr.mxu0 0.0
        %5361 = vmatpush1.msra.mxu0 0.0
        %5362 = vmatprep.subr.mxu0 0.0
        %5363 = vmatpush1.msra.mxu0 0.0
        %5364 = vmatprep.subr.mxu0 0.0
        %5365 = vmatpush1.msra.mxu0 0.0
        %5366 = vmatprep.subr.mxu0 0.0
        %5367 = vmatpush1.msra.mxu0 0.0
        %5368 = vmatprep.subr.mxu0 0.0
        %5369 = vmatpush1.msra.mxu0 0.0
        %5370 = vmatprep.subr.mxu0 0.0
        %5371 = vmatpush1.msra.mxu0 0.0
        %5372 = vmatprep.subr.mxu0 0.0
        %5373 = vmatpush1.msra.mxu0 0.0
        %5374 = vmatprep.subr.mxu0 0.0
        %5375 = vmatpush1.msra.mxu0 0.0
        %5376 = vmatprep.subr.mxu0 0.0
        %5377 = vmatpush1.msra.mxu0 0.0
        %5378 = vmatprep.subr.mxu0 0.0
        %5379 = vmatpush1.msra.mxu0 0.0
        %5380 = vmatprep.subr.mxu0 0.0
        %5381 = vmatpush1.msra.mxu0 0.0
        %5382 = vmatprep.subr.mxu0 0.0
        %5383 = vmatpush1.msra.mxu0 0.0
        %5384 = vmatprep.subr.mxu0 0.0
        %5385 = vmatpush1.msra.mxu0 0.0
        %5386 = vmatprep.subr.mxu0 0.0
        %5387 = vmatpush1.msra.mxu0 0.0
        %5388 = vmatprep.subr.mxu0 0.0
        %5389 = vmatpush1.msra.mxu0 0.0
        %5390 = vmatprep.subr.mxu0 0.0
        %5391 = vmatpush1.msra.mxu0 0.0
        %5392 = vmatprep.subr.mxu0 0.0
        %5393 = vmatpush1.msra.mxu0 0.0
        %5394 = vmatprep.mubr.f32.mxu0 0.0
        %5395 = vmatmul.mubr.f32.gmra.mrb[0].mxu0 %v4862
        %v5396 = vpop.f32.mrb[0].mxu0
        %v5397 = vadd.f32 %v5181, %v5396
        %v5398 = vpop.f32.mrb[0].mxu0
        %5399 = vdwg.mxu0
        %5400 = vmatprep.subr.mxu0 0.0
        %5401 = vmatpush1.msra.mxu0 %v5157
        %5402 = vmatprep.subr.mxu0 0.0
        %5403 = vmatpush1.msra.mxu0 %v5158
        %5404 = vmatprep.subr.mxu0 0.0
        %5405 = vmatpush1.msra.mxu0 %v5159
        %5406 = vmatprep.subr.mxu0 0.0
        %5407 = vmatpush1.msra.mxu0 %v5160
        %5408 = vmatprep.subr.mxu0 0.0
        %5409 = vmatpush1.msra.mxu0 0.0
        %5410 = vmatprep.subr.mxu0 0.0
        %5411 = vmatpush1.msra.mxu0 0.0
        %5412 = vmatprep.subr.mxu0 0.0
        %5413 = vmatpush1.msra.mxu0 0.0
        %5414 = vmatprep.subr.mxu0 0.0
        %5415 = vmatpush1.msra.mxu0 0.0
        %5416 = vmatprep.subr.mxu0 0.0
        %5417 = vmatpush1.msra.mxu0 0.0
        %5418 = vmatprep.subr.mxu0 0.0
        %5419 = vmatpush1.msra.mxu0 0.0
        %5420 = vmatprep.subr.mxu0 0.0
        %5421 = vmatpush1.msra.mxu0 0.0
        %5422 = vmatprep.subr.mxu0 0.0
        %5423 = vmatpush1.msra.mxu0 0.0
        %5424 = vmatprep.subr.mxu0 0.0
        %5425 = vmatpush1.msra.mxu0 0.0
        %5426 = vmatprep.subr.mxu0 0.0
        %5427 = vmatpush1.msra.mxu0 0.0
        %5428 = vmatprep.subr.mxu0 0.0
        %5429 = vmatpush1.msra.mxu0 0.0
        %5430 = vmatprep.subr.mxu0 0.0
        %5431 = vmatpush1.msra.mxu0 0.0
        %5432 = vmatprep.subr.mxu0 0.0
        %5433 = vmatpush1.msra.mxu0 0.0
        %5434 = vmatprep.subr.mxu0 0.0
        %5435 = vmatpush1.msra.mxu0 0.0
        %5436 = vmatprep.subr.mxu0 0.0
        %5437 = vmatpush1.msra.mxu0 0.0
        %5438 = vmatprep.subr.mxu0 0.0
        %5439 = vmatpush1.msra.mxu0 0.0
        %5440 = vmatprep.subr.mxu0 0.0
        %5441 = vmatpush1.msra.mxu0 0.0
        %5442 = vmatprep.subr.mxu0 0.0
        %5443 = vmatpush1.msra.mxu0 0.0
        %5444 = vmatprep.subr.mxu0 0.0
        %5445 = vmatpush1.msra.mxu0 0.0
        %5446 = vmatprep.subr.mxu0 0.0
        %5447 = vmatpush1.msra.mxu0 0.0
        %5448 = vmatprep.subr.mxu0 0.0
        %5449 = vmatpush1.msra.mxu0 0.0
        %5450 = vmatprep.subr.mxu0 0.0
        %5451 = vmatpush1.msra.mxu0 0.0
        %5452 = vmatprep.subr.mxu0 0.0
        %5453 = vmatpush1.msra.mxu0 0.0
        %5454 = vmatprep.subr.mxu0 0.0
        %5455 = vmatpush1.msra.mxu0 0.0
        %5456 = vmatprep.subr.mxu0 0.0
        %5457 = vmatpush1.msra.mxu0 0.0
        %5458 = vmatprep.subr.mxu0 0.0
        %5459 = vmatpush1.msra.mxu0 0.0
        %5460 = vmatprep.subr.mxu0 0.0
        %5461 = vmatpush1.msra.mxu0 0.0
        %5462 = vmatprep.subr.mxu0 0.0
        %5463 = vmatpush1.msra.mxu0 0.0
        %5464 = vmatprep.mubr.f32.mxu0 0.0
        %5465 = vmatmul.mubr.f32.gmra.mrb[0].mxu0 %v4862
        %v5466 = vpop.f32.mrb[0].mxu0
        %v5467 = vadd.f32 %v5185, %v5466
        %v5468 = vpop.f32.mrb[0].mxu0
        %5469 = vdwg.mxu0
        %s5470 = scalar_lea.vmem %s7, 1024
        %v5471 = vld [vmem:[%s5470] sm:$0xff]
        %v5472 = vld [vmem:[%s5470 + $0x8] sm:$0xff]
        %v5473 = vld [vmem:[%s5470 + $0x10] sm:$0xff]
        %v5474 = vld [vmem:[%s5470 + $0x18] sm:$0xff]
        %v5475 = vld [vmem:[%s5470 + $0x20] sm:$0xff]
        %v5476 = vld [vmem:[%s5470 + $0x28] sm:$0xff]
        %v5477 = vld [vmem:[%s5470 + $0x30] sm:$0xff]
        %v5478 = vld [vmem:[%s5470 + $0x38] sm:$0xff]
        %v5479 = vld [vmem:[%s5470 + $0x40] sm:$0xff]
        %v5480 = vld [vmem:[%s5470 + $0x48] sm:$0xff]
        %v5481 = vld [vmem:[%s5470 + $0x50] sm:$0xff]
        %v5482 = vld [vmem:[%s5470 + $0x58] sm:$0xff]
        %v5483 = vld [vmem:[%s5470 + $0x60] sm:$0xff]
        %v5484 = vld [vmem:[%s5470 + $0x68] sm:$0xff]
        %v5485 = vld [vmem:[%s5470 + $0x70] sm:$0xff]
        %v5486 = vld [vmem:[%s5470 + $0x78] sm:$0xff]
        %s5487 = scalar_lea.vmem %s5, 32
        %v5488 = vld [vmem:[%s5487] sm:$0x1]
        %v5489 = vld [vmem:[%s5487 + $0x1] sm:$0x1]
        %v5490 = vld [vmem:[%s5487 + $0x2] sm:$0x1]
        %v5491 = vld [vmem:[%s5487 + $0x3] sm:$0x1]
        %v5496 = vlaneseq
        %v5497 = vshrl.u32 %v5496, 7
        %v5498 = vsub.s32 0, %v5497
        %v5499 = vrot.slane %v5488, %v5498
        %v5500 = vlaneseq
        %v5501 = vshrl.u32 %v5500, 7
        %v5502 = vsub.s32 0, %v5501
        %v5503 = vrot.slane %v5489, %v5502
        %v5504 = vlaneseq
        %v5505 = vshrl.u32 %v5504, 7
        %v5506 = vsub.s32 0, %v5505
        %v5507 = vrot.slane %v5490, %v5506
        %v5508 = vlaneseq
        %v5509 = vshrl.u32 %v5508, 7
        %v5510 = vsub.s32 0, %v5509
        %v5511 = vrot.slane %v5491, %v5510
        %5516 = vmatprep.subr.mxu0 0.0
        %5517 = vmatpush1.msra.mxu0 %v5471
        %5518 = vmatprep.subr.mxu0 0.0
        %5519 = vmatpush1.msra.mxu0 %v5472
        %5520 = vmatprep.subr.mxu0 0.0
        %5521 = vmatpush1.msra.mxu0 %v5473
        %5522 = vmatprep.subr.mxu0 0.0
        %5523 = vmatpush1.msra.mxu0 %v5474
        %5524 = vmatprep.subr.mxu0 0.0
        %5525 = vmatpush1.msra.mxu0 0.0
        %5526 = vmatprep.subr.mxu0 0.0
        %5527 = vmatpush1.msra.mxu0 0.0
        %5528 = vmatprep.subr.mxu0 0.0
        %5529 = vmatpush1.msra.mxu0 0.0
        %5530 = vmatprep.subr.mxu0 0.0
        %5531 = vmatpush1.msra.mxu0 0.0
        %5532 = vmatprep.subr.mxu0 0.0
        %5533 = vmatpush1.msra.mxu0 0.0
        %5534 = vmatprep.subr.mxu0 0.0
        %5535 = vmatpush1.msra.mxu0 0.0
        %5536 = vmatprep.subr.mxu0 0.0
        %5537 = vmatpush1.msra.mxu0 0.0
        %5538 = vmatprep.subr.mxu0 0.0
        %5539 = vmatpush1.msra.mxu0 0.0
        %5540 = vmatprep.subr.mxu0 0.0
        %5541 = vmatpush1.msra.mxu0 0.0
        %5542 = vmatprep.subr.mxu0 0.0
        %5543 = vmatpush1.msra.mxu0 0.0
        %5544 = vmatprep.subr.mxu0 0.0
        %5545 = vmatpush1.msra.mxu0 0.0
        %5546 = vmatprep.subr.mxu0 0.0
        %5547 = vmatpush1.msra.mxu0 0.0
        %5548 = vmatprep.subr.mxu0 0.0
        %5549 = vmatpush1.msra.mxu0 0.0
        %5550 = vmatprep.subr.mxu0 0.0
        %5551 = vmatpush1.msra.mxu0 0.0
        %5552 = vmatprep.subr.mxu0 0.0
        %5553 = vmatpush1.msra.mxu0 0.0
        %5554 = vmatprep.subr.mxu0 0.0
        %5555 = vmatpush1.msra.mxu0 0.0
        %5556 = vmatprep.subr.mxu0 0.0
        %5557 = vmatpush1.msra.mxu0 0.0
        %5558 = vmatprep.subr.mxu0 0.0
        %5559 = vmatpush1.msra.mxu0 0.0
        %5560 = vmatprep.subr.mxu0 0.0
        %5561 = vmatpush1.msra.mxu0 0.0
        %5562 = vmatprep.subr.mxu0 0.0
        %5563 = vmatpush1.msra.mxu0 0.0
        %5564 = vmatprep.subr.mxu0 0.0
        %5565 = vmatpush1.msra.mxu0 0.0
        %5566 = vmatprep.subr.mxu0 0.0
        %5567 = vmatpush1.msra.mxu0 0.0
        %5568 = vmatprep.subr.mxu0 0.0
        %5569 = vmatpush1.msra.mxu0 0.0
        %5570 = vmatprep.subr.mxu0 0.0
        %5571 = vmatpush1.msra.mxu0 0.0
        %5572 = vmatprep.subr.mxu0 0.0
        %5573 = vmatpush1.msra.mxu0 0.0
        %5574 = vmatprep.subr.mxu0 0.0
        %5575 = vmatpush1.msra.mxu0 0.0
        %5576 = vmatprep.subr.mxu0 0.0
        %5577 = vmatpush1.msra.mxu0 0.0
        %5578 = vmatprep.subr.mxu0 0.0
        %5579 = vmatpush1.msra.mxu0 0.0
        %5580 = vmatprep.mubr.f32.mxu0 0.0
        %5581 = vmatmul.mubr.f32.gmra.mrb[0].mxu0 %v4862
        %v5582 = vpop.f32.mrb[0].mxu0
        %v5583 = vadd.f32 %v5499, %v5582
        %v5584 = vpop.f32.mrb[0].mxu0
        %5585 = vdwg.mxu0
        %5586 = vmatprep.subr.mxu0 0.0
        %5587 = vmatpush1.msra.mxu0 %v5475
        %5588 = vmatprep.subr.mxu0 0.0
        %5589 = vmatpush1.msra.mxu0 %v5476
        %5590 = vmatprep.subr.mxu0 0.0
        %5591 = vmatpush1.msra.mxu0 %v5477
        %5592 = vmatprep.subr.mxu0 0.0
        %5593 = vmatpush1.msra.mxu0 %v5478
        %5594 = vmatprep.subr.mxu0 0.0
        %5595 = vmatpush1.msra.mxu0 0.0
        %5596 = vmatprep.subr.mxu0 0.0
        %5597 = vmatpush1.msra.mxu0 0.0
        %5598 = vmatprep.subr.mxu0 0.0
        %5599 = vmatpush1.msra.mxu0 0.0
        %5600 = vmatprep.subr.mxu0 0.0
        %5601 = vmatpush1.msra.mxu0 0.0
        %5602 = vmatprep.subr.mxu0 0.0
        %5603 = vmatpush1.msra.mxu0 0.0
        %5604 = vmatprep.subr.mxu0 0.0
        %5605 = vmatpush1.msra.mxu0 0.0
        %5606 = vmatprep.subr.mxu0 0.0
        %5607 = vmatpush1.msra.mxu0 0.0
        %5608 = vmatprep.subr.mxu0 0.0
        %5609 = vmatpush1.msra.mxu0 0.0
        %5610 = vmatprep.subr.mxu0 0.0
        %5611 = vmatpush1.msra.mxu0 0.0
        %5612 = vmatprep.subr.mxu0 0.0
        %5613 = vmatpush1.msra.mxu0 0.0
        %5614 = vmatprep.subr.mxu0 0.0
        %5615 = vmatpush1.msra.mxu0 0.0
        %5616 = vmatprep.subr.mxu0 0.0
        %5617 = vmatpush1.msra.mxu0 0.0
        %5618 = vmatprep.subr.mxu0 0.0
        %5619 = vmatpush1.msra.mxu0 0.0
        %5620 = vmatprep.subr.mxu0 0.0
        %5621 = vmatpush1.msra.mxu0 0.0
        %5622 = vmatprep.subr.mxu0 0.0
        %5623 = vmatpush1.msra.mxu0 0.0
        %5624 = vmatprep.subr.mxu0 0.0
        %5625 = vmatpush1.msra.mxu0 0.0
        %5626 = vmatprep.subr.mxu0 0.0
        %5627 = vmatpush1.msra.mxu0 0.0
        %5628 = vmatprep.subr.mxu0 0.0
        %5629 = vmatpush1.msra.mxu0 0.0
        %5630 = vmatprep.subr.mxu0 0.0
        %5631 = vmatpush1.msra.mxu0 0.0
        %5632 = vmatprep.subr.mxu0 0.0
        %5633 = vmatpush1.msra.mxu0 0.0
        %5634 = vmatprep.subr.mxu0 0.0
        %5635 = vmatpush1.msra.mxu0 0.0
        %5636 = vmatprep.subr.mxu0 0.0
        %5637 = vmatpush1.msra.mxu0 0.0
        %5638 = vmatprep.subr.mxu0 0.0
        %5639 = vmatpush1.msra.mxu0 0.0
        %5640 = vmatprep.subr.mxu0 0.0
        %5641 = vmatpush1.msra.mxu0 0.0
        %5642 = vmatprep.subr.mxu0 0.0
        %5643 = vmatpush1.msra.mxu0 0.0
        %5644 = vmatprep.subr.mxu0 0.0
        %5645 = vmatpush1.msra.mxu0 0.0
        %5646 = vmatprep.subr.mxu0 0.0
        %5647 = vmatpush1.msra.mxu0 0.0
        %5648 = vmatprep.subr.mxu0 0.0
        %5649 = vmatpush1.msra.mxu0 0.0
        %5650 = vmatprep.mubr.f32.mxu0 0.0
        %5651 = vmatmul.mubr.f32.gmra.mrb[0].mxu0 %v4862
        %v5652 = vpop.f32.mrb[0].mxu0
        %v5653 = vadd.f32 %v5503, %v5652
        %v5654 = vpop.f32.mrb[0].mxu0
        %5655 = vdwg.mxu0
        %5656 = vmatprep.subr.mxu0 0.0
        %5657 = vmatpush1.msra.mxu0 %v5479
        %5658 = vmatprep.subr.mxu0 0.0
        %5659 = vmatpush1.msra.mxu0 %v5480
        %5660 = vmatprep.subr.mxu0 0.0
        %5661 = vmatpush1.msra.mxu0 %v5481
        %5662 = vmatprep.subr.mxu0 0.0
        %5663 = vmatpush1.msra.mxu0 %v5482
        %5664 = vmatprep.subr.mxu0 0.0
        %5665 = vmatpush1.msra.mxu0 0.0
        %5666 = vmatprep.subr.mxu0 0.0
        %5667 = vmatpush1.msra.mxu0 0.0
        %5668 = vmatprep.subr.mxu0 0.0
        %5669 = vmatpush1.msra.mxu0 0.0
        %5670 = vmatprep.subr.mxu0 0.0
        %5671 = vmatpush1.msra.mxu0 0.0
        %5672 = vmatprep.subr.mxu0 0.0
        %5673 = vmatpush1.msra.mxu0 0.0
        %5674 = vmatprep.subr.mxu0 0.0
        %5675 = vmatpush1.msra.mxu0 0.0
        %5676 = vmatprep.subr.mxu0 0.0
        %5677 = vmatpush1.msra.mxu0 0.0
        %5678 = vmatprep.subr.mxu0 0.0
        %5679 = vmatpush1.msra.mxu0 0.0
        %5680 = vmatprep.subr.mxu0 0.0
        %5681 = vmatpush1.msra.mxu0 0.0
        %5682 = vmatprep.subr.mxu0 0.0
        %5683 = vmatpush1.msra.mxu0 0.0
        %5684 = vmatprep.subr.mxu0 0.0
        %5685 = vmatpush1.msra.mxu0 0.0
        %5686 = vmatprep.subr.mxu0 0.0
        %5687 = vmatpush1.msra.mxu0 0.0
        %5688 = vmatprep.subr.mxu0 0.0
        %5689 = vmatpush1.msra.mxu0 0.0
        %5690 = vmatprep.subr.mxu0 0.0
        %5691 = vmatpush1.msra.mxu0 0.0
        %5692 = vmatprep.subr.mxu0 0.0
        %5693 = vmatpush1.msra.mxu0 0.0
        %5694 = vmatprep.subr.mxu0 0.0
        %5695 = vmatpush1.msra.mxu0 0.0
        %5696 = vmatprep.subr.mxu0 0.0
        %5697 = vmatpush1.msra.mxu0 0.0
        %5698 = vmatprep.subr.mxu0 0.0
        %5699 = vmatpush1.msra.mxu0 0.0
        %5700 = vmatprep.subr.mxu0 0.0
        %5701 = vmatpush1.msra.mxu0 0.0
        %5702 = vmatprep.subr.mxu0 0.0
        %5703 = vmatpush1.msra.mxu0 0.0
        %5704 = vmatprep.subr.mxu0 0.0
        %5705 = vmatpush1.msra.mxu0 0.0
        %5706 = vmatprep.subr.mxu0 0.0
        %5707 = vmatpush1.msra.mxu0 0.0
        %5708 = vmatprep.subr.mxu0 0.0
        %5709 = vmatpush1.msra.mxu0 0.0
        %5710 = vmatprep.subr.mxu0 0.0
        %5711 = vmatpush1.msra.mxu0 0.0
        %5712 = vmatprep.subr.mxu0 0.0
        %5713 = vmatpush1.msra.mxu0 0.0
        %5714 = vmatprep.subr.mxu0 0.0
        %5715 = vmatpush1.msra.mxu0 0.0
        %5716 = vmatprep.subr.mxu0 0.0
        %5717 = vmatpush1.msra.mxu0 0.0
        %5718 = vmatprep.subr.mxu0 0.0
        %5719 = vmatpush1.msra.mxu0 0.0
        %5720 = vmatprep.mubr.f32.mxu0 0.0
        %5721 = vmatmul.mubr.f32.gmra.mrb[0].mxu0 %v4862
        %v5722 = vpop.f32.mrb[0].mxu0
        %v5723 = vadd.f32 %v5507, %v5722
        %v5724 = vpop.f32.mrb[0].mxu0
        %5725 = vdwg.mxu0
        %5726 = vmatprep.subr.mxu0 0.0
        %5727 = vmatpush1.msra.mxu0 %v5483
        %5728 = vmatprep.subr.mxu0 0.0
        %5729 = vmatpush1.msra.mxu0 %v5484
        %5730 = vmatprep.subr.mxu0 0.0
        %5731 = vmatpush1.msra.mxu0 %v5485
        %5732 = vmatprep.subr.mxu0 0.0
        %5733 = vmatpush1.msra.mxu0 %v5486
        %5734 = vmatprep.subr.mxu0 0.0
        %5735 = vmatpush1.msra.mxu0 0.0
        %5736 = vmatprep.subr.mxu0 0.0
        %5737 = vmatpush1.msra.mxu0 0.0
        %5738 = vmatprep.subr.mxu0 0.0
        %5739 = vmatpush1.msra.mxu0 0.0
        %5740 = vmatprep.subr.mxu0 0.0
        %5741 = vmatpush1.msra.mxu0 0.0
        %5742 = vmatprep.subr.mxu0 0.0
        %5743 = vmatpush1.msra.mxu0 0.0
        %5744 = vmatprep.subr.mxu0 0.0
        %5745 = vmatpush1.msra.mxu0 0.0
        %5746 = vmatprep.subr.mxu0 0.0
        %5747 = vmatpush1.msra.mxu0 0.0
        %5748 = vmatprep.subr.mxu0 0.0
        %5749 = vmatpush1.msra.mxu0 0.0
        %5750 = vmatprep.subr.mxu0 0.0
        %5751 = vmatpush1.msra.mxu0 0.0
        %5752 = vmatprep.subr.mxu0 0.0
        %5753 = vmatpush1.msra.mxu0 0.0
        %5754 = vmatprep.subr.mxu0 0.0
        %5755 = vmatpush1.msra.mxu0 0.0
        %5756 = vmatprep.subr.mxu0 0.0
        %5757 = vmatpush1.msra.mxu0 0.0
        %5758 = vmatprep.subr.mxu0 0.0
        %5759 = vmatpush1.msra.mxu0 0.0
        %5760 = vmatprep.subr.mxu0 0.0
        %5761 = vmatpush1.msra.mxu0 0.0
        %5762 = vmatprep.subr.mxu0 0.0
        %5763 = vmatpush1.msra.mxu0 0.0
        %5764 = vmatprep.subr.mxu0 0.0
        %5765 = vmatpush1.msra.mxu0 0.0
        %5766 = vmatprep.subr.mxu0 0.0
        %5767 = vmatpush1.msra.mxu0 0.0
        %5768 = vmatprep.subr.mxu0 0.0
        %5769 = vmatpush1.msra.mxu0 0.0
        %5770 = vmatprep.subr.mxu0 0.0
        %5771 = vmatpush1.msra.mxu0 0.0
        %5772 = vmatprep.subr.mxu0 0.0
        %5773 = vmatpush1.msra.mxu0 0.0
        %5774 = vmatprep.subr.mxu0 0.0
        %5775 = vmatpush1.msra.mxu0 0.0
        %5776 = vmatprep.subr.mxu0 0.0
        %5777 = vmatpush1.msra.mxu0 0.0
        %5778 = vmatprep.subr.mxu0 0.0
        %5779 = vmatpush1.msra.mxu0 0.0
        %5780 = vmatprep.subr.mxu0 0.0
        %5781 = vmatpush1.msra.mxu0 0.0
        %5782 = vmatprep.subr.mxu0 0.0
        %5783 = vmatpush1.msra.mxu0 0.0
        %5784 = vmatprep.subr.mxu0 0.0
        %5785 = vmatpush1.msra.mxu0 0.0
        %5786 = vmatprep.subr.mxu0 0.0
        %5787 = vmatpush1.msra.mxu0 0.0
        %5788 = vmatprep.subr.mxu0 0.0
        %5789 = vmatpush1.msra.mxu0 0.0
        %5790 = vmatprep.mubr.f32.mxu0 0.0
        %5791 = vmatmul.mubr.f32.gmra.mrb[0].mxu0 %v4862
        %v5792 = vpop.f32.mrb[0].mxu0
        %v5793 = vadd.f32 %v5511, %v5792
        %v5794 = vpop.f32.mrb[0].mxu0
        %5795 = vdwg.mxu0
        %v5797 = vsel %vm1442, %v4931, 0
        %v5800 = vsel %vm1442, %v5257, 0
        %5802 = vmatprep.subr.mxu0 0.0
        %5803 = vmatpush1.xpose.msra.mxu0 %v5800
        %5804 = vmatprep.subr.mxu0 0.0
        %5805 = vmatpush1.xpose.msra.mxu0 0.0
        %5806 = vmatprep.subr.mxu0 0.0
        %5807 = vmatpush1.xpose.msra.mxu0 0.0
        %5808 = vmatprep.subr.mxu0 0.0
        %5809 = vmatpush1.xpose.msra.mxu0 0.0
        %5810 = vmatprep.subr.mxu0 0.0
        %5811 = vmatpush1.xpose.msra.mxu0 0.0
        %5812 = vmatprep.subr.mxu0 0.0
        %5813 = vmatpush1.xpose.msra.mxu0 0.0
        %5814 = vmatprep.subr.mxu0 0.0
        %5815 = vmatpush1.xpose.msra.mxu0 0.0
        %5816 = vmatprep.subr.mxu0 0.0
        %5817 = vmatpush1.xpose.msra.mxu0 0.0
        %5818 = vmatprep.subr.mxu0 0.0
        %5819 = vmatpush1.xpose.msra.mxu0 0.0
        %5820 = vmatprep.subr.mxu0 0.0
        %5821 = vmatpush1.xpose.msra.mxu0 0.0
        %5822 = vmatprep.subr.mxu0 0.0
        %5823 = vmatpush1.xpose.msra.mxu0 0.0
        %5824 = vmatprep.subr.mxu0 0.0
        %5825 = vmatpush1.xpose.msra.mxu0 0.0
        %5826 = vmatprep.subr.mxu0 0.0
        %5827 = vmatpush1.xpose.msra.mxu0 0.0
        %5828 = vmatprep.subr.mxu0 0.0
        %5829 = vmatpush1.xpose.msra.mxu0 0.0
        %5830 = vmatprep.subr.mxu0 0.0
        %5831 = vmatpush1.xpose.msra.mxu0 0.0
        %5832 = vmatprep.subr.mxu0 0.0
        %5833 = vmatpush1.xpose.msra.mxu0 0.0
        %5834 = vmatprep.subr.mxu0 0.0
        %5835 = vmatpush1.xpose.msra.mxu0 0.0
        %5836 = vmatprep.subr.mxu0 0.0
        %5837 = vmatpush1.xpose.msra.mxu0 0.0
        %5838 = vmatprep.subr.mxu0 0.0
        %5839 = vmatpush1.xpose.msra.mxu0 0.0
        %5840 = vmatprep.subr.mxu0 0.0
        %5841 = vmatpush1.xpose.msra.mxu0 0.0
        %5842 = vmatprep.subr.mxu0 0.0
        %5843 = vmatpush1.xpose.msra.mxu0 0.0
        %5844 = vmatprep.subr.mxu0 0.0
        %5845 = vmatpush1.xpose.msra.mxu0 0.0
        %5846 = vmatprep.subr.mxu0 0.0
        %5847 = vmatpush1.xpose.msra.mxu0 0.0
        %5848 = vmatprep.subr.mxu0 0.0
        %5849 = vmatpush1.xpose.msra.mxu0 0.0
        %5850 = vmatprep.subr.mxu0 0.0
        %5851 = vmatpush1.xpose.msra.mxu0 0.0
        %5852 = vmatprep.subr.mxu0 0.0
        %5853 = vmatpush1.xpose.msra.mxu0 0.0
        %5854 = vmatprep.subr.mxu0 0.0
        %5855 = vmatpush1.xpose.msra.mxu0 0.0
        %5856 = vmatprep.subr.mxu0 0.0
        %5857 = vmatpush1.xpose.msra.mxu0 0.0
        %5858 = vmatprep.subr.mxu0 0.0
        %5859 = vmatpush1.xpose.msra.mxu0 0.0
        %5860 = vmatprep.subr.mxu0 0.0
        %5861 = vmatpush1.xpose.msra.mxu0 0.0
        %5862 = vmatprep.subr.mxu0 0.0
        %5863 = vmatpush1.xpose.msra.mxu0 0.0
        %5864 = vmatprep.subr.mxu0 0.0
        %5865 = vmatpush1.xpose.msra.mxu0 0.0
        %5866 = vmatprep.mubr.f32.mxu0 0.0
        %5867 = vmatmul.mubr.f32.gmra.mrb[0].mxu0 %v5797
        %v5868 = vpop.f32.mrb[0].mxu0
        %v5869 = vadd.f32 0.0, %v5868
        %v5870 = vpop.f32.mrb[0].mxu0
        %5871 = vdwg.mxu0
        %v5873 = vsel %vm1442, %v5001, 0
        %v5876 = vsel %vm1442, %v5327, 0
        %5878 = vmatprep.subr.mxu0 0.0
        %5879 = vmatpush1.xpose.msra.mxu0 %v5876
        %5880 = vmatprep.subr.mxu0 0.0
        %5881 = vmatpush1.xpose.msra.mxu0 0.0
        %5882 = vmatprep.subr.mxu0 0.0
        %5883 = vmatpush1.xpose.msra.mxu0 0.0
        %5884 = vmatprep.subr.mxu0 0.0
        %5885 = vmatpush1.xpose.msra.mxu0 0.0
        %5886 = vmatprep.subr.mxu0 0.0
        %5887 = vmatpush1.xpose.msra.mxu0 0.0
        %5888 = vmatprep.subr.mxu0 0.0
        %5889 = vmatpush1.xpose.msra.mxu0 0.0
        %5890 = vmatprep.subr.mxu0 0.0
        %5891 = vmatpush1.xpose.msra.mxu0 0.0
        %5892 = vmatprep.subr.mxu0 0.0
        %5893 = vmatpush1.xpose.msra.mxu0 0.0
        %5894 = vmatprep.subr.mxu0 0.0
        %5895 = vmatpush1.xpose.msra.mxu0 0.0
        %5896 = vmatprep.subr.mxu0 0.0
        %5897 = vmatpush1.xpose.msra.mxu0 0.0
        %5898 = vmatprep.subr.mxu0 0.0
        %5899 = vmatpush1.xpose.msra.mxu0 0.0
        %5900 = vmatprep.subr.mxu0 0.0
        %5901 = vmatpush1.xpose.msra.mxu0 0.0
        %5902 = vmatprep.subr.mxu0 0.0
        %5903 = vmatpush1.xpose.msra.mxu0 0.0
        %5904 = vmatprep.subr.mxu0 0.0
        %5905 = vmatpush1.xpose.msra.mxu0 0.0
        %5906 = vmatprep.subr.mxu0 0.0
        %5907 = vmatpush1.xpose.msra.mxu0 0.0
        %5908 = vmatprep.subr.mxu0 0.0
        %5909 = vmatpush1.xpose.msra.mxu0 0.0
        %5910 = vmatprep.subr.mxu0 0.0
        %5911 = vmatpush1.xpose.msra.mxu0 0.0
        %5912 = vmatprep.subr.mxu0 0.0
        %5913 = vmatpush1.xpose.msra.mxu0 0.0
        %5914 = vmatprep.subr.mxu0 0.0
        %5915 = vmatpush1.xpose.msra.mxu0 0.0
        %5916 = vmatprep.subr.mxu0 0.0
        %5917 = vmatpush1.xpose.msra.mxu0 0.0
        %5918 = vmatprep.subr.mxu0 0.0
        %5919 = vmatpush1.xpose.msra.mxu0 0.0
        %5920 = vmatprep.subr.mxu0 0.0
        %5921 = vmatpush1.xpose.msra.mxu0 0.0
        %5922 = vmatprep.subr.mxu0 0.0
        %5923 = vmatpush1.xpose.msra.mxu0 0.0
        %5924 = vmatprep.subr.mxu0 0.0
        %5925 = vmatpush1.xpose.msra.mxu0 0.0
        %5926 = vmatprep.subr.mxu0 0.0
        %5927 = vmatpush1.xpose.msra.mxu0 0.0
        %5928 = vmatprep.subr.mxu0 0.0
        %5929 = vmatpush1.xpose.msra.mxu0 0.0
        %5930 = vmatprep.subr.mxu0 0.0
        %5931 = vmatpush1.xpose.msra.mxu0 0.0
        %5932 = vmatprep.subr.mxu0 0.0
        %5933 = vmatpush1.xpose.msra.mxu0 0.0
        %5934 = vmatprep.subr.mxu0 0.0
        %5935 = vmatpush1.xpose.msra.mxu0 0.0
        %5936 = vmatprep.subr.mxu0 0.0
        %5937 = vmatpush1.xpose.msra.mxu0 0.0
        %5938 = vmatprep.subr.mxu0 0.0
        %5939 = vmatpush1.xpose.msra.mxu0 0.0
        %5940 = vmatprep.subr.mxu0 0.0
        %5941 = vmatpush1.xpose.msra.mxu0 0.0
        %5942 = vmatprep.mubr.f32.mxu0 0.0
        %5943 = vmatmul.mubr.f32.gmra.mrb[0].mxu0 %v5873
        %v5944 = vpop.f32.mrb[0].mxu0
        %v5945 = vadd.f32 0.0, %v5944
        %v5946 = vpop.f32.mrb[0].mxu0
        %5947 = vdwg.mxu0
        %v5949 = vsel %vm1442, %v5071, 0
        %v5952 = vsel %vm1442, %v5397, 0
        %5954 = vmatprep.subr.mxu0 0.0
        %5955 = vmatpush1.xpose.msra.mxu0 %v5952
        %5956 = vmatprep.subr.mxu0 0.0
        %5957 = vmatpush1.xpose.msra.mxu0 0.0
        %5958 = vmatprep.subr.mxu0 0.0
        %5959 = vmatpush1.xpose.msra.mxu0 0.0
        %5960 = vmatprep.subr.mxu0 0.0
        %5961 = vmatpush1.xpose.msra.mxu0 0.0
        %5962 = vmatprep.subr.mxu0 0.0
        %5963 = vmatpush1.xpose.msra.mxu0 0.0
        %5964 = vmatprep.subr.mxu0 0.0
        %5965 = vmatpush1.xpose.msra.mxu0 0.0
        %5966 = vmatprep.subr.mxu0 0.0
        %5967 = vmatpush1.xpose.msra.mxu0 0.0
        %5968 = vmatprep.subr.mxu0 0.0
        %5969 = vmatpush1.xpose.msra.mxu0 0.0
        %5970 = vmatprep.subr.mxu0 0.0
        %5971 = vmatpush1.xpose.msra.mxu0 0.0
        %5972 = vmatprep.subr.mxu0 0.0
        %5973 = vmatpush1.xpose.msra.mxu0 0.0
        %5974 = vmatprep.subr.mxu0 0.0
        %5975 = vmatpush1.xpose.msra.mxu0 0.0
        %5976 = vmatprep.subr.mxu0 0.0
        %5977 = vmatpush1.xpose.msra.mxu0 0.0
        %5978 = vmatprep.subr.mxu0 0.0
        %5979 = vmatpush1.xpose.msra.mxu0 0.0
        %5980 = vmatprep.subr.mxu0 0.0
        %5981 = vmatpush1.xpose.msra.mxu0 0.0
        %5982 = vmatprep.subr.mxu0 0.0
        %5983 = vmatpush1.xpose.msra.mxu0 0.0
        %5984 = vmatprep.subr.mxu0 0.0
        %5985 = vmatpush1.xpose.msra.mxu0 0.0
        %5986 = vmatprep.subr.mxu0 0.0
        %5987 = vmatpush1.xpose.msra.mxu0 0.0
        %5988 = vmatprep.subr.mxu0 0.0
        %5989 = vmatpush1.xpose.msra.mxu0 0.0
        %5990 = vmatprep.subr.mxu0 0.0
        %5991 = vmatpush1.xpose.msra.mxu0 0.0
        %5992 = vmatprep.subr.mxu0 0.0
        %5993 = vmatpush1.xpose.msra.mxu0 0.0
        %5994 = vmatprep.subr.mxu0 0.0
        %5995 = vmatpush1.xpose.msra.mxu0 0.0
        %5996 = vmatprep.subr.mxu0 0.0
        %5997 = vmatpush1.xpose.msra.mxu0 0.0
        %5998 = vmatprep.subr.mxu0 0.0
        %5999 = vmatpush1.xpose.msra.mxu0 0.0
        %6000 = vmatprep.subr.mxu0 0.0
        %6001 = vmatpush1.xpose.msra.mxu0 0.0
        %6002 = vmatprep.subr.mxu0 0.0
        %6003 = vmatpush1.xpose.msra.mxu0 0.0
        %6004 = vmatprep.subr.mxu0 0.0
        %6005 = vmatpush1.xpose.msra.mxu0 0.0
        %6006 = vmatprep.subr.mxu0 0.0
        %6007 = vmatpush1.xpose.msra.mxu0 0.0
        %6008 = vmatprep.subr.mxu0 0.0
        %6009 = vmatpush1.xpose.msra.mxu0 0.0
        %6010 = vmatprep.subr.mxu0 0.0
        %6011 = vmatpush1.xpose.msra.mxu0 0.0
        %6012 = vmatprep.subr.mxu0 0.0
        %6013 = vmatpush1.xpose.msra.mxu0 0.0
        %6014 = vmatprep.subr.mxu0 0.0
        %6015 = vmatpush1.xpose.msra.mxu0 0.0
        %6016 = vmatprep.subr.mxu0 0.0
        %6017 = vmatpush1.xpose.msra.mxu0 0.0
        %6018 = vmatprep.mubr.f32.mxu0 0.0
        %6019 = vmatmul.mubr.f32.gmra.mrb[0].mxu0 %v5949
        %v6020 = vpop.f32.mrb[0].mxu0
        %v6021 = vadd.f32 0.0, %v6020
        %v6022 = vpop.f32.mrb[0].mxu0
        %6023 = vdwg.mxu0
        %v6025 = vsel %vm1442, %v5141, 0
        %v6028 = vsel %vm1442, %v5467, 0
        %6030 = vmatprep.subr.mxu0 0.0
        %6031 = vmatpush1.xpose.msra.mxu0 %v6028
        %6032 = vmatprep.subr.mxu0 0.0
        %6033 = vmatpush1.xpose.msra.mxu0 0.0
        %6034 = vmatprep.subr.mxu0 0.0
        %6035 = vmatpush1.xpose.msra.mxu0 0.0
        %6036 = vmatprep.subr.mxu0 0.0
        %6037 = vmatpush1.xpose.msra.mxu0 0.0
        %6038 = vmatprep.subr.mxu0 0.0
        %6039 = vmatpush1.xpose.msra.mxu0 0.0
        %6040 = vmatprep.subr.mxu0 0.0
        %6041 = vmatpush1.xpose.msra.mxu0 0.0
        %6042 = vmatprep.subr.mxu0 0.0
        %6043 = vmatpush1.xpose.msra.mxu0 0.0
        %6044 = vmatprep.subr.mxu0 0.0
        %6045 = vmatpush1.xpose.msra.mxu0 0.0
        %6046 = vmatprep.subr.mxu0 0.0
        %6047 = vmatpush1.xpose.msra.mxu0 0.0
        %6048 = vmatprep.subr.mxu0 0.0
        %6049 = vmatpush1.xpose.msra.mxu0 0.0
        %6050 = vmatprep.subr.mxu0 0.0
        %6051 = vmatpush1.xpose.msra.mxu0 0.0
        %6052 = vmatprep.subr.mxu0 0.0
        %6053 = vmatpush1.xpose.msra.mxu0 0.0
        %6054 = vmatprep.subr.mxu0 0.0
        %6055 = vmatpush1.xpose.msra.mxu0 0.0
        %6056 = vmatprep.subr.mxu0 0.0
        %6057 = vmatpush1.xpose.msra.mxu0 0.0
        %6058 = vmatprep.subr.mxu0 0.0
        %6059 = vmatpush1.xpose.msra.mxu0 0.0
        %6060 = vmatprep.subr.mxu0 0.0
        %6061 = vmatpush1.xpose.msra.mxu0 0.0
        %6062 = vmatprep.subr.mxu0 0.0
        %6063 = vmatpush1.xpose.msra.mxu0 0.0
        %6064 = vmatprep.subr.mxu0 0.0
        %6065 = vmatpush1.xpose.msra.mxu0 0.0
        %6066 = vmatprep.subr.mxu0 0.0
        %6067 = vmatpush1.xpose.msra.mxu0 0.0
        %6068 = vmatprep.subr.mxu0 0.0
        %6069 = vmatpush1.xpose.msra.mxu0 0.0
        %6070 = vmatprep.subr.mxu0 0.0
        %6071 = vmatpush1.xpose.msra.mxu0 0.0
        %6072 = vmatprep.subr.mxu0 0.0
        %6073 = vmatpush1.xpose.msra.mxu0 0.0
        %6074 = vmatprep.subr.mxu0 0.0
        %6075 = vmatpush1.xpose.msra.mxu0 0.0
        %6076 = vmatprep.subr.mxu0 0.0
        %6077 = vmatpush1.xpose.msra.mxu0 0.0
        %6078 = vmatprep.subr.mxu0 0.0
        %6079 = vmatpush1.xpose.msra.mxu0 0.0
        %6080 = vmatprep.subr.mxu0 0.0
        %6081 = vmatpush1.xpose.msra.mxu0 0.0
        %6082 = vmatprep.subr.mxu0 0.0
        %6083 = vmatpush1.xpose.msra.mxu0 0.0
        %6084 = vmatprep.subr.mxu0 0.0
        %6085 = vmatpush1.xpose.msra.mxu0 0.0
        %6086 = vmatprep.subr.mxu0 0.0
        %6087 = vmatpush1.xpose.msra.mxu0 0.0
        %6088 = vmatprep.subr.mxu0 0.0
        %6089 = vmatpush1.xpose.msra.mxu0 0.0
        %6090 = vmatprep.subr.mxu0 0.0
        %6091 = vmatpush1.xpose.msra.mxu0 0.0
        %6092 = vmatprep.subr.mxu0 0.0
        %6093 = vmatpush1.xpose.msra.mxu0 0.0
        %6094 = vmatprep.mubr.f32.mxu0 0.0
        %6095 = vmatmul.mubr.f32.gmra.mrb[0].mxu0 %v6025
        %v6096 = vpop.f32.mrb[0].mxu0
        %v6097 = vadd.f32 0.0, %v6096
        %v6098 = vpop.f32.mrb[0].mxu0
        %6099 = vdwg.mxu0
        %v6100 = vmul.f32 %v5869, 0.35355338
        %v6101 = vmul.f32 %v5945, 0.35355338
        %v6102 = vmul.f32 %v6021, 0.35355338
        %v6103 = vmul.f32 %v6097, 0.35355338
        %v6104 = vadd.f32 %v6100, %v1755
        %v6105 = vadd.f32 %v6101, %v1755
        %v6106 = vadd.f32 %v6102, %v1755
        %v6107 = vadd.f32 %v6103, %v1755
        %v6108 = vsel %vm1442, %v6104, -inf
        %6109 = vmax.xlane.f32.xlu0 %v6108
        %v6110 = vpop.xlane.xlu0 %6109
        %v6111 = vsel %vm1442, %v6105, -inf
        %6112 = vmax.xlane.f32.xlu0 %v6111
        %v6113 = vpop.xlane.xlu0 %6112
        %v6114 = vsel %vm1442, %v6106, -inf
        %6115 = vmax.xlane.f32.xlu0 %v6114
        %v6116 = vpop.xlane.xlu0 %6115
        %v6117 = vsel %vm1442, %v6107, -inf
        %6118 = vmax.xlane.f32.xlu0 %v6117
        %v6119 = vpop.xlane.xlu0 %6118
        %v6120 = vsub.f32 %v6104, %v6110
        %v6121 = vsub.f32 %v6105, %v6113
        %v6122 = vsub.f32 %v6106, %v6116
        %v6123 = vsub.f32 %v6107, %v6119
        %v6124 = vmul.f32 %v6120, 1.442695
        %v6125 = vpow.pop %v6124
        %v6126 = vmul.f32 %v6121, 1.442695
        %v6127 = vpow.pop %v6126
        %v6128 = vmul.f32 %v6122, 1.442695
        %v6129 = vpow.pop %v6128
        %v6130 = vmul.f32 %v6123, 1.442695
        %v6131 = vpow.pop %v6130
        %v6132 = vsel %vm1442, %v6125, 0.0
        %6133 = vadd.xlane.f32.xlu0 %v6132
        %v6134 = vpop.xlane.xlu0 %6133
        %v6135 = vsel %vm1442, %v6127, 0.0
        %6136 = vadd.xlane.f32.xlu0 %v6135
        %v6137 = vpop.xlane.xlu0 %6136
        %v6138 = vsel %vm1442, %v6129, 0.0
        %6139 = vadd.xlane.f32.xlu0 %v6138
        %v6140 = vpop.xlane.xlu0 %6139
        %v6141 = vsel %vm1442, %v6131, 0.0
        %6142 = vadd.xlane.f32.xlu0 %v6141
        %v6143 = vpop.xlane.xlu0 %6142
        %v6144 = vrcp.pop %v6134
        %v6145 = vrcp.pop %v6137
        %v6146 = vrcp.pop %v6140
        %v6147 = vrcp.pop %v6143
        %v6148 = vmul.f32 %v6125, %v6144
        %v6149 = vmul.f32 %v6127, %v6145
        %v6150 = vmul.f32 %v6129, %v6146
        %v6151 = vmul.f32 %v6131, %v6147
        %v6153 = vsel %vm1442, %v6148, 0
        %6155 = vmatprep.subr.mxu0 0.0
        %6156 = vmatpush1.msra.mxu0 %v5583
        %6157 = vmatprep.subr.mxu0 0.0
        %6158 = vmatpush1.msra.mxu0 0.0
        %6159 = vmatprep.subr.mxu0 0.0
        %6160 = vmatpush1.msra.mxu0 0.0
        %6161 = vmatprep.subr.mxu0 0.0
        %6162 = vmatpush1.msra.mxu0 0.0
        %6163 = vmatprep.subr.mxu0 0.0
        %6164 = vmatpush1.msra.mxu0 0.0
        %6165 = vmatprep.subr.mxu0 0.0
        %6166 = vmatpush1.msra.mxu0 0.0
        %6167 = vmatprep.subr.mxu0 0.0
        %6168 = vmatpush1.msra.mxu0 0.0
        %6169 = vmatprep.subr.mxu0 0.0
        %6170 = vmatpush1.msra.mxu0 0.0
        %6171 = vmatprep.subr.mxu0 0.0
        %6172 = vmatpush1.msra.mxu0 0.0
        %6173 = vmatprep.subr.mxu0 0.0
        %6174 = vmatpush1.msra.mxu0 0.0
        %6175 = vmatprep.subr.mxu0 0.0
        %6176 = vmatpush1.msra.mxu0 0.0
        %6177 = vmatprep.subr.mxu0 0.0
        %6178 = vmatpush1.msra.mxu0 0.0
        %6179 = vmatprep.subr.mxu0 0.0
        %6180 = vmatpush1.msra.mxu0 0.0
        %6181 = vmatprep.subr.mxu0 0.0
        %6182 = vmatpush1.msra.mxu0 0.0
        %6183 = vmatprep.subr.mxu0 0.0
        %6184 = vmatpush1.msra.mxu0 0.0
        %6185 = vmatprep.subr.mxu0 0.0
        %6186 = vmatpush1.msra.mxu0 0.0
        %6187 = vmatprep.subr.mxu0 0.0
        %6188 = vmatpush1.msra.mxu0 0.0
        %6189 = vmatprep.subr.mxu0 0.0
        %6190 = vmatpush1.msra.mxu0 0.0
        %6191 = vmatprep.subr.mxu0 0.0
        %6192 = vmatpush1.msra.mxu0 0.0
        %6193 = vmatprep.subr.mxu0 0.0
        %6194 = vmatpush1.msra.mxu0 0.0
        %6195 = vmatprep.subr.mxu0 0.0
        %6196 = vmatpush1.msra.mxu0 0.0
        %6197 = vmatprep.subr.mxu0 0.0
        %6198 = vmatpush1.msra.mxu0 0.0
        %6199 = vmatprep.subr.mxu0 0.0
        %6200 = vmatpush1.msra.mxu0 0.0
        %6201 = vmatprep.subr.mxu0 0.0
        %6202 = vmatpush1.msra.mxu0 0.0
        %6203 = vmatprep.subr.mxu0 0.0
        %6204 = vmatpush1.msra.mxu0 0.0
        %6205 = vmatprep.subr.mxu0 0.0
        %6206 = vmatpush1.msra.mxu0 0.0
        %6207 = vmatprep.subr.mxu0 0.0
        %6208 = vmatpush1.msra.mxu0 0.0
        %6209 = vmatprep.subr.mxu0 0.0
        %6210 = vmatpush1.msra.mxu0 0.0
        %6211 = vmatprep.subr.mxu0 0.0
        %6212 = vmatpush1.msra.mxu0 0.0
        %6213 = vmatprep.subr.mxu0 0.0
        %6214 = vmatpush1.msra.mxu0 0.0
        %6215 = vmatprep.subr.mxu0 0.0
        %6216 = vmatpush1.msra.mxu0 0.0
        %6217 = vmatprep.subr.mxu0 0.0
        %6218 = vmatpush1.msra.mxu0 0.0
        %6219 = vmatprep.mubr.f32.mxu0 0.0
        %6220 = vmatmul.mubr.f32.gmra.mrb[0].mxu0 %v6153
        %v6221 = vpop.f32.mrb[0].mxu0
        %v6222 = vadd.f32 0.0, %v6221
        %v6223 = vpop.f32.mrb[0].mxu0
        %6224 = vdwg.mxu0
        %v6226 = vsel %vm1442, %v6149, 0
        %6228 = vmatprep.subr.mxu0 0.0
        %6229 = vmatpush1.msra.mxu0 %v5653
        %6230 = vmatprep.subr.mxu0 0.0
        %6231 = vmatpush1.msra.mxu0 0.0
        %6232 = vmatprep.subr.mxu0 0.0
        %6233 = vmatpush1.msra.mxu0 0.0
        %6234 = vmatprep.subr.mxu0 0.0
        %6235 = vmatpush1.msra.mxu0 0.0
        %6236 = vmatprep.subr.mxu0 0.0
        %6237 = vmatpush1.msra.mxu0 0.0
        %6238 = vmatprep.subr.mxu0 0.0
        %6239 = vmatpush1.msra.mxu0 0.0
        %6240 = vmatprep.subr.mxu0 0.0
        %6241 = vmatpush1.msra.mxu0 0.0
        %6242 = vmatprep.subr.mxu0 0.0
        %6243 = vmatpush1.msra.mxu0 0.0
        %6244 = vmatprep.subr.mxu0 0.0
        %6245 = vmatpush1.msra.mxu0 0.0
        %6246 = vmatprep.subr.mxu0 0.0
        %6247 = vmatpush1.msra.mxu0 0.0
        %6248 = vmatprep.subr.mxu0 0.0
        %6249 = vmatpush1.msra.mxu0 0.0
        %6250 = vmatprep.subr.mxu0 0.0
        %6251 = vmatpush1.msra.mxu0 0.0
        %6252 = vmatprep.subr.mxu0 0.0
        %6253 = vmatpush1.msra.mxu0 0.0
        %6254 = vmatprep.subr.mxu0 0.0
        %6255 = vmatpush1.msra.mxu0 0.0
        %6256 = vmatprep.subr.mxu0 0.0
        %6257 = vmatpush1.msra.mxu0 0.0
        %6258 = vmatprep.subr.mxu0 0.0
        %6259 = vmatpush1.msra.mxu0 0.0
        %6260 = vmatprep.subr.mxu0 0.0
        %6261 = vmatpush1.msra.mxu0 0.0
        %6262 = vmatprep.subr.mxu0 0.0
        %6263 = vmatpush1.msra.mxu0 0.0
        %6264 = vmatprep.subr.mxu0 0.0
        %6265 = vmatpush1.msra.mxu0 0.0
        %6266 = vmatprep.subr.mxu0 0.0
        %6267 = vmatpush1.msra.mxu0 0.0
        %6268 = vmatprep.subr.mxu0 0.0
        %6269 = vmatpush1.msra.mxu0 0.0
        %6270 = vmatprep.subr.mxu0 0.0
        %6271 = vmatpush1.msra.mxu0 0.0
        %6272 = vmatprep.subr.mxu0 0.0
        %6273 = vmatpush1.msra.mxu0 0.0
        %6274 = vmatprep.subr.mxu0 0.0
        %6275 = vmatpush1.msra.mxu0 0.0
        %6276 = vmatprep.subr.mxu0 0.0
        %6277 = vmatpush1.msra.mxu0 0.0
        %6278 = vmatprep.subr.mxu0 0.0
        %6279 = vmatpush1.msra.mxu0 0.0
        %6280 = vmatprep.subr.mxu0 0.0
        %6281 = vmatpush1.msra.mxu0 0.0
        %6282 = vmatprep.subr.mxu0 0.0
        %6283 = vmatpush1.msra.mxu0 0.0
        %6284 = vmatprep.subr.mxu0 0.0
        %6285 = vmatpush1.msra.mxu0 0.0
        %6286 = vmatprep.subr.mxu0 0.0
        %6287 = vmatpush1.msra.mxu0 0.0
        %6288 = vmatprep.subr.mxu0 0.0
        %6289 = vmatpush1.msra.mxu0 0.0
        %6290 = vmatprep.subr.mxu0 0.0
        %6291 = vmatpush1.msra.mxu0 0.0
        %6292 = vmatprep.mubr.f32.mxu0 0.0
        %6293 = vmatmul.mubr.f32.gmra.mrb[0].mxu0 %v6226
        %v6294 = vpop.f32.mrb[0].mxu0
        %v6295 = vadd.f32 0.0, %v6294
        %v6296 = vpop.f32.mrb[0].mxu0
        %6297 = vdwg.mxu0
        %v6299 = vsel %vm1442, %v6150, 0
        %6301 = vmatprep.subr.mxu0 0.0
        %6302 = vmatpush1.msra.mxu0 %v5723
        %6303 = vmatprep.subr.mxu0 0.0
        %6304 = vmatpush1.msra.mxu0 0.0
        %6305 = vmatprep.subr.mxu0 0.0
        %6306 = vmatpush1.msra.mxu0 0.0
        %6307 = vmatprep.subr.mxu0 0.0
        %6308 = vmatpush1.msra.mxu0 0.0
        %6309 = vmatprep.subr.mxu0 0.0
        %6310 = vmatpush1.msra.mxu0 0.0
        %6311 = vmatprep.subr.mxu0 0.0
        %6312 = vmatpush1.msra.mxu0 0.0
        %6313 = vmatprep.subr.mxu0 0.0
        %6314 = vmatpush1.msra.mxu0 0.0
        %6315 = vmatprep.subr.mxu0 0.0
        %6316 = vmatpush1.msra.mxu0 0.0
        %6317 = vmatprep.subr.mxu0 0.0
        %6318 = vmatpush1.msra.mxu0 0.0
        %6319 = vmatprep.subr.mxu0 0.0
        %6320 = vmatpush1.msra.mxu0 0.0
        %6321 = vmatprep.subr.mxu0 0.0
        %6322 = vmatpush1.msra.mxu0 0.0
        %6323 = vmatprep.subr.mxu0 0.0
        %6324 = vmatpush1.msra.mxu0 0.0
        %6325 = vmatprep.subr.mxu0 0.0
        %6326 = vmatpush1.msra.mxu0 0.0
        %6327 = vmatprep.subr.mxu0 0.0
        %6328 = vmatpush1.msra.mxu0 0.0
        %6329 = vmatprep.subr.mxu0 0.0
        %6330 = vmatpush1.msra.mxu0 0.0
        %6331 = vmatprep.subr.mxu0 0.0
        %6332 = vmatpush1.msra.mxu0 0.0
        %6333 = vmatprep.subr.mxu0 0.0
        %6334 = vmatpush1.msra.mxu0 0.0
        %6335 = vmatprep.subr.mxu0 0.0
        %6336 = vmatpush1.msra.mxu0 0.0
        %6337 = vmatprep.subr.mxu0 0.0
        %6338 = vmatpush1.msra.mxu0 0.0
        %6339 = vmatprep.subr.mxu0 0.0
        %6340 = vmatpush1.msra.mxu0 0.0
        %6341 = vmatprep.subr.mxu0 0.0
        %6342 = vmatpush1.msra.mxu0 0.0
        %6343 = vmatprep.subr.mxu0 0.0
        %6344 = vmatpush1.msra.mxu0 0.0
        %6345 = vmatprep.subr.mxu0 0.0
        %6346 = vmatpush1.msra.mxu0 0.0
        %6347 = vmatprep.subr.mxu0 0.0
        %6348 = vmatpush1.msra.mxu0 0.0
        %6349 = vmatprep.subr.mxu0 0.0
        %6350 = vmatpush1.msra.mxu0 0.0
        %6351 = vmatprep.subr.mxu0 0.0
        %6352 = vmatpush1.msra.mxu0 0.0
        %6353 = vmatprep.subr.mxu0 0.0
        %6354 = vmatpush1.msra.mxu0 0.0
        %6355 = vmatprep.subr.mxu0 0.0
        %6356 = vmatpush1.msra.mxu0 0.0
        %6357 = vmatprep.subr.mxu0 0.0
        %6358 = vmatpush1.msra.mxu0 0.0
        %6359 = vmatprep.subr.mxu0 0.0
        %6360 = vmatpush1.msra.mxu0 0.0
        %6361 = vmatprep.subr.mxu0 0.0
        %6362 = vmatpush1.msra.mxu0 0.0
        %6363 = vmatprep.subr.mxu0 0.0
        %6364 = vmatpush1.msra.mxu0 0.0
        %6365 = vmatprep.mubr.f32.mxu0 0.0
        %6366 = vmatmul.mubr.f32.gmra.mrb[0].mxu0 %v6299
        %v6367 = vpop.f32.mrb[0].mxu0
        %v6368 = vadd.f32 0.0, %v6367
        %v6369 = vpop.f32.mrb[0].mxu0
        %6370 = vdwg.mxu0
        %v6372 = vsel %vm1442, %v6151, 0
        %6374 = vmatprep.subr.mxu0 0.0
        %6375 = vmatpush1.msra.mxu0 %v5793
        %6376 = vmatprep.subr.mxu0 0.0
        %6377 = vmatpush1.msra.mxu0 0.0
        %6378 = vmatprep.subr.mxu0 0.0
        %6379 = vmatpush1.msra.mxu0 0.0
        %6380 = vmatprep.subr.mxu0 0.0
        %6381 = vmatpush1.msra.mxu0 0.0
        %6382 = vmatprep.subr.mxu0 0.0
        %6383 = vmatpush1.msra.mxu0 0.0
        %6384 = vmatprep.subr.mxu0 0.0
        %6385 = vmatpush1.msra.mxu0 0.0
        %6386 = vmatprep.subr.mxu0 0.0
        %6387 = vmatpush1.msra.mxu0 0.0
        %6388 = vmatprep.subr.mxu0 0.0
        %6389 = vmatpush1.msra.mxu0 0.0
        %6390 = vmatprep.subr.mxu0 0.0
        %6391 = vmatpush1.msra.mxu0 0.0
        %6392 = vmatprep.subr.mxu0 0.0
        %6393 = vmatpush1.msra.mxu0 0.0
        %6394 = vmatprep.subr.mxu0 0.0
        %6395 = vmatpush1.msra.mxu0 0.0
        %6396 = vmatprep.subr.mxu0 0.0
        %6397 = vmatpush1.msra.mxu0 0.0
        %6398 = vmatprep.subr.mxu0 0.0
        %6399 = vmatpush1.msra.mxu0 0.0
        %6400 = vmatprep.subr.mxu0 0.0
        %6401 = vmatpush1.msra.mxu0 0.0
        %6402 = vmatprep.subr.mxu0 0.0
        %6403 = vmatpush1.msra.mxu0 0.0
        %6404 = vmatprep.subr.mxu0 0.0
        %6405 = vmatpush1.msra.mxu0 0.0
        %6406 = vmatprep.subr.mxu0 0.0
        %6407 = vmatpush1.msra.mxu0 0.0
        %6408 = vmatprep.subr.mxu0 0.0
        %6409 = vmatpush1.msra.mxu0 0.0
        %6410 = vmatprep.subr.mxu0 0.0
        %6411 = vmatpush1.msra.mxu0 0.0
        %6412 = vmatprep.subr.mxu0 0.0
        %6413 = vmatpush1.msra.mxu0 0.0
        %6414 = vmatprep.subr.mxu0 0.0
        %6415 = vmatpush1.msra.mxu0 0.0
        %6416 = vmatprep.subr.mxu0 0.0
        %6417 = vmatpush1.msra.mxu0 0.0
        %6418 = vmatprep.subr.mxu0 0.0
        %6419 = vmatpush1.msra.mxu0 0.0
        %6420 = vmatprep.subr.mxu0 0.0
        %6421 = vmatpush1.msra.mxu0 0.0
        %6422 = vmatprep.subr.mxu0 0.0
        %6423 = vmatpush1.msra.mxu0 0.0
        %6424 = vmatprep.subr.mxu0 0.0
        %6425 = vmatpush1.msra.mxu0 0.0
        %6426 = vmatprep.subr.mxu0 0.0
        %6427 = vmatpush1.msra.mxu0 0.0
        %6428 = vmatprep.subr.mxu0 0.0
        %6429 = vmatpush1.msra.mxu0 0.0
        %6430 = vmatprep.subr.mxu0 0.0
        %6431 = vmatpush1.msra.mxu0 0.0
        %6432 = vmatprep.subr.mxu0 0.0
        %6433 = vmatpush1.msra.mxu0 0.0
        %6434 = vmatprep.subr.mxu0 0.0
        %6435 = vmatpush1.msra.mxu0 0.0
        %6436 = vmatprep.subr.mxu0 0.0
        %6437 = vmatpush1.msra.mxu0 0.0
        %6438 = vmatprep.mubr.f32.mxu0 0.0
        %6439 = vmatmul.mubr.f32.gmra.mrb[0].mxu0 %v6372
        %v6440 = vpop.f32.mrb[0].mxu0
        %v6441 = vadd.f32 0.0, %v6440
        %v6442 = vpop.f32.mrb[0].mxu0
        %6443 = vdwg.mxu0
        %s6444 = scalar_lea.vmem %s8, 64
        %v6445 = vld [vmem:[%s6444] sm:$0xff]
        %v6446 = vld [vmem:[%s6444 + $0x8] sm:$0xff]
        %v6447 = vld [vmem:[%s6444 + $0x10] sm:$0xff]
        %v6448 = vld [vmem:[%s6444 + $0x18] sm:$0xff]
        %v6450 = vsel %vm1442, %v6222, 0
        %6452 = vmatprep.subr.mxu0 0.0
        %6453 = vmatpush1.msra.mxu0 %v6445
        %6454 = vmatprep.subr.mxu0 0.0
        %6455 = vmatpush1.msra.mxu0 0.0
        %6456 = vmatprep.subr.mxu0 0.0
        %6457 = vmatpush1.msra.mxu0 0.0
        %6458 = vmatprep.subr.mxu0 0.0
        %6459 = vmatpush1.msra.mxu0 0.0
        %6460 = vmatprep.subr.mxu0 0.0
        %6461 = vmatpush1.msra.mxu0 0.0
        %6462 = vmatprep.subr.mxu0 0.0
        %6463 = vmatpush1.msra.mxu0 0.0
        %6464 = vmatprep.subr.mxu0 0.0
        %6465 = vmatpush1.msra.mxu0 0.0
        %6466 = vmatprep.subr.mxu0 0.0
        %6467 = vmatpush1.msra.mxu0 0.0
        %6468 = vmatprep.subr.mxu0 0.0
        %6469 = vmatpush1.msra.mxu0 0.0
        %6470 = vmatprep.subr.mxu0 0.0
        %6471 = vmatpush1.msra.mxu0 0.0
        %6472 = vmatprep.subr.mxu0 0.0
        %6473 = vmatpush1.msra.mxu0 0.0
        %6474 = vmatprep.subr.mxu0 0.0
        %6475 = vmatpush1.msra.mxu0 0.0
        %6476 = vmatprep.subr.mxu0 0.0
        %6477 = vmatpush1.msra.mxu0 0.0
        %6478 = vmatprep.subr.mxu0 0.0
        %6479 = vmatpush1.msra.mxu0 0.0
        %6480 = vmatprep.subr.mxu0 0.0
        %6481 = vmatpush1.msra.mxu0 0.0
        %6482 = vmatprep.subr.mxu0 0.0
        %6483 = vmatpush1.msra.mxu0 0.0
        %6484 = vmatprep.subr.mxu0 0.0
        %6485 = vmatpush1.msra.mxu0 0.0
        %6486 = vmatprep.subr.mxu0 0.0
        %6487 = vmatpush1.msra.mxu0 0.0
        %6488 = vmatprep.subr.mxu0 0.0
        %6489 = vmatpush1.msra.mxu0 0.0
        %6490 = vmatprep.subr.mxu0 0.0
        %6491 = vmatpush1.msra.mxu0 0.0
        %6492 = vmatprep.subr.mxu0 0.0
        %6493 = vmatpush1.msra.mxu0 0.0
        %6494 = vmatprep.subr.mxu0 0.0
        %6495 = vmatpush1.msra.mxu0 0.0
        %6496 = vmatprep.subr.mxu0 0.0
        %6497 = vmatpush1.msra.mxu0 0.0
        %6498 = vmatprep.subr.mxu0 0.0
        %6499 = vmatpush1.msra.mxu0 0.0
        %6500 = vmatprep.subr.mxu0 0.0
        %6501 = vmatpush1.msra.mxu0 0.0
        %6502 = vmatprep.subr.mxu0 0.0
        %6503 = vmatpush1.msra.mxu0 0.0
        %6504 = vmatprep.subr.mxu0 0.0
        %6505 = vmatpush1.msra.mxu0 0.0
        %6506 = vmatprep.subr.mxu0 0.0
        %6507 = vmatpush1.msra.mxu0 0.0
        %6508 = vmatprep.subr.mxu0 0.0
        %6509 = vmatpush1.msra.mxu0 0.0
        %6510 = vmatprep.subr.mxu0 0.0
        %6511 = vmatpush1.msra.mxu0 0.0
        %6512 = vmatprep.subr.mxu0 0.0
        %6513 = vmatpush1.msra.mxu0 0.0
        %6514 = vmatprep.subr.mxu0 0.0
        %6515 = vmatpush1.msra.mxu0 0.0
        %6516 = vmatprep.mubr.f32.mxu0 0.0
        %6517 = vmatmul.mubr.f32.gmra.mrb[0].mxu0 %v6450
        %v6518 = vpop.f32.mrb[0].mxu0
        %v6519 = vadd.f32 0.0, %v6518
        %v6520 = vpop.f32.mrb[0].mxu0
        %6521 = vdwg.mxu0
        %v6523 = vsel %vm1442, %v6295, 0
        %6525 = vmatprep.subr.mxu0 0.0
        %6526 = vmatpush1.msra.mxu0 %v6446
        %6527 = vmatprep.subr.mxu0 0.0
        %6528 = vmatpush1.msra.mxu0 0.0
        %6529 = vmatprep.subr.mxu0 0.0
        %6530 = vmatpush1.msra.mxu0 0.0
        %6531 = vmatprep.subr.mxu0 0.0
        %6532 = vmatpush1.msra.mxu0 0.0
        %6533 = vmatprep.subr.mxu0 0.0
        %6534 = vmatpush1.msra.mxu0 0.0
        %6535 = vmatprep.subr.mxu0 0.0
        %6536 = vmatpush1.msra.mxu0 0.0
        %6537 = vmatprep.subr.mxu0 0.0
        %6538 = vmatpush1.msra.mxu0 0.0
        %6539 = vmatprep.subr.mxu0 0.0
        %6540 = vmatpush1.msra.mxu0 0.0
        %6541 = vmatprep.subr.mxu0 0.0
        %6542 = vmatpush1.msra.mxu0 0.0
        %6543 = vmatprep.subr.mxu0 0.0
        %6544 = vmatpush1.msra.mxu0 0.0
        %6545 = vmatprep.subr.mxu0 0.0
        %6546 = vmatpush1.msra.mxu0 0.0
        %6547 = vmatprep.subr.mxu0 0.0
        %6548 = vmatpush1.msra.mxu0 0.0
        %6549 = vmatprep.subr.mxu0 0.0
        %6550 = vmatpush1.msra.mxu0 0.0
        %6551 = vmatprep.subr.mxu0 0.0
        %6552 = vmatpush1.msra.mxu0 0.0
        %6553 = vmatprep.subr.mxu0 0.0
        %6554 = vmatpush1.msra.mxu0 0.0
        %6555 = vmatprep.subr.mxu0 0.0
        %6556 = vmatpush1.msra.mxu0 0.0
        %6557 = vmatprep.subr.mxu0 0.0
        %6558 = vmatpush1.msra.mxu0 0.0
        %6559 = vmatprep.subr.mxu0 0.0
        %6560 = vmatpush1.msra.mxu0 0.0
        %6561 = vmatprep.subr.mxu0 0.0
        %6562 = vmatpush1.msra.mxu0 0.0
        %6563 = vmatprep.subr.mxu0 0.0
        %6564 = vmatpush1.msra.mxu0 0.0
        %6565 = vmatprep.subr.mxu0 0.0
        %6566 = vmatpush1.msra.mxu0 0.0
        %6567 = vmatprep.subr.mxu0 0.0
        %6568 = vmatpush1.msra.mxu0 0.0
        %6569 = vmatprep.subr.mxu0 0.0
        %6570 = vmatpush1.msra.mxu0 0.0
        %6571 = vmatprep.subr.mxu0 0.0
        %6572 = vmatpush1.msra.mxu0 0.0
        %6573 = vmatprep.subr.mxu0 0.0
        %6574 = vmatpush1.msra.mxu0 0.0
        %6575 = vmatprep.subr.mxu0 0.0
        %6576 = vmatpush1.msra.mxu0 0.0
        %6577 = vmatprep.subr.mxu0 0.0
        %6578 = vmatpush1.msra.mxu0 0.0
        %6579 = vmatprep.subr.mxu0 0.0
        %6580 = vmatpush1.msra.mxu0 0.0
        %6581 = vmatprep.subr.mxu0 0.0
        %6582 = vmatpush1.msra.mxu0 0.0
        %6583 = vmatprep.subr.mxu0 0.0
        %6584 = vmatpush1.msra.mxu0 0.0
        %6585 = vmatprep.subr.mxu0 0.0
        %6586 = vmatpush1.msra.mxu0 0.0
        %6587 = vmatprep.subr.mxu0 0.0
        %6588 = vmatpush1.msra.mxu0 0.0
        %6589 = vmatprep.mubr.f32.mxu0 0.0
        %6590 = vmatmul.mubr.f32.gmra.mrb[0].mxu0 %v6523
        %v6591 = vpop.f32.mrb[0].mxu0
        %v6592 = vadd.f32 0.0, %v6591
        %v6593 = vpop.f32.mrb[0].mxu0
        %6594 = vdwg.mxu0
        %v6596 = vsel %vm1442, %v6368, 0
        %6598 = vmatprep.subr.mxu0 0.0
        %6599 = vmatpush1.msra.mxu0 %v6447
        %6600 = vmatprep.subr.mxu0 0.0
        %6601 = vmatpush1.msra.mxu0 0.0
        %6602 = vmatprep.subr.mxu0 0.0
        %6603 = vmatpush1.msra.mxu0 0.0
        %6604 = vmatprep.subr.mxu0 0.0
        %6605 = vmatpush1.msra.mxu0 0.0
        %6606 = vmatprep.subr.mxu0 0.0
        %6607 = vmatpush1.msra.mxu0 0.0
        %6608 = vmatprep.subr.mxu0 0.0
        %6609 = vmatpush1.msra.mxu0 0.0
        %6610 = vmatprep.subr.mxu0 0.0
        %6611 = vmatpush1.msra.mxu0 0.0
        %6612 = vmatprep.subr.mxu0 0.0
        %6613 = vmatpush1.msra.mxu0 0.0
        %6614 = vmatprep.subr.mxu0 0.0
        %6615 = vmatpush1.msra.mxu0 0.0
        %6616 = vmatprep.subr.mxu0 0.0
        %6617 = vmatpush1.msra.mxu0 0.0
        %6618 = vmatprep.subr.mxu0 0.0
        %6619 = vmatpush1.msra.mxu0 0.0
        %6620 = vmatprep.subr.mxu0 0.0
        %6621 = vmatpush1.msra.mxu0 0.0
        %6622 = vmatprep.subr.mxu0 0.0
        %6623 = vmatpush1.msra.mxu0 0.0
        %6624 = vmatprep.subr.mxu0 0.0
        %6625 = vmatpush1.msra.mxu0 0.0
        %6626 = vmatprep.subr.mxu0 0.0
        %6627 = vmatpush1.msra.mxu0 0.0
        %6628 = vmatprep.subr.mxu0 0.0
        %6629 = vmatpush1.msra.mxu0 0.0
        %6630 = vmatprep.subr.mxu0 0.0
        %6631 = vmatpush1.msra.mxu0 0.0
        %6632 = vmatprep.subr.mxu0 0.0
        %6633 = vmatpush1.msra.mxu0 0.0
        %6634 = vmatprep.subr.mxu0 0.0
        %6635 = vmatpush1.msra.mxu0 0.0
        %6636 = vmatprep.subr.mxu0 0.0
        %6637 = vmatpush1.msra.mxu0 0.0
        %6638 = vmatprep.subr.mxu0 0.0
        %6639 = vmatpush1.msra.mxu0 0.0
        %6640 = vmatprep.subr.mxu0 0.0
        %6641 = vmatpush1.msra.mxu0 0.0
        %6642 = vmatprep.subr.mxu0 0.0
        %6643 = vmatpush1.msra.mxu0 0.0
        %6644 = vmatprep.subr.mxu0 0.0
        %6645 = vmatpush1.msra.mxu0 0.0
        %6646 = vmatprep.subr.mxu0 0.0
        %6647 = vmatpush1.msra.mxu0 0.0
        %6648 = vmatprep.subr.mxu0 0.0
        %6649 = vmatpush1.msra.mxu0 0.0
        %6650 = vmatprep.subr.mxu0 0.0
        %6651 = vmatpush1.msra.mxu0 0.0
        %6652 = vmatprep.subr.mxu0 0.0
        %6653 = vmatpush1.msra.mxu0 0.0
        %6654 = vmatprep.subr.mxu0 0.0
        %6655 = vmatpush1.msra.mxu0 0.0
        %6656 = vmatprep.subr.mxu0 0.0
        %6657 = vmatpush1.msra.mxu0 0.0
        %6658 = vmatprep.subr.mxu0 0.0
        %6659 = vmatpush1.msra.mxu0 0.0
        %6660 = vmatprep.subr.mxu0 0.0
        %6661 = vmatpush1.msra.mxu0 0.0
        %6662 = vmatprep.mubr.f32.mxu0 0.0
        %6663 = vmatmul.mubr.f32.gmra.mrb[0].mxu0 %v6596
        %v6664 = vpop.f32.mrb[0].mxu0
        %v6665 = vadd.f32 0.0, %v6664
        %v6666 = vpop.f32.mrb[0].mxu0
        %6667 = vdwg.mxu0
        %v6669 = vsel %vm1442, %v6441, 0
        %6671 = vmatprep.subr.mxu0 0.0
        %6672 = vmatpush1.msra.mxu0 %v6448
        %6673 = vmatprep.subr.mxu0 0.0
        %6674 = vmatpush1.msra.mxu0 0.0
        %6675 = vmatprep.subr.mxu0 0.0
        %6676 = vmatpush1.msra.mxu0 0.0
        %6677 = vmatprep.subr.mxu0 0.0
        %6678 = vmatpush1.msra.mxu0 0.0
        %6679 = vmatprep.subr.mxu0 0.0
        %6680 = vmatpush1.msra.mxu0 0.0
        %6681 = vmatprep.subr.mxu0 0.0
        %6682 = vmatpush1.msra.mxu0 0.0
        %6683 = vmatprep.subr.mxu0 0.0
        %6684 = vmatpush1.msra.mxu0 0.0
        %6685 = vmatprep.subr.mxu0 0.0
        %6686 = vmatpush1.msra.mxu0 0.0
        %6687 = vmatprep.subr.mxu0 0.0
        %6688 = vmatpush1.msra.mxu0 0.0
        %6689 = vmatprep.subr.mxu0 0.0
        %6690 = vmatpush1.msra.mxu0 0.0
        %6691 = vmatprep.subr.mxu0 0.0
        %6692 = vmatpush1.msra.mxu0 0.0
        %6693 = vmatprep.subr.mxu0 0.0
        %6694 = vmatpush1.msra.mxu0 0.0
        %6695 = vmatprep.subr.mxu0 0.0
        %6696 = vmatpush1.msra.mxu0 0.0
        %6697 = vmatprep.subr.mxu0 0.0
        %6698 = vmatpush1.msra.mxu0 0.0
        %6699 = vmatprep.subr.mxu0 0.0
        %6700 = vmatpush1.msra.mxu0 0.0
        %6701 = vmatprep.subr.mxu0 0.0
        %6702 = vmatpush1.msra.mxu0 0.0
        %6703 = vmatprep.subr.mxu0 0.0
        %6704 = vmatpush1.msra.mxu0 0.0
        %6705 = vmatprep.subr.mxu0 0.0
        %6706 = vmatpush1.msra.mxu0 0.0
        %6707 = vmatprep.subr.mxu0 0.0
        %6708 = vmatpush1.msra.mxu0 0.0
        %6709 = vmatprep.subr.mxu0 0.0
        %6710 = vmatpush1.msra.mxu0 0.0
        %6711 = vmatprep.subr.mxu0 0.0
        %6712 = vmatpush1.msra.mxu0 0.0
        %6713 = vmatprep.subr.mxu0 0.0
        %6714 = vmatpush1.msra.mxu0 0.0
        %6715 = vmatprep.subr.mxu0 0.0
        %6716 = vmatpush1.msra.mxu0 0.0
        %6717 = vmatprep.subr.mxu0 0.0
        %6718 = vmatpush1.msra.mxu0 0.0
        %6719 = vmatprep.subr.mxu0 0.0
        %6720 = vmatpush1.msra.mxu0 0.0
        %6721 = vmatprep.subr.mxu0 0.0
        %6722 = vmatpush1.msra.mxu0 0.0
        %6723 = vmatprep.subr.mxu0 0.0
        %6724 = vmatpush1.msra.mxu0 0.0
        %6725 = vmatprep.subr.mxu0 0.0
        %6726 = vmatpush1.msra.mxu0 0.0
        %6727 = vmatprep.subr.mxu0 0.0
        %6728 = vmatpush1.msra.mxu0 0.0
        %6729 = vmatprep.subr.mxu0 0.0
        %6730 = vmatpush1.msra.mxu0 0.0
        %6731 = vmatprep.subr.mxu0 0.0
        %6732 = vmatpush1.msra.mxu0 0.0
        %6733 = vmatprep.subr.mxu0 0.0
        %6734 = vmatpush1.msra.mxu0 0.0
        %6735 = vmatprep.mubr.f32.mxu0 0.0
        %6736 = vmatmul.mubr.f32.gmra.mrb[0].mxu0 %v6669
        %v6737 = vpop.f32.mrb[0].mxu0
        %v6738 = vadd.f32 0.0, %v6737
        %v6739 = vpop.f32.mrb[0].mxu0
        %6740 = vdwg.mxu0
        %v6741 = vsel %vm429, %v6519, 0.0
        %v6742 = vsel %vm429, %v6592, 0.0
        %v6743 = vadd.f32 %v6741, %v6742
        %v6744 = vsel %vm429, %v6665, 0.0
        %v6745 = vadd.f32 %v6743, %v6744
        %v6746 = vsel %vm429, %v6738, 0.0
        %v6747 = vadd.f32 %v6745, %v6746
        %v6748 = vlaneseq
        %v6749 = vshrl.u32 %v6748, 7
        %v6750 = vsub.s32 0, %v6749
        %v6751 = vrot.slane %v4809, %v6750
        %v6752 = vadd.f32 %v6747, %v6751
        %v6753 = vadd.f32 %v4804, %v6752
        %v6754 = vsel %vm429, %v6753, 0.0
        %6755 = vadd.xlane.f32.xlu0 %v6754
        %v6756 = vpop.xlane.xlu0 %6755
        %v6757 = vmul.f32 %v6756, %v433
        %v6758 = vsub.f32 %v6753, %v6757
        %v6759 = vmul.f32 %v6758, %v6758
        %v6760 = vsel %vm429, %v6759, 0.0
        %6761 = vadd.xlane.f32.xlu0 %v6760
        %v6762 = vpop.xlane.xlu0 %6761
        %v6763 = vmul.f32 %v6762, %v433
        %v6764 = vadd.f32 %v6763, 1e-07
        %v6765 = vrsqrt.pop %v6764
        %v6766 = vmul.f32 %v6758, %v6765
        %v6767 = vlaneseq
        %v6768 = vshrl.u32 %v6767, 7
        %v6769 = vsub.s32 0, %v6768
        %v6770 = vrot.slane %v4810, %v6769
        %v6771 = vmul.f32 %v6766, %v6770
        %v6772 = vlaneseq
        %v6773 = vshrl.u32 %v6772, 7
        %v6774 = vsub.s32 0, %v6773
        %v6775 = vrot.slane %v4811, %v6774
        %v6776 = vadd.f32 %v6771, %v6775
        %s6777 = scalar_lea.vmem %s9, 64
        %v6778 = vld [vmem:[%s6777] sm:$0xff]
        %v6779 = vld [vmem:[%s6777 + $0x8] sm:$0xff]
        %v6780 = vld [vmem:[%s6777 + $0x10] sm:$0xff]
        %v6781 = vld [vmem:[%s6777 + $0x18] sm:$0xff]
        %s6782 = scalar_lea.vmem %s6, 2
        %v6783 = vld [vmem:[%s6782] sm:$0x1]
        %v6785 = vlaneseq
        %v6786 = vshrl.u32 %v6785, 7
        %v6787 = vsub.s32 0, %v6786
        %v6788 = vrot.slane %v6783, %v6787
        %v6791 = vsel %vm429, %v6776, 0
        %6793 = vmatprep.subr.mxu0 0.0
        %6794 = vmatpush1.msra.mxu0 %v6778
        %6795 = vmatprep.subr.mxu0 0.0
        %6796 = vmatpush1.msra.mxu0 %v6779
        %6797 = vmatprep.subr.mxu0 0.0
        %6798 = vmatpush1.msra.mxu0 %v6780
        %6799 = vmatprep.subr.mxu0 0.0
        %6800 = vmatpush1.msra.mxu0 %v6781
        %6801 = vmatprep.subr.mxu0 0.0
        %6802 = vmatpush1.msra.mxu0 0.0
        %6803 = vmatprep.subr.mxu0 0.0
        %6804 = vmatpush1.msra.mxu0 0.0
        %6805 = vmatprep.subr.mxu0 0.0
        %6806 = vmatpush1.msra.mxu0 0.0
        %6807 = vmatprep.subr.mxu0 0.0
        %6808 = vmatpush1.msra.mxu0 0.0
        %6809 = vmatprep.subr.mxu0 0.0
        %6810 = vmatpush1.msra.mxu0 0.0
        %6811 = vmatprep.subr.mxu0 0.0
        %6812 = vmatpush1.msra.mxu0 0.0
        %6813 = vmatprep.subr.mxu0 0.0
        %6814 = vmatpush1.msra.mxu0 0.0
        %6815 = vmatprep.subr.mxu0 0.0
        %6816 = vmatpush1.msra.mxu0 0.0
        %6817 = vmatprep.subr.mxu0 0.0
        %6818 = vmatpush1.msra.mxu0 0.0
        %6819 = vmatprep.subr.mxu0 0.0
        %6820 = vmatpush1.msra.mxu0 0.0
        %6821 = vmatprep.subr.mxu0 0.0
        %6822 = vmatpush1.msra.mxu0 0.0
        %6823 = vmatprep.subr.mxu0 0.0
        %6824 = vmatpush1.msra.mxu0 0.0
        %6825 = vmatprep.subr.mxu0 0.0
        %6826 = vmatpush1.msra.mxu0 0.0
        %6827 = vmatprep.subr.mxu0 0.0
        %6828 = vmatpush1.msra.mxu0 0.0
        %6829 = vmatprep.subr.mxu0 0.0
        %6830 = vmatpush1.msra.mxu0 0.0
        %6831 = vmatprep.subr.mxu0 0.0
        %6832 = vmatpush1.msra.mxu0 0.0
        %6833 = vmatprep.subr.mxu0 0.0
        %6834 = vmatpush1.msra.mxu0 0.0
        %6835 = vmatprep.subr.mxu0 0.0
        %6836 = vmatpush1.msra.mxu0 0.0
        %6837 = vmatprep.subr.mxu0 0.0
        %6838 = vmatpush1.msra.mxu0 0.0
        %6839 = vmatprep.subr.mxu0 0.0
        %6840 = vmatpush1.msra.mxu0 0.0
        %6841 = vmatprep.subr.mxu0 0.0
        %6842 = vmatpush1.msra.mxu0 0.0
        %6843 = vmatprep.subr.mxu0 0.0
        %6844 = vmatpush1.msra.mxu0 0.0
        %6845 = vmatprep.subr.mxu0 0.0
        %6846 = vmatpush1.msra.mxu0 0.0
        %6847 = vmatprep.subr.mxu0 0.0
        %6848 = vmatpush1.msra.mxu0 0.0
        %6849 = vmatprep.subr.mxu0 0.0
        %6850 = vmatpush1.msra.mxu0 0.0
        %6851 = vmatprep.subr.mxu0 0.0
        %6852 = vmatpush1.msra.mxu0 0.0
        %6853 = vmatprep.subr.mxu0 0.0
        %6854 = vmatpush1.msra.mxu0 0.0
        %6855 = vmatprep.subr.mxu0 0.0
        %6856 = vmatpush1.msra.mxu0 0.0
        %6857 = vmatprep.mubr.f32.mxu0 0.0
        %6858 = vmatmul.mubr.f32.gmra.mrb[0].mxu0 %v6791
        %v6859 = vpop.f32.mrb[0].mxu0
        %v6860 = vadd.f32 %v6788, %v6859
        %v6861 = vpop.f32.mrb[0].mxu0
        %6862 = vdwg.mxu0
        %v6863 = vmul.f32 %v6860, %v6860
        %v6864 = vmul.f32 %v6860, %v6863
        %v6865 = vmul.f32 %v6864, 0.044715
        %v6866 = vadd.f32 %v6860, %v6865
        %v6867 = vmul.f32 %v6866, 0.7978846
        %v6868 = vtanh.pop %v6867
        %v6869 = vadd.f32 %v6868, 1.0
        %v6870 = vmul.f32 %v6869, 0.5
        %v6871 = vmul.f32 %v6860, %v6870
        %s6872 = scalar_lea.vmem %s10, 128
        %v6873 = vld [vmem:[%s6872] sm:$0xff]
        %v6874 = vld [vmem:[%s6872 + $0x8] sm:$0xff]
        %v6875 = vld [vmem:[%s6872 + $0x10] sm:$0xff]
        %v6876 = vld [vmem:[%s6872 + $0x18] sm:$0xff]
        %v6877 = vld [vmem:[%s6872 + $0x20] sm:$0xff]
        %v6878 = vld [vmem:[%s6872 + $0x28] sm:$0xff]
        %v6879 = vld [vmem:[%s6872 + $0x30] sm:$0xff]
        %v6880 = vld [vmem:[%s6872 + $0x38] sm:$0xff]
        %v6881 = vlaneseq
        %v6882 = vshrl.u32 %v6881, 7
        %v6883 = vsub.s32 0, %v6882
        %v6884 = vrot.slane %v4812, %v6883
        %v6886 = vsel %vm2534, %v6871, 0
        %6888 = vmatprep.subr.mxu0 0.0
        %6889 = vmatpush1.msra.mxu0 %v6873
        %6890 = vmatprep.subr.mxu0 0.0
        %6891 = vmatpush1.msra.mxu0 %v6874
        %6892 = vmatprep.subr.mxu0 0.0
        %6893 = vmatpush1.msra.mxu0 %v6875
        %6894 = vmatprep.subr.mxu0 0.0
        %6895 = vmatpush1.msra.mxu0 %v6876
        %6896 = vmatprep.subr.mxu0 0.0
        %6897 = vmatpush1.msra.mxu0 %v6877
        %6898 = vmatprep.subr.mxu0 0.0
        %6899 = vmatpush1.msra.mxu0 %v6878
        %6900 = vmatprep.subr.mxu0 0.0
        %6901 = vmatpush1.msra.mxu0 %v6879
        %6902 = vmatprep.subr.mxu0 0.0
        %6903 = vmatpush1.msra.mxu0 %v6880
        %6904 = vmatprep.subr.mxu0 0.0
        %6905 = vmatpush1.msra.mxu0 0.0
        %6906 = vmatprep.subr.mxu0 0.0
        %6907 = vmatpush1.msra.mxu0 0.0
        %6908 = vmatprep.subr.mxu0 0.0
        %6909 = vmatpush1.msra.mxu0 0.0
        %6910 = vmatprep.subr.mxu0 0.0
        %6911 = vmatpush1.msra.mxu0 0.0
        %6912 = vmatprep.subr.mxu0 0.0
        %6913 = vmatpush1.msra.mxu0 0.0
        %6914 = vmatprep.subr.mxu0 0.0
        %6915 = vmatpush1.msra.mxu0 0.0
        %6916 = vmatprep.subr.mxu0 0.0
        %6917 = vmatpush1.msra.mxu0 0.0
        %6918 = vmatprep.subr.mxu0 0.0
        %6919 = vmatpush1.msra.mxu0 0.0
        %6920 = vmatprep.subr.mxu0 0.0
        %6921 = vmatpush1.msra.mxu0 0.0
        %6922 = vmatprep.subr.mxu0 0.0
        %6923 = vmatpush1.msra.mxu0 0.0
        %6924 = vmatprep.subr.mxu0 0.0
        %6925 = vmatpush1.msra.mxu0 0.0
        %6926 = vmatprep.subr.mxu0 0.0
        %6927 = vmatpush1.msra.mxu0 0.0
        %6928 = vmatprep.subr.mxu0 0.0
        %6929 = vmatpush1.msra.mxu0 0.0
        %6930 = vmatprep.subr.mxu0 0.0
        %6931 = vmatpush1.msra.mxu0 0.0
        %6932 = vmatprep.subr.mxu0 0.0
        %6933 = vmatpush1.msra.mxu0 0.0
        %6934 = vmatprep.subr.mxu0 0.0
        %6935 = vmatpush1.msra.mxu0 0.0
        %6936 = vmatprep.subr.mxu0 0.0
        %6937 = vmatpush1.msra.mxu0 0.0
        %6938 = vmatprep.subr.mxu0 0.0
        %6939 = vmatpush1.msra.mxu0 0.0
        %6940 = vmatprep.subr.mxu0 0.0
        %6941 = vmatpush1.msra.mxu0 0.0
        %6942 = vmatprep.subr.mxu0 0.0
        %6943 = vmatpush1.msra.mxu0 0.0
        %6944 = vmatprep.subr.mxu0 0.0
        %6945 = vmatpush1.msra.mxu0 0.0
        %6946 = vmatprep.subr.mxu0 0.0
        %6947 = vmatpush1.msra.mxu0 0.0
        %6948 = vmatprep.subr.mxu0 0.0
        %6949 = vmatpush1.msra.mxu0 0.0
        %6950 = vmatprep.subr.mxu0 0.0
        %6951 = vmatpush1.msra.mxu0 0.0
        %6952 = vmatprep.mubr.f32.mxu0 0.0
        %6953 = vmatmul.mubr.f32.gmra.mrb[0].mxu0 %v6886
        %v6954 = vpop.f32.mrb[0].mxu0
        %v6955 = vadd.f32 %v6884, %v6954
        %v6956 = vpop.f32.mrb[0].mxu0
        %6957 = vdwg.mxu0
        %v6958 = vadd.f32 %v6776, %v6955
        %v6959 = vsel %vm429, %v6958, 0.0
        %6960 = vadd.xlane.f32.xlu0 %v6959
        %v6961 = vpop.xlane.xlu0 %6960
        %v6962 = vmul.f32 %v6961, %v433
        %v6963 = vsub.f32 %v6958, %v6962
        %v6964 = vmul.f32 %v6963, %v6963
        %v6965 = vsel %vm429, %v6964, 0.0
        %6966 = vadd.xlane.f32.xlu0 %v6965
        %v6967 = vpop.xlane.xlu0 %6966
        %v6968 = vmul.f32 %v6967, %v433
        %v6969 = vadd.f32 %v6968, 1e-07
        %v6970 = vrsqrt.pop %v6969
        %v6971 = vmul.f32 %v6963, %v6970
        %v6972 = vlaneseq
        %v6973 = vshrl.u32 %v6972, 7
        %v6974 = vsub.s32 0, %v6973
        %v6975 = vrot.slane %v4813, %v6974
        %v6976 = vmul.f32 %v6971, %v6975
        %v6977 = vlaneseq
        %v6978 = vshrl.u32 %v6977, 7
        %v6979 = vsub.s32 0, %v6978
        %v6980 = vrot.slane %v4814, %v6979
        %v6981 = vadd.f32 %v6976, %v6980
        %s6982 = sld [smem:[#allocation2 + $0x1]]
        %v6983 = vstv %s6982
        %v6984 = vmul.f32 %v6983, %v6981
        %v6985 = vadd.f32 %v4808, %v6984
        %v6986 = vld [vmem:[%s4 + $0x14] sm:$0x1]
        %v6987 = vld [vmem:[%s4 + $0x15] sm:$0x1]
        %v6988 = vld [vmem:[%s4 + $0x16] sm:$0x1]
        %v6989 = vld [vmem:[%s4 + $0x17] sm:$0x1]
        %v6990 = vld [vmem:[%s4 + $0x18] sm:$0x1]
        %v6991 = vld [vmem:[%s4 + $0x19] sm:$0x1]
        %s6992 = scalar_lea.vmem %s7, 1152
        %v6993 = vld [vmem:[%s6992] sm:$0xff]
        %v6994 = vld [vmem:[%s6992 + $0x8] sm:$0xff]
        %v6995 = vld [vmem:[%s6992 + $0x10] sm:$0xff]
        %v6996 = vld [vmem:[%s6992 + $0x18] sm:$0xff]
        %v6997 = vld [vmem:[%s6992 + $0x20] sm:$0xff]
        %v6998 = vld [vmem:[%s6992 + $0x28] sm:$0xff]
        %v6999 = vld [vmem:[%s6992 + $0x30] sm:$0xff]
        %v7000 = vld [vmem:[%s6992 + $0x38] sm:$0xff]
        %v7001 = vld [vmem:[%s6992 + $0x40] sm:$0xff]
        %v7002 = vld [vmem:[%s6992 + $0x48] sm:$0xff]
        %v7003 = vld [vmem:[%s6992 + $0x50] sm:$0xff]
        %v7004 = vld [vmem:[%s6992 + $0x58] sm:$0xff]
        %v7005 = vld [vmem:[%s6992 + $0x60] sm:$0xff]
        %v7006 = vld [vmem:[%s6992 + $0x68] sm:$0xff]
        %v7007 = vld [vmem:[%s6992 + $0x70] sm:$0xff]
        %v7008 = vld [vmem:[%s6992 + $0x78] sm:$0xff]
        %s7009 = scalar_lea.vmem %s5, 36
        %v7010 = vld [vmem:[%s7009] sm:$0x1]
        %v7011 = vld [vmem:[%s7009 + $0x1] sm:$0x1]
        %v7012 = vld [vmem:[%s7009 + $0x2] sm:$0x1]
        %v7013 = vld [vmem:[%s7009 + $0x3] sm:$0x1]
        %v7018 = vlaneseq
        %v7019 = vshrl.u32 %v7018, 7
        %v7020 = vsub.s32 0, %v7019
        %v7021 = vrot.slane %v7010, %v7020
        %v7022 = vlaneseq
        %v7023 = vshrl.u32 %v7022, 7
        %v7024 = vsub.s32 0, %v7023
        %v7025 = vrot.slane %v7011, %v7024
        %v7026 = vlaneseq
        %v7027 = vshrl.u32 %v7026, 7
        %v7028 = vsub.s32 0, %v7027
        %v7029 = vrot.slane %v7012, %v7028
        %v7030 = vlaneseq
        %v7031 = vshrl.u32 %v7030, 7
        %v7032 = vsub.s32 0, %v7031
        %v7033 = vrot.slane %v7013, %v7032
        %v7039 = vsel %vm429, %v6981, 0
        %7041 = vmatprep.subr.mxu0 0.0
        %7042 = vmatpush1.msra.mxu0 %v6993
        %7043 = vmatprep.subr.mxu0 0.0
        %7044 = vmatpush1.msra.mxu0 %v6994
        %7045 = vmatprep.subr.mxu0 0.0
        %7046 = vmatpush1.msra.mxu0 %v6995
        %7047 = vmatprep.subr.mxu0 0.0
        %7048 = vmatpush1.msra.mxu0 %v6996
        %7049 = vmatprep.subr.mxu0 0.0
        %7050 = vmatpush1.msra.mxu0 0.0
        %7051 = vmatprep.subr.mxu0 0.0
        %7052 = vmatpush1.msra.mxu0 0.0
        %7053 = vmatprep.subr.mxu0 0.0
        %7054 = vmatpush1.msra.mxu0 0.0
        %7055 = vmatprep.subr.mxu0 0.0
        %7056 = vmatpush1.msra.mxu0 0.0
        %7057 = vmatprep.subr.mxu0 0.0
        %7058 = vmatpush1.msra.mxu0 0.0
        %7059 = vmatprep.subr.mxu0 0.0
        %7060 = vmatpush1.msra.mxu0 0.0
        %7061 = vmatprep.subr.mxu0 0.0
        %7062 = vmatpush1.msra.mxu0 0.0
        %7063 = vmatprep.subr.mxu0 0.0
        %7064 = vmatpush1.msra.mxu0 0.0
        %7065 = vmatprep.subr.mxu0 0.0
        %7066 = vmatpush1.msra.mxu0 0.0
        %7067 = vmatprep.subr.mxu0 0.0
        %7068 = vmatpush1.msra.mxu0 0.0
        %7069 = vmatprep.subr.mxu0 0.0
        %7070 = vmatpush1.msra.mxu0 0.0
        %7071 = vmatprep.subr.mxu0 0.0
        %7072 = vmatpush1.msra.mxu0 0.0
        %7073 = vmatprep.subr.mxu0 0.0
        %7074 = vmatpush1.msra.mxu0 0.0
        %7075 = vmatprep.subr.mxu0 0.0
        %7076 = vmatpush1.msra.mxu0 0.0
        %7077 = vmatprep.subr.mxu0 0.0
        %7078 = vmatpush1.msra.mxu0 0.0
        %7079 = vmatprep.subr.mxu0 0.0
        %7080 = vmatpush1.msra.mxu0 0.0
        %7081 = vmatprep.subr.mxu0 0.0
        %7082 = vmatpush1.msra.mxu0 0.0
        %7083 = vmatprep.subr.mxu0 0.0
        %7084 = vmatpush1.msra.mxu0 0.0
        %7085 = vmatprep.subr.mxu0 0.0
        %7086 = vmatpush1.msra.mxu0 0.0
        %7087 = vmatprep.subr.mxu0 0.0
        %7088 = vmatpush1.msra.mxu0 0.0
        %7089 = vmatprep.subr.mxu0 0.0
        %7090 = vmatpush1.msra.mxu0 0.0
        %7091 = vmatprep.subr.mxu0 0.0
        %7092 = vmatpush1.msra.mxu0 0.0
        %7093 = vmatprep.subr.mxu0 0.0
        %7094 = vmatpush1.msra.mxu0 0.0
        %7095 = vmatprep.subr.mxu0 0.0
        %7096 = vmatpush1.msra.mxu0 0.0
        %7097 = vmatprep.subr.mxu0 0.0
        %7098 = vmatpush1.msra.mxu0 0.0
        %7099 = vmatprep.subr.mxu0 0.0
        %7100 = vmatpush1.msra.mxu0 0.0
        %7101 = vmatprep.subr.mxu0 0.0
        %7102 = vmatpush1.msra.mxu0 0.0
        %7103 = vmatprep.subr.mxu0 0.0
        %7104 = vmatpush1.msra.mxu0 0.0
        %7105 = vmatprep.mubr.f32.mxu0 0.0
        %7106 = vmatmul.mubr.f32.gmra.mrb[0].mxu0 %v7039
        %v7107 = vpop.f32.mrb[0].mxu0
        %v7108 = vadd.f32 %v7021, %v7107
        %v7109 = vpop.f32.mrb[0].mxu0
        %7110 = vdwg.mxu0
        %7111 = vmatprep.subr.mxu0 0.0
        %7112 = vmatpush1.msra.mxu0 %v6997
        %7113 = vmatprep.subr.mxu0 0.0
        %7114 = vmatpush1.msra.mxu0 %v6998
        %7115 = vmatprep.subr.mxu0 0.0
        %7116 = vmatpush1.msra.mxu0 %v6999
        %7117 = vmatprep.subr.mxu0 0.0
        %7118 = vmatpush1.msra.mxu0 %v7000
        %7119 = vmatprep.subr.mxu0 0.0
        %7120 = vmatpush1.msra.mxu0 0.0
        %7121 = vmatprep.subr.mxu0 0.0
        %7122 = vmatpush1.msra.mxu0 0.0
        %7123 = vmatprep.subr.mxu0 0.0
        %7124 = vmatpush1.msra.mxu0 0.0
        %7125 = vmatprep.subr.mxu0 0.0
        %7126 = vmatpush1.msra.mxu0 0.0
        %7127 = vmatprep.subr.mxu0 0.0
        %7128 = vmatpush1.msra.mxu0 0.0
        %7129 = vmatprep.subr.mxu0 0.0
        %7130 = vmatpush1.msra.mxu0 0.0
        %7131 = vmatprep.subr.mxu0 0.0
        %7132 = vmatpush1.msra.mxu0 0.0
        %7133 = vmatprep.subr.mxu0 0.0
        %7134 = vmatpush1.msra.mxu0 0.0
        %7135 = vmatprep.subr.mxu0 0.0
        %7136 = vmatpush1.msra.mxu0 0.0
        %7137 = vmatprep.subr.mxu0 0.0
        %7138 = vmatpush1.msra.mxu0 0.0
        %7139 = vmatprep.subr.mxu0 0.0
        %7140 = vmatpush1.msra.mxu0 0.0
        %7141 = vmatprep.subr.mxu0 0.0
        %7142 = vmatpush1.msra.mxu0 0.0
        %7143 = vmatprep.subr.mxu0 0.0
        %7144 = vmatpush1.msra.mxu0 0.0
        %7145 = vmatprep.subr.mxu0 0.0
        %7146 = vmatpush1.msra.mxu0 0.0
        %7147 = vmatprep.subr.mxu0 0.0
        %7148 = vmatpush1.msra.mxu0 0.0
        %7149 = vmatprep.subr.mxu0 0.0
        %7150 = vmatpush1.msra.mxu0 0.0
        %7151 = vmatprep.subr.mxu0 0.0
        %7152 = vmatpush1.msra.mxu0 0.0
        %7153 = vmatprep.subr.mxu0 0.0
        %7154 = vmatpush1.msra.mxu0 0.0
        %7155 = vmatprep.subr.mxu0 0.0
        %7156 = vmatpush1.msra.mxu0 0.0
        %7157 = vmatprep.subr.mxu0 0.0
        %7158 = vmatpush1.msra.mxu0 0.0
        %7159 = vmatprep.subr.mxu0 0.0
        %7160 = vmatpush1.msra.mxu0 0.0
        %7161 = vmatprep.subr.mxu0 0.0
        %7162 = vmatpush1.msra.mxu0 0.0
        %7163 = vmatprep.subr.mxu0 0.0
        %7164 = vmatpush1.msra.mxu0 0.0
        %7165 = vmatprep.subr.mxu0 0.0
        %7166 = vmatpush1.msra.mxu0 0.0
        %7167 = vmatprep.subr.mxu0 0.0
        %7168 = vmatpush1.msra.mxu0 0.0
        %7169 = vmatprep.subr.mxu0 0.0
        %7170 = vmatpush1.msra.mxu0 0.0
        %7171 = vmatprep.subr.mxu0 0.0
        %7172 = vmatpush1.msra.mxu0 0.0
        %7173 = vmatprep.subr.mxu0 0.0
        %7174 = vmatpush1.msra.mxu0 0.0
        %7175 = vmatprep.mubr.f32.mxu0 0.0
        %7176 = vmatmul.mubr.f32.gmra.mrb[0].mxu0 %v7039
        %v7177 = vpop.f32.mrb[0].mxu0
        %v7178 = vadd.f32 %v7025, %v7177
        %v7179 = vpop.f32.mrb[0].mxu0
        %7180 = vdwg.mxu0
        %7181 = vmatprep.subr.mxu0 0.0
        %7182 = vmatpush1.msra.mxu0 %v7001
        %7183 = vmatprep.subr.mxu0 0.0
        %7184 = vmatpush1.msra.mxu0 %v7002
        %7185 = vmatprep.subr.mxu0 0.0
        %7186 = vmatpush1.msra.mxu0 %v7003
        %7187 = vmatprep.subr.mxu0 0.0
        %7188 = vmatpush1.msra.mxu0 %v7004
        %7189 = vmatprep.subr.mxu0 0.0
        %7190 = vmatpush1.msra.mxu0 0.0
        %7191 = vmatprep.subr.mxu0 0.0
        %7192 = vmatpush1.msra.mxu0 0.0
        %7193 = vmatprep.subr.mxu0 0.0
        %7194 = vmatpush1.msra.mxu0 0.0
        %7195 = vmatprep.subr.mxu0 0.0
        %7196 = vmatpush1.msra.mxu0 0.0
        %7197 = vmatprep.subr.mxu0 0.0
        %7198 = vmatpush1.msra.mxu0 0.0
        %7199 = vmatprep.subr.mxu0 0.0
        %7200 = vmatpush1.msra.mxu0 0.0
        %7201 = vmatprep.subr.mxu0 0.0
        %7202 = vmatpush1.msra.mxu0 0.0
        %7203 = vmatprep.subr.mxu0 0.0
        %7204 = vmatpush1.msra.mxu0 0.0
        %7205 = vmatprep.subr.mxu0 0.0
        %7206 = vmatpush1.msra.mxu0 0.0
        %7207 = vmatprep.subr.mxu0 0.0
        %7208 = vmatpush1.msra.mxu0 0.0
        %7209 = vmatprep.subr.mxu0 0.0
        %7210 = vmatpush1.msra.mxu0 0.0
        %7211 = vmatprep.subr.mxu0 0.0
        %7212 = vmatpush1.msra.mxu0 0.0
        %7213 = vmatprep.subr.mxu0 0.0
        %7214 = vmatpush1.msra.mxu0 0.0
        %7215 = vmatprep.subr.mxu0 0.0
        %7216 = vmatpush1.msra.mxu0 0.0
        %7217 = vmatprep.subr.mxu0 0.0
        %7218 = vmatpush1.msra.mxu0 0.0
        %7219 = vmatprep.subr.mxu0 0.0
        %7220 = vmatpush1.msra.mxu0 0.0
        %7221 = vmatprep.subr.mxu0 0.0
        %7222 = vmatpush1.msra.mxu0 0.0
        %7223 = vmatprep.subr.mxu0 0.0
        %7224 = vmatpush1.msra.mxu0 0.0
        %7225 = vmatprep.subr.mxu0 0.0
        %7226 = vmatpush1.msra.mxu0 0.0
        %7227 = vmatprep.subr.mxu0 0.0
        %7228 = vmatpush1.msra.mxu0 0.0
        %7229 = vmatprep.subr.mxu0 0.0
        %7230 = vmatpush1.msra.mxu0 0.0
        %7231 = vmatprep.subr.mxu0 0.0
        %7232 = vmatpush1.msra.mxu0 0.0
        %7233 = vmatprep.subr.mxu0 0.0
        %7234 = vmatpush1.msra.mxu0 0.0
        %7235 = vmatprep.subr.mxu0 0.0
        %7236 = vmatpush1.msra.mxu0 0.0
        %7237 = vmatprep.subr.mxu0 0.0
        %7238 = vmatpush1.msra.mxu0 0.0
        %7239 = vmatprep.subr.mxu0 0.0
        %7240 = vmatpush1.msra.mxu0 0.0
        %7241 = vmatprep.subr.mxu0 0.0
        %7242 = vmatpush1.msra.mxu0 0.0
        %7243 = vmatprep.subr.mxu0 0.0
        %7244 = vmatpush1.msra.mxu0 0.0
        %7245 = vmatprep.mubr.f32.mxu0 0.0
        %7246 = vmatmul.mubr.f32.gmra.mrb[0].mxu0 %v7039
        %v7247 = vpop.f32.mrb[0].mxu0
        %v7248 = vadd.f32 %v7029, %v7247
        %v7249 = vpop.f32.mrb[0].mxu0
        %7250 = vdwg.mxu0
        %7251 = vmatprep.subr.mxu0 0.0
        %7252 = vmatpush1.msra.mxu0 %v7005
        %7253 = vmatprep.subr.mxu0 0.0
        %7254 = vmatpush1.msra.mxu0 %v7006
        %7255 = vmatprep.subr.mxu0 0.0
        %7256 = vmatpush1.msra.mxu0 %v7007
        %7257 = vmatprep.subr.mxu0 0.0
        %7258 = vmatpush1.msra.mxu0 %v7008
        %7259 = vmatprep.subr.mxu0 0.0
        %7260 = vmatpush1.msra.mxu0 0.0
        %7261 = vmatprep.subr.mxu0 0.0
        %7262 = vmatpush1.msra.mxu0 0.0
        %7263 = vmatprep.subr.mxu0 0.0
        %7264 = vmatpush1.msra.mxu0 0.0
        %7265 = vmatprep.subr.mxu0 0.0
        %7266 = vmatpush1.msra.mxu0 0.0
        %7267 = vmatprep.subr.mxu0 0.0
        %7268 = vmatpush1.msra.mxu0 0.0
        %7269 = vmatprep.subr.mxu0 0.0
        %7270 = vmatpush1.msra.mxu0 0.0
        %7271 = vmatprep.subr.mxu0 0.0
        %7272 = vmatpush1.msra.mxu0 0.0
        %7273 = vmatprep.subr.mxu0 0.0
        %7274 = vmatpush1.msra.mxu0 0.0
        %7275 = vmatprep.subr.mxu0 0.0
        %7276 = vmatpush1.msra.mxu0 0.0
        %7277 = vmatprep.subr.mxu0 0.0
        %7278 = vmatpush1.msra.mxu0 0.0
        %7279 = vmatprep.subr.mxu0 0.0
        %7280 = vmatpush1.msra.mxu0 0.0
        %7281 = vmatprep.subr.mxu0 0.0
        %7282 = vmatpush1.msra.mxu0 0.0
        %7283 = vmatprep.subr.mxu0 0.0
        %7284 = vmatpush1.msra.mxu0 0.0
        %7285 = vmatprep.subr.mxu0 0.0
        %7286 = vmatpush1.msra.mxu0 0.0
        %7287 = vmatprep.subr.mxu0 0.0
        %7288 = vmatpush1.msra.mxu0 0.0
        %7289 = vmatprep.subr.mxu0 0.0
        %7290 = vmatpush1.msra.mxu0 0.0
        %7291 = vmatprep.subr.mxu0 0.0
        %7292 = vmatpush1.msra.mxu0 0.0
        %7293 = vmatprep.subr.mxu0 0.0
        %7294 = vmatpush1.msra.mxu0 0.0
        %7295 = vmatprep.subr.mxu0 0.0
        %7296 = vmatpush1.msra.mxu0 0.0
        %7297 = vmatprep.subr.mxu0 0.0
        %7298 = vmatpush1.msra.mxu0 0.0
        %7299 = vmatprep.subr.mxu0 0.0
        %7300 = vmatpush1.msra.mxu0 0.0
        %7301 = vmatprep.subr.mxu0 0.0
        %7302 = vmatpush1.msra.mxu0 0.0
        %7303 = vmatprep.subr.mxu0 0.0
        %7304 = vmatpush1.msra.mxu0 0.0
        %7305 = vmatprep.subr.mxu0 0.0
        %7306 = vmatpush1.msra.mxu0 0.0
        %7307 = vmatprep.subr.mxu0 0.0
        %7308 = vmatpush1.msra.mxu0 0.0
        %7309 = vmatprep.subr.mxu0 0.0
        %7310 = vmatpush1.msra.mxu0 0.0
        %7311 = vmatprep.subr.mxu0 0.0
        %7312 = vmatpush1.msra.mxu0 0.0
        %7313 = vmatprep.subr.mxu0 0.0
        %7314 = vmatpush1.msra.mxu0 0.0
        %7315 = vmatprep.mubr.f32.mxu0 0.0
        %7316 = vmatmul.mubr.f32.gmra.mrb[0].mxu0 %v7039
        %v7317 = vpop.f32.mrb[0].mxu0
        %v7318 = vadd.f32 %v7033, %v7317
        %v7319 = vpop.f32.mrb[0].mxu0
        %7320 = vdwg.mxu0
        %s7321 = scalar_lea.vmem %s7, 1280
        %v7322 = vld [vmem:[%s7321] sm:$0xff]
        %v7323 = vld [vmem:[%s7321 + $0x8] sm:$0xff]
        %v7324 = vld [vmem:[%s7321 + $0x10] sm:$0xff]
        %v7325 = vld [vmem:[%s7321 + $0x18] sm:$0xff]
        %v7326 = vld [vmem:[%s7321 + $0x20] sm:$0xff]
        %v7327 = vld [vmem:[%s7321 + $0x28] sm:$0xff]
        %v7328 = vld [vmem:[%s7321 + $0x30] sm:$0xff]
        %v7329 = vld [vmem:[%s7321 + $0x38] sm:$0xff]
        %v7330 = vld [vmem:[%s7321 + $0x40] sm:$0xff]
        %v7331 = vld [vmem:[%s7321 + $0x48] sm:$0xff]
        %v7332 = vld [vmem:[%s7321 + $0x50] sm:$0xff]
        %v7333 = vld [vmem:[%s7321 + $0x58] sm:$0xff]
        %v7334 = vld [vmem:[%s7321 + $0x60] sm:$0xff]
        %v7335 = vld [vmem:[%s7321 + $0x68] sm:$0xff]
        %v7336 = vld [vmem:[%s7321 + $0x70] sm:$0xff]
        %v7337 = vld [vmem:[%s7321 + $0x78] sm:$0xff]
        %s7338 = scalar_lea.vmem %s5, 40
        %v7339 = vld [vmem:[%s7338] sm:$0x1]
        %v7340 = vld [vmem:[%s7338 + $0x1] sm:$0x1]
        %v7341 = vld [vmem:[%s7338 + $0x2] sm:$0x1]
        %v7342 = vld [vmem:[%s7338 + $0x3] sm:$0x1]
        %v7347 = vlaneseq
        %v7348 = vshrl.u32 %v7347, 7
        %v7349 = vsub.s32 0, %v7348
        %v7350 = vrot.slane %v7339, %v7349
        %v7351 = vlaneseq
        %v7352 = vshrl.u32 %v7351, 7
        %v7353 = vsub.s32 0, %v7352
        %v7354 = vrot.slane %v7340, %v7353
        %v7355 = vlaneseq
        %v7356 = vshrl.u32 %v7355, 7
        %v7357 = vsub.s32 0, %v7356
        %v7358 = vrot.slane %v7341, %v7357
        %v7359 = vlaneseq
        %v7360 = vshrl.u32 %v7359, 7
        %v7361 = vsub.s32 0, %v7360
        %v7362 = vrot.slane %v7342, %v7361
        %7367 = vmatprep.subr.mxu0 0.0
        %7368 = vmatpush1.msra.mxu0 %v7322
        %7369 = vmatprep.subr.mxu0 0.0
        %7370 = vmatpush1.msra.mxu0 %v7323
        %7371 = vmatprep.subr.mxu0 0.0
        %7372 = vmatpush1.msra.mxu0 %v7324
        %7373 = vmatprep.subr.mxu0 0.0
        %7374 = vmatpush1.msra.mxu0 %v7325
        %7375 = vmatprep.subr.mxu0 0.0
        %7376 = vmatpush1.msra.mxu0 0.0
        %7377 = vmatprep.subr.mxu0 0.0
        %7378 = vmatpush1.msra.mxu0 0.0
        %7379 = vmatprep.subr.mxu0 0.0
        %7380 = vmatpush1.msra.mxu0 0.0
        %7381 = vmatprep.subr.mxu0 0.0
        %7382 = vmatpush1.msra.mxu0 0.0
        %7383 = vmatprep.subr.mxu0 0.0
        %7384 = vmatpush1.msra.mxu0 0.0
        %7385 = vmatprep.subr.mxu0 0.0
        %7386 = vmatpush1.msra.mxu0 0.0
        %7387 = vmatprep.subr.mxu0 0.0
        %7388 = vmatpush1.msra.mxu0 0.0
        %7389 = vmatprep.subr.mxu0 0.0
        %7390 = vmatpush1.msra.mxu0 0.0
        %7391 = vmatprep.subr.mxu0 0.0
        %7392 = vmatpush1.msra.mxu0 0.0
        %7393 = vmatprep.subr.mxu0 0.0
        %7394 = vmatpush1.msra.mxu0 0.0
        %7395 = vmatprep.subr.mxu0 0.0
        %7396 = vmatpush1.msra.mxu0 0.0
        %7397 = vmatprep.subr.mxu0 0.0
        %7398 = vmatpush1.msra.mxu0 0.0
        %7399 = vmatprep.subr.mxu0 0.0
        %7400 = vmatpush1.msra.mxu0 0.0
        %7401 = vmatprep.subr.mxu0 0.0
        %7402 = vmatpush1.msra.mxu0 0.0
        %7403 = vmatprep.subr.mxu0 0.0
        %7404 = vmatpush1.msra.mxu0 0.0
        %7405 = vmatprep.subr.mxu0 0.0
        %7406 = vmatpush1.msra.mxu0 0.0
        %7407 = vmatprep.subr.mxu0 0.0
        %7408 = vmatpush1.msra.mxu0 0.0
        %7409 = vmatprep.subr.mxu0 0.0
        %7410 = vmatpush1.msra.mxu0 0.0
        %7411 = vmatprep.subr.mxu0 0.0
        %7412 = vmatpush1.msra.mxu0 0.0
        %7413 = vmatprep.subr.mxu0 0.0
        %7414 = vmatpush1.msra.mxu0 0.0
        %7415 = vmatprep.subr.mxu0 0.0
        %7416 = vmatpush1.msra.mxu0 0.0
        %7417 = vmatprep.subr.mxu0 0.0
        %7418 = vmatpush1.msra.mxu0 0.0
        %7419 = vmatprep.subr.mxu0 0.0
        %7420 = vmatpush1.msra.mxu0 0.0
        %7421 = vmatprep.subr.mxu0 0.0
        %7422 = vmatpush1.msra.mxu0 0.0
        %7423 = vmatprep.subr.mxu0 0.0
        %7424 = vmatpush1.msra.mxu0 0.0
        %7425 = vmatprep.subr.mxu0 0.0
        %7426 = vmatpush1.msra.mxu0 0.0
        %7427 = vmatprep.subr.mxu0 0.0
        %7428 = vmatpush1.msra.mxu0 0.0
        %7429 = vmatprep.subr.mxu0 0.0
        %7430 = vmatpush1.msra.mxu0 0.0
        %7431 = vmatprep.mubr.f32.mxu0 0.0
        %7432 = vmatmul.mubr.f32.gmra.mrb[0].mxu0 %v7039
        %v7433 = vpop.f32.mrb[0].mxu0
        %v7434 = vadd.f32 %v7350, %v7433
        %v7435 = vpop.f32.mrb[0].mxu0
        %7436 = vdwg.mxu0
        %7437 = vmatprep.subr.mxu0 0.0
        %7438 = vmatpush1.msra.mxu0 %v7326
        %7439 = vmatprep.subr.mxu0 0.0
        %7440 = vmatpush1.msra.mxu0 %v7327
        %7441 = vmatprep.subr.mxu0 0.0
        %7442 = vmatpush1.msra.mxu0 %v7328
        %7443 = vmatprep.subr.mxu0 0.0
        %7444 = vmatpush1.msra.mxu0 %v7329
        %7445 = vmatprep.subr.mxu0 0.0
        %7446 = vmatpush1.msra.mxu0 0.0
        %7447 = vmatprep.subr.mxu0 0.0
        %7448 = vmatpush1.msra.mxu0 0.0
        %7449 = vmatprep.subr.mxu0 0.0
        %7450 = vmatpush1.msra.mxu0 0.0
        %7451 = vmatprep.subr.mxu0 0.0
        %7452 = vmatpush1.msra.mxu0 0.0
        %7453 = vmatprep.subr.mxu0 0.0
        %7454 = vmatpush1.msra.mxu0 0.0
        %7455 = vmatprep.subr.mxu0 0.0
        %7456 = vmatpush1.msra.mxu0 0.0
        %7457 = vmatprep.subr.mxu0 0.0
        %7458 = vmatpush1.msra.mxu0 0.0
        %7459 = vmatprep.subr.mxu0 0.0
        %7460 = vmatpush1.msra.mxu0 0.0
        %7461 = vmatprep.subr.mxu0 0.0
        %7462 = vmatpush1.msra.mxu0 0.0
        %7463 = vmatprep.subr.mxu0 0.0
        %7464 = vmatpush1.msra.mxu0 0.0
        %7465 = vmatprep.subr.mxu0 0.0
        %7466 = vmatpush1.msra.mxu0 0.0
        %7467 = vmatprep.subr.mxu0 0.0
        %7468 = vmatpush1.msra.mxu0 0.0
        %7469 = vmatprep.subr.mxu0 0.0
        %7470 = vmatpush1.msra.mxu0 0.0
        %7471 = vmatprep.subr.mxu0 0.0
        %7472 = vmatpush1.msra.mxu0 0.0
        %7473 = vmatprep.subr.mxu0 0.0
        %7474 = vmatpush1.msra.mxu0 0.0
        %7475 = vmatprep.subr.mxu0 0.0
        %7476 = vmatpush1.msra.mxu0 0.0
        %7477 = vmatprep.subr.mxu0 0.0
        %7478 = vmatpush1.msra.mxu0 0.0
        %7479 = vmatprep.subr.mxu0 0.0
        %7480 = vmatpush1.msra.mxu0 0.0
        %7481 = vmatprep.subr.mxu0 0.0
        %7482 = vmatpush1.msra.mxu0 0.0
        %7483 = vmatprep.subr.mxu0 0.0
        %7484 = vmatpush1.msra.mxu0 0.0
        %7485 = vmatprep.subr.mxu0 0.0
        %7486 = vmatpush1.msra.mxu0 0.0
        %7487 = vmatprep.subr.mxu0 0.0
        %7488 = vmatpush1.msra.mxu0 0.0
        %7489 = vmatprep.subr.mxu0 0.0
        %7490 = vmatpush1.msra.mxu0 0.0
        %7491 = vmatprep.subr.mxu0 0.0
        %7492 = vmatpush1.msra.mxu0 0.0
        %7493 = vmatprep.subr.mxu0 0.0
        %7494 = vmatpush1.msra.mxu0 0.0
        %7495 = vmatprep.subr.mxu0 0.0
        %7496 = vmatpush1.msra.mxu0 0.0
        %7497 = vmatprep.subr.mxu0 0.0
        %7498 = vmatpush1.msra.mxu0 0.0
        %7499 = vmatprep.subr.mxu0 0.0
        %7500 = vmatpush1.msra.mxu0 0.0
        %7501 = vmatprep.mubr.f32.mxu0 0.0
        %7502 = vmatmul.mubr.f32.gmra.mrb[0].mxu0 %v7039
        %v7503 = vpop.f32.mrb[0].mxu0
        %v7504 = vadd.f32 %v7354, %v7503
        %v7505 = vpop.f32.mrb[0].mxu0
        %7506 = vdwg.mxu0
        %7507 = vmatprep.subr.mxu0 0.0
        %7508 = vmatpush1.msra.mxu0 %v7330
        %7509 = vmatprep.subr.mxu0 0.0
        %7510 = vmatpush1.msra.mxu0 %v7331
        %7511 = vmatprep.subr.mxu0 0.0
        %7512 = vmatpush1.msra.mxu0 %v7332
        %7513 = vmatprep.subr.mxu0 0.0
        %7514 = vmatpush1.msra.mxu0 %v7333
        %7515 = vmatprep.subr.mxu0 0.0
        %7516 = vmatpush1.msra.mxu0 0.0
        %7517 = vmatprep.subr.mxu0 0.0
        %7518 = vmatpush1.msra.mxu0 0.0
        %7519 = vmatprep.subr.mxu0 0.0
        %7520 = vmatpush1.msra.mxu0 0.0
        %7521 = vmatprep.subr.mxu0 0.0
        %7522 = vmatpush1.msra.mxu0 0.0
        %7523 = vmatprep.subr.mxu0 0.0
        %7524 = vmatpush1.msra.mxu0 0.0
        %7525 = vmatprep.subr.mxu0 0.0
        %7526 = vmatpush1.msra.mxu0 0.0
        %7527 = vmatprep.subr.mxu0 0.0
        %7528 = vmatpush1.msra.mxu0 0.0
        %7529 = vmatprep.subr.mxu0 0.0
        %7530 = vmatpush1.msra.mxu0 0.0
        %7531 = vmatprep.subr.mxu0 0.0
        %7532 = vmatpush1.msra.mxu0 0.0
        %7533 = vmatprep.subr.mxu0 0.0
        %7534 = vmatpush1.msra.mxu0 0.0
        %7535 = vmatprep.subr.mxu0 0.0
        %7536 = vmatpush1.msra.mxu0 0.0
        %7537 = vmatprep.subr.mxu0 0.0
        %7538 = vmatpush1.msra.mxu0 0.0
        %7539 = vmatprep.subr.mxu0 0.0
        %7540 = vmatpush1.msra.mxu0 0.0
        %7541 = vmatprep.subr.mxu0 0.0
        %7542 = vmatpush1.msra.mxu0 0.0
        %7543 = vmatprep.subr.mxu0 0.0
        %7544 = vmatpush1.msra.mxu0 0.0
        %7545 = vmatprep.subr.mxu0 0.0
        %7546 = vmatpush1.msra.mxu0 0.0
        %7547 = vmatprep.subr.mxu0 0.0
        %7548 = vmatpush1.msra.mxu0 0.0
        %7549 = vmatprep.subr.mxu0 0.0
        %7550 = vmatpush1.msra.mxu0 0.0
        %7551 = vmatprep.subr.mxu0 0.0
        %7552 = vmatpush1.msra.mxu0 0.0
        %7553 = vmatprep.subr.mxu0 0.0
        %7554 = vmatpush1.msra.mxu0 0.0
        %7555 = vmatprep.subr.mxu0 0.0
        %7556 = vmatpush1.msra.mxu0 0.0
        %7557 = vmatprep.subr.mxu0 0.0
        %7558 = vmatpush1.msra.mxu0 0.0
        %7559 = vmatprep.subr.mxu0 0.0
        %7560 = vmatpush1.msra.mxu0 0.0
        %7561 = vmatprep.subr.mxu0 0.0
        %7562 = vmatpush1.msra.mxu0 0.0
        %7563 = vmatprep.subr.mxu0 0.0
        %7564 = vmatpush1.msra.mxu0 0.0
        %7565 = vmatprep.subr.mxu0 0.0
        %7566 = vmatpush1.msra.mxu0 0.0
        %7567 = vmatprep.subr.mxu0 0.0
        %7568 = vmatpush1.msra.mxu0 0.0
        %7569 = vmatprep.subr.mxu0 0.0
        %7570 = vmatpush1.msra.mxu0 0.0
        %7571 = vmatprep.mubr.f32.mxu0 0.0
        %7572 = vmatmul.mubr.f32.gmra.mrb[0].mxu0 %v7039
        %v7573 = vpop.f32.mrb[0].mxu0
        %v7574 = vadd.f32 %v7358, %v7573
        %v7575 = vpop.f32.mrb[0].mxu0
        %7576 = vdwg.mxu0
        %7577 = vmatprep.subr.mxu0 0.0
        %7578 = vmatpush1.msra.mxu0 %v7334
        %7579 = vmatprep.subr.mxu0 0.0
        %7580 = vmatpush1.msra.mxu0 %v7335
        %7581 = vmatprep.subr.mxu0 0.0
        %7582 = vmatpush1.msra.mxu0 %v7336
        %7583 = vmatprep.subr.mxu0 0.0
        %7584 = vmatpush1.msra.mxu0 %v7337
        %7585 = vmatprep.subr.mxu0 0.0
        %7586 = vmatpush1.msra.mxu0 0.0
        %7587 = vmatprep.subr.mxu0 0.0
        %7588 = vmatpush1.msra.mxu0 0.0
        %7589 = vmatprep.subr.mxu0 0.0
        %7590 = vmatpush1.msra.mxu0 0.0
        %7591 = vmatprep.subr.mxu0 0.0
        %7592 = vmatpush1.msra.mxu0 0.0
        %7593 = vmatprep.subr.mxu0 0.0
        %7594 = vmatpush1.msra.mxu0 0.0
        %7595 = vmatprep.subr.mxu0 0.0
        %7596 = vmatpush1.msra.mxu0 0.0
        %7597 = vmatprep.subr.mxu0 0.0
        %7598 = vmatpush1.msra.mxu0 0.0
        %7599 = vmatprep.subr.mxu0 0.0
        %7600 = vmatpush1.msra.mxu0 0.0
        %7601 = vmatprep.subr.mxu0 0.0
        %7602 = vmatpush1.msra.mxu0 0.0
        %7603 = vmatprep.subr.mxu0 0.0
        %7604 = vmatpush1.msra.mxu0 0.0
        %7605 = vmatprep.subr.mxu0 0.0
        %7606 = vmatpush1.msra.mxu0 0.0
        %7607 = vmatprep.subr.mxu0 0.0
        %7608 = vmatpush1.msra.mxu0 0.0
        %7609 = vmatprep.subr.mxu0 0.0
        %7610 = vmatpush1.msra.mxu0 0.0
        %7611 = vmatprep.subr.mxu0 0.0
        %7612 = vmatpush1.msra.mxu0 0.0
        %7613 = vmatprep.subr.mxu0 0.0
        %7614 = vmatpush1.msra.mxu0 0.0
        %7615 = vmatprep.subr.mxu0 0.0
        %7616 = vmatpush1.msra.mxu0 0.0
        %7617 = vmatprep.subr.mxu0 0.0
        %7618 = vmatpush1.msra.mxu0 0.0
        %7619 = vmatprep.subr.mxu0 0.0
        %7620 = vmatpush1.msra.mxu0 0.0
        %7621 = vmatprep.subr.mxu0 0.0
        %7622 = vmatpush1.msra.mxu0 0.0
        %7623 = vmatprep.subr.mxu0 0.0
        %7624 = vmatpush1.msra.mxu0 0.0
        %7625 = vmatprep.subr.mxu0 0.0
        %7626 = vmatpush1.msra.mxu0 0.0
        %7627 = vmatprep.subr.mxu0 0.0
        %7628 = vmatpush1.msra.mxu0 0.0
        %7629 = vmatprep.subr.mxu0 0.0
        %7630 = vmatpush1.msra.mxu0 0.0
        %7631 = vmatprep.subr.mxu0 0.0
        %7632 = vmatpush1.msra.mxu0 0.0
        %7633 = vmatprep.subr.mxu0 0.0
        %7634 = vmatpush1.msra.mxu0 0.0
        %7635 = vmatprep.subr.mxu0 0.0
        %7636 = vmatpush1.msra.mxu0 0.0
        %7637 = vmatprep.subr.mxu0 0.0
        %7638 = vmatpush1.msra.mxu0 0.0
        %7639 = vmatprep.subr.mxu0 0.0
        %7640 = vmatpush1.msra.mxu0 0.0
        %7641 = vmatprep.mubr.f32.mxu0 0.0
        %7642 = vmatmul.mubr.f32.gmra.mrb[0].mxu0 %v7039
        %v7643 = vpop.f32.mrb[0].mxu0
        %v7644 = vadd.f32 %v7362, %v7643
        %v7645 = vpop.f32.mrb[0].mxu0
        %7646 = vdwg.mxu0
        %s7647 = scalar_lea.vmem %s7, 1408
        %v7648 = vld [vmem:[%s7647] sm:$0xff]
        %v7649 = vld [vmem:[%s7647 + $0x8] sm:$0xff]
        %v7650 = vld [vmem:[%s7647 + $0x10] sm:$0xff]
        %v7651 = vld [vmem:[%s7647 + $0x18] sm:$0xff]
        %v7652 = vld [vmem:[%s7647 + $0x20] sm:$0xff]
        %v7653 = vld [vmem:[%s7647 + $0x28] sm:$0xff]
        %v7654 = vld [vmem:[%s7647 + $0x30] sm:$0xff]
        %v7655 = vld [vmem:[%s7647 + $0x38] sm:$0xff]
        %v7656 = vld [vmem:[%s7647 + $0x40] sm:$0xff]
        %v7657 = vld [vmem:[%s7647 + $0x48] sm:$0xff]
        %v7658 = vld [vmem:[%s7647 + $0x50] sm:$0xff]
        %v7659 = vld [vmem:[%s7647 + $0x58] sm:$0xff]
        %v7660 = vld [vmem:[%s7647 + $0x60] sm:$0xff]
        %v7661 = vld [vmem:[%s7647 + $0x68] sm:$0xff]
        %v7662 = vld [vmem:[%s7647 + $0x70] sm:$0xff]
        %v7663 = vld [vmem:[%s7647 + $0x78] sm:$0xff]
        %s7664 = scalar_lea.vmem %s5, 44
        %v7665 = vld [vmem:[%s7664] sm:$0x1]
        %v7666 = vld [vmem:[%s7664 + $0x1] sm:$0x1]
        %v7667 = vld [vmem:[%s7664 + $0x2] sm:$0x1]
        %v7668 = vld [vmem:[%s7664 + $0x3] sm:$0x1]
        %v7673 = vlaneseq
        %v7674 = vshrl.u32 %v7673, 7
        %v7675 = vsub.s32 0, %v7674
        %v7676 = vrot.slane %v7665, %v7675
        %v7677 = vlaneseq
        %v7678 = vshrl.u32 %v7677, 7
        %v7679 = vsub.s32 0, %v7678
        %v7680 = vrot.slane %v7666, %v7679
        %v7681 = vlaneseq
        %v7682 = vshrl.u32 %v7681, 7
        %v7683 = vsub.s32 0, %v7682
        %v7684 = vrot.slane %v7667, %v7683
        %v7685 = vlaneseq
        %v7686 = vshrl.u32 %v7685, 7
        %v7687 = vsub.s32 0, %v7686
        %v7688 = vrot.slane %v7668, %v7687
        %7693 = vmatprep.subr.mxu0 0.0
        %7694 = vmatpush1.msra.mxu0 %v7648
        %7695 = vmatprep.subr.mxu0 0.0
        %7696 = vmatpush1.msra.mxu0 %v7649
        %7697 = vmatprep.subr.mxu0 0.0
        %7698 = vmatpush1.msra.mxu0 %v7650
        %7699 = vmatprep.subr.mxu0 0.0
        %7700 = vmatpush1.msra.mxu0 %v7651
        %7701 = vmatprep.subr.mxu0 0.0
        %7702 = vmatpush1.msra.mxu0 0.0
        %7703 = vmatprep.subr.mxu0 0.0
        %7704 = vmatpush1.msra.mxu0 0.0
        %7705 = vmatprep.subr.mxu0 0.0
        %7706 = vmatpush1.msra.mxu0 0.0
        %7707 = vmatprep.subr.mxu0 0.0
        %7708 = vmatpush1.msra.mxu0 0.0
        %7709 = vmatprep.subr.mxu0 0.0
        %7710 = vmatpush1.msra.mxu0 0.0
        %7711 = vmatprep.subr.mxu0 0.0
        %7712 = vmatpush1.msra.mxu0 0.0
        %7713 = vmatprep.subr.mxu0 0.0
        %7714 = vmatpush1.msra.mxu0 0.0
        %7715 = vmatprep.subr.mxu0 0.0
        %7716 = vmatpush1.msra.mxu0 0.0
        %7717 = vmatprep.subr.mxu0 0.0
        %7718 = vmatpush1.msra.mxu0 0.0
        %7719 = vmatprep.subr.mxu0 0.0
        %7720 = vmatpush1.msra.mxu0 0.0
        %7721 = vmatprep.subr.mxu0 0.0
        %7722 = vmatpush1.msra.mxu0 0.0
        %7723 = vmatprep.subr.mxu0 0.0
        %7724 = vmatpush1.msra.mxu0 0.0
        %7725 = vmatprep.subr.mxu0 0.0
        %7726 = vmatpush1.msra.mxu0 0.0
        %7727 = vmatprep.subr.mxu0 0.0
        %7728 = vmatpush1.msra.mxu0 0.0
        %7729 = vmatprep.subr.mxu0 0.0
        %7730 = vmatpush1.msra.mxu0 0.0
        %7731 = vmatprep.subr.mxu0 0.0
        %7732 = vmatpush1.msra.mxu0 0.0
        %7733 = vmatprep.subr.mxu0 0.0
        %7734 = vmatpush1.msra.mxu0 0.0
        %7735 = vmatprep.subr.mxu0 0.0
        %7736 = vmatpush1.msra.mxu0 0.0
        %7737 = vmatprep.subr.mxu0 0.0
        %7738 = vmatpush1.msra.mxu0 0.0
        %7739 = vmatprep.subr.mxu0 0.0
        %7740 = vmatpush1.msra.mxu0 0.0
        %7741 = vmatprep.subr.mxu0 0.0
        %7742 = vmatpush1.msra.mxu0 0.0
        %7743 = vmatprep.subr.mxu0 0.0
        %7744 = vmatpush1.msra.mxu0 0.0
        %7745 = vmatprep.subr.mxu0 0.0
        %7746 = vmatpush1.msra.mxu0 0.0
        %7747 = vmatprep.subr.mxu0 0.0
        %7748 = vmatpush1.msra.mxu0 0.0
        %7749 = vmatprep.subr.mxu0 0.0
        %7750 = vmatpush1.msra.mxu0 0.0
        %7751 = vmatprep.subr.mxu0 0.0
        %7752 = vmatpush1.msra.mxu0 0.0
        %7753 = vmatprep.subr.mxu0 0.0
        %7754 = vmatpush1.msra.mxu0 0.0
        %7755 = vmatprep.subr.mxu0 0.0
        %7756 = vmatpush1.msra.mxu0 0.0
        %7757 = vmatprep.mubr.f32.mxu0 0.0
        %7758 = vmatmul.mubr.f32.gmra.mrb[0].mxu0 %v7039
        %v7759 = vpop.f32.mrb[0].mxu0
        %v7760 = vadd.f32 %v7676, %v7759
        %v7761 = vpop.f32.mrb[0].mxu0
        %7762 = vdwg.mxu0
        %7763 = vmatprep.subr.mxu0 0.0
        %7764 = vmatpush1.msra.mxu0 %v7652
        %7765 = vmatprep.subr.mxu0 0.0
        %7766 = vmatpush1.msra.mxu0 %v7653
        %7767 = vmatprep.subr.mxu0 0.0
        %7768 = vmatpush1.msra.mxu0 %v7654
        %7769 = vmatprep.subr.mxu0 0.0
        %7770 = vmatpush1.msra.mxu0 %v7655
        %7771 = vmatprep.subr.mxu0 0.0
        %7772 = vmatpush1.msra.mxu0 0.0
        %7773 = vmatprep.subr.mxu0 0.0
        %7774 = vmatpush1.msra.mxu0 0.0
        %7775 = vmatprep.subr.mxu0 0.0
        %7776 = vmatpush1.msra.mxu0 0.0
        %7777 = vmatprep.subr.mxu0 0.0
        %7778 = vmatpush1.msra.mxu0 0.0
        %7779 = vmatprep.subr.mxu0 0.0
        %7780 = vmatpush1.msra.mxu0 0.0
        %7781 = vmatprep.subr.mxu0 0.0
        %7782 = vmatpush1.msra.mxu0 0.0
        %7783 = vmatprep.subr.mxu0 0.0
        %7784 = vmatpush1.msra.mxu0 0.0
        %7785 = vmatprep.subr.mxu0 0.0
        %7786 = vmatpush1.msra.mxu0 0.0
        %7787 = vmatprep.subr.mxu0 0.0
        %7788 = vmatpush1.msra.mxu0 0.0
        %7789 = vmatprep.subr.mxu0 0.0
        %7790 = vmatpush1.msra.mxu0 0.0
        %7791 = vmatprep.subr.mxu0 0.0
        %7792 = vmatpush1.msra.mxu0 0.0
        %7793 = vmatprep.subr.mxu0 0.0
        %7794 = vmatpush1.msra.mxu0 0.0
        %7795 = vmatprep.subr.mxu0 0.0
        %7796 = vmatpush1.msra.mxu0 0.0
        %7797 = vmatprep.subr.mxu0 0.0
        %7798 = vmatpush1.msra.mxu0 0.0
        %7799 = vmatprep.subr.mxu0 0.0
        %7800 = vmatpush1.msra.mxu0 0.0
        %7801 = vmatprep.subr.mxu0 0.0
        %7802 = vmatpush1.msra.mxu0 0.0
        %7803 = vmatprep.subr.mxu0 0.0
        %7804 = vmatpush1.msra.mxu0 0.0
        %7805 = vmatprep.subr.mxu0 0.0
        %7806 = vmatpush1.msra.mxu0 0.0
        %7807 = vmatprep.subr.mxu0 0.0
        %7808 = vmatpush1.msra.mxu0 0.0
        %7809 = vmatprep.subr.mxu0 0.0
        %7810 = vmatpush1.msra.mxu0 0.0
        %7811 = vmatprep.subr.mxu0 0.0
        %7812 = vmatpush1.msra.mxu0 0.0
        %7813 = vmatprep.subr.mxu0 0.0
        %7814 = vmatpush1.msra.mxu0 0.0
        %7815 = vmatprep.subr.mxu0 0.0
        %7816 = vmatpush1.msra.mxu0 0.0
        %7817 = vmatprep.subr.mxu0 0.0
        %7818 = vmatpush1.msra.mxu0 0.0
        %7819 = vmatprep.subr.mxu0 0.0
        %7820 = vmatpush1.msra.mxu0 0.0
        %7821 = vmatprep.subr.mxu0 0.0
        %7822 = vmatpush1.msra.mxu0 0.0
        %7823 = vmatprep.subr.mxu0 0.0
        %7824 = vmatpush1.msra.mxu0 0.0
        %7825 = vmatprep.subr.mxu0 0.0
        %7826 = vmatpush1.msra.mxu0 0.0
        %7827 = vmatprep.mubr.f32.mxu0 0.0
        %7828 = vmatmul.mubr.f32.gmra.mrb[0].mxu0 %v7039
        %v7829 = vpop.f32.mrb[0].mxu0
        %v7830 = vadd.f32 %v7680, %v7829
        %v7831 = vpop.f32.mrb[0].mxu0
        %7832 = vdwg.mxu0
        %7833 = vmatprep.subr.mxu0 0.0
        %7834 = vmatpush1.msra.mxu0 %v7656
        %7835 = vmatprep.subr.mxu0 0.0
        %7836 = vmatpush1.msra.mxu0 %v7657
        %7837 = vmatprep.subr.mxu0 0.0
        %7838 = vmatpush1.msra.mxu0 %v7658
        %7839 = vmatprep.subr.mxu0 0.0
        %7840 = vmatpush1.msra.mxu0 %v7659
        %7841 = vmatprep.subr.mxu0 0.0
        %7842 = vmatpush1.msra.mxu0 0.0
        %7843 = vmatprep.subr.mxu0 0.0
        %7844 = vmatpush1.msra.mxu0 0.0
        %7845 = vmatprep.subr.mxu0 0.0
        %7846 = vmatpush1.msra.mxu0 0.0
        %7847 = vmatprep.subr.mxu0 0.0
        %7848 = vmatpush1.msra.mxu0 0.0
        %7849 = vmatprep.subr.mxu0 0.0
        %7850 = vmatpush1.msra.mxu0 0.0
        %7851 = vmatprep.subr.mxu0 0.0
        %7852 = vmatpush1.msra.mxu0 0.0
        %7853 = vmatprep.subr.mxu0 0.0
        %7854 = vmatpush1.msra.mxu0 0.0
        %7855 = vmatprep.subr.mxu0 0.0
        %7856 = vmatpush1.msra.mxu0 0.0
        %7857 = vmatprep.subr.mxu0 0.0
        %7858 = vmatpush1.msra.mxu0 0.0
        %7859 = vmatprep.subr.mxu0 0.0
        %7860 = vmatpush1.msra.mxu0 0.0
        %7861 = vmatprep.subr.mxu0 0.0
        %7862 = vmatpush1.msra.mxu0 0.0
        %7863 = vmatprep.subr.mxu0 0.0
        %7864 = vmatpush1.msra.mxu0 0.0
        %7865 = vmatprep.subr.mxu0 0.0
        %7866 = vmatpush1.msra.mxu0 0.0
        %7867 = vmatprep.subr.mxu0 0.0
        %7868 = vmatpush1.msra.mxu0 0.0
        %7869 = vmatprep.subr.mxu0 0.0
        %7870 = vmatpush1.msra.mxu0 0.0
        %7871 = vmatprep.subr.mxu0 0.0
        %7872 = vmatpush1.msra.mxu0 0.0
        %7873 = vmatprep.subr.mxu0 0.0
        %7874 = vmatpush1.msra.mxu0 0.0
        %7875 = vmatprep.subr.mxu0 0.0
        %7876 = vmatpush1.msra.mxu0 0.0
        %7877 = vmatprep.subr.mxu0 0.0
        %7878 = vmatpush1.msra.mxu0 0.0
        %7879 = vmatprep.subr.mxu0 0.0
        %7880 = vmatpush1.msra.mxu0 0.0
        %7881 = vmatprep.subr.mxu0 0.0
        %7882 = vmatpush1.msra.mxu0 0.0
        %7883 = vmatprep.subr.mxu0 0.0
        %7884 = vmatpush1.msra.mxu0 0.0
        %7885 = vmatprep.subr.mxu0 0.0
        %7886 = vmatpush1.msra.mxu0 0.0
        %7887 = vmatprep.subr.mxu0 0.0
        %7888 = vmatpush1.msra.mxu0 0.0
        %7889 = vmatprep.subr.mxu0 0.0
        %7890 = vmatpush1.msra.mxu0 0.0
        %7891 = vmatprep.subr.mxu0 0.0
        %7892 = vmatpush1.msra.mxu0 0.0
        %7893 = vmatprep.subr.mxu0 0.0
        %7894 = vmatpush1.msra.mxu0 0.0
        %7895 = vmatprep.subr.mxu0 0.0
        %7896 = vmatpush1.msra.mxu0 0.0
        %7897 = vmatprep.mubr.f32.mxu0 0.0
        %7898 = vmatmul.mubr.f32.gmra.mrb[0].mxu0 %v7039
        %v7899 = vpop.f32.mrb[0].mxu0
        %v7900 = vadd.f32 %v7684, %v7899
        %v7901 = vpop.f32.mrb[0].mxu0
        %7902 = vdwg.mxu0
        %7903 = vmatprep.subr.mxu0 0.0
        %7904 = vmatpush1.msra.mxu0 %v7660
        %7905 = vmatprep.subr.mxu0 0.0
        %7906 = vmatpush1.msra.mxu0 %v7661
        %7907 = vmatprep.subr.mxu0 0.0
        %7908 = vmatpush1.msra.mxu0 %v7662
        %7909 = vmatprep.subr.mxu0 0.0
        %7910 = vmatpush1.msra.mxu0 %v7663
        %7911 = vmatprep.subr.mxu0 0.0
        %7912 = vmatpush1.msra.mxu0 0.0
        %7913 = vmatprep.subr.mxu0 0.0
        %7914 = vmatpush1.msra.mxu0 0.0
        %7915 = vmatprep.subr.mxu0 0.0
        %7916 = vmatpush1.msra.mxu0 0.0
        %7917 = vmatprep.subr.mxu0 0.0
        %7918 = vmatpush1.msra.mxu0 0.0
        %7919 = vmatprep.subr.mxu0 0.0
        %7920 = vmatpush1.msra.mxu0 0.0
        %7921 = vmatprep.subr.mxu0 0.0
        %7922 = vmatpush1.msra.mxu0 0.0
        %7923 = vmatprep.subr.mxu0 0.0
        %7924 = vmatpush1.msra.mxu0 0.0
        %7925 = vmatprep.subr.mxu0 0.0
        %7926 = vmatpush1.msra.mxu0 0.0
        %7927 = vmatprep.subr.mxu0 0.0
        %7928 = vmatpush1.msra.mxu0 0.0
        %7929 = vmatprep.subr.mxu0 0.0
        %7930 = vmatpush1.msra.mxu0 0.0
        %7931 = vmatprep.subr.mxu0 0.0
        %7932 = vmatpush1.msra.mxu0 0.0
        %7933 = vmatprep.subr.mxu0 0.0
        %7934 = vmatpush1.msra.mxu0 0.0
        %7935 = vmatprep.subr.mxu0 0.0
        %7936 = vmatpush1.msra.mxu0 0.0
        %7937 = vmatprep.subr.mxu0 0.0
        %7938 = vmatpush1.msra.mxu0 0.0
        %7939 = vmatprep.subr.mxu0 0.0
        %7940 = vmatpush1.msra.mxu0 0.0
        %7941 = vmatprep.subr.mxu0 0.0
        %7942 = vmatpush1.msra.mxu0 0.0
        %7943 = vmatprep.subr.mxu0 0.0
        %7944 = vmatpush1.msra.mxu0 0.0
        %7945 = vmatprep.subr.mxu0 0.0
        %7946 = vmatpush1.msra.mxu0 0.0
        %7947 = vmatprep.subr.mxu0 0.0
        %7948 = vmatpush1.msra.mxu0 0.0
        %7949 = vmatprep.subr.mxu0 0.0
        %7950 = vmatpush1.msra.mxu0 0.0
        %7951 = vmatprep.subr.mxu0 0.0
        %7952 = vmatpush1.msra.mxu0 0.0
        %7953 = vmatprep.subr.mxu0 0.0
        %7954 = vmatpush1.msra.mxu0 0.0
        %7955 = vmatprep.subr.mxu0 0.0
        %7956 = vmatpush1.msra.mxu0 0.0
        %7957 = vmatprep.subr.mxu0 0.0
        %7958 = vmatpush1.msra.mxu0 0.0
        %7959 = vmatprep.subr.mxu0 0.0
        %7960 = vmatpush1.msra.mxu0 0.0
        %7961 = vmatprep.subr.mxu0 0.0
        %7962 = vmatpush1.msra.mxu0 0.0
        %7963 = vmatprep.subr.mxu0 0.0
        %7964 = vmatpush1.msra.mxu0 0.0
        %7965 = vmatprep.subr.mxu0 0.0
        %7966 = vmatpush1.msra.mxu0 0.0
        %7967 = vmatprep.mubr.f32.mxu0 0.0
        %7968 = vmatmul.mubr.f32.gmra.mrb[0].mxu0 %v7039
        %v7969 = vpop.f32.mrb[0].mxu0
        %v7970 = vadd.f32 %v7688, %v7969
        %v7971 = vpop.f32.mrb[0].mxu0
        %7972 = vdwg.mxu0
        %v7974 = vsel %vm1442, %v7108, 0
        %v7977 = vsel %vm1442, %v7434, 0
        %7979 = vmatprep.subr.mxu0 0.0
        %7980 = vmatpush1.xpose.msra.mxu0 %v7977
        %7981 = vmatprep.subr.mxu0 0.0
        %7982 = vmatpush1.xpose.msra.mxu0 0.0
        %7983 = vmatprep.subr.mxu0 0.0
        %7984 = vmatpush1.xpose.msra.mxu0 0.0
        %7985 = vmatprep.subr.mxu0 0.0
        %7986 = vmatpush1.xpose.msra.mxu0 0.0
        %7987 = vmatprep.subr.mxu0 0.0
        %7988 = vmatpush1.xpose.msra.mxu0 0.0
        %7989 = vmatprep.subr.mxu0 0.0
        %7990 = vmatpush1.xpose.msra.mxu0 0.0
        %7991 = vmatprep.subr.mxu0 0.0
        %7992 = vmatpush1.xpose.msra.mxu0 0.0
        %7993 = vmatprep.subr.mxu0 0.0
        %7994 = vmatpush1.xpose.msra.mxu0 0.0
        %7995 = vmatprep.subr.mxu0 0.0
        %7996 = vmatpush1.xpose.msra.mxu0 0.0
        %7997 = vmatprep.subr.mxu0 0.0
        %7998 = vmatpush1.xpose.msra.mxu0 0.0
        %7999 = vmatprep.subr.mxu0 0.0
        %8000 = vmatpush1.xpose.msra.mxu0 0.0
        %8001 = vmatprep.subr.mxu0 0.0
        %8002 = vmatpush1.xpose.msra.mxu0 0.0
        %8003 = vmatprep.subr.mxu0 0.0
        %8004 = vmatpush1.xpose.msra.mxu0 0.0
        %8005 = vmatprep.subr.mxu0 0.0
        %8006 = vmatpush1.xpose.msra.mxu0 0.0
        %8007 = vmatprep.subr.mxu0 0.0
        %8008 = vmatpush1.xpose.msra.mxu0 0.0
        %8009 = vmatprep.subr.mxu0 0.0
        %8010 = vmatpush1.xpose.msra.mxu0 0.0
        %8011 = vmatprep.subr.mxu0 0.0
        %8012 = vmatpush1.xpose.msra.mxu0 0.0
        %8013 = vmatprep.subr.mxu0 0.0
        %8014 = vmatpush1.xpose.msra.mxu0 0.0
        %8015 = vmatprep.subr.mxu0 0.0
        %8016 = vmatpush1.xpose.msra.mxu0 0.0
        %8017 = vmatprep.subr.mxu0 0.0
        %8018 = vmatpush1.xpose.msra.mxu0 0.0
        %8019 = vmatprep.subr.mxu0 0.0
        %8020 = vmatpush1.xpose.msra.mxu0 0.0
        %8021 = vmatprep.subr.mxu0 0.0
        %8022 = vmatpush1.xpose.msra.mxu0 0.0
        %8023 = vmatprep.subr.mxu0 0.0
        %8024 = vmatpush1.xpose.msra.mxu0 0.0
        %8025 = vmatprep.subr.mxu0 0.0
        %8026 = vmatpush1.xpose.msra.mxu0 0.0
        %8027 = vmatprep.subr.mxu0 0.0
        %8028 = vmatpush1.xpose.msra.mxu0 0.0
        %8029 = vmatprep.subr.mxu0 0.0
        %8030 = vmatpush1.xpose.msra.mxu0 0.0
        %8031 = vmatprep.subr.mxu0 0.0
        %8032 = vmatpush1.xpose.msra.mxu0 0.0
        %8033 = vmatprep.subr.mxu0 0.0
        %8034 = vmatpush1.xpose.msra.mxu0 0.0
        %8035 = vmatprep.subr.mxu0 0.0
        %8036 = vmatpush1.xpose.msra.mxu0 0.0
        %8037 = vmatprep.subr.mxu0 0.0
        %8038 = vmatpush1.xpose.msra.mxu0 0.0
        %8039 = vmatprep.subr.mxu0 0.0
        %8040 = vmatpush1.xpose.msra.mxu0 0.0
        %8041 = vmatprep.subr.mxu0 0.0
        %8042 = vmatpush1.xpose.msra.mxu0 0.0
        %8043 = vmatprep.mubr.f32.mxu0 0.0
        %8044 = vmatmul.mubr.f32.gmra.mrb[0].mxu0 %v7974
        %v8045 = vpop.f32.mrb[0].mxu0
        %v8046 = vadd.f32 0.0, %v8045
        %v8047 = vpop.f32.mrb[0].mxu0
        %8048 = vdwg.mxu0
        %v8050 = vsel %vm1442, %v7178, 0
        %v8053 = vsel %vm1442, %v7504, 0
        %8055 = vmatprep.subr.mxu0 0.0
        %8056 = vmatpush1.xpose.msra.mxu0 %v8053
        %8057 = vmatprep.subr.mxu0 0.0
        %8058 = vmatpush1.xpose.msra.mxu0 0.0
        %8059 = vmatprep.subr.mxu0 0.0
        %8060 = vmatpush1.xpose.msra.mxu0 0.0
        %8061 = vmatprep.subr.mxu0 0.0
        %8062 = vmatpush1.xpose.msra.mxu0 0.0
        %8063 = vmatprep.subr.mxu0 0.0
        %8064 = vmatpush1.xpose.msra.mxu0 0.0
        %8065 = vmatprep.subr.mxu0 0.0
        %8066 = vmatpush1.xpose.msra.mxu0 0.0
        %8067 = vmatprep.subr.mxu0 0.0
        %8068 = vmatpush1.xpose.msra.mxu0 0.0
        %8069 = vmatprep.subr.mxu0 0.0
        %8070 = vmatpush1.xpose.msra.mxu0 0.0
        %8071 = vmatprep.subr.mxu0 0.0
        %8072 = vmatpush1.xpose.msra.mxu0 0.0
        %8073 = vmatprep.subr.mxu0 0.0
        %8074 = vmatpush1.xpose.msra.mxu0 0.0
        %8075 = vmatprep.subr.mxu0 0.0
        %8076 = vmatpush1.xpose.msra.mxu0 0.0
        %8077 = vmatprep.subr.mxu0 0.0
        %8078 = vmatpush1.xpose.msra.mxu0 0.0
        %8079 = vmatprep.subr.mxu0 0.0
        %8080 = vmatpush1.xpose.msra.mxu0 0.0
        %8081 = vmatprep.subr.mxu0 0.0
        %8082 = vmatpush1.xpose.msra.mxu0 0.0
        %8083 = vmatprep.subr.mxu0 0.0
        %8084 = vmatpush1.xpose.msra.mxu0 0.0
        %8085 = vmatprep.subr.mxu0 0.0
        %8086 = vmatpush1.xpose.msra.mxu0 0.0
        %8087 = vmatprep.subr.mxu0 0.0
        %8088 = vmatpush1.xpose.msra.mxu0 0.0
        %8089 = vmatprep.subr.mxu0 0.0
        %8090 = vmatpush1.xpose.msra.mxu0 0.0
        %8091 = vmatprep.subr.mxu0 0.0
        %8092 = vmatpush1.xpose.msra.mxu0 0.0
        %8093 = vmatprep.subr.mxu0 0.0
        %8094 = vmatpush1.xpose.msra.mxu0 0.0
        %8095 = vmatprep.subr.mxu0 0.0
        %8096 = vmatpush1.xpose.msra.mxu0 0.0
        %8097 = vmatprep.subr.mxu0 0.0
        %8098 = vmatpush1.xpose.msra.mxu0 0.0
        %8099 = vmatprep.subr.mxu0 0.0
        %8100 = vmatpush1.xpose.msra.mxu0 0.0
        %8101 = vmatprep.subr.mxu0 0.0
        %8102 = vmatpush1.xpose.msra.mxu0 0.0
        %8103 = vmatprep.subr.mxu0 0.0
        %8104 = vmatpush1.xpose.msra.mxu0 0.0
        %8105 = vmatprep.subr.mxu0 0.0
        %8106 = vmatpush1.xpose.msra.mxu0 0.0
        %8107 = vmatprep.subr.mxu0 0.0
        %8108 = vmatpush1.xpose.msra.mxu0 0.0
        %8109 = vmatprep.subr.mxu0 0.0
        %8110 = vmatpush1.xpose.msra.mxu0 0.0
        %8111 = vmatprep.subr.mxu0 0.0
        %8112 = vmatpush1.xpose.msra.mxu0 0.0
        %8113 = vmatprep.subr.mxu0 0.0
        %8114 = vmatpush1.xpose.msra.mxu0 0.0
        %8115 = vmatprep.subr.mxu0 0.0
        %8116 = vmatpush1.xpose.msra.mxu0 0.0
        %8117 = vmatprep.subr.mxu0 0.0
        %8118 = vmatpush1.xpose.msra.mxu0 0.0
        %8119 = vmatprep.mubr.f32.mxu0 0.0
        %8120 = vmatmul.mubr.f32.gmra.mrb[0].mxu0 %v8050
        %v8121 = vpop.f32.mrb[0].mxu0
        %v8122 = vadd.f32 0.0, %v8121
        %v8123 = vpop.f32.mrb[0].mxu0
        %8124 = vdwg.mxu0
        %v8126 = vsel %vm1442, %v7248, 0
        %v8129 = vsel %vm1442, %v7574, 0
        %8131 = vmatprep.subr.mxu0 0.0
        %8132 = vmatpush1.xpose.msra.mxu0 %v8129
        %8133 = vmatprep.subr.mxu0 0.0
        %8134 = vmatpush1.xpose.msra.mxu0 0.0
        %8135 = vmatprep.subr.mxu0 0.0
        %8136 = vmatpush1.xpose.msra.mxu0 0.0
        %8137 = vmatprep.subr.mxu0 0.0
        %8138 = vmatpush1.xpose.msra.mxu0 0.0
        %8139 = vmatprep.subr.mxu0 0.0
        %8140 = vmatpush1.xpose.msra.mxu0 0.0
        %8141 = vmatprep.subr.mxu0 0.0
        %8142 = vmatpush1.xpose.msra.mxu0 0.0
        %8143 = vmatprep.subr.mxu0 0.0
        %8144 = vmatpush1.xpose.msra.mxu0 0.0
        %8145 = vmatprep.subr.mxu0 0.0
        %8146 = vmatpush1.xpose.msra.mxu0 0.0
        %8147 = vmatprep.subr.mxu0 0.0
        %8148 = vmatpush1.xpose.msra.mxu0 0.0
        %8149 = vmatprep.subr.mxu0 0.0
        %8150 = vmatpush1.xpose.msra.mxu0 0.0
        %8151 = vmatprep.subr.mxu0 0.0
        %8152 = vmatpush1.xpose.msra.mxu0 0.0
        %8153 = vmatprep.subr.mxu0 0.0
        %8154 = vmatpush1.xpose.msra.mxu0 0.0
        %8155 = vmatprep.subr.mxu0 0.0
        %8156 = vmatpush1.xpose.msra.mxu0 0.0
        %8157 = vmatprep.subr.mxu0 0.0
        %8158 = vmatpush1.xpose.msra.mxu0 0.0
        %8159 = vmatprep.subr.mxu0 0.0
        %8160 = vmatpush1.xpose.msra.mxu0 0.0
        %8161 = vmatprep.subr.mxu0 0.0
        %8162 = vmatpush1.xpose.msra.mxu0 0.0
        %8163 = vmatprep.subr.mxu0 0.0
        %8164 = vmatpush1.xpose.msra.mxu0 0.0
        %8165 = vmatprep.subr.mxu0 0.0
        %8166 = vmatpush1.xpose.msra.mxu0 0.0
        %8167 = vmatprep.subr.mxu0 0.0
        %8168 = vmatpush1.xpose.msra.mxu0 0.0
        %8169 = vmatprep.subr.mxu0 0.0
        %8170 = vmatpush1.xpose.msra.mxu0 0.0
        %8171 = vmatprep.subr.mxu0 0.0
        %8172 = vmatpush1.xpose.msra.mxu0 0.0
        %8173 = vmatprep.subr.mxu0 0.0
        %8174 = vmatpush1.xpose.msra.mxu0 0.0
        %8175 = vmatprep.subr.mxu0 0.0
        %8176 = vmatpush1.xpose.msra.mxu0 0.0
        %8177 = vmatprep.subr.mxu0 0.0
        %8178 = vmatpush1.xpose.msra.mxu0 0.0
        %8179 = vmatprep.subr.mxu0 0.0
        %8180 = vmatpush1.xpose.msra.mxu0 0.0
        %8181 = vmatprep.subr.mxu0 0.0
        %8182 = vmatpush1.xpose.msra.mxu0 0.0
        %8183 = vmatprep.subr.mxu0 0.0
        %8184 = vmatpush1.xpose.msra.mxu0 0.0
        %8185 = vmatprep.subr.mxu0 0.0
        %8186 = vmatpush1.xpose.msra.mxu0 0.0
        %8187 = vmatprep.subr.mxu0 0.0
        %8188 = vmatpush1.xpose.msra.mxu0 0.0
        %8189 = vmatprep.subr.mxu0 0.0
        %8190 = vmatpush1.xpose.msra.mxu0 0.0
        %8191 = vmatprep.subr.mxu0 0.0
        %8192 = vmatpush1.xpose.msra.mxu0 0.0
        %8193 = vmatprep.subr.mxu0 0.0
        %8194 = vmatpush1.xpose.msra.mxu0 0.0
        %8195 = vmatprep.mubr.f32.mxu0 0.0
        %8196 = vmatmul.mubr.f32.gmra.mrb[0].mxu0 %v8126
        %v8197 = vpop.f32.mrb[0].mxu0
        %v8198 = vadd.f32 0.0, %v8197
        %v8199 = vpop.f32.mrb[0].mxu0
        %8200 = vdwg.mxu0
        %v8202 = vsel %vm1442, %v7318, 0
        %v8205 = vsel %vm1442, %v7644, 0
        %8207 = vmatprep.subr.mxu0 0.0
        %8208 = vmatpush1.xpose.msra.mxu0 %v8205
        %8209 = vmatprep.subr.mxu0 0.0
        %8210 = vmatpush1.xpose.msra.mxu0 0.0
        %8211 = vmatprep.subr.mxu0 0.0
        %8212 = vmatpush1.xpose.msra.mxu0 0.0
        %8213 = vmatprep.subr.mxu0 0.0
        %8214 = vmatpush1.xpose.msra.mxu0 0.0
        %8215 = vmatprep.subr.mxu0 0.0
        %8216 = vmatpush1.xpose.msra.mxu0 0.0
        %8217 = vmatprep.subr.mxu0 0.0
        %8218 = vmatpush1.xpose.msra.mxu0 0.0
        %8219 = vmatprep.subr.mxu0 0.0
        %8220 = vmatpush1.xpose.msra.mxu0 0.0
        %8221 = vmatprep.subr.mxu0 0.0
        %8222 = vmatpush1.xpose.msra.mxu0 0.0
        %8223 = vmatprep.subr.mxu0 0.0
        %8224 = vmatpush1.xpose.msra.mxu0 0.0
        %8225 = vmatprep.subr.mxu0 0.0
        %8226 = vmatpush1.xpose.msra.mxu0 0.0
        %8227 = vmatprep.subr.mxu0 0.0
        %8228 = vmatpush1.xpose.msra.mxu0 0.0
        %8229 = vmatprep.subr.mxu0 0.0
        %8230 = vmatpush1.xpose.msra.mxu0 0.0
        %8231 = vmatprep.subr.mxu0 0.0
        %8232 = vmatpush1.xpose.msra.mxu0 0.0
        %8233 = vmatprep.subr.mxu0 0.0
        %8234 = vmatpush1.xpose.msra.mxu0 0.0
        %8235 = vmatprep.subr.mxu0 0.0
        %8236 = vmatpush1.xpose.msra.mxu0 0.0
        %8237 = vmatprep.subr.mxu0 0.0
        %8238 = vmatpush1.xpose.msra.mxu0 0.0
        %8239 = vmatprep.subr.mxu0 0.0
        %8240 = vmatpush1.xpose.msra.mxu0 0.0
        %8241 = vmatprep.subr.mxu0 0.0
        %8242 = vmatpush1.xpose.msra.mxu0 0.0
        %8243 = vmatprep.subr.mxu0 0.0
        %8244 = vmatpush1.xpose.msra.mxu0 0.0
        %8245 = vmatprep.subr.mxu0 0.0
        %8246 = vmatpush1.xpose.msra.mxu0 0.0
        %8247 = vmatprep.subr.mxu0 0.0
        %8248 = vmatpush1.xpose.msra.mxu0 0.0
        %8249 = vmatprep.subr.mxu0 0.0
        %8250 = vmatpush1.xpose.msra.mxu0 0.0
        %8251 = vmatprep.subr.mxu0 0.0
        %8252 = vmatpush1.xpose.msra.mxu0 0.0
        %8253 = vmatprep.subr.mxu0 0.0
        %8254 = vmatpush1.xpose.msra.mxu0 0.0
        %8255 = vmatprep.subr.mxu0 0.0
        %8256 = vmatpush1.xpose.msra.mxu0 0.0
        %8257 = vmatprep.subr.mxu0 0.0
        %8258 = vmatpush1.xpose.msra.mxu0 0.0
        %8259 = vmatprep.subr.mxu0 0.0
        %8260 = vmatpush1.xpose.msra.mxu0 0.0
        %8261 = vmatprep.subr.mxu0 0.0
        %8262 = vmatpush1.xpose.msra.mxu0 0.0
        %8263 = vmatprep.subr.mxu0 0.0
        %8264 = vmatpush1.xpose.msra.mxu0 0.0
        %8265 = vmatprep.subr.mxu0 0.0
        %8266 = vmatpush1.xpose.msra.mxu0 0.0
        %8267 = vmatprep.subr.mxu0 0.0
        %8268 = vmatpush1.xpose.msra.mxu0 0.0
        %8269 = vmatprep.subr.mxu0 0.0
        %8270 = vmatpush1.xpose.msra.mxu0 0.0
        %8271 = vmatprep.mubr.f32.mxu0 0.0
        %8272 = vmatmul.mubr.f32.gmra.mrb[0].mxu0 %v8202
        %v8273 = vpop.f32.mrb[0].mxu0
        %v8274 = vadd.f32 0.0, %v8273
        %v8275 = vpop.f32.mrb[0].mxu0
        %8276 = vdwg.mxu0
        %v8277 = vmul.f32 %v8046, 0.35355338
        %v8278 = vmul.f32 %v8122, 0.35355338
        %v8279 = vmul.f32 %v8198, 0.35355338
        %v8280 = vmul.f32 %v8274, 0.35355338
        %v8281 = vadd.f32 %v8277, %v1755
        %v8282 = vadd.f32 %v8278, %v1755
        %v8283 = vadd.f32 %v8279, %v1755
        %v8284 = vadd.f32 %v8280, %v1755
        %v8285 = vsel %vm1442, %v8281, -inf
        %8286 = vmax.xlane.f32.xlu0 %v8285
        %v8287 = vpop.xlane.xlu0 %8286
        %v8288 = vsel %vm1442, %v8282, -inf
        %8289 = vmax.xlane.f32.xlu0 %v8288
        %v8290 = vpop.xlane.xlu0 %8289
        %v8291 = vsel %vm1442, %v8283, -inf
        %8292 = vmax.xlane.f32.xlu0 %v8291
        %v8293 = vpop.xlane.xlu0 %8292
        %v8294 = vsel %vm1442, %v8284, -inf
        %8295 = vmax.xlane.f32.xlu0 %v8294
        %v8296 = vpop.xlane.xlu0 %8295
        %v8297 = vsub.f32 %v8281, %v8287
        %v8298 = vsub.f32 %v8282, %v8290
        %v8299 = vsub.f32 %v8283, %v8293
        %v8300 = vsub.f32 %v8284, %v8296
        %v8301 = vmul.f32 %v8297, 1.442695
        %v8302 = vpow.pop %v8301
        %v8303 = vmul.f32 %v8298, 1.442695
        %v8304 = vpow.pop %v8303
        %v8305 = vmul.f32 %v8299, 1.442695
        %v8306 = vpow.pop %v8305
        %v8307 = vmul.f32 %v8300, 1.442695
        %v8308 = vpow.pop %v8307
        %v8309 = vsel %vm1442, %v8302, 0.0
        %8310 = vadd.xlane.f32.xlu0 %v8309
        %v8311 = vpop.xlane.xlu0 %8310
        %v8312 = vsel %vm1442, %v8304, 0.0
        %8313 = vadd.xlane.f32.xlu0 %v8312
        %v8314 = vpop.xlane.xlu0 %8313
        %v8315 = vsel %vm1442, %v8306, 0.0
        %8316 = vadd.xlane.f32.xlu0 %v8315
        %v8317 = vpop.xlane.xlu0 %8316
        %v8318 = vsel %vm1442, %v8308, 0.0
        %8319 = vadd.xlane.f32.xlu0 %v8318
        %v8320 = vpop.xlane.xlu0 %8319
        %v8321 = vrcp.pop %v8311
        %v8322 = vrcp.pop %v8314
        %v8323 = vrcp.pop %v8317
        %v8324 = vrcp.pop %v8320
        %v8325 = vmul.f32 %v8302, %v8321
        %v8326 = vmul.f32 %v8304, %v8322
        %v8327 = vmul.f32 %v8306, %v8323
        %v8328 = vmul.f32 %v8308, %v8324
        %v8330 = vsel %vm1442, %v8325, 0
        %8332 = vmatprep.subr.mxu0 0.0
        %8333 = vmatpush1.msra.mxu0 %v7760
        %8334 = vmatprep.subr.mxu0 0.0
        %8335 = vmatpush1.msra.mxu0 0.0
        %8336 = vmatprep.subr.mxu0 0.0
        %8337 = vmatpush1.msra.mxu0 0.0
        %8338 = vmatprep.subr.mxu0 0.0
        %8339 = vmatpush1.msra.mxu0 0.0
        %8340 = vmatprep.subr.mxu0 0.0
        %8341 = vmatpush1.msra.mxu0 0.0
        %8342 = vmatprep.subr.mxu0 0.0
        %8343 = vmatpush1.msra.mxu0 0.0
        %8344 = vmatprep.subr.mxu0 0.0
        %8345 = vmatpush1.msra.mxu0 0.0
        %8346 = vmatprep.subr.mxu0 0.0
        %8347 = vmatpush1.msra.mxu0 0.0
        %8348 = vmatprep.subr.mxu0 0.0
        %8349 = vmatpush1.msra.mxu0 0.0
        %8350 = vmatprep.subr.mxu0 0.0
        %8351 = vmatpush1.msra.mxu0 0.0
        %8352 = vmatprep.subr.mxu0 0.0
        %8353 = vmatpush1.msra.mxu0 0.0
        %8354 = vmatprep.subr.mxu0 0.0
        %8355 = vmatpush1.msra.mxu0 0.0
        %8356 = vmatprep.subr.mxu0 0.0
        %8357 = vmatpush1.msra.mxu0 0.0
        %8358 = vmatprep.subr.mxu0 0.0
        %8359 = vmatpush1.msra.mxu0 0.0
        %8360 = vmatprep.subr.mxu0 0.0
        %8361 = vmatpush1.msra.mxu0 0.0
        %8362 = vmatprep.subr.mxu0 0.0
        %8363 = vmatpush1.msra.mxu0 0.0
        %8364 = vmatprep.subr.mxu0 0.0
        %8365 = vmatpush1.msra.mxu0 0.0
        %8366 = vmatprep.subr.mxu0 0.0
        %8367 = vmatpush1.msra.mxu0 0.0
        %8368 = vmatprep.subr.mxu0 0.0
        %8369 = vmatpush1.msra.mxu0 0.0
        %8370 = vmatprep.subr.mxu0 0.0
        %8371 = vmatpush1.msra.mxu0 0.0
        %8372 = vmatprep.subr.mxu0 0.0
        %8373 = vmatpush1.msra.mxu0 0.0
        %8374 = vmatprep.subr.mxu0 0.0
        %8375 = vmatpush1.msra.mxu0 0.0
        %8376 = vmatprep.subr.mxu0 0.0
        %8377 = vmatpush1.msra.mxu0 0.0
        %8378 = vmatprep.subr.mxu0 0.0
        %8379 = vmatpush1.msra.mxu0 0.0
        %8380 = vmatprep.subr.mxu0 0.0
        %8381 = vmatpush1.msra.mxu0 0.0
        %8382 = vmatprep.subr.mxu0 0.0
        %8383 = vmatpush1.msra.mxu0 0.0
        %8384 = vmatprep.subr.mxu0 0.0
        %8385 = vmatpush1.msra.mxu0 0.0
        %8386 = vmatprep.subr.mxu0 0.0
        %8387 = vmatpush1.msra.mxu0 0.0
        %8388 = vmatprep.subr.mxu0 0.0
        %8389 = vmatpush1.msra.mxu0 0.0
        %8390 = vmatprep.subr.mxu0 0.0
        %8391 = vmatpush1.msra.mxu0 0.0
        %8392 = vmatprep.subr.mxu0 0.0
        %8393 = vmatpush1.msra.mxu0 0.0
        %8394 = vmatprep.subr.mxu0 0.0
        %8395 = vmatpush1.msra.mxu0 0.0
        %8396 = vmatprep.mubr.f32.mxu0 0.0
        %8397 = vmatmul.mubr.f32.gmra.mrb[0].mxu0 %v8330
        %v8398 = vpop.f32.mrb[0].mxu0
        %v8399 = vadd.f32 0.0, %v8398
        %v8400 = vpop.f32.mrb[0].mxu0
        %8401 = vdwg.mxu0
        %v8403 = vsel %vm1442, %v8326, 0
        %8405 = vmatprep.subr.mxu0 0.0
        %8406 = vmatpush1.msra.mxu0 %v7830
        %8407 = vmatprep.subr.mxu0 0.0
        %8408 = vmatpush1.msra.mxu0 0.0
        %8409 = vmatprep.subr.mxu0 0.0
        %8410 = vmatpush1.msra.mxu0 0.0
        %8411 = vmatprep.subr.mxu0 0.0
        %8412 = vmatpush1.msra.mxu0 0.0
        %8413 = vmatprep.subr.mxu0 0.0
        %8414 = vmatpush1.msra.mxu0 0.0
        %8415 = vmatprep.subr.mxu0 0.0
        %8416 = vmatpush1.msra.mxu0 0.0
        %8417 = vmatprep.subr.mxu0 0.0
        %8418 = vmatpush1.msra.mxu0 0.0
        %8419 = vmatprep.subr.mxu0 0.0
        %8420 = vmatpush1.msra.mxu0 0.0
        %8421 = vmatprep.subr.mxu0 0.0
        %8422 = vmatpush1.msra.mxu0 0.0
        %8423 = vmatprep.subr.mxu0 0.0
        %8424 = vmatpush1.msra.mxu0 0.0
        %8425 = vmatprep.subr.mxu0 0.0
        %8426 = vmatpush1.msra.mxu0 0.0
        %8427 = vmatprep.subr.mxu0 0.0
        %8428 = vmatpush1.msra.mxu0 0.0
        %8429 = vmatprep.subr.mxu0 0.0
        %8430 = vmatpush1.msra.mxu0 0.0
        %8431 = vmatprep.subr.mxu0 0.0
        %8432 = vmatpush1.msra.mxu0 0.0
        %8433 = vmatprep.subr.mxu0 0.0
        %8434 = vmatpush1.msra.mxu0 0.0
        %8435 = vmatprep.subr.mxu0 0.0
        %8436 = vmatpush1.msra.mxu0 0.0
        %8437 = vmatprep.subr.mxu0 0.0
        %8438 = vmatpush1.msra.mxu0 0.0
        %8439 = vmatprep.subr.mxu0 0.0
        %8440 = vmatpush1.msra.mxu0 0.0
        %8441 = vmatprep.subr.mxu0 0.0
        %8442 = vmatpush1.msra.mxu0 0.0
        %8443 = vmatprep.subr.mxu0 0.0
        %8444 = vmatpush1.msra.mxu0 0.0
        %8445 = vmatprep.subr.mxu0 0.0
        %8446 = vmatpush1.msra.mxu0 0.0
        %8447 = vmatprep.subr.mxu0 0.0
        %8448 = vmatpush1.msra.mxu0 0.0
        %8449 = vmatprep.subr.mxu0 0.0
        %8450 = vmatpush1.msra.mxu0 0.0
        %8451 = vmatprep.subr.mxu0 0.0
        %8452 = vmatpush1.msra.mxu0 0.0
        %8453 = vmatprep.subr.mxu0 0.0
        %8454 = vmatpush1.msra.mxu0 0.0
        %8455 = vmatprep.subr.mxu0 0.0
        %8456 = vmatpush1.msra.mxu0 0.0
        %8457 = vmatprep.subr.mxu0 0.0
        %8458 = vmatpush1.msra.mxu0 0.0
        %8459 = vmatprep.subr.mxu0 0.0
        %8460 = vmatpush1.msra.mxu0 0.0
        %8461 = vmatprep.subr.mxu0 0.0
        %8462 = vmatpush1.msra.mxu0 0.0
        %8463 = vmatprep.subr.mxu0 0.0
        %8464 = vmatpush1.msra.mxu0 0.0
        %8465 = vmatprep.subr.mxu0 0.0
        %8466 = vmatpush1.msra.mxu0 0.0
        %8467 = vmatprep.subr.mxu0 0.0
        %8468 = vmatpush1.msra.mxu0 0.0
        %8469 = vmatprep.mubr.f32.mxu0 0.0
        %8470 = vmatmul.mubr.f32.gmra.mrb[0].mxu0 %v8403
        %v8471 = vpop.f32.mrb[0].mxu0
        %v8472 = vadd.f32 0.0, %v8471
        %v8473 = vpop.f32.mrb[0].mxu0
        %8474 = vdwg.mxu0
        %v8476 = vsel %vm1442, %v8327, 0
        %8478 = vmatprep.subr.mxu0 0.0
        %8479 = vmatpush1.msra.mxu0 %v7900
        %8480 = vmatprep.subr.mxu0 0.0
        %8481 = vmatpush1.msra.mxu0 0.0
        %8482 = vmatprep.subr.mxu0 0.0
        %8483 = vmatpush1.msra.mxu0 0.0
        %8484 = vmatprep.subr.mxu0 0.0
        %8485 = vmatpush1.msra.mxu0 0.0
        %8486 = vmatprep.subr.mxu0 0.0
        %8487 = vmatpush1.msra.mxu0 0.0
        %8488 = vmatprep.subr.mxu0 0.0
        %8489 = vmatpush1.msra.mxu0 0.0
        %8490 = vmatprep.subr.mxu0 0.0
        %8491 = vmatpush1.msra.mxu0 0.0
        %8492 = vmatprep.subr.mxu0 0.0
        %8493 = vmatpush1.msra.mxu0 0.0
        %8494 = vmatprep.subr.mxu0 0.0
        %8495 = vmatpush1.msra.mxu0 0.0
        %8496 = vmatprep.subr.mxu0 0.0
        %8497 = vmatpush1.msra.mxu0 0.0
        %8498 = vmatprep.subr.mxu0 0.0
        %8499 = vmatpush1.msra.mxu0 0.0
        %8500 = vmatprep.subr.mxu0 0.0
        %8501 = vmatpush1.msra.mxu0 0.0
        %8502 = vmatprep.subr.mxu0 0.0
        %8503 = vmatpush1.msra.mxu0 0.0
        %8504 = vmatprep.subr.mxu0 0.0
        %8505 = vmatpush1.msra.mxu0 0.0
        %8506 = vmatprep.subr.mxu0 0.0
        %8507 = vmatpush1.msra.mxu0 0.0
        %8508 = vmatprep.subr.mxu0 0.0
        %8509 = vmatpush1.msra.mxu0 0.0
        %8510 = vmatprep.subr.mxu0 0.0
        %8511 = vmatpush1.msra.mxu0 0.0
        %8512 = vmatprep.subr.mxu0 0.0
        %8513 = vmatpush1.msra.mxu0 0.0
        %8514 = vmatprep.subr.mxu0 0.0
        %8515 = vmatpush1.msra.mxu0 0.0
        %8516 = vmatprep.subr.mxu0 0.0
        %8517 = vmatpush1.msra.mxu0 0.0
        %8518 = vmatprep.subr.mxu0 0.0
        %8519 = vmatpush1.msra.mxu0 0.0
        %8520 = vmatprep.subr.mxu0 0.0
        %8521 = vmatpush1.msra.mxu0 0.0
        %8522 = vmatprep.subr.mxu0 0.0
        %8523 = vmatpush1.msra.mxu0 0.0
        %8524 = vmatprep.subr.mxu0 0.0
        %8525 = vmatpush1.msra.mxu0 0.0
        %8526 = vmatprep.subr.mxu0 0.0
        %8527 = vmatpush1.msra.mxu0 0.0
        %8528 = vmatprep.subr.mxu0 0.0
        %8529 = vmatpush1.msra.mxu0 0.0
        %8530 = vmatprep.subr.mxu0 0.0
        %8531 = vmatpush1.msra.mxu0 0.0
        %8532 = vmatprep.subr.mxu0 0.0
        %8533 = vmatpush1.msra.mxu0 0.0
        %8534 = vmatprep.subr.mxu0 0.0
        %8535 = vmatpush1.msra.mxu0 0.0
        %8536 = vmatprep.subr.mxu0 0.0
        %8537 = vmatpush1.msra.mxu0 0.0
        %8538 = vmatprep.subr.mxu0 0.0
        %8539 = vmatpush1.msra.mxu0 0.0
        %8540 = vmatprep.subr.mxu0 0.0
        %8541 = vmatpush1.msra.mxu0 0.0
        %8542 = vmatprep.mubr.f32.mxu0 0.0
        %8543 = vmatmul.mubr.f32.gmra.mrb[0].mxu0 %v8476
        %v8544 = vpop.f32.mrb[0].mxu0
        %v8545 = vadd.f32 0.0, %v8544
        %v8546 = vpop.f32.mrb[0].mxu0
        %8547 = vdwg.mxu0
        %v8549 = vsel %vm1442, %v8328, 0
        %8551 = vmatprep.subr.mxu0 0.0
        %8552 = vmatpush1.msra.mxu0 %v7970
        %8553 = vmatprep.subr.mxu0 0.0
        %8554 = vmatpush1.msra.mxu0 0.0
        %8555 = vmatprep.subr.mxu0 0.0
        %8556 = vmatpush1.msra.mxu0 0.0
        %8557 = vmatprep.subr.mxu0 0.0
        %8558 = vmatpush1.msra.mxu0 0.0
        %8559 = vmatprep.subr.mxu0 0.0
        %8560 = vmatpush1.msra.mxu0 0.0
        %8561 = vmatprep.subr.mxu0 0.0
        %8562 = vmatpush1.msra.mxu0 0.0
        %8563 = vmatprep.subr.mxu0 0.0
        %8564 = vmatpush1.msra.mxu0 0.0
        %8565 = vmatprep.subr.mxu0 0.0
        %8566 = vmatpush1.msra.mxu0 0.0
        %8567 = vmatprep.subr.mxu0 0.0
        %8568 = vmatpush1.msra.mxu0 0.0
        %8569 = vmatprep.subr.mxu0 0.0
        %8570 = vmatpush1.msra.mxu0 0.0
        %8571 = vmatprep.subr.mxu0 0.0
        %8572 = vmatpush1.msra.mxu0 0.0
        %8573 = vmatprep.subr.mxu0 0.0
        %8574 = vmatpush1.msra.mxu0 0.0
        %8575 = vmatprep.subr.mxu0 0.0
        %8576 = vmatpush1.msra.mxu0 0.0
        %8577 = vmatprep.subr.mxu0 0.0
        %8578 = vmatpush1.msra.mxu0 0.0
        %8579 = vmatprep.subr.mxu0 0.0
        %8580 = vmatpush1.msra.mxu0 0.0
        %8581 = vmatprep.subr.mxu0 0.0
        %8582 = vmatpush1.msra.mxu0 0.0
        %8583 = vmatprep.subr.mxu0 0.0
        %8584 = vmatpush1.msra.mxu0 0.0
        %8585 = vmatprep.subr.mxu0 0.0
        %8586 = vmatpush1.msra.mxu0 0.0
        %8587 = vmatprep.subr.mxu0 0.0
        %8588 = vmatpush1.msra.mxu0 0.0
        %8589 = vmatprep.subr.mxu0 0.0
        %8590 = vmatpush1.msra.mxu0 0.0
        %8591 = vmatprep.subr.mxu0 0.0
        %8592 = vmatpush1.msra.mxu0 0.0
        %8593 = vmatprep.subr.mxu0 0.0
        %8594 = vmatpush1.msra.mxu0 0.0
        %8595 = vmatprep.subr.mxu0 0.0
        %8596 = vmatpush1.msra.mxu0 0.0
        %8597 = vmatprep.subr.mxu0 0.0
        %8598 = vmatpush1.msra.mxu0 0.0
        %8599 = vmatprep.subr.mxu0 0.0
        %8600 = vmatpush1.msra.mxu0 0.0
        %8601 = vmatprep.subr.mxu0 0.0
        %8602 = vmatpush1.msra.mxu0 0.0
        %8603 = vmatprep.subr.mxu0 0.0
        %8604 = vmatpush1.msra.mxu0 0.0
        %8605 = vmatprep.subr.mxu0 0.0
        %8606 = vmatpush1.msra.mxu0 0.0
        %8607 = vmatprep.subr.mxu0 0.0
        %8608 = vmatpush1.msra.mxu0 0.0
        %8609 = vmatprep.subr.mxu0 0.0
        %8610 = vmatpush1.msra.mxu0 0.0
        %8611 = vmatprep.subr.mxu0 0.0
        %8612 = vmatpush1.msra.mxu0 0.0
        %8613 = vmatprep.subr.mxu0 0.0
        %8614 = vmatpush1.msra.mxu0 0.0
        %8615 = vmatprep.mubr.f32.mxu0 0.0
        %8616 = vmatmul.mubr.f32.gmra.mrb[0].mxu0 %v8549
        %v8617 = vpop.f32.mrb[0].mxu0
        %v8618 = vadd.f32 0.0, %v8617
        %v8619 = vpop.f32.mrb[0].mxu0
        %8620 = vdwg.mxu0
        %s8621 = scalar_lea.vmem %s8, 96
        %v8622 = vld [vmem:[%s8621] sm:$0xff]
        %v8623 = vld [vmem:[%s8621 + $0x8] sm:$0xff]
        %v8624 = vld [vmem:[%s8621 + $0x10] sm:$0xff]
        %v8625 = vld [vmem:[%s8621 + $0x18] sm:$0xff]
        %v8627 = vsel %vm1442, %v8399, 0
        %8629 = vmatprep.subr.mxu0 0.0
        %8630 = vmatpush1.msra.mxu0 %v8622
        %8631 = vmatprep.subr.mxu0 0.0
        %8632 = vmatpush1.msra.mxu0 0.0
        %8633 = vmatprep.subr.mxu0 0.0
        %8634 = vmatpush1.msra.mxu0 0.0
        %8635 = vmatprep.subr.mxu0 0.0
        %8636 = vmatpush1.msra.mxu0 0.0
        %8637 = vmatprep.subr.mxu0 0.0
        %8638 = vmatpush1.msra.mxu0 0.0
        %8639 = vmatprep.subr.mxu0 0.0
        %8640 = vmatpush1.msra.mxu0 0.0
        %8641 = vmatprep.subr.mxu0 0.0
        %8642 = vmatpush1.msra.mxu0 0.0
        %8643 = vmatprep.subr.mxu0 0.0
        %8644 = vmatpush1.msra.mxu0 0.0
        %8645 = vmatprep.subr.mxu0 0.0
        %8646 = vmatpush1.msra.mxu0 0.0
        %8647 = vmatprep.subr.mxu0 0.0
        %8648 = vmatpush1.msra.mxu0 0.0
        %8649 = vmatprep.subr.mxu0 0.0
        %8650 = vmatpush1.msra.mxu0 0.0
        %8651 = vmatprep.subr.mxu0 0.0
        %8652 = vmatpush1.msra.mxu0 0.0
        %8653 = vmatprep.subr.mxu0 0.0
        %8654 = vmatpush1.msra.mxu0 0.0
        %8655 = vmatprep.subr.mxu0 0.0
        %8656 = vmatpush1.msra.mxu0 0.0
        %8657 = vmatprep.subr.mxu0 0.0
        %8658 = vmatpush1.msra.mxu0 0.0
        %8659 = vmatprep.subr.mxu0 0.0
        %8660 = vmatpush1.msra.mxu0 0.0
        %8661 = vmatprep.subr.mxu0 0.0
        %8662 = vmatpush1.msra.mxu0 0.0
        %8663 = vmatprep.subr.mxu0 0.0
        %8664 = vmatpush1.msra.mxu0 0.0
        %8665 = vmatprep.subr.mxu0 0.0
        %8666 = vmatpush1.msra.mxu0 0.0
        %8667 = vmatprep.subr.mxu0 0.0
        %8668 = vmatpush1.msra.mxu0 0.0
        %8669 = vmatprep.subr.mxu0 0.0
        %8670 = vmatpush1.msra.mxu0 0.0
        %8671 = vmatprep.subr.mxu0 0.0
        %8672 = vmatpush1.msra.mxu0 0.0
        %8673 = vmatprep.subr.mxu0 0.0
        %8674 = vmatpush1.msra.mxu0 0.0
        %8675 = vmatprep.subr.mxu0 0.0
        %8676 = vmatpush1.msra.mxu0 0.0
        %8677 = vmatprep.subr.mxu0 0.0
        %8678 = vmatpush1.msra.mxu0 0.0
        %8679 = vmatprep.subr.mxu0 0.0
        %8680 = vmatpush1.msra.mxu0 0.0
        %8681 = vmatprep.subr.mxu0 0.0
        %8682 = vmatpush1.msra.mxu0 0.0
        %8683 = vmatprep.subr.mxu0 0.0
        %8684 = vmatpush1.msra.mxu0 0.0
        %8685 = vmatprep.subr.mxu0 0.0
        %8686 = vmatpush1.msra.mxu0 0.0
        %8687 = vmatprep.subr.mxu0 0.0
        %8688 = vmatpush1.msra.mxu0 0.0
        %8689 = vmatprep.subr.mxu0 0.0
        %8690 = vmatpush1.msra.mxu0 0.0
        %8691 = vmatprep.subr.mxu0 0.0
        %8692 = vmatpush1.msra.mxu0 0.0
        %8693 = vmatprep.mubr.f32.mxu0 0.0
        %8694 = vmatmul.mubr.f32.gmra.mrb[0].mxu0 %v8627
        %v8695 = vpop.f32.mrb[0].mxu0
        %v8696 = vadd.f32 0.0, %v8695
        %v8697 = vpop.f32.mrb[0].mxu0
        %8698 = vdwg.mxu0
        %v8700 = vsel %vm1442, %v8472, 0
        %8702 = vmatprep.subr.mxu0 0.0
        %8703 = vmatpush1.msra.mxu0 %v8623
        %8704 = vmatprep.subr.mxu0 0.0
        %8705 = vmatpush1.msra.mxu0 0.0
        %8706 = vmatprep.subr.mxu0 0.0
        %8707 = vmatpush1.msra.mxu0 0.0
        %8708 = vmatprep.subr.mxu0 0.0
        %8709 = vmatpush1.msra.mxu0 0.0
        %8710 = vmatprep.subr.mxu0 0.0
        %8711 = vmatpush1.msra.mxu0 0.0
        %8712 = vmatprep.subr.mxu0 0.0
        %8713 = vmatpush1.msra.mxu0 0.0
        %8714 = vmatprep.subr.mxu0 0.0
        %8715 = vmatpush1.msra.mxu0 0.0
        %8716 = vmatprep.subr.mxu0 0.0
        %8717 = vmatpush1.msra.mxu0 0.0
        %8718 = vmatprep.subr.mxu0 0.0
        %8719 = vmatpush1.msra.mxu0 0.0
        %8720 = vmatprep.subr.mxu0 0.0
        %8721 = vmatpush1.msra.mxu0 0.0
        %8722 = vmatprep.subr.mxu0 0.0
        %8723 = vmatpush1.msra.mxu0 0.0
        %8724 = vmatprep.subr.mxu0 0.0
        %8725 = vmatpush1.msra.mxu0 0.0
        %8726 = vmatprep.subr.mxu0 0.0
        %8727 = vmatpush1.msra.mxu0 0.0
        %8728 = vmatprep.subr.mxu0 0.0
        %8729 = vmatpush1.msra.mxu0 0.0
        %8730 = vmatprep.subr.mxu0 0.0
        %8731 = vmatpush1.msra.mxu0 0.0
        %8732 = vmatprep.subr.mxu0 0.0
        %8733 = vmatpush1.msra.mxu0 0.0
        %8734 = vmatprep.subr.mxu0 0.0
        %8735 = vmatpush1.msra.mxu0 0.0
        %8736 = vmatprep.subr.mxu0 0.0
        %8737 = vmatpush1.msra.mxu0 0.0
        %8738 = vmatprep.subr.mxu0 0.0
        %8739 = vmatpush1.msra.mxu0 0.0
        %8740 = vmatprep.subr.mxu0 0.0
        %8741 = vmatpush1.msra.mxu0 0.0
        %8742 = vmatprep.subr.mxu0 0.0
        %8743 = vmatpush1.msra.mxu0 0.0
        %8744 = vmatprep.subr.mxu0 0.0
        %8745 = vmatpush1.msra.mxu0 0.0
        %8746 = vmatprep.subr.mxu0 0.0
        %8747 = vmatpush1.msra.mxu0 0.0
        %8748 = vmatprep.subr.mxu0 0.0
        %8749 = vmatpush1.msra.mxu0 0.0
        %8750 = vmatprep.subr.mxu0 0.0
        %8751 = vmatpush1.msra.mxu0 0.0
        %8752 = vmatprep.subr.mxu0 0.0
        %8753 = vmatpush1.msra.mxu0 0.0
        %8754 = vmatprep.subr.mxu0 0.0
        %8755 = vmatpush1.msra.mxu0 0.0
        %8756 = vmatprep.subr.mxu0 0.0
        %8757 = vmatpush1.msra.mxu0 0.0
        %8758 = vmatprep.subr.mxu0 0.0
        %8759 = vmatpush1.msra.mxu0 0.0
        %8760 = vmatprep.subr.mxu0 0.0
        %8761 = vmatpush1.msra.mxu0 0.0
        %8762 = vmatprep.subr.mxu0 0.0
        %8763 = vmatpush1.msra.mxu0 0.0
        %8764 = vmatprep.subr.mxu0 0.0
        %8765 = vmatpush1.msra.mxu0 0.0
        %8766 = vmatprep.mubr.f32.mxu0 0.0
        %8767 = vmatmul.mubr.f32.gmra.mrb[0].mxu0 %v8700
        %v8768 = vpop.f32.mrb[0].mxu0
        %v8769 = vadd.f32 0.0, %v8768
        %v8770 = vpop.f32.mrb[0].mxu0
        %8771 = vdwg.mxu0
        %v8773 = vsel %vm1442, %v8545, 0
        %8775 = vmatprep.subr.mxu0 0.0
        %8776 = vmatpush1.msra.mxu0 %v8624
        %8777 = vmatprep.subr.mxu0 0.0
        %8778 = vmatpush1.msra.mxu0 0.0
        %8779 = vmatprep.subr.mxu0 0.0
        %8780 = vmatpush1.msra.mxu0 0.0
        %8781 = vmatprep.subr.mxu0 0.0
        %8782 = vmatpush1.msra.mxu0 0.0
        %8783 = vmatprep.subr.mxu0 0.0
        %8784 = vmatpush1.msra.mxu0 0.0
        %8785 = vmatprep.subr.mxu0 0.0
        %8786 = vmatpush1.msra.mxu0 0.0
        %8787 = vmatprep.subr.mxu0 0.0
        %8788 = vmatpush1.msra.mxu0 0.0
        %8789 = vmatprep.subr.mxu0 0.0
        %8790 = vmatpush1.msra.mxu0 0.0
        %8791 = vmatprep.subr.mxu0 0.0
        %8792 = vmatpush1.msra.mxu0 0.0
        %8793 = vmatprep.subr.mxu0 0.0
        %8794 = vmatpush1.msra.mxu0 0.0
        %8795 = vmatprep.subr.mxu0 0.0
        %8796 = vmatpush1.msra.mxu0 0.0
        %8797 = vmatprep.subr.mxu0 0.0
        %8798 = vmatpush1.msra.mxu0 0.0
        %8799 = vmatprep.subr.mxu0 0.0
        %8800 = vmatpush1.msra.mxu0 0.0
        %8801 = vmatprep.subr.mxu0 0.0
        %8802 = vmatpush1.msra.mxu0 0.0
        %8803 = vmatprep.subr.mxu0 0.0
        %8804 = vmatpush1.msra.mxu0 0.0
        %8805 = vmatprep.subr.mxu0 0.0
        %8806 = vmatpush1.msra.mxu0 0.0
        %8807 = vmatprep.subr.mxu0 0.0
        %8808 = vmatpush1.msra.mxu0 0.0
        %8809 = vmatprep.subr.mxu0 0.0
        %8810 = vmatpush1.msra.mxu0 0.0
        %8811 = vmatprep.subr.mxu0 0.0
        %8812 = vmatpush1.msra.mxu0 0.0
        %8813 = vmatprep.subr.mxu0 0.0
        %8814 = vmatpush1.msra.mxu0 0.0
        %8815 = vmatprep.subr.mxu0 0.0
        %8816 = vmatpush1.msra.mxu0 0.0
        %8817 = vmatprep.subr.mxu0 0.0
        %8818 = vmatpush1.msra.mxu0 0.0
        %8819 = vmatprep.subr.mxu0 0.0
        %8820 = vmatpush1.msra.mxu0 0.0
        %8821 = vmatprep.subr.mxu0 0.0
        %8822 = vmatpush1.msra.mxu0 0.0
        %8823 = vmatprep.subr.mxu0 0.0
        %8824 = vmatpush1.msra.mxu0 0.0
        %8825 = vmatprep.subr.mxu0 0.0
        %8826 = vmatpush1.msra.mxu0 0.0
        %8827 = vmatprep.subr.mxu0 0.0
        %8828 = vmatpush1.msra.mxu0 0.0
        %8829 = vmatprep.subr.mxu0 0.0
        %8830 = vmatpush1.msra.mxu0 0.0
        %8831 = vmatprep.subr.mxu0 0.0
        %8832 = vmatpush1.msra.mxu0 0.0
        %8833 = vmatprep.subr.mxu0 0.0
        %8834 = vmatpush1.msra.mxu0 0.0
        %8835 = vmatprep.subr.mxu0 0.0
        %8836 = vmatpush1.msra.mxu0 0.0
        %8837 = vmatprep.subr.mxu0 0.0
        %8838 = vmatpush1.msra.mxu0 0.0
        %8839 = vmatprep.mubr.f32.mxu0 0.0
        %8840 = vmatmul.mubr.f32.gmra.mrb[0].mxu0 %v8773
        %v8841 = vpop.f32.mrb[0].mxu0
        %v8842 = vadd.f32 0.0, %v8841
        %v8843 = vpop.f32.mrb[0].mxu0
        %8844 = vdwg.mxu0
        %v8846 = vsel %vm1442, %v8618, 0
        %8848 = vmatprep.subr.mxu0 0.0
        %8849 = vmatpush1.msra.mxu0 %v8625
        %8850 = vmatprep.subr.mxu0 0.0
        %8851 = vmatpush1.msra.mxu0 0.0
        %8852 = vmatprep.subr.mxu0 0.0
        %8853 = vmatpush1.msra.mxu0 0.0
        %8854 = vmatprep.subr.mxu0 0.0
        %8855 = vmatpush1.msra.mxu0 0.0
        %8856 = vmatprep.subr.mxu0 0.0
        %8857 = vmatpush1.msra.mxu0 0.0
        %8858 = vmatprep.subr.mxu0 0.0
        %8859 = vmatpush1.msra.mxu0 0.0
        %8860 = vmatprep.subr.mxu0 0.0
        %8861 = vmatpush1.msra.mxu0 0.0
        %8862 = vmatprep.subr.mxu0 0.0
        %8863 = vmatpush1.msra.mxu0 0.0
        %8864 = vmatprep.subr.mxu0 0.0
        %8865 = vmatpush1.msra.mxu0 0.0
        %8866 = vmatprep.subr.mxu0 0.0
        %8867 = vmatpush1.msra.mxu0 0.0
        %8868 = vmatprep.subr.mxu0 0.0
        %8869 = vmatpush1.msra.mxu0 0.0
        %8870 = vmatprep.subr.mxu0 0.0
        %8871 = vmatpush1.msra.mxu0 0.0
        %8872 = vmatprep.subr.mxu0 0.0
        %8873 = vmatpush1.msra.mxu0 0.0
        %8874 = vmatprep.subr.mxu0 0.0
        %8875 = vmatpush1.msra.mxu0 0.0
        %8876 = vmatprep.subr.mxu0 0.0
        %8877 = vmatpush1.msra.mxu0 0.0
        %8878 = vmatprep.subr.mxu0 0.0
        %8879 = vmatpush1.msra.mxu0 0.0
        %8880 = vmatprep.subr.mxu0 0.0
        %8881 = vmatpush1.msra.mxu0 0.0
        %8882 = vmatprep.subr.mxu0 0.0
        %8883 = vmatpush1.msra.mxu0 0.0
        %8884 = vmatprep.subr.mxu0 0.0
        %8885 = vmatpush1.msra.mxu0 0.0
        %8886 = vmatprep.subr.mxu0 0.0
        %8887 = vmatpush1.msra.mxu0 0.0
        %8888 = vmatprep.subr.mxu0 0.0
        %8889 = vmatpush1.msra.mxu0 0.0
        %8890 = vmatprep.subr.mxu0 0.0
        %8891 = vmatpush1.msra.mxu0 0.0
        %8892 = vmatprep.subr.mxu0 0.0
        %8893 = vmatpush1.msra.mxu0 0.0
        %8894 = vmatprep.subr.mxu0 0.0
        %8895 = vmatpush1.msra.mxu0 0.0
        %8896 = vmatprep.subr.mxu0 0.0
        %8897 = vmatpush1.msra.mxu0 0.0
        %8898 = vmatprep.subr.mxu0 0.0
        %8899 = vmatpush1.msra.mxu0 0.0
        %8900 = vmatprep.subr.mxu0 0.0
        %8901 = vmatpush1.msra.mxu0 0.0
        %8902 = vmatprep.subr.mxu0 0.0
        %8903 = vmatpush1.msra.mxu0 0.0
        %8904 = vmatprep.subr.mxu0 0.0
        %8905 = vmatpush1.msra.mxu0 0.0
        %8906 = vmatprep.subr.mxu0 0.0
        %8907 = vmatpush1.msra.mxu0 0.0
        %8908 = vmatprep.subr.mxu0 0.0
        %8909 = vmatpush1.msra.mxu0 0.0
        %8910 = vmatprep.subr.mxu0 0.0
        %8911 = vmatpush1.msra.mxu0 0.0
        %8912 = vmatprep.mubr.f32.mxu0 0.0
        %8913 = vmatmul.mubr.f32.gmra.mrb[0].mxu0 %v8846
        %v8914 = vpop.f32.mrb[0].mxu0
        %v8915 = vadd.f32 0.0, %v8914
        %v8916 = vpop.f32.mrb[0].mxu0
        %8917 = vdwg.mxu0
        %v8918 = vsel %vm429, %v8696, 0.0
        %v8919 = vsel %vm429, %v8769, 0.0
        %v8920 = vadd.f32 %v8918, %v8919
        %v8921 = vsel %vm429, %v8842, 0.0
        %v8922 = vadd.f32 %v8920, %v8921
        %v8923 = vsel %vm429, %v8915, 0.0
        %v8924 = vadd.f32 %v8922, %v8923
        %v8925 = vlaneseq
        %v8926 = vshrl.u32 %v8925, 7
        %v8927 = vsub.s32 0, %v8926
        %v8928 = vrot.slane %v6986, %v8927
        %v8929 = vadd.f32 %v8924, %v8928
        %v8930 = vadd.f32 %v6981, %v8929
        %v8931 = vsel %vm429, %v8930, 0.0
        %8932 = vadd.xlane.f32.xlu0 %v8931
        %v8933 = vpop.xlane.xlu0 %8932
        %v8934 = vmul.f32 %v8933, %v433
        %v8935 = vsub.f32 %v8930, %v8934
        %v8936 = vmul.f32 %v8935, %v8935
        %v8937 = vsel %vm429, %v8936, 0.0
        %8938 = vadd.xlane.f32.xlu0 %v8937
        %v8939 = vpop.xlane.xlu0 %8938
        %v8940 = vmul.f32 %v8939, %v433
        %v8941 = vadd.f32 %v8940, 1e-07
        %v8942 = vrsqrt.pop %v8941
        %v8943 = vmul.f32 %v8935, %v8942
        %v8944 = vlaneseq
        %v8945 = vshrl.u32 %v8944, 7
        %v8946 = vsub.s32 0, %v8945
        %v8947 = vrot.slane %v6987, %v8946
        %v8948 = vmul.f32 %v8943, %v8947
        %v8949 = vlaneseq
        %v8950 = vshrl.u32 %v8949, 7
        %v8951 = vsub.s32 0, %v8950
        %v8952 = vrot.slane %v6988, %v8951
        %v8953 = vadd.f32 %v8948, %v8952
        %s8954 = scalar_lea.vmem %s9, 96
        %v8955 = vld [vmem:[%s8954] sm:$0xff]
        %v8956 = vld [vmem:[%s8954 + $0x8] sm:$0xff]
        %v8957 = vld [vmem:[%s8954 + $0x10] sm:$0xff]
        %v8958 = vld [vmem:[%s8954 + $0x18] sm:$0xff]
        %s8959 = scalar_lea.vmem %s6, 3
        %v8960 = vld [vmem:[%s8959] sm:$0x1]
        %v8962 = vlaneseq
        %v8963 = vshrl.u32 %v8962, 7
        %v8964 = vsub.s32 0, %v8963
        %v8965 = vrot.slane %v8960, %v8964
        %v8968 = vsel %vm429, %v8953, 0
        %8970 = vmatprep.subr.mxu0 0.0
        %8971 = vmatpush1.msra.mxu0 %v8955
        %8972 = vmatprep.subr.mxu0 0.0
        %8973 = vmatpush1.msra.mxu0 %v8956
        %8974 = vmatprep.subr.mxu0 0.0
        %8975 = vmatpush1.msra.mxu0 %v8957
        %8976 = vmatprep.subr.mxu0 0.0
        %8977 = vmatpush1.msra.mxu0 %v8958
        %8978 = vmatprep.subr.mxu0 0.0
        %8979 = vmatpush1.msra.mxu0 0.0
        %8980 = vmatprep.subr.mxu0 0.0
        %8981 = vmatpush1.msra.mxu0 0.0
        %8982 = vmatprep.subr.mxu0 0.0
        %8983 = vmatpush1.msra.mxu0 0.0
        %8984 = vmatprep.subr.mxu0 0.0
        %8985 = vmatpush1.msra.mxu0 0.0
        %8986 = vmatprep.subr.mxu0 0.0
        %8987 = vmatpush1.msra.mxu0 0.0
        %8988 = vmatprep.subr.mxu0 0.0
        %8989 = vmatpush1.msra.mxu0 0.0
        %8990 = vmatprep.subr.mxu0 0.0
        %8991 = vmatpush1.msra.mxu0 0.0
        %8992 = vmatprep.subr.mxu0 0.0
        %8993 = vmatpush1.msra.mxu0 0.0
        %8994 = vmatprep.subr.mxu0 0.0
        %8995 = vmatpush1.msra.mxu0 0.0
        %8996 = vmatprep.subr.mxu0 0.0
        %8997 = vmatpush1.msra.mxu0 0.0
        %8998 = vmatprep.subr.mxu0 0.0
        %8999 = vmatpush1.msra.mxu0 0.0
        %9000 = vmatprep.subr.mxu0 0.0
        %9001 = vmatpush1.msra.mxu0 0.0
        %9002 = vmatprep.subr.mxu0 0.0
        %9003 = vmatpush1.msra.mxu0 0.0
        %9004 = vmatprep.subr.mxu0 0.0
        %9005 = vmatpush1.msra.mxu0 0.0
        %9006 = vmatprep.subr.mxu0 0.0
        %9007 = vmatpush1.msra.mxu0 0.0
        %9008 = vmatprep.subr.mxu0 0.0
        %9009 = vmatpush1.msra.mxu0 0.0
        %9010 = vmatprep.subr.mxu0 0.0
        %9011 = vmatpush1.msra.mxu0 0.0
        %9012 = vmatprep.subr.mxu0 0.0
        %9013 = vmatpush1.msra.mxu0 0.0
        %9014 = vmatprep.subr.mxu0 0.0
        %9015 = vmatpush1.msra.mxu0 0.0
        %9016 = vmatprep.subr.mxu0 0.0
        %9017 = vmatpush1.msra.mxu0 0.0
        %9018 = vmatprep.subr.mxu0 0.0
        %9019 = vmatpush1.msra.mxu0 0.0
        %9020 = vmatprep.subr.mxu0 0.0
        %9021 = vmatpush1.msra.mxu0 0.0
        %9022 = vmatprep.subr.mxu0 0.0
        %9023 = vmatpush1.msra.mxu0 0.0
        %9024 = vmatprep.subr.mxu0 0.0
        %9025 = vmatpush1.msra.mxu0 0.0
        %9026 = vmatprep.subr.mxu0 0.0
        %9027 = vmatpush1.msra.mxu0 0.0
        %9028 = vmatprep.subr.mxu0 0.0
        %9029 = vmatpush1.msra.mxu0 0.0
        %9030 = vmatprep.subr.mxu0 0.0
        %9031 = vmatpush1.msra.mxu0 0.0
        %9032 = vmatprep.subr.mxu0 0.0
        %9033 = vmatpush1.msra.mxu0 0.0
        %9034 = vmatprep.mubr.f32.mxu0 0.0
        %9035 = vmatmul.mubr.f32.gmra.mrb[0].mxu0 %v8968
        %v9036 = vpop.f32.mrb[0].mxu0
        %v9037 = vadd.f32 %v8965, %v9036
        %v9038 = vpop.f32.mrb[0].mxu0
        %9039 = vdwg.mxu0
        %v9040 = vmul.f32 %v9037, %v9037
        %v9041 = vmul.f32 %v9037, %v9040
        %v9042 = vmul.f32 %v9041, 0.044715
        %v9043 = vadd.f32 %v9037, %v9042
        %v9044 = vmul.f32 %v9043, 0.7978846
        %v9045 = vtanh.pop %v9044
        %v9046 = vadd.f32 %v9045, 1.0
        %v9047 = vmul.f32 %v9046, 0.5
        %v9048 = vmul.f32 %v9037, %v9047
        %s9049 = scalar_lea.vmem %s10, 192
        %v9050 = vld [vmem:[%s9049] sm:$0xff]
        %v9051 = vld [vmem:[%s9049 + $0x8] sm:$0xff]
        %v9052 = vld [vmem:[%s9049 + $0x10] sm:$0xff]
        %v9053 = vld [vmem:[%s9049 + $0x18] sm:$0xff]
        %v9054 = vld [vmem:[%s9049 + $0x20] sm:$0xff]
        %v9055 = vld [vmem:[%s9049 + $0x28] sm:$0xff]
        %v9056 = vld [vmem:[%s9049 + $0x30] sm:$0xff]
        %v9057 = vld [vmem:[%s9049 + $0x38] sm:$0xff]
        %v9058 = vlaneseq
        %v9059 = vshrl.u32 %v9058, 7
        %v9060 = vsub.s32 0, %v9059
        %v9061 = vrot.slane %v6989, %v9060
        %v9063 = vsel %vm2534, %v9048, 0
        %9065 = vmatprep.subr.mxu0 0.0
        %9066 = vmatpush1.msra.mxu0 %v9050
        %9067 = vmatprep.subr.mxu0 0.0
        %9068 = vmatpush1.msra.mxu0 %v9051
        %9069 = vmatprep.subr.mxu0 0.0
        %9070 = vmatpush1.msra.mxu0 %v9052
        %9071 = vmatprep.subr.mxu0 0.0
        %9072 = vmatpush1.msra.mxu0 %v9053
        %9073 = vmatprep.subr.mxu0 0.0
        %9074 = vmatpush1.msra.mxu0 %v9054
        %9075 = vmatprep.subr.mxu0 0.0
        %9076 = vmatpush1.msra.mxu0 %v9055
        %9077 = vmatprep.subr.mxu0 0.0
        %9078 = vmatpush1.msra.mxu0 %v9056
        %9079 = vmatprep.subr.mxu0 0.0
        %9080 = vmatpush1.msra.mxu0 %v9057
        %9081 = vmatprep.subr.mxu0 0.0
        %9082 = vmatpush1.msra.mxu0 0.0
        %9083 = vmatprep.subr.mxu0 0.0
        %9084 = vmatpush1.msra.mxu0 0.0
        %9085 = vmatprep.subr.mxu0 0.0
        %9086 = vmatpush1.msra.mxu0 0.0
        %9087 = vmatprep.subr.mxu0 0.0
        %9088 = vmatpush1.msra.mxu0 0.0
        %9089 = vmatprep.subr.mxu0 0.0
        %9090 = vmatpush1.msra.mxu0 0.0
        %9091 = vmatprep.subr.mxu0 0.0
        %9092 = vmatpush1.msra.mxu0 0.0
        %9093 = vmatprep.subr.mxu0 0.0
        %9094 = vmatpush1.msra.mxu0 0.0
        %9095 = vmatprep.subr.mxu0 0.0
        %9096 = vmatpush1.msra.mxu0 0.0
        %9097 = vmatprep.subr.mxu0 0.0
        %9098 = vmatpush1.msra.mxu0 0.0
        %9099 = vmatprep.subr.mxu0 0.0
        %9100 = vmatpush1.msra.mxu0 0.0
        %9101 = vmatprep.subr.mxu0 0.0
        %9102 = vmatpush1.msra.mxu0 0.0
        %9103 = vmatprep.subr.mxu0 0.0
        %9104 = vmatpush1.msra.mxu0 0.0
        %9105 = vmatprep.subr.mxu0 0.0
        %9106 = vmatpush1.msra.mxu0 0.0
        %9107 = vmatprep.subr.mxu0 0.0
        %9108 = vmatpush1.msra.mxu0 0.0
        %9109 = vmatprep.subr.mxu0 0.0
        %9110 = vmatpush1.msra.mxu0 0.0
        %9111 = vmatprep.subr.mxu0 0.0
        %9112 = vmatpush1.msra.mxu0 0.0
        %9113 = vmatprep.subr.mxu0 0.0
        %9114 = vmatpush1.msra.mxu0 0.0
        %9115 = vmatprep.subr.mxu0 0.0
        %9116 = vmatpush1.msra.mxu0 0.0
        %9117 = vmatprep.subr.mxu0 0.0
        %9118 = vmatpush1.msra.mxu0 0.0
        %9119 = vmatprep.subr.mxu0 0.0
        %9120 = vmatpush1.msra.mxu0 0.0
        %9121 = vmatprep.subr.mxu0 0.0
        %9122 = vmatpush1.msra.mxu0 0.0
        %9123 = vmatprep.subr.mxu0 0.0
        %9124 = vmatpush1.msra.mxu0 0.0
        %9125 = vmatprep.subr.mxu0 0.0
        %9126 = vmatpush1.msra.mxu0 0.0
        %9127 = vmatprep.subr.mxu0 0.0
        %9128 = vmatpush1.msra.mxu0 0.0
        %9129 = vmatprep.mubr.f32.mxu0 0.0
        %9130 = vmatmul.mubr.f32.gmra.mrb[0].mxu0 %v9063
        %v9131 = vpop.f32.mrb[0].mxu0
        %v9132 = vadd.f32 %v9061, %v9131
        %v9133 = vpop.f32.mrb[0].mxu0
        %9134 = vdwg.mxu0
        %v9135 = vadd.f32 %v8953, %v9132
        %v9136 = vsel %vm429, %v9135, 0.0
        %9137 = vadd.xlane.f32.xlu0 %v9136
        %v9138 = vpop.xlane.xlu0 %9137
        %v9139 = vmul.f32 %v9138, %v433
        %v9140 = vsub.f32 %v9135, %v9139
        %v9141 = vmul.f32 %v9140, %v9140
        %v9142 = vsel %vm429, %v9141, 0.0
        %9143 = vadd.xlane.f32.xlu0 %v9142
        %v9144 = vpop.xlane.xlu0 %9143
        %v9145 = vmul.f32 %v9144, %v433
        %v9146 = vadd.f32 %v9145, 1e-07
        %v9147 = vrsqrt.pop %v9146
        %v9148 = vmul.f32 %v9140, %v9147
        %v9149 = vlaneseq
        %v9150 = vshrl.u32 %v9149, 7
        %v9151 = vsub.s32 0, %v9150
        %v9152 = vrot.slane %v6990, %v9151
        %v9153 = vmul.f32 %v9148, %v9152
        %v9154 = vlaneseq
        %v9155 = vshrl.u32 %v9154, 7
        %v9156 = vsub.s32 0, %v9155
        %v9157 = vrot.slane %v6991, %v9156
        %v9158 = vadd.f32 %v9153, %v9157
        %s9159 = sld [smem:[#allocation2 + $0x2]]
        %v9160 = vstv %s9159
        %v9161 = vmul.f32 %v9160, %v9158
        %v9162 = vadd.f32 %v6985, %v9161
        %s9163 = sld [smem:[#allocation2]]
        %s9164 = sld [smem:[#allocation2 + $0x1]]
        %s9165 = sadd.f32 %s9163, %s9164
        %s9166 = sadd.f32 %s9165, %s9159
        %v9167 = vstv %s9166
        %v9168 = vrcp.pop %v9167
        %v9169 = vmul.f32 %v9162, %v9168
        %v9170 = vld [vmem:[%s425] sm:$0xff]
        %9172 = vset.pattern.permute.xlu0 0
        %9173 = vperm.xlu0 %9172, %v9170
        %v9174 = vpop.permute.xlu0 %9173
        %v9176 = vmul.f32 %v9169, %v9174
        %v9177 = vsel %vm429, %v9176, 0.0
        %v9178 = vrot.slane %v9177, 4
        %v9179 = vadd.f32 %v9177, %v9178
        %v9180 = vrot.slane %v9179, 2
        %v9181 = vadd.f32 %v9179, %v9180
        %v9182 = vrot.slane %v9181, 1
        %v9183 = vadd.f32 %v9181, %v9182
        %vm9184 = vcmask 7168
        %v9185 = vsel %vm9184, %v9170, 0.0
        %v9186 = vrot.slane %v9185, 4
        %v9187 = vadd.f32 %v9185, %v9186
        %v9188 = vrot.slane %v9187, 2
        %v9189 = vadd.f32 %v9187, %v9188
        %v9190 = vrot.slane %v9189, 1
        %v9191 = vadd.f32 %v9189, %v9190
        %v9192 = vmax.f32 %v9191, 1e-09
        %9194 = vset.pattern.permute.xlu0 0
        %9195 = vperm.xlu0 %9194, %v9192
        %v9196 = vpop.permute.xlu0 %9195
        %v9198 = vrcp.pop %v9196
        %v9199 = vmul.f32 %v9183, %v9198
        %vm9200 = vcmask 253952
        %9201 = vst.msk [vmem:[%s414] sm:$0x1] %vm9200, %v9199
        %s9202 = sand.u32 %s280, 1
        %s9203 = scalar_lea.sflag [#allocation3], %s9202
        %s9204 = sand.u32 %s280, 1
        %s9205 = scalar_lea.vmem [#allocation5], %s9204
        // Predicated region
        $region69: #{tpu_custom_call.1} parent=63 // pred_check
          %p9206 = pneg %p290
        $region70: #{tpu_custom_call.1} parent=63 // pred_check_branch
          %9208 = sbr.rel (%p9206) target = $region72
        $region71: #{tpu_custom_call.1} parent=63 // pred_region
          %s9210 = ssub.s32 16, 16
          %9211 = vsyncadd %s9203, %s9210
          %s9212 = smul.addr %s26, 16
          %s9213 = scalar_lea.hbm %s11, %s9212
          %s9215 = sshll.u32 %s9205, 4
          %s9216 = int_to_ptr.vmem [resolvable:$true] %s9215
          %9218 = dma.vmem_to_hbm [thread:$0]  %s9216, 16, %s9213, %s9203
        $region72: #{tpu_custom_call.1} parent=63 // pred_fallthru
          _
      $region64: #{tpu_custom_call.1} parent=5 // pred_fallthru
        _
      %p9219 = scmp.le.s32.totalorder 2, %s21
      // Predicated region
      $region73: #{tpu_custom_call.1} parent=5 // pred_check
        %p9220 = pneg %p9219
      $region74: #{tpu_custom_call.1} parent=5 // pred_check_branch
        %9222 = sbr.rel (%p9220) target = $region76
      $region75: #{tpu_custom_call.1} parent=5 // pred_region
        %s9223 = ssub.s32 %s21, 2
        // Predicated region
        $region77: #{tpu_custom_call.1} parent=75 // pred_check
          %p9224 = pneg %p296
        $region78: #{tpu_custom_call.1} parent=75 // pred_check_branch
          %9226 = sbr.rel (%p9224) target = $region80
        $region79: #{tpu_custom_call.1} parent=75 // pred_region
          %s9227 = sand.u32 %s281, 1
          %s9228 = scalar_lea.sflag [#allocation3], %s9227
          %s9229 = sand.u32 %s281, 1
          %s9230 = scalar_lea.vmem [#allocation5], %s9229
          %9231 = dma.done %s9228, 16
        $region80: #{tpu_custom_call.1} parent=75 // pred_fallthru
          _
      $region76: #{tpu_custom_call.1} parent=5 // pred_fallthru
        _
    $region6: #{tpu_custom_call.1} parent=1 // loop_footer
      %s25 = sadd.s32 1, %s21
    $region7: #{tpu_custom_call.1} parent=1 // loop_footer_branch
      %20 = sbr.rel target = $region3
    $region8: #{tpu_custom_call.1} parent=1 // loop_exit
      _
    %9232 = vsyncpa [#allocation3], 1
    %s9233 = scalar_lea.sflag [#allocation3], 1
    %9234 = vsyncpa %s9233, 1
    %9235 = vsyncpa [#allocation4], 1
    %s9236 = scalar_lea.sflag [#allocation4], 1
    %9237 = vsyncpa %s9236, 1

</llo_original>
